<compile_context>
chip_gen: v7x
topology: tpu7x:2x2x1
jax: 0.10.0
libtpu: 0.0.40
codegen_flags: <defaults>
</compile_context>

<pallas_src>
import functools
import math

import jax
import jax.numpy as jnp
from jax import lax
from jax.experimental import pallas as pl
from jax.experimental.pallas import tpu as pltpu

NUM_HEADS = 4
KV_SIZE_CONST = 960.0      # Attention_org.KV_size is hard-coded to 960 in the module
LN_EPS = 1e-6              # nn.LayerNorm(eps=1e-6)
IN_EPS = 1e-5              # nn.InstanceNorm2d default eps (affine=False, no running stats)

_SCALE = 1.0 / math.sqrt(KV_SIZE_CONST)   # folded into the scores matmul epilogue
_INV_H = 1.0 / NUM_HEADS                  # head-mean folded into each head's contribution

# Set to jnp.bfloat16 on v6e/v7x for ~2x MXU throughput (all statistics/epilogues stay
# f32, accumulation stays f32 via preferred_element_type).  f32 by default to match the
# PyTorch reference bit-for-bit-ish; v5e elementwise units have no bf16 anyway.
_MXU_INPUT_DTYPE = jnp.float32

# Row / column tile caps for the tiled linears.  "Full dim if small, else a (8,128)-
# aligned tile" keeps every per-step working set (x + w + out, double-buffered) well
# under the 32 MiB default scoped VMEM on all of v5e/v6e/v7x.
_TM_FULL, _TM_TILE = 512, 256
_TN_FULL, _TN_TILE = 2048, 512
# TODO(synk): for very large contraction dims (e.g. Conv2d patch embedding with
# Cin*p*p >> 8K) add a K-tiled grid axis ("arbitrary") with a VMEM f32 accumulator.


def _pick_tm(m):
    return m if m <= _TM_FULL else _TM_TILE


def _pick_tn(n):
    return n if n <= _TN_FULL else _TN_TILE


# ---------------------------------------------------------------------------
# Pallas kernels
# ---------------------------------------------------------------------------

def _erf_approx(x):
    # Abramowitz & Stegun 7.1.26 polynomial (max abs err ~1.5e-7 ~= f32 eps).
    # TODO(synk): nn.GELU() uses exact erf; approximated in-kernel (no native erf op).
    a1, a2, a3, a4, a5 = 0.254829592, -0.284496736, 1.421413741, -1.453152027, 1.061405429
    pc = 0.3275911
    ax = jnp.abs(x)
    t = 1.0 / (1.0 + pc * ax)
    poly = ((((a5 * t + a4) * t + a3) * t + a2) * t + a1) * t
    y = 1.0 - poly * jnp.exp(-ax * ax)
    return jnp.where(x >= 0.0, y, -y)


def _gelu_exact(x):
    return 0.5 * x * (1.0 + _erf_approx(x * 0.7071067811865476))


def _matmul_bias_kernel(x_ref, w_ref, b_ref, o_ref):
    # x: (tm, K); w: (K, tn) pre-transposed; b: (1, tn)
    dt = _MXU_INPUT_DTYPE
    o_ref[...] = jnp.dot(x_ref[...].astype(dt), w_ref[...].astype(dt),
                         preferred_element_type=jnp.float32) + b_ref[...]


def _ln_matmul_kernel(x_ref, g_ref, b_ref, w_ref, o_ref):
    # LayerNorm(eps=1e-6) over the full K row, fused into the projection matmul.
    x = x_ref[...]
    mu = jnp.mean(x, axis=-1, keepdims=True)
    var = jnp.mean((x - mu) ** 2, axis=-1, keepdims=True)
    xn = (x - mu) * lax.rsqrt(var + LN_EPS) * g_ref[...] + b_ref[...]
    dt = _MXU_INPUT_DTYPE
    o_ref[...] = jnp.dot(xn.astype(dt), w_ref[...].astype(dt),
                         preferred_element_type=jnp.float32)


def _layernorm_kernel(x_ref, g_ref, b_ref, o_ref):
    x = x_ref[...]
    mu = jnp.mean(x, axis=-1, keepdims=True)
    var = jnp.mean((x - mu) ** 2, axis=-1, keepdims=True)
    o_ref[...] = (x - mu) * lax.rsqrt(var + LN_EPS) * g_ref[...] + b_ref[...]


def _channel_attn_kernel(kt_ref, q_ref, v_ref, o_ref, *, seg_sizes):
    # grid = (B, NUM_HEADS).  NOTE: the head axis MUST stay the last, "arbitrary" grid
    # dimension with a constant (per-b) output index_map -- the output block stays
    # resident in VMEM and accumulates the head-mean across consecutive h steps.
    h = pl.program_id(1)

    kt = kt_ref[0, 0]      # (KV, N)   K pre-transposed -> natural MXU layout
    q = q_ref[0, 0]        # (N, Ctot) all three branches concatenated on channels
    v = v_ref[0, 0]        # (N, KV)

    dt = _MXU_INPUT_DTYPE
    # scores^T[kv, c] = sum_n K[n,kv] Q[n,c]  (== PyTorch scores[c,kv]); scale folded in.
    scores = jnp.dot(kt.astype(dt), q.astype(dt),
                     preferred_element_type=jnp.float32) * _SCALE       # (KV, Ctot)

    kv_rows, ctot = scores.shape
    # psi = InstanceNorm2d(num_heads): per (b, h, branch) normalization over the whole
    # (C_i, KV) slab, biased variance, eps=1e-5, no affine.  Branch segments are handled
    # with static lane masks (no in-kernel slicing/relayout).
    col2 = lax.broadcasted_iota(jnp.int32, (kv_rows, ctot), 1)
    col1 = lax.broadcasted_iota(jnp.int32, (1, ctot), 1)
    mu_row = jnp.zeros((1, ctot), jnp.float32)
    rs_row = jnp.zeros((1, ctot), jnp.float32)
    off = 0
    for cs in seg_sizes:
        m2 = (col2 >= off) & (col2 < off + cs)
        m1 = ((col1 >= off) & (col1 < off + cs)).astype(jnp.float32)
        cnt = jnp.float32(kv_rows * cs)
        mu = jnp.sum(jnp.where(m2, scores, 0.0), axis=(0, 1), keepdims=True) / cnt
        var = jnp.sum(jnp.where(m2, (scores - mu) ** 2, 0.0),
                      axis=(0, 1), keepdims=True) / cnt
        mu_row = mu_row + m1 * mu
        rs_row = rs_row + m1 * lax.rsqrt(var + IN_EPS)
        off += cs
    normed = (scores - mu_row) * rs_row

    # Softmax over the KV axis (axis 0 of scores^T), reciprocal on the EUP.
    m = jnp.max(normed, axis=0, keepdims=True)
    e = jnp.exp(normed - m)
    denom = jnp.sum(e, axis=0, keepdims=True)
    probs = e * pl.reciprocal(denom, approx=True)                        # (KV, Ctot)

    # context[n, c] = sum_kv V[n, kv] * probs[c, kv]  -- natural MXU layout again.
    contrib = jnp.dot(v.astype(dt), probs.astype(dt),
                      preferred_element_type=jnp.float32) * _INV_H       # (N, Ctot)

    @pl.when(h == 0)
    def _():
        o_ref[0] = contrib

    @pl.when(h > 0)
    def _():
        o_ref[0] += contrib


def _attnout_ffn_kernel(ctx_ref, emb_ref, wout_ref, g_ref, be_ref,
                        w1_ref, b1_ref, w2_ref, b2_ref, o_ref):
    # Fused: O = ctx @ Wout ; h1 = emb + O ; x = LN(h1) ; x = GELU(x@W1+b1)@W2+b2 ; out = x+h1
    dt = _MXU_INPUT_DTYPE
    o_proj = jnp.dot(ctx_ref[...].astype(dt), wout_ref[...].astype(dt),
                     preferred_element_type=jnp.float32)
    h1 = emb_ref[...] + o_proj                                           # residual 1
    mu = jnp.mean(h1, axis=-1, keepdims=True)
    var = jnp.mean((h1 - mu) ** 2, axis=-1, keepdims=True)
    xn = (h1 - mu) * lax.rsqrt(var + LN_EPS) * g_ref[...] + be_ref[...]
    hmid = jnp.dot(xn.astype(dt), w1_ref[...].astype(dt),
                   preferred_element_type=jnp.float32) + b1_ref[...]
    hmid = _gelu_exact(hmid)
    out = jnp.dot(hmid.astype(dt), w2_ref[...].astype(dt),
                  preferred_element_type=jnp.float32) + b2_ref[...]
    o_ref[...] = out + h1                                                # residual 2


# ---------------------------------------------------------------------------
# Pallas wrappers (grids / BlockSpecs)
# ---------------------------------------------------------------------------

def matmul_bias(x2d, w, b):
    M, K = x2d.shape
    cout = w.shape[1]
    tm, tn = _pick_tm(M), _pick_tn(cout)
    return pl.pallas_call(
        _matmul_bias_kernel,
        out_shape=jax.ShapeDtypeStruct((M, cout), jnp.float32),
        grid=(pl.cdiv(M, tm), pl.cdiv(cout, tn)),
        in_specs=[
            pl.BlockSpec((tm, K), lambda i, j: (i, 0)),
            pl.BlockSpec((K, tn), lambda i, j: (0, j)),
            pl.BlockSpec((1, tn), lambda i, j: (0, j)),
        ],
        out_specs=pl.BlockSpec((tm, tn), lambda i, j: (i, j)),
        compiler_params=pltpu.CompilerParams(
            dimension_semantics=("parallel", "parallel")),
    )(x2d, w, b.reshape(1, cout))


def ln_linear(x2d, gamma, beta, w):
    # LayerNorm over the full row fused with  y = LN(x) @ w   (w pre-transposed (K, Cout)).
    M, K = x2d.shape
    cout = w.shape[1]
    tm, tn = _pick_tm(M), _pick_tn(cout)
    return pl.pallas_call(
        _ln_matmul_kernel,
        out_shape=jax.ShapeDtypeStruct((M, cout), jnp.float32),
        grid=(pl.cdiv(M, tm), pl.cdiv(cout, tn)),
        in_specs=[
            pl.BlockSpec((tm, K), lambda i, j: (i, 0)),
            pl.BlockSpec((1, K), lambda i, j: (0, 0)),
            pl.BlockSpec((1, K), lambda i, j: (0, 0)),
            pl.BlockSpec((K, tn), lambda i, j: (0, j)),
        ],
        out_specs=pl.BlockSpec((tm, tn), lambda i, j: (i, j)),
        compiler_params=pltpu.CompilerParams(
            dimension_semantics=("parallel", "parallel")),
    )(x2d, gamma.reshape(1, K), beta.reshape(1, K), w)


def layernorm(x, gamma, beta):
    B, N, C = x.shape
    M = B * N
    tm = M if M <= 1024 else 1024
    y = pl.pallas_call(
        _layernorm_kernel,
        out_shape=jax.ShapeDtypeStruct((M, C), jnp.float32),
        grid=(pl.cdiv(M, tm),),
        in_specs=[
            pl.BlockSpec((tm, C), lambda i: (i, 0)),
            pl.BlockSpec((1, C), lambda i: (0, 0)),
            pl.BlockSpec((1, C), lambda i: (0, 0)),
        ],
        out_specs=pl.BlockSpec((tm, C), lambda i: (i, 0)),
        compiler_params=pltpu.CompilerParams(dimension_semantics=("parallel",)),
    )(x.reshape(M, C), gamma.reshape(1, C), beta.reshape(1, C))
    return y.reshape(B, N, C)


def channel_attention(kt, q, v, seg_sizes):
    # kt: (B, H, KV, N)  [K pre-transposed]
    # q : (B, H, N, Ctot) [all 3 branches concatenated on channels]
    # v : (B, H, N, KV)
    # returns head-averaged context (B, N, Ctot)
    B, H, KV, N = kt.shape
    ctot = q.shape[-1]
    kernel = functools.partial(_channel_attn_kernel, seg_sizes=tuple(seg_sizes))
    return pl.pallas_call(
        kernel,
        out_shape=jax.ShapeDtypeStruct((B, N, ctot), jnp.float32),
        grid=(B, H),
        in_specs=[
            pl.BlockSpec((1, 1, KV, N), lambda b, h: (b, h, 0, 0)),
            pl.BlockSpec((1, 1, N, ctot), lambda b, h: (b, h, 0, 0)),
            pl.BlockSpec((1, 1, N, KV), lambda b, h: (b, h, 0, 0)),
        ],
        out_specs=pl.BlockSpec((1, N, ctot), lambda b, h: (b, 0, 0)),
        compiler_params=pltpu.CompilerParams(
            dimension_semantics=("parallel", "arbitrary")),
    )(kt, q, v)


def attn_out_ffn(ctx2d, emb2d, wout, gamma, beta, w1, b1, w2, b2):
    M, C = ctx2d.shape
    ch = w1.shape[1]
    tm = _pick_tm(M)
    return pl.pallas_call(
        _attnout_ffn_kernel,
        out_shape=jax.ShapeDtypeStruct((M, C), jnp.float32),
        grid=(pl.cdiv(M, tm),),
        in_specs=[
            pl.BlockSpec((tm, C), lambda i: (i, 0)),
            pl.BlockSpec((tm, C), lambda i: (i, 0)),
            pl.BlockSpec((C, C), lambda i: (0, 0)),
            pl.BlockSpec((1, C), lambda i: (0, 0)),
            pl.BlockSpec((1, C), lambda i: (0, 0)),
            pl.BlockSpec((C, ch), lambda i: (0, 0)),
            pl.BlockSpec((1, ch), lambda i: (0, 0)),
            pl.BlockSpec((ch, C), lambda i: (0, 0)),
            pl.BlockSpec((1, C), lambda i: (0, 0)),
        ],
        out_specs=pl.BlockSpec((tm, C), lambda i: (i, 0)),
        compiler_params=pltpu.CompilerParams(dimension_semantics=("parallel",)),
    )(ctx2d, emb2d, wout, gamma.reshape(1, C), beta.reshape(1, C),
      w1, b1.reshape(1, ch), w2, b2.reshape(1, C))


# ---------------------------------------------------------------------------
# Module forward (glue in plain JAX, hot path in the fused Pallas kernels)
# ---------------------------------------------------------------------------

def channel_embeddings(p, x, patch):
    # Conv2d(kernel=stride=patch) == patch extraction + one matmul (weight pre-flattened).
    B, C, H, W = x.shape
    nh, nw = H // patch, W // patch
    xp = x.reshape(B, C, nh, patch, nw, patch)
    xp = xp.transpose(0, 2, 4, 1, 3, 5).reshape(B * nh * nw, C * patch * patch)
    emb = matmul_bias(xp, p["w"], p["b"]).reshape(B, nh * nw, C)
    # TODO(synk): Dropout(0.1) after the position-embedding add is an eval-mode identity.
    return emb + p["pos"]


def block_forward(p, embs):
    B, N, _ = embs[0].shape
    Cs = [int(e.shape[-1]) for e in embs]
    M = B * N
    emb_all = jnp.concatenate(embs, axis=-1)
    KV = emb_all.shape[-1]

    # Fused attn_norm(all) + all-head K and V projections (one wide matmul).
    g_all, b_all = p["attn_norm_all"]
    kv = ln_linear(emb_all.reshape(M, KV), g_all, b_all, p["wkv"])        # (M, 8*KV)
    kv = kv.reshape(B, N, 2 * NUM_HEADS, KV)
    kt = jnp.transpose(kv[:, :, :NUM_HEADS, :], (0, 2, 3, 1))             # (B, H, KV, N)
    v = jnp.transpose(kv[:, :, NUM_HEADS:, :], (0, 2, 1, 3))              # (B, H, N, KV)

    # Fused attn_norm_i + all-head Q projection per branch; concat branches on channels.
    qs = []
    for i in range(3):
        g, b = p[f"attn_norm{i}"]
        qi = ln_linear(embs[i].reshape(M, Cs[i]), g, b, p[f"wq{i}"])      # (M, H*C_i)
        qi = jnp.transpose(qi.reshape(B, N, NUM_HEADS, Cs[i]), (0, 2, 1, 3))
        qs.append(qi)
    qcat = jnp.concatenate(qs, axis=-1)                                   # (B, H, N, Ctot)

    ctx = channel_attention(kt, qcat, v, Cs)                              # (B, N, Ctot)

    # Fused out-projection + residual + ffn_norm + MLP (fc1/GELU/fc2) + residual.
    outs = []
    off = 0
    for i in range(3):
        C = Cs[i]
        ctx_i = ctx[:, :, off:off + C]
        off += C
        g, b = p[f"ffn_norm{i}"]
        w1, b1 = p[f"fc1_{i}"]
        w2, b2 = p[f"fc2_{i}"]
        y = attn_out_ffn(ctx_i.reshape(M, C), embs[i].reshape(M, C),
                         p[f"wout{i}"], g, b, w1, b1, w2, b2)
        outs.append(y.reshape(B, N, C))
    return outs


def encoder_forward(p, e1, e2, e3):
    embs = [e1, e2, e3]
    for bp in p["blocks"]:
        embs = block_forward(bp, embs)
    return [layernorm(embs[i], *p["norms"][i]) for i in range(3)]


def channel_transformer(params, en1, en2, en3, patch_sizes=(4, 2, 1)):
    emb1 = channel_embeddings(params["emb"][0], en1, patch_sizes[0])
    emb2 = channel_embeddings(params["emb"][1], en2, patch_sizes[1])
    emb3 = channel_embeddings(params["emb"][2], en3, patch_sizes[2])
    e1, e2, e3 = encoder_forward(params["encoder1"], emb1, emb2, emb3)
    e1, e2, e3 = encoder_forward(params["encoder2"], e1, e2, e3)
    return e1, e2, e3


# ---------------------------------------------------------------------------
# Deterministic parameter init (synthetic weights; shapes match the module,
# stored pre-transposed (K, Cout) and with per-head weights pre-concatenated)
# ---------------------------------------------------------------------------

def init_params(key, channel_num, dim, patch_sizes, n_patches):
    assert sum(channel_num) == dim * 3, "concat width must match K/V Linear size"
    counter = [0]

    def nxt(shape, scale=0.02):
        counter[0] += 1
        return scale * jax.random.normal(jax.random.fold_in(key, counter[0]),
                                         shape, jnp.float32)

    kv = dim * 3
    H = NUM_HEADS

    def init_block():
        p = {}
        for i in range(3):
            C = channel_num[i]
            p[f"attn_norm{i}"] = (jnp.ones((C,), jnp.float32), jnp.zeros((C,), jnp.float32))
            p[f"ffn_norm{i}"] = (jnp.ones((C,), jnp.float32), jnp.zeros((C,), jnp.float32))
            # 4 per-head (C, C) Q weights, pre-transposed to (in, out) and concatenated.
            p[f"wq{i}"] = nxt((C, H * C))
            p[f"wout{i}"] = nxt((C, C))                 # out_i (bias=False), (in, out)
            p[f"fc1_{i}"] = (nxt((C, 4 * C)), nxt((4 * C,), scale=1e-6))
            p[f"fc2_{i}"] = (nxt((4 * C, C)), nxt((C,), scale=1e-6))
        p["attn_norm_all"] = (jnp.ones((kv,), jnp.float32), jnp.zeros((kv,), jnp.float32))
        # [K heads 0..3 | V heads 0..3] pre-transposed & concatenated along out dim.
        p["wkv"] = nxt((kv, 2 * H * kv))
        return p

    def init_encoder():
        return {
            "blocks": [init_block() for _ in range(4)],
            "norms": [(jnp.ones((channel_num[i],), jnp.float32),
                       jnp.zeros((channel_num[i],), jnp.float32)) for i in range(3)],
        }

    emb = []
    for i in range(3):
        C, ps = channel_num[i], patch_sizes[i]
        emb.append({
            "w": nxt((C * ps * ps, C)),                          # Conv2d weight, flattened (in, out)
            "b": nxt((C,)),
            "pos": jnp.zeros((1, n_patches, C), jnp.float32),    # torch.zeros init
        })
    return {"emb": emb, "encoder1": init_encoder(), "encoder2": init_encoder()}


# ---------------------------------------------------------------------------

if __name__ == "__main__":
    B = 2
    # Small, self-consistent config: sum(channel_num) == dim*3 so the concatenated
    # embedding matches the key/value Linear and attn_norm sizes.
    channel_num = [32, 32, 32]
    dim = 32
    patch_sizes = (4, 2, 1)
    spatial = (16, 8, 4)               # all three levels yield N = 16 patches
    n_patches = (spatial[0] // patch_sizes[0]) ** 2

    params = init_params(jax.random.PRNGKey(0), channel_num, dim, patch_sizes, n_patches)

    k1, k2, k3 = jax.random.split(jax.random.PRNGKey(0), 3)
    en1 = jax.random.normal(k1, (B, channel_num[0], spatial[0], spatial[0]), jnp.float32)
    en2 = jax.random.normal(k2, (B, channel_num[1], spatial[1], spatial[1]), jnp.float32)
    en3 = jax.random.normal(k3, (B, channel_num[2], spatial[2], spatial[2]), jnp.float32)

    fwd = jax.jit(functools.partial(channel_transformer, patch_sizes=patch_sizes))
    o1, o2, o3 = fwd(params, en1, en2, en3)
    jax.block_until_ready((o1, o2, o3))

    assert o1.shape == (B, n_patches, channel_num[0])
    assert o2.shape == (B, n_patches, channel_num[1])
    assert o3.shape == (B, n_patches, channel_num[2])
    print("KERNEL_OK")
</pallas_src>

<mosaic_0001>
module attributes {stable_mosaic.version = 11 : i64} {
  func.func @_matmul_bias_kernel(%arg0: i32, %arg1: i32, %arg2: memref<32x32xf32, #tpu.memory_space<vmem>>, %arg3: memref<32x32xf32, #tpu.memory_space<vmem>>, %arg4: memref<1x32xf32, #tpu.memory_space<vmem>>, %arg5: memref<32x32xf32, #tpu.memory_space<vmem>>) attributes {dimension_semantics = [#tpu.dimension_semantics<parallel>, #tpu.dimension_semantics<parallel>], iteration_bounds = array<i64: 1, 1>, scalar_prefetch = 0 : i64, scratch_operands = 0 : i64, tpu.core_type = #tpu.core_type<tc>, window_params = [{transform_indices = @transform_0, window_bounds = array<i64: 32, 32>}, {transform_indices = @transform_1, window_bounds = array<i64: 32, 32>}, {transform_indices = @transform_2, window_bounds = array<i64: 1, 32>}, {transform_indices = @transform_3, window_bounds = array<i64: 32, 32>}]} {
    %c0 = arith.constant 0 : index
    %c0_0 = arith.constant 0 : index
    %0 = vector.load %arg2[%c0, %c0_0] : memref<32x32xf32, #tpu.memory_space<vmem>>, vector<32x32xf32>
    %c0_1 = arith.constant 0 : index
    %c0_2 = arith.constant 0 : index
    %1 = vector.load %arg3[%c0_1, %c0_2] : memref<32x32xf32, #tpu.memory_space<vmem>>, vector<32x32xf32>
    %cst = arith.constant dense<0.000000e+00> : vector<32x32xf32>
    %2 = tpu.matmul %0, %1, %cst {dimension_numbers = #tpu.dot_dimension_numbers<[1], [0], [0], [1], [0, 0, 1, 1], [], []>} : vector<32x32xf32>, vector<32x32xf32>, vector<32x32xf32> -> vector<32x32xf32>
    %c0_3 = arith.constant 0 : index
    %c0_4 = arith.constant 0 : index
    %3 = vector.load %arg4[%c0_3, %c0_4] : memref<1x32xf32, #tpu.memory_space<vmem>>, vector<1x32xf32>
    %4 = vector.broadcast %3 : vector<1x32xf32> to vector<32x32xf32>
    %5 = arith.addf %2, %4 : vector<32x32xf32>
    %c0_5 = arith.constant 0 : index
    %c0_6 = arith.constant 0 : index
    %6 = vector.load %arg5[%c0_5, %c0_6] : memref<32x32xf32, #tpu.memory_space<vmem>>, vector<32x32xf32>
    tpu.vector_store %arg5[%c0_5, %c0_6], %5 {strides = array<i32>} : memref<32x32xf32, #tpu.memory_space<vmem>>, vector<32x32xf32>,
    return
  }
  func.func @transform_0(%arg0: i32, %arg1: i32) -> (i32, i32) {
    %c0_i32 = arith.constant 0 : i32
    %c0_i32_0 = arith.constant 0 : i32
    return %arg0, %c0_i32 : i32, i32
  }
  func.func @transform_1(%arg0: i32, %arg1: i32) -> (i32, i32) {
    %c0_i32 = arith.constant 0 : i32
    %c0_i32_0 = arith.constant 0 : i32
    return %c0_i32, %arg1 : i32, i32
  }
  func.func @transform_2(%arg0: i32, %arg1: i32) -> (i32, i32) {
    %c0_i32 = arith.constant 0 : i32
    %c0_i32_0 = arith.constant 0 : i32
    return %c0_i32, %arg1 : i32, i32
  }
  func.func @transform_3(%arg0: i32, %arg1: i32) -> (i32, i32) {
    %c0_i32 = arith.constant 0 : i32
    return %arg0, %arg1 : i32, i32
  }
}

module attributes {stable_mosaic.version = 11 : i64} {
  func.func @_matmul_bias_kernel(%arg0: i32, %arg1: i32, %arg2: memref<32x128xf32, #tpu.memory_space<vmem>>, %arg3: memref<128x32xf32, #tpu.memory_space<vmem>>, %arg4: memref<1x32xf32, #tpu.memory_space<vmem>>, %arg5: memref<32x32xf32, #tpu.memory_space<vmem>>) attributes {dimension_semantics = [#tpu.dimension_semantics<parallel>, #tpu.dimension_semantics<parallel>], iteration_bounds = array<i64: 1, 1>, scalar_prefetch = 0 : i64, scratch_operands = 0 : i64, tpu.core_type = #tpu.core_type<tc>, window_params = [{transform_indices = @transform_0, window_bounds = array<i64: 32, 128>}, {transform_indices = @transform_1, window_bounds = array<i64: 128, 32>}, {transform_indices = @transform_2, window_bounds = array<i64: 1, 32>}, {transform_indices = @transform_3, window_bounds = array<i64: 32, 32>}]} {
    %c0 = arith.constant 0 : index
    %c0_0 = arith.constant 0 : index
    %0 = vector.load %arg2[%c0, %c0_0] : memref<32x128xf32, #tpu.memory_space<vmem>>, vector<32x128xf32>
    %c0_1 = arith.constant 0 : index
    %c0_2 = arith.constant 0 : index
    %1 = vector.load %arg3[%c0_1, %c0_2] : memref<128x32xf32, #tpu.memory_space<vmem>>, vector<128x32xf32>
    %cst = arith.constant dense<0.000000e+00> : vector<32x32xf32>
    %2 = tpu.matmul %0, %1, %cst {dimension_numbers = #tpu.dot_dimension_numbers<[1], [0], [0], [1], [0, 0, 1, 1], [], []>} : vector<32x128xf32>, vector<128x32xf32>, vector<32x32xf32> -> vector<32x32xf32>
    %c0_3 = arith.constant 0 : index
    %c0_4 = arith.constant 0 : index
    %3 = vector.load %arg4[%c0_3, %c0_4] : memref<1x32xf32, #tpu.memory_space<vmem>>, vector<1x32xf32>
    %4 = vector.broadcast %3 : vector<1x32xf32> to vector<32x32xf32>
    %5 = arith.addf %2, %4 : vector<32x32xf32>
    %c0_5 = arith.constant 0 : index
    %c0_6 = arith.constant 0 : index
    %6 = vector.load %arg5[%c0_5, %c0_6] : memref<32x32xf32, #tpu.memory_space<vmem>>, vector<32x32xf32>
    tpu.vector_store %arg5[%c0_5, %c0_6], %5 {strides = array<i32>} : memref<32x32xf32, #tpu.memory_space<vmem>>, vector<32x32xf32>,
    return
  }
  func.func @transform_0(%arg0: i32, %arg1: i32) -> (i32, i32) {
    %c0_i32 = arith.constant 0 : i32
    %c0_i32_0 = arith.constant 0 : i32
    return %arg0, %c0_i32 : i32, i32
  }
  func.func @transform_1(%arg0: i32, %arg1: i32) -> (i32, i32) {
    %c0_i32 = arith.constant 0 : i32
    %c0_i32_0 = arith.constant 0 : i32
    return %c0_i32, %arg1 : i32, i32
  }
  func.func @transform_2(%arg0: i32, %arg1: i32) -> (i32, i32) {
    %c0_i32 = arith.constant 0 : i32
    %c0_i32_0 = arith.constant 0 : i32
    return %c0_i32, %arg1 : i32, i32
  }
  func.func @transform_3(%arg0: i32, %arg1: i32) -> (i32, i32) {
    %c0_i32 = arith.constant 0 : i32
    return %arg0, %arg1 : i32, i32
  }
}

module attributes {stable_mosaic.version = 11 : i64} {
  func.func @_ln_matmul_kernel(%arg0: i32, %arg1: i32, %arg2: memref<32x96xf32, #tpu.memory_space<vmem>>, %arg3: memref<1x96xf32, #tpu.memory_space<vmem>>, %arg4: memref<1x96xf32, #tpu.memory_space<vmem>>, %arg5: memref<96x768xf32, #tpu.memory_space<vmem>>, %arg6: memref<32x768xf32, #tpu.memory_space<vmem>>) attributes {dimension_semantics = [#tpu.dimension_semantics<parallel>, #tpu.dimension_semantics<parallel>], iteration_bounds = array<i64: 1, 1>, scalar_prefetch = 0 : i64, scratch_operands = 0 : i64, tpu.core_type = #tpu.core_type<tc>, window_params = [{transform_indices = @transform_0, window_bounds = array<i64: 32, 96>}, {pipeline_mode = #tpu.pipeline_mode<synchronous>, transform_indices = @transform_1, window_bounds = array<i64: 1, 96>}, {pipeline_mode = #tpu.pipeline_mode<synchronous>, transform_indices = @transform_2, window_bounds = array<i64: 1, 96>}, {transform_indices = @transform_3, window_bounds = array<i64: 96, 768>}, {transform_indices = @transform_4, window_bounds = array<i64: 32, 768>}]} {
    %c0 = arith.constant 0 : index
    %c0_0 = arith.constant 0 : index
    %0 = vector.load %arg2[%c0, %c0_0] : memref<32x96xf32, #tpu.memory_space<vmem>>, vector<32x96xf32>
    %cst = arith.constant dense<0.000000e+00> : vector<32xf32>
    %1 = vector.multi_reduction <add>, %0, %cst [1] : vector<32x96xf32> to vector<32xf32>
    %2 = vector.shape_cast %1 : vector<32xf32> to vector<32x1xf32>
    %cst_1 = arith.constant 9.600000e+01 : f32
    %3 = vector.broadcast %cst_1 : f32 to vector<32x1xf32>
    %4 = arith.divf %2, %3 : vector<32x1xf32>
    %5 = vector.broadcast %4 : vector<32x1xf32> to vector<32x96xf32>
    %6 = arith.subf %0, %5 : vector<32x96xf32>
    %7 = arith.mulf %6, %6 : vector<32x96xf32>
    %cst_2 = arith.constant dense<0.000000e+00> : vector<32xf32>
    %8 = vector.multi_reduction <add>, %7, %cst_2 [1] : vector<32x96xf32> to vector<32xf32>
    %9 = vector.shape_cast %8 : vector<32xf32> to vector<32x1xf32>
    %cst_3 = arith.constant 9.600000e+01 : f32
    %10 = vector.broadcast %cst_3 : f32 to vector<32x1xf32>
    %11 = arith.divf %9, %10 : vector<32x1xf32>
    %12 = vector.broadcast %4 : vector<32x1xf32> to vector<32x96xf32>
    %13 = arith.subf %0, %12 : vector<32x96xf32>
    %cst_4 = arith.constant 9.99999997E-7 : f32
    %14 = vector.broadcast %cst_4 : f32 to vector<32x1xf32>
    %15 = arith.addf %11, %14 : vector<32x1xf32>
    %16 = math.rsqrt %15 : vector<32x1xf32>
    %17 = vector.broadcast %16 : vector<32x1xf32> to vector<32x96xf32>
    %18 = arith.mulf %13, %17 : vector<32x96xf32>
    %c0_5 = arith.constant 0 : index
    %c0_6 = arith.constant 0 : index
    %19 = vector.load %arg3[%c0_5, %c0_6] : memref<1x96xf32, #tpu.memory_space<vmem>>, vector<1x96xf32>
    %20 = vector.broadcast %19 : vector<1x96xf32> to vector<32x96xf32>
    %21 = arith.mulf %18, %20 : vector<32x96xf32>
    %c0_7 = arith.constant 0 : index
    %c0_8 = arith.constant 0 : index
    %22 = vector.load %arg4[%c0_7, %c0_8] : memref<1x96xf32, #tpu.memory_space<vmem>>, vector<1x96xf32>
    %23 = vector.broadcast %22 : vector<1x96xf32> to vector<32x96xf32>
    %24 = arith.addf %21, %23 : vector<32x96xf32>
    %c0_9 = arith.constant 0 : index
    %c0_10 = arith.constant 0 : index
    %25 = vector.load %arg5[%c0_9, %c0_10] : memref<96x768xf32, #tpu.memory_space<vmem>>, vector<96x768xf32>
    %cst_11 = arith.constant dense<0.000000e+00> : vector<32x768xf32>
    %26 = tpu.matmul %24, %25, %cst_11 {dimension_numbers = #tpu.dot_dimension_numbers<[1], [0], [0], [1], [0, 0, 1, 1], [], []>} : vector<32x96xf32>, vector<96x768xf32>, vector<32x768xf32> -> vector<32x768xf32>
    %c0_12 = arith.constant 0 : index
    %c0_13 = arith.constant 0 : index
    %27 = vector.load %arg6[%c0_12, %c0_13] : memref<32x768xf32, #tpu.memory_space<vmem>>, vector<32x768xf32>
    tpu.vector_store %arg6[%c0_12, %c0_13], %26 {strides = array<i32>} : memref<32x768xf32, #tpu.memory_space<vmem>>, vector<32x768xf32>,
    return
  }
  func.func @transform_0(%arg0: i32, %arg1: i32) -> (i32, i32) {
    %c0_i32 = arith.constant 0 : i32
    %c0_i32_0 = arith.constant 0 : i32
    return %arg0, %c0_i32 : i32, i32
  }
  func.func @transform_1(%arg0: i32, %arg1: i32) -> (i32, i32) {
    %c0_i32 = arith.constant 0 : i32
    %c0_i32_0 = arith.constant 0 : i32
    %c0_i32_1 = arith.constant 0 : i32
    return %c0_i32, %c0_i32_0 : i32, i32
  }
  func.func @transform_2(%arg0: i32, %arg1: i32) -> (i32, i32) {
    %c0_i32 = arith.constant 0 : i32
    %c0_i32_0 = arith.constant 0 : i32
    %c0_i32_1 = arith.constant 0 : i32
    return %c0_i32, %c0_i32_0 : i32, i32
  }
  func.func @transform_3(%arg0: i32, %arg1: i32) -> (i32, i32) {
    %c0_i32 = arith.constant 0 : i32
    %c0_i32_0 = arith.constant 0 : i32
    return %c0_i32, %arg1 : i32, i32
  }
  func.func @transform_4(%arg0: i32, %arg1: i32) -> (i32, i32) {
    %c0_i32 = arith.constant 0 : i32
    return %arg0, %arg1 : i32, i32
  }
}

module attributes {stable_mosaic.version = 11 : i64} {
  func.func @_matmul_bias_kernel(%arg0: i32, %arg1: i32, %arg2: memref<32x512xf32, #tpu.memory_space<vmem>>, %arg3: memref<512x32xf32, #tpu.memory_space<vmem>>, %arg4: memref<1x32xf32, #tpu.memory_space<vmem>>, %arg5: memref<32x32xf32, #tpu.memory_space<vmem>>) attributes {dimension_semantics = [#tpu.dimension_semantics<parallel>, #tpu.dimension_semantics<parallel>], iteration_bounds = array<i64: 1, 1>, scalar_prefetch = 0 : i64, scratch_operands = 0 : i64, tpu.core_type = #tpu.core_type<tc>, window_params = [{transform_indices = @transform_0, window_bounds = array<i64: 32, 512>}, {transform_indices = @transform_1, window_bounds = array<i64: 512, 32>}, {transform_indices = @transform_2, window_bounds = array<i64: 1, 32>}, {transform_indices = @transform_3, window_bounds = array<i64: 32, 32>}]} {
    %c0 = arith.constant 0 : index
    %c0_0 = arith.constant 0 : index
    %0 = vector.load %arg2[%c0, %c0_0] : memref<32x512xf32, #tpu.memory_space<vmem>>, vector<32x512xf32>
    %c0_1 = arith.constant 0 : index
    %c0_2 = arith.constant 0 : index
    %1 = vector.load %arg3[%c0_1, %c0_2] : memref<512x32xf32, #tpu.memory_space<vmem>>, vector<512x32xf32>
    %cst = arith.constant dense<0.000000e+00> : vector<32x32xf32>
    %2 = tpu.matmul %0, %1, %cst {dimension_numbers = #tpu.dot_dimension_numbers<[1], [0], [0], [1], [0, 0, 1, 1], [], []>} : vector<32x512xf32>, vector<512x32xf32>, vector<32x32xf32> -> vector<32x32xf32>
    %c0_3 = arith.constant 0 : index
    %c0_4 = arith.constant 0 : index
    %3 = vector.load %arg4[%c0_3, %c0_4] : memref<1x32xf32, #tpu.memory_space<vmem>>, vector<1x32xf32>
    %4 = vector.broadcast %3 : vector<1x32xf32> to vector<32x32xf32>
    %5 = arith.addf %2, %4 : vector<32x32xf32>
    %c0_5 = arith.constant 0 : index
    %c0_6 = arith.constant 0 : index
    %6 = vector.load %arg5[%c0_5, %c0_6] : memref<32x32xf32, #tpu.memory_space<vmem>>, vector<32x32xf32>
    tpu.vector_store %arg5[%c0_5, %c0_6], %5 {strides = array<i32>} : memref<32x32xf32, #tpu.memory_space<vmem>>, vector<32x32xf32>,
    return
  }
  func.func @transform_0(%arg0: i32, %arg1: i32) -> (i32, i32) {
    %c0_i32 = arith.constant 0 : i32
    %c0_i32_0 = arith.constant 0 : i32
    return %arg0, %c0_i32 : i32, i32
  }
  func.func @transform_1(%arg0: i32, %arg1: i32) -> (i32, i32) {
    %c0_i32 = arith.constant 0 : i32
    %c0_i32_0 = arith.constant 0 : i32
    return %c0_i32, %arg1 : i32, i32
  }
  func.func @transform_2(%arg0: i32, %arg1: i32) -> (i32, i32) {
    %c0_i32 = arith.constant 0 : i32
    %c0_i32_0 = arith.constant 0 : i32
    return %c0_i32, %arg1 : i32, i32
  }
  func.func @transform_3(%arg0: i32, %arg1: i32) -> (i32, i32) {
    %c0_i32 = arith.constant 0 : i32
    return %arg0, %arg1 : i32, i32
  }
}

module attributes {stable_mosaic.version = 11 : i64} {
  func.func @_ln_matmul_kernel(%arg0: i32, %arg1: i32, %arg2: memref<32x32xf32, #tpu.memory_space<vmem>>, %arg3: memref<1x32xf32, #tpu.memory_space<vmem>>, %arg4: memref<1x32xf32, #tpu.memory_space<vmem>>, %arg5: memref<32x128xf32, #tpu.memory_space<vmem>>, %arg6: memref<32x128xf32, #tpu.memory_space<vmem>>) attributes {dimension_semantics = [#tpu.dimension_semantics<parallel>, #tpu.dimension_semantics<parallel>], iteration_bounds = array<i64: 1, 1>, scalar_prefetch = 0 : i64, scratch_operands = 0 : i64, tpu.core_type = #tpu.core_type<tc>, window_params = [{transform_indices = @transform_0, window_bounds = array<i64: 32, 32>}, {pipeline_mode = #tpu.pipeline_mode<synchronous>, transform_indices = @transform_1, window_bounds = array<i64: 1, 32>}, {pipeline_mode = #tpu.pipeline_mode<synchronous>, transform_indices = @transform_2, window_bounds = array<i64: 1, 32>}, {transform_indices = @transform_3, window_bounds = array<i64: 32, 128>}, {transform_indices = @transform_4, window_bounds = array<i64: 32, 128>}]} {
    %c0 = arith.constant 0 : index
    %c0_0 = arith.constant 0 : index
    %0 = vector.load %arg2[%c0, %c0_0] : memref<32x32xf32, #tpu.memory_space<vmem>>, vector<32x32xf32>
    %cst = arith.constant dense<0.000000e+00> : vector<32xf32>
    %1 = vector.multi_reduction <add>, %0, %cst [1] : vector<32x32xf32> to vector<32xf32>
    %2 = vector.shape_cast %1 : vector<32xf32> to vector<32x1xf32>
    %cst_1 = arith.constant 3.200000e+01 : f32
    %3 = vector.broadcast %cst_1 : f32 to vector<32x1xf32>
    %4 = arith.divf %2, %3 : vector<32x1xf32>
    %5 = vector.broadcast %4 : vector<32x1xf32> to vector<32x32xf32>
    %6 = arith.subf %0, %5 : vector<32x32xf32>
    %7 = arith.mulf %6, %6 : vector<32x32xf32>
    %cst_2 = arith.constant dense<0.000000e+00> : vector<32xf32>
    %8 = vector.multi_reduction <add>, %7, %cst_2 [1] : vector<32x32xf32> to vector<32xf32>
    %9 = vector.shape_cast %8 : vector<32xf32> to vector<32x1xf32>
    %cst_3 = arith.constant 3.200000e+01 : f32
    %10 = vector.broadcast %cst_3 : f32 to vector<32x1xf32>
    %11 = arith.divf %9, %10 : vector<32x1xf32>
    %12 = vector.broadcast %4 : vector<32x1xf32> to vector<32x32xf32>
    %13 = arith.subf %0, %12 : vector<32x32xf32>
    %cst_4 = arith.constant 9.99999997E-7 : f32
    %14 = vector.broadcast %cst_4 : f32 to vector<32x1xf32>
    %15 = arith.addf %11, %14 : vector<32x1xf32>
    %16 = math.rsqrt %15 : vector<32x1xf32>
    %17 = vector.broadcast %16 : vector<32x1xf32> to vector<32x32xf32>
    %18 = arith.mulf %13, %17 : vector<32x32xf32>
    %c0_5 = arith.constant 0 : index
    %c0_6 = arith.constant 0 : index
    %19 = vector.load %arg3[%c0_5, %c0_6] : memref<1x32xf32, #tpu.memory_space<vmem>>, vector<1x32xf32>
    %20 = vector.broadcast %19 : vector<1x32xf32> to vector<32x32xf32>
    %21 = arith.mulf %18, %20 : vector<32x32xf32>
    %c0_7 = arith.constant 0 : index
    %c0_8 = arith.constant 0 : index
    %22 = vector.load %arg4[%c0_7, %c0_8] : memref<1x32xf32, #tpu.memory_space<vmem>>, vector<1x32xf32>
    %23 = vector.broadcast %22 : vector<1x32xf32> to vector<32x32xf32>
    %24 = arith.addf %21, %23 : vector<32x32xf32>
    %c0_9 = arith.constant 0 : index
    %c0_10 = arith.constant 0 : index
    %25 = vector.load %arg5[%c0_9, %c0_10] : memref<32x128xf32, #tpu.memory_space<vmem>>, vector<32x128xf32>
    %cst_11 = arith.constant dense<0.000000e+00> : vector<32x128xf32>
    %26 = tpu.matmul %24, %25, %cst_11 {dimension_numbers = #tpu.dot_dimension_numbers<[1], [0], [0], [1], [0, 0, 1, 1], [], []>} : vector<32x32xf32>, vector<32x128xf32>, vector<32x128xf32> -> vector<32x128xf32>
    %c0_12 = arith.constant 0 : index
    %c0_13 = arith.constant 0 : index
    %27 = vector.load %arg6[%c0_12, %c0_13] : memref<32x128xf32, #tpu.memory_space<vmem>>, vector<32x128xf32>
    tpu.vector_store %arg6[%c0_12, %c0_13], %26 {strides = array<i32>} : memref<32x128xf32, #tpu.memory_space<vmem>>, vector<32x128xf32>,
    return
  }
  func.func @transform_0(%arg0: i32, %arg1: i32) -> (i32, i32) {
    %c0_i32 = arith.constant 0 : i32
    %c0_i32_0 = arith.constant 0 : i32
    return %arg0, %c0_i32 : i32, i32
  }
  func.func @transform_1(%arg0: i32, %arg1: i32) -> (i32, i32) {
    %c0_i32 = arith.constant 0 : i32
    %c0_i32_0 = arith.constant 0 : i32
    %c0_i32_1 = arith.constant 0 : i32
    return %c0_i32, %c0_i32_0 : i32, i32
  }
  func.func @transform_2(%arg0: i32, %arg1: i32) -> (i32, i32) {
    %c0_i32 = arith.constant 0 : i32
    %c0_i32_0 = arith.constant 0 : i32
    %c0_i32_1 = arith.constant 0 : i32
    return %c0_i32, %c0_i32_0 : i32, i32
  }
  func.func @transform_3(%arg0: i32, %arg1: i32) -> (i32, i32) {
    %c0_i32 = arith.constant 0 : i32
    %c0_i32_0 = arith.constant 0 : i32
    return %c0_i32, %arg1 : i32, i32
  }
  func.func @transform_4(%arg0: i32, %arg1: i32) -> (i32, i32) {
    %c0_i32 = arith.constant 0 : i32
    return %arg0, %arg1 : i32, i32
  }
}

module attributes {stable_mosaic.version = 11 : i64} {
  func.func @_channel_attn_kernel(%arg0: i32, %arg1: i32, %arg2: memref<1x1x96x16xf32, #tpu.memory_space<vmem>>, %arg3: memref<1x1x16x96xf32, #tpu.memory_space<vmem>>, %arg4: memref<1x1x16x96xf32, #tpu.memory_space<vmem>>, %arg5: memref<1x16x96xf32, #tpu.memory_space<vmem>>) attributes {dimension_semantics = [#tpu.dimension_semantics<parallel>, #tpu.dimension_semantics<arbitrary>], iteration_bounds = array<i64: 2, 4>, scalar_prefetch = 0 : i64, scratch_operands = 0 : i64, tpu.core_type = #tpu.core_type<tc>, window_params = [{transform_indices = @transform_0, window_bounds = array<i64: 1, 1, 96, 16>}, {transform_indices = @transform_1, window_bounds = array<i64: 1, 1, 16, 96>}, {transform_indices = @transform_2, window_bounds = array<i64: 1, 1, 16, 96>}, {transform_indices = @transform_3, window_bounds = array<i64: 1, 16, 96>}]} {
    %c0 = arith.constant 0 : index
    %c0_0 = arith.constant 0 : index
    %c0_1 = arith.constant 0 : index
    %c0_2 = arith.constant 0 : index
    %0 = vector.load %arg2[%c0, %c0_0, %c0_1, %c0_2] : memref<1x1x96x16xf32, #tpu.memory_space<vmem>>, vector<1x1x96x16xf32>
    %1 = vector.shape_cast %0 : vector<1x1x96x16xf32> to vector<96x16xf32>
    %c0_3 = arith.constant 0 : index
    %c0_4 = arith.constant 0 : index
    %c0_5 = arith.constant 0 : index
    %c0_6 = arith.constant 0 : index
    %2 = vector.load %arg3[%c0_3, %c0_4, %c0_5, %c0_6] : memref<1x1x16x96xf32, #tpu.memory_space<vmem>>, vector<1x1x16x96xf32>
    %3 = vector.shape_cast %2 : vector<1x1x16x96xf32> to vector<16x96xf32>
    %c0_7 = arith.constant 0 : index
    %c0_8 = arith.constant 0 : index
    %c0_9 = arith.constant 0 : index
    %c0_10 = arith.constant 0 : index
    %4 = vector.load %arg4[%c0_7, %c0_8, %c0_9, %c0_10] : memref<1x1x16x96xf32, #tpu.memory_space<vmem>>, vector<1x1x16x96xf32>
    %5 = vector.shape_cast %4 : vector<1x1x16x96xf32> to vector<16x96xf32>
    %cst = arith.constant dense<0.000000e+00> : vector<96x96xf32>
    %6 = tpu.matmul %1, %3, %cst {dimension_numbers = #tpu.dot_dimension_numbers<[1], [0], [0], [1], [0, 0, 1, 1], [], []>} : vector<96x16xf32>, vector<16x96xf32>, vector<96x96xf32> -> vector<96x96xf32>
    %cst_11 = arith.constant 0.0322748609 : f32
    %7 = vector.broadcast %cst_11 : f32 to vector<96x96xf32>
    %8 = arith.mulf %6, %7 : vector<96x96xf32>
    %9 = tpu.iota {dimensions = array<i32: 1>} : vector<96x96xi32>
    %10 = tpu.iota {dimensions = array<i32: 1>} : vector<1x96xi32>
    %cst_12 = arith.constant 0.000000e+00 : f32
    %11 = vector.broadcast %cst_12 : f32 to vector<1x96xf32>
    %cst_13 = arith.constant 0.000000e+00 : f32
    %12 = vector.broadcast %cst_13 : f32 to vector<1x96xf32>
    %c0_i32 = arith.constant 0 : i32
    %13 = vector.broadcast %c0_i32 : i32 to vector<96x96xi32>
    %14 = arith.cmpi sge, %9, %13 : vector<96x96xi32>
    %c32_i32 = arith.constant 32 : i32
    %15 = vector.broadcast %c32_i32 : i32 to vector<96x96xi32>
    %16 = arith.cmpi slt, %9, %15 : vector<96x96xi32>
    %17 = arith.andi %14, %16 : vector<96x96xi1>
    %c0_i32_14 = arith.constant 0 : i32
    %18 = vector.broadcast %c0_i32_14 : i32 to vector<1x96xi32>
    %19 = arith.cmpi sge, %10, %18 : vector<1x96xi32>
    %c32_i32_15 = arith.constant 32 : i32
    %20 = vector.broadcast %c32_i32_15 : i32 to vector<1x96xi32>
    %21 = arith.cmpi slt, %10, %20 : vector<1x96xi32>
    %22 = arith.andi %19, %21 : vector<1x96xi1>
    %23 = arith.extui %22 : vector<1x96xi1> to vector<1x96xi32>
    %24 = arith.sitofp %23 : vector<1x96xi32> to vector<1x96xf32>
    %cst_16 = arith.constant 0.000000e+00 : f32
    %25 = vector.broadcast %cst_16 : f32 to vector<96x96xf32>
    %26 = arith.select %17, %8, %25 : vector<96x96xi1>, vector<96x96xf32>
    %27 = vector.shape_cast %26 : vector<96x96xf32> to vector<1x96x96xf32>
    %cst_17 = arith.constant dense<0.000000e+00> : vector<1xf32>
    %28 = vector.multi_reduction <add>, %27, %cst_17 [1, 2] : vector<1x96x96xf32> to vector<1xf32>
    %29 = vector.shape_cast %28 : vector<1xf32> to vector<1x1x1xf32>
    %30 = vector.extract %29[0, 0, 0] : f32 from vector<1x1x1xf32>
    %31 = vector.broadcast %30 : f32 to vector<1x1xf32>
    %cst_18 = arith.constant 3.072000e+03 : f32
    %32 = vector.broadcast %cst_18 : f32 to vector<1x1xf32>
    %33 = arith.divf %31, %32 : vector<1x1xf32>
    %34 = vector.broadcast %33 : vector<1x1xf32> to vector<96x96xf32>
    %35 = arith.subf %8, %34 : vector<96x96xf32>
    %36 = arith.mulf %35, %35 : vector<96x96xf32>
    %cst_19 = arith.constant 0.000000e+00 : f32
    %37 = vector.broadcast %cst_19 : f32 to vector<96x96xf32>
    %38 = arith.select %17, %36, %37 : vector<96x96xi1>, vector<96x96xf32>
    %39 = vector.shape_cast %38 : vector<96x96xf32> to vector<1x96x96xf32>
    %cst_20 = arith.constant dense<0.000000e+00> : vector<1xf32>
    %40 = vector.multi_reduction <add>, %39, %cst_20 [1, 2] : vector<1x96x96xf32> to vector<1xf32>
    %41 = vector.shape_cast %40 : vector<1xf32> to vector<1x1x1xf32>
    %42 = vector.extract %41[0, 0, 0] : f32 from vector<1x1x1xf32>
    %43 = vector.broadcast %42 : f32 to vector<1x1xf32>
    %cst_21 = arith.constant 3.072000e+03 : f32
    %44 = vector.broadcast %cst_21 : f32 to vector<1x1xf32>
    %45 = arith.divf %43, %44 : vector<1x1xf32>
    %46 = vector.broadcast %33 : vector<1x1xf32> to vector<1x96xf32>
    %47 = arith.mulf %24, %46 : vector<1x96xf32>
    %48 = arith.addf %11, %47 : vector<1x96xf32>
    %cst_22 = arith.constant 9.99999974E-6 : f32
    %49 = vector.broadcast %cst_22 : f32 to vector<1x1xf32>
    %50 = arith.addf %45, %49 : vector<1x1xf32>
    %51 = math.rsqrt %50 : vector<1x1xf32>
    %52 = vector.broadcast %51 : vector<1x1xf32> to vector<1x96xf32>
    %53 = arith.mulf %24, %52 : vector<1x96xf32>
    %54 = arith.addf %12, %53 : vector<1x96xf32>
    %c32_i32_23 = arith.constant 32 : i32
    %55 = vector.broadcast %c32_i32_23 : i32 to vector<96x96xi32>
    %56 = arith.cmpi sge, %9, %55 : vector<96x96xi32>
    %c64_i32 = arith.constant 64 : i32
    %57 = vector.broadcast %c64_i32 : i32 to vector<96x96xi32>
    %58 = arith.cmpi slt, %9, %57 : vector<96x96xi32>
    %59 = arith.andi %56, %58 : vector<96x96xi1>
    %c32_i32_24 = arith.constant 32 : i32
    %60 = vector.broadcast %c32_i32_24 : i32 to vector<1x96xi32>
    %61 = arith.cmpi sge, %10, %60 : vector<1x96xi32>
    %c64_i32_25 = arith.constant 64 : i32
    %62 = vector.broadcast %c64_i32_25 : i32 to vector<1x96xi32>
    %63 = arith.cmpi slt, %10, %62 : vector<1x96xi32>
    %64 = arith.andi %61, %63 : vector<1x96xi1>
    %65 = arith.extui %64 : vector<1x96xi1> to vector<1x96xi32>
    %66 = arith.sitofp %65 : vector<1x96xi32> to vector<1x96xf32>
    %cst_26 = arith.constant 0.000000e+00 : f32
    %67 = vector.broadcast %cst_26 : f32 to vector<96x96xf32>
    %68 = arith.select %59, %8, %67 : vector<96x96xi1>, vector<96x96xf32>
    %69 = vector.shape_cast %68 : vector<96x96xf32> to vector<1x96x96xf32>
    %cst_27 = arith.constant dense<0.000000e+00> : vector<1xf32>
    %70 = vector.multi_reduction <add>, %69, %cst_27 [1, 2] : vector<1x96x96xf32> to vector<1xf32>
    %71 = vector.shape_cast %70 : vector<1xf32> to vector<1x1x1xf32>
    %72 = vector.extract %71[0, 0, 0] : f32 from vector<1x1x1xf32>
    %73 = vector.broadcast %72 : f32 to vector<1x1xf32>
    %cst_28 = arith.constant 3.072000e+03 : f32
    %74 = vector.broadcast %cst_28 : f32 to vector<1x1xf32>
    %75 = arith.divf %73, %74 : vector<1x1xf32>
    %76 = vector.broadcast %75 : vector<1x1xf32> to vector<96x96xf32>
    %77 = arith.subf %8, %76 : vector<96x96xf32>
    %78 = arith.mulf %77, %77 : vector<96x96xf32>
    %cst_29 = arith.constant 0.000000e+00 : f32
    %79 = vector.broadcast %cst_29 : f32 to vector<96x96xf32>
    %80 = arith.select %59, %78, %79 : vector<96x96xi1>, vector<96x96xf32>
    %81 = vector.shape_cast %80 : vector<96x96xf32> to vector<1x96x96xf32>
    %cst_30 = arith.constant dense<0.000000e+00> : vector<1xf32>
    %82 = vector.multi_reduction <add>, %81, %cst_30 [1, 2] : vector<1x96x96xf32> to vector<1xf32>
    %83 = vector.shape_cast %82 : vector<1xf32> to vector<1x1x1xf32>
    %84 = vector.extract %83[0, 0, 0] : f32 from vector<1x1x1xf32>
    %85 = vector.broadcast %84 : f32 to vector<1x1xf32>
    %cst_31 = arith.constant 3.072000e+03 : f32
    %86 = vector.broadcast %cst_31 : f32 to vector<1x1xf32>
    %87 = arith.divf %85, %86 : vector<1x1xf32>
    %88 = vector.broadcast %75 : vector<1x1xf32> to vector<1x96xf32>
    %89 = arith.mulf %66, %88 : vector<1x96xf32>
    %90 = arith.addf %48, %89 : vector<1x96xf32>
    %cst_32 = arith.constant 9.99999974E-6 : f32
    %91 = vector.broadcast %cst_32 : f32 to vector<1x1xf32>
    %92 = arith.addf %87, %91 : vector<1x1xf32>
    %93 = math.rsqrt %92 : vector<1x1xf32>
    %94 = vector.broadcast %93 : vector<1x1xf32> to vector<1x96xf32>
    %95 = arith.mulf %66, %94 : vector<1x96xf32>
    %96 = arith.addf %54, %95 : vector<1x96xf32>
    %c64_i32_33 = arith.constant 64 : i32
    %97 = vector.broadcast %c64_i32_33 : i32 to vector<96x96xi32>
    %98 = arith.cmpi sge, %9, %97 : vector<96x96xi32>
    %c96_i32 = arith.constant 96 : i32
    %99 = vector.broadcast %c96_i32 : i32 to vector<96x96xi32>
    %100 = arith.cmpi slt, %9, %99 : vector<96x96xi32>
    %101 = arith.andi %98, %100 : vector<96x96xi1>
    %c64_i32_34 = arith.constant 64 : i32
    %102 = vector.broadcast %c64_i32_34 : i32 to vector<1x96xi32>
    %103 = arith.cmpi sge, %10, %102 : vector<1x96xi32>
    %c96_i32_35 = arith.constant 96 : i32
    %104 = vector.broadcast %c96_i32_35 : i32 to vector<1x96xi32>
    %105 = arith.cmpi slt, %10, %104 : vector<1x96xi32>
    %106 = arith.andi %103, %105 : vector<1x96xi1>
    %107 = arith.extui %106 : vector<1x96xi1> to vector<1x96xi32>
    %108 = arith.sitofp %107 : vector<1x96xi32> to vector<1x96xf32>
    %cst_36 = arith.constant 0.000000e+00 : f32
    %109 = vector.broadcast %cst_36 : f32 to vector<96x96xf32>
    %110 = arith.select %101, %8, %109 : vector<96x96xi1>, vector<96x96xf32>
    %111 = vector.shape_cast %110 : vector<96x96xf32> to vector<1x96x96xf32>
    %cst_37 = arith.constant dense<0.000000e+00> : vector<1xf32>
    %112 = vector.multi_reduction <add>, %111, %cst_37 [1, 2] : vector<1x96x96xf32> to vector<1xf32>
    %113 = vector.shape_cast %112 : vector<1xf32> to vector<1x1x1xf32>
    %114 = vector.extract %113[0, 0, 0] : f32 from vector<1x1x1xf32>
    %115 = vector.broadcast %114 : f32 to vector<1x1xf32>
    %cst_38 = arith.constant 3.072000e+03 : f32
    %116 = vector.broadcast %cst_38 : f32 to vector<1x1xf32>
    %117 = arith.divf %115, %116 : vector<1x1xf32>
    %118 = vector.broadcast %117 : vector<1x1xf32> to vector<96x96xf32>
    %119 = arith.subf %8, %118 : vector<96x96xf32>
    %120 = arith.mulf %119, %119 : vector<96x96xf32>
    %cst_39 = arith.constant 0.000000e+00 : f32
    %121 = vector.broadcast %cst_39 : f32 to vector<96x96xf32>
    %122 = arith.select %101, %120, %121 : vector<96x96xi1>, vector<96x96xf32>
    %123 = vector.shape_cast %122 : vector<96x96xf32> to vector<1x96x96xf32>
    %cst_40 = arith.constant dense<0.000000e+00> : vector<1xf32>
    %124 = vector.multi_reduction <add>, %123, %cst_40 [1, 2] : vector<1x96x96xf32> to vector<1xf32>
    %125 = vector.shape_cast %124 : vector<1xf32> to vector<1x1x1xf32>
    %126 = vector.extract %125[0, 0, 0] : f32 from vector<1x1x1xf32>
    %127 = vector.broadcast %126 : f32 to vector<1x1xf32>
    %cst_41 = arith.constant 3.072000e+03 : f32
    %128 = vector.broadcast %cst_41 : f32 to vector<1x1xf32>
    %129 = arith.divf %127, %128 : vector<1x1xf32>
    %130 = vector.broadcast %117 : vector<1x1xf32> to vector<1x96xf32>
    %131 = arith.mulf %108, %130 : vector<1x96xf32>
    %132 = arith.addf %90, %131 : vector<1x96xf32>
    %cst_42 = arith.constant 9.99999974E-6 : f32
    %133 = vector.broadcast %cst_42 : f32 to vector<1x1xf32>
    %134 = arith.addf %129, %133 : vector<1x1xf32>
    %135 = math.rsqrt %134 : vector<1x1xf32>
    %136 = vector.broadcast %135 : vector<1x1xf32> to vector<1x96xf32>
    %137 = arith.mulf %108, %136 : vector<1x96xf32>
    %138 = arith.addf %96, %137 : vector<1x96xf32>
    %139 = vector.broadcast %132 : vector<1x96xf32> to vector<96x96xf32>
    %140 = arith.subf %8, %139 : vector<96x96xf32>
    %141 = vector.broadcast %138 : vector<1x96xf32> to vector<96x96xf32>
    %142 = arith.mulf %140, %141 : vector<96x96xf32>
    %cst_43 = arith.constant dense<0xFF800000> : vector<96xf32>
    %143 = vector.multi_reduction <maximumf>, %142, %cst_43 [0] : vector<96x96xf32> to vector<96xf32>
    %144 = vector.shape_cast %143 : vector<96xf32> to vector<1x96xf32>
    %145 = vector.broadcast %144 : vector<1x96xf32> to vector<96x96xf32>
    %146 = arith.subf %142, %145 : vector<96x96xf32>
    %147 = math.exp %146 : vector<96x96xf32>
    %cst_44 = arith.constant dense<0.000000e+00> : vector<96xf32>
    %148 = vector.multi_reduction <add>, %147, %cst_44 [0] : vector<96x96xf32> to vector<96xf32>
    %149 = vector.shape_cast %148 : vector<96xf32> to vector<1x96xf32>
    %150 = tpu.reciprocal %149 {approx = true} : vector<1x96xf32> -> vector<1x96xf32>
    %151 = vector.broadcast %150 : vector<1x96xf32> to vector<96x96xf32>
    %152 = arith.mulf %147, %151 : vector<96x96xf32>
    %cst_45 = arith.constant dense<0.000000e+00> : vector<16x96xf32>
    %153 = tpu.matmul %5, %152, %cst_45 {dimension_numbers = #tpu.dot_dimension_numbers<[1], [0], [0], [1], [0, 0, 1, 1], [], []>} : vector<16x96xf32>, vector<96x96xf32>, vector<16x96xf32> -> vector<16x96xf32>
    %cst_46 = arith.constant 2.500000e-01 : f32
    %154 = vector.broadcast %cst_46 : f32 to vector<16x96xf32>
    %155 = arith.mulf %153, %154 : vector<16x96xf32>
    %c0_i32_47 = arith.constant 0 : i32
    %156 = arith.cmpi eq, %arg1, %c0_i32_47 : i32
    %157 = arith.extui %156 : i1 to i32
    %c0_i32_48 = arith.constant 0 : i32
    %158 = arith.cmpi ne, %157, %c0_i32_48 : i32
    scf.if %158 {
      %c0_51 = arith.constant 0 : index
      %c0_52 = arith.constant 0 : index
      %c0_53 = arith.constant 0 : index
      %162 = vector.load %arg5[%c0_51, %c0_52, %c0_53] : memref<1x16x96xf32, #tpu.memory_space<vmem>>, vector<1x16x96xf32>
      %163 = vector.shape_cast %162 : vector<1x16x96xf32> to vector<16x96xf32>
      %164 = vector.shape_cast %155 : vector<16x96xf32> to vector<1x16x96xf32>
      tpu.vector_store %arg5[%c0_51, %c0_52, %c0_53], %164 {strides = array<i32>} : memref<1x16x96xf32, #tpu.memory_space<vmem>>, vector<1x16x96xf32>,
    } else {
    }
    %c0_i32_49 = arith.constant 0 : i32
    %159 = arith.cmpi sgt, %arg1, %c0_i32_49 : i32
    %160 = arith.extui %159 : i1 to i32
    %c0_i32_50 = arith.constant 0 : i32
    %161 = arith.cmpi ne, %160, %c0_i32_50 : i32
    scf.if %161 {
      %c0_51 = arith.constant 0 : index
      %c0_52 = arith.constant 0 : index
      %c0_53 = arith.constant 0 : index
      %162 = vector.load %arg5[%c0_51, %c0_52, %c0_53] : memref<1x16x96xf32, #tpu.memory_space<vmem>>, vector<1x16x96xf32>
      %163 = vector.shape_cast %162 : vector<1x16x96xf32> to vector<16x96xf32>
      %164 = arith.addf %163, %155 : vector<16x96xf32>
      %c0_54 = arith.constant 0 : index
      %c0_55 = arith.constant 0 : index
      %c0_56 = arith.constant 0 : index
      %165 = vector.load %arg5[%c0_54, %c0_55, %c0_56] : memref<1x16x96xf32, #tpu.memory_space<vmem>>, vector<1x16x96xf32>
      %166 = vector.shape_cast %165 : vector<1x16x96xf32> to vector<16x96xf32>
      %167 = vector.shape_cast %164 : vector<16x96xf32> to vector<1x16x96xf32>
      tpu.vector_store %arg5[%c0_54, %c0_55, %c0_56], %167 {strides = array<i32>} : memref<1x16x96xf32, #tpu.memory_space<vmem>>, vector<1x16x96xf32>,
    } else {
    }
    return
  }
  func.func @transform_0(%arg0: i32, %arg1: i32) -> (i32, i32, i32, i32) {
    %c0_i32 = arith.constant 0 : i32
    %c0_i32_0 = arith.constant 0 : i32
    %c0_i32_1 = arith.constant 0 : i32
    return %arg0, %arg1, %c0_i32, %c0_i32_0 : i32, i32, i32, i32
  }
  func.func @transform_1(%arg0: i32, %arg1: i32) -> (i32, i32, i32, i32) {
    %c0_i32 = arith.constant 0 : i32
    %c0_i32_0 = arith.constant 0 : i32
    %c0_i32_1 = arith.constant 0 : i32
    return %arg0, %arg1, %c0_i32, %c0_i32_0 : i32, i32, i32, i32
  }
  func.func @transform_2(%arg0: i32, %arg1: i32) -> (i32, i32, i32, i32) {
    %c0_i32 = arith.constant 0 : i32
    %c0_i32_0 = arith.constant 0 : i32
    %c0_i32_1 = arith.constant 0 : i32
    return %arg0, %arg1, %c0_i32, %c0_i32_0 : i32, i32, i32, i32
  }
  func.func @transform_3(%arg0: i32, %arg1: i32) -> (i32, i32, i32) {
    %c0_i32 = arith.constant 0 : i32
    %c0_i32_0 = arith.constant 0 : i32
    %c0_i32_1 = arith.constant 0 : i32
    return %arg0, %c0_i32, %c0_i32_0 : i32, i32, i32
  }
}

module attributes {stable_mosaic.version = 11 : i64} {
  func.func @_attnout_ffn_kernel(%arg0: i32, %arg1: memref<32x32xf32, #tpu.memory_space<vmem>>, %arg2: memref<32x32xf32, #tpu.memory_space<vmem>>, %arg3: memref<32x32xf32, #tpu.memory_space<vmem>>, %arg4: memref<1x32xf32, #tpu.memory_space<vmem>>, %arg5: memref<1x32xf32, #tpu.memory_space<vmem>>, %arg6: memref<32x128xf32, #tpu.memory_space<vmem>>, %arg7: memref<1x128xf32, #tpu.memory_space<vmem>>, %arg8: memref<128x32xf32, #tpu.memory_space<vmem>>, %arg9: memref<1x32xf32, #tpu.memory_space<vmem>>, %arg10: memref<32x32xf32, #tpu.memory_space<vmem>>) attributes {dimension_semantics = [#tpu.dimension_semantics<parallel>], iteration_bounds = array<i64: 1>, scalar_prefetch = 0 : i64, scratch_operands = 0 : i64, tpu.core_type = #tpu.core_type<tc>, window_params = [{transform_indices = @transform_0, window_bounds = array<i64: 32, 32>}, {transform_indices = @transform_1, window_bounds = array<i64: 32, 32>}, {pipeline_mode = #tpu.pipeline_mode<synchronous>, transform_indices = @transform_2, window_bounds = array<i64: 32, 32>}, {pipeline_mode = #tpu.pipeline_mode<synchronous>, transform_indices = @transform_3, window_bounds = array<i64: 1, 32>}, {pipeline_mode = #tpu.pipeline_mode<synchronous>, transform_indices = @transform_4, window_bounds = array<i64: 1, 32>}, {pipeline_mode = #tpu.pipeline_mode<synchronous>, transform_indices = @transform_5, window_bounds = array<i64: 32, 128>}, {pipeline_mode = #tpu.pipeline_mode<synchronous>, transform_indices = @transform_6, window_bounds = array<i64: 1, 128>}, {pipeline_mode = #tpu.pipeline_mode<synchronous>, transform_indices = @transform_7, window_bounds = array<i64: 128, 32>}, {pipeline_mode = #tpu.pipeline_mode<synchronous>, transform_indices = @transform_8, window_bounds = array<i64: 1, 32>}, {transform_indices = @transform_9, window_bounds = array<i64: 32, 32>}]} {
    %c0 = arith.constant 0 : index
    %c0_0 = arith.constant 0 : index
    %0 = vector.load %arg1[%c0, %c0_0] : memref<32x32xf32, #tpu.memory_space<vmem>>, vector<32x32xf32>
    %c0_1 = arith.constant 0 : index
    %c0_2 = arith.constant 0 : index
    %1 = vector.load %arg3[%c0_1, %c0_2] : memref<32x32xf32, #tpu.memory_space<vmem>>, vector<32x32xf32>
    %cst = arith.constant dense<0.000000e+00> : vector<32x32xf32>
    %2 = tpu.matmul %0, %1, %cst {dimension_numbers = #tpu.dot_dimension_numbers<[1], [0], [0], [1], [0, 0, 1, 1], [], []>} : vector<32x32xf32>, vector<32x32xf32>, vector<32x32xf32> -> vector<32x32xf32>
    %c0_3 = arith.constant 0 : index
    %c0_4 = arith.constant 0 : index
    %3 = vector.load %arg2[%c0_3, %c0_4] : memref<32x32xf32, #tpu.memory_space<vmem>>, vector<32x32xf32>
    %4 = arith.addf %3, %2 : vector<32x32xf32>
    %cst_5 = arith.constant dense<0.000000e+00> : vector<32xf32>
    %5 = vector.multi_reduction <add>, %4, %cst_5 [1] : vector<32x32xf32> to vector<32xf32>
    %6 = vector.shape_cast %5 : vector<32xf32> to vector<32x1xf32>
    %cst_6 = arith.constant 3.200000e+01 : f32
    %7 = vector.broadcast %cst_6 : f32 to vector<32x1xf32>
    %8 = arith.divf %6, %7 : vector<32x1xf32>
    %9 = vector.broadcast %8 : vector<32x1xf32> to vector<32x32xf32>
    %10 = arith.subf %4, %9 : vector<32x32xf32>
    %11 = arith.mulf %10, %10 : vector<32x32xf32>
    %cst_7 = arith.constant dense<0.000000e+00> : vector<32xf32>
    %12 = vector.multi_reduction <add>, %11, %cst_7 [1] : vector<32x32xf32> to vector<32xf32>
    %13 = vector.shape_cast %12 : vector<32xf32> to vector<32x1xf32>
    %cst_8 = arith.constant 3.200000e+01 : f32
    %14 = vector.broadcast %cst_8 : f32 to vector<32x1xf32>
    %15 = arith.divf %13, %14 : vector<32x1xf32>
    %16 = vector.broadcast %8 : vector<32x1xf32> to vector<32x32xf32>
    %17 = arith.subf %4, %16 : vector<32x32xf32>
    %cst_9 = arith.constant 9.99999997E-7 : f32
    %18 = vector.broadcast %cst_9 : f32 to vector<32x1xf32>
    %19 = arith.addf %15, %18 : vector<32x1xf32>
    %20 = math.rsqrt %19 : vector<32x1xf32>
    %21 = vector.broadcast %20 : vector<32x1xf32> to vector<32x32xf32>
    %22 = arith.mulf %17, %21 : vector<32x32xf32>
    %c0_10 = arith.constant 0 : index
    %c0_11 = arith.constant 0 : index
    %23 = vector.load %arg4[%c0_10, %c0_11] : memref<1x32xf32, #tpu.memory_space<vmem>>, vector<1x32xf32>
    %24 = vector.broadcast %23 : vector<1x32xf32> to vector<32x32xf32>
    %25 = arith.mulf %22, %24 : vector<32x32xf32>
    %c0_12 = arith.constant 0 : index
    %c0_13 = arith.constant 0 : index
    %26 = vector.load %arg5[%c0_12, %c0_13] : memref<1x32xf32, #tpu.memory_space<vmem>>, vector<1x32xf32>
    %27 = vector.broadcast %26 : vector<1x32xf32> to vector<32x32xf32>
    %28 = arith.addf %25, %27 : vector<32x32xf32>
    %c0_14 = arith.constant 0 : index
    %c0_15 = arith.constant 0 : index
    %29 = vector.load %arg6[%c0_14, %c0_15] : memref<32x128xf32, #tpu.memory_space<vmem>>, vector<32x128xf32>
    %cst_16 = arith.constant dense<0.000000e+00> : vector<32x128xf32>
    %30 = tpu.matmul %28, %29, %cst_16 {dimension_numbers = #tpu.dot_dimension_numbers<[1], [0], [0], [1], [0, 0, 1, 1], [], []>} : vector<32x32xf32>, vector<32x128xf32>, vector<32x128xf32> -> vector<32x128xf32>
    %c0_17 = arith.constant 0 : index
    %c0_18 = arith.constant 0 : index
    %31 = vector.load %arg7[%c0_17, %c0_18] : memref<1x128xf32, #tpu.memory_space<vmem>>, vector<1x128xf32>
    %32 = vector.broadcast %31 : vector<1x128xf32> to vector<32x128xf32>
    %33 = arith.addf %30, %32 : vector<32x128xf32>
    %cst_19 = arith.constant 5.000000e-01 : f32
    %34 = vector.broadcast %cst_19 : f32 to vector<32x128xf32>
    %35 = arith.mulf %34, %33 : vector<32x128xf32>
    %cst_20 = arith.constant 0.707106769 : f32
    %36 = vector.broadcast %cst_20 : f32 to vector<32x128xf32>
    %37 = arith.mulf %33, %36 : vector<32x128xf32>
    %38 = math.absf %37 : vector<32x128xf32>
    %cst_21 = arith.constant 0.327591091 : f32
    %39 = vector.broadcast %cst_21 : f32 to vector<32x128xf32>
    %40 = arith.mulf %39, %38 : vector<32x128xf32>
    %cst_22 = arith.constant 1.000000e+00 : f32
    %41 = vector.broadcast %cst_22 : f32 to vector<32x128xf32>
    %42 = arith.addf %41, %40 : vector<32x128xf32>
    %cst_23 = arith.constant 1.000000e+00 : f32
    %43 = vector.broadcast %cst_23 : f32 to vector<32x128xf32>
    %44 = arith.divf %43, %42 : vector<32x128xf32>
    %cst_24 = arith.constant 1.06140542 : f32
    %45 = vector.broadcast %cst_24 : f32 to vector<32x128xf32>
    %46 = arith.mulf %45, %44 : vector<32x128xf32>
    %cst_25 = arith.constant -1.45315206 : f32
    %47 = vector.broadcast %cst_25 : f32 to vector<32x128xf32>
    %48 = arith.addf %46, %47 : vector<32x128xf32>
    %49 = arith.mulf %48, %44 : vector<32x128xf32>
    %cst_26 = arith.constant 1.42141378 : f32
    %50 = vector.broadcast %cst_26 : f32 to vector<32x128xf32>
    %51 = arith.addf %49, %50 : vector<32x128xf32>
    %52 = arith.mulf %51, %44 : vector<32x128xf32>
    %cst_27 = arith.constant -0.284496725 : f32
    %53 = vector.broadcast %cst_27 : f32 to vector<32x128xf32>
    %54 = arith.addf %52, %53 : vector<32x128xf32>
    %55 = arith.mulf %54, %44 : vector<32x128xf32>
    %cst_28 = arith.constant 0.254829586 : f32
    %56 = vector.broadcast %cst_28 : f32 to vector<32x128xf32>
    %57 = arith.addf %55, %56 : vector<32x128xf32>
    %58 = arith.mulf %57, %44 : vector<32x128xf32>
    %cst_29 = arith.constant 0.000000e+00 : f32
    %59 = vector.broadcast %cst_29 : f32 to vector<32x128xf32>
    %60 = arith.subf %59, %38 : vector<32x128xf32>
    %61 = arith.mulf %60, %38 : vector<32x128xf32>
    %62 = math.exp %61 : vector<32x128xf32>
    %63 = arith.mulf %58, %62 : vector<32x128xf32>
    %cst_30 = arith.constant 1.000000e+00 : f32
    %64 = vector.broadcast %cst_30 : f32 to vector<32x128xf32>
    %65 = arith.subf %64, %63 : vector<32x128xf32>
    %cst_31 = arith.constant 0.000000e+00 : f32
    %66 = vector.broadcast %cst_31 : f32 to vector<32x128xf32>
    %67 = arith.cmpf oge, %37, %66 : vector<32x128xf32>
    %cst_32 = arith.constant 0.000000e+00 : f32
    %68 = vector.broadcast %cst_32 : f32 to vector<32x128xf32>
    %69 = arith.subf %68, %65 : vector<32x128xf32>
    %70 = arith.select %67, %65, %69 : vector<32x128xi1>, vector<32x128xf32>
    %cst_33 = arith.constant 1.000000e+00 : f32
    %71 = vector.broadcast %cst_33 : f32 to vector<32x128xf32>
    %72 = arith.addf %71, %70 : vector<32x128xf32>
    %73 = arith.mulf %35, %72 : vector<32x128xf32>
    %c0_34 = arith.constant 0 : index
    %c0_35 = arith.constant 0 : index
    %74 = vector.load %arg8[%c0_34, %c0_35] : memref<128x32xf32, #tpu.memory_space<vmem>>, vector<128x32xf32>
    %cst_36 = arith.constant dense<0.000000e+00> : vector<32x32xf32>
    %75 = tpu.matmul %73, %74, %cst_36 {dimension_numbers = #tpu.dot_dimension_numbers<[1], [0], [0], [1], [0, 0, 1, 1], [], []>} : vector<32x128xf32>, vector<128x32xf32>, vector<32x32xf32> -> vector<32x32xf32>
    %c0_37 = arith.constant 0 : index
    %c0_38 = arith.constant 0 : index
    %76 = vector.load %arg9[%c0_37, %c0_38] : memref<1x32xf32, #tpu.memory_space<vmem>>, vector<1x32xf32>
    %77 = vector.broadcast %76 : vector<1x32xf32> to vector<32x32xf32>
    %78 = arith.addf %75, %77 : vector<32x32xf32>
    %79 = arith.addf %78, %4 : vector<32x32xf32>
    %c0_39 = arith.constant 0 : index
    %c0_40 = arith.constant 0 : index
    %80 = vector.load %arg10[%c0_39, %c0_40] : memref<32x32xf32, #tpu.memory_space<vmem>>, vector<32x32xf32>
    tpu.vector_store %arg10[%c0_39, %c0_40], %79 {strides = array<i32>} : memref<32x32xf32, #tpu.memory_space<vmem>>, vector<32x32xf32>,
    return
  }
  func.func @transform_0(%arg0: i32) -> (i32, i32) {
    %c0_i32 = arith.constant 0 : i32
    %c0_i32_0 = arith.constant 0 : i32
    return %arg0, %c0_i32 : i32, i32
  }
  func.func @transform_1(%arg0: i32) -> (i32, i32) {
    %c0_i32 = arith.constant 0 : i32
    %c0_i32_0 = arith.constant 0 : i32
    return %arg0, %c0_i32 : i32, i32
  }
  func.func @transform_2(%arg0: i32) -> (i32, i32) {
    %c0_i32 = arith.constant 0 : i32
    %c0_i32_0 = arith.constant 0 : i32
    %c0_i32_1 = arith.constant 0 : i32
    return %c0_i32, %c0_i32_0 : i32, i32
  }
  func.func @transform_3(%arg0: i32) -> (i32, i32) {
    %c0_i32 = arith.constant 0 : i32
    %c0_i32_0 = arith.constant 0 : i32
    %c0_i32_1 = arith.constant 0 : i32
    return %c0_i32, %c0_i32_0 : i32, i32
  }
  func.func @transform_4(%arg0: i32) -> (i32, i32) {
    %c0_i32 = arith.constant 0 : i32
    %c0_i32_0 = arith.constant 0 : i32
    %c0_i32_1 = arith.constant 0 : i32
    return %c0_i32, %c0_i32_0 : i32, i32
  }
  func.func @transform_5(%arg0: i32) -> (i32, i32) {
    %c0_i32 = arith.constant 0 : i32
    %c0_i32_0 = arith.constant 0 : i32
    %c0_i32_1 = arith.constant 0 : i32
    return %c0_i32, %c0_i32_0 : i32, i32
  }
  func.func @transform_6(%arg0: i32) -> (i32, i32) {
    %c0_i32 = arith.constant 0 : i32
    %c0_i32_0 = arith.constant 0 : i32
    %c0_i32_1 = arith.constant 0 : i32
    return %c0_i32, %c0_i32_0 : i32, i32
  }
  func.func @transform_7(%arg0: i32) -> (i32, i32) {
    %c0_i32 = arith.constant 0 : i32
    %c0_i32_0 = arith.constant 0 : i32
    %c0_i32_1 = arith.constant 0 : i32
    return %c0_i32, %c0_i32_0 : i32, i32
  }
  func.func @transform_8(%arg0: i32) -> (i32, i32) {
    %c0_i32 = arith.constant 0 : i32
    %c0_i32_0 = arith.constant 0 : i32
    %c0_i32_1 = arith.constant 0 : i32
    return %c0_i32, %c0_i32_0 : i32, i32
  }
  func.func @transform_9(%arg0: i32) -> (i32, i32) {
    %c0_i32 = arith.constant 0 : i32
    %c0_i32_0 = arith.constant 0 : i32
    return %arg0, %c0_i32 : i32, i32
  }
}

module attributes {stable_mosaic.version = 11 : i64} {
  func.func @_attnout_ffn_kernel(%arg0: i32, %arg1: memref<32x32xf32, #tpu.memory_space<vmem>>, %arg2: memref<32x32xf32, #tpu.memory_space<vmem>>, %arg3: memref<32x32xf32, #tpu.memory_space<vmem>>, %arg4: memref<1x32xf32, #tpu.memory_space<vmem>>, %arg5: memref<1x32xf32, #tpu.memory_space<vmem>>, %arg6: memref<32x128xf32, #tpu.memory_space<vmem>>, %arg7: memref<1x128xf32, #tpu.memory_space<vmem>>, %arg8: memref<128x32xf32, #tpu.memory_space<vmem>>, %arg9: memref<1x32xf32, #tpu.memory_space<vmem>>, %arg10: memref<32x32xf32, #tpu.memory_space<vmem>>) attributes {dimension_semantics = [#tpu.dimension_semantics<parallel>], iteration_bounds = array<i64: 1>, scalar_prefetch = 0 : i64, scratch_operands = 0 : i64, tpu.core_type = #tpu.core_type<tc>, window_params = [{transform_indices = @transform_0, window_bounds = array<i64: 32, 32>}, {transform_indices = @transform_1, window_bounds = array<i64: 32, 32>}, {pipeline_mode = #tpu.pipeline_mode<synchronous>, transform_indices = @transform_2, window_bounds = array<i64: 32, 32>}, {pipeline_mode = #tpu.pipeline_mode<synchronous>, transform_indices = @transform_3, window_bounds = array<i64: 1, 32>}, {pipeline_mode = #tpu.pipeline_mode<synchronous>, transform_indices = @transform_4, window_bounds = array<i64: 1, 32>}, {pipeline_mode = #tpu.pipeline_mode<synchronous>, transform_indices = @transform_5, window_bounds = array<i64: 32, 128>}, {pipeline_mode = #tpu.pipeline_mode<synchronous>, transform_indices = @transform_6, window_bounds = array<i64: 1, 128>}, {pipeline_mode = #tpu.pipeline_mode<synchronous>, transform_indices = @transform_7, window_bounds = array<i64: 128, 32>}, {pipeline_mode = #tpu.pipeline_mode<synchronous>, transform_indices = @transform_8, window_bounds = array<i64: 1, 32>}, {transform_indices = @transform_9, window_bounds = array<i64: 32, 32>}]} {
    %c0 = arith.constant 0 : index
    %c0_0 = arith.constant 0 : index
    %0 = vector.load %arg1[%c0, %c0_0] : memref<32x32xf32, #tpu.memory_space<vmem>>, vector<32x32xf32>
    %c0_1 = arith.constant 0 : index
    %c0_2 = arith.constant 0 : index
    %1 = vector.load %arg3[%c0_1, %c0_2] : memref<32x32xf32, #tpu.memory_space<vmem>>, vector<32x32xf32>
    %cst = arith.constant dense<0.000000e+00> : vector<32x32xf32>
    %2 = tpu.matmul %0, %1, %cst {dimension_numbers = #tpu.dot_dimension_numbers<[1], [0], [0], [1], [0, 0, 1, 1], [], []>} : vector<32x32xf32>, vector<32x32xf32>, vector<32x32xf32> -> vector<32x32xf32>
    %c0_3 = arith.constant 0 : index
    %c0_4 = arith.constant 0 : index
    %3 = vector.load %arg2[%c0_3, %c0_4] : memref<32x32xf32, #tpu.memory_space<vmem>>, vector<32x32xf32>
    %4 = arith.addf %3, %2 : vector<32x32xf32>
    %cst_5 = arith.constant dense<0.000000e+00> : vector<32xf32>
    %5 = vector.multi_reduction <add>, %4, %cst_5 [1] : vector<32x32xf32> to vector<32xf32>
    %6 = vector.shape_cast %5 : vector<32xf32> to vector<32x1xf32>
    %cst_6 = arith.constant 3.200000e+01 : f32
    %7 = vector.broadcast %cst_6 : f32 to vector<32x1xf32>
    %8 = arith.divf %6, %7 : vector<32x1xf32>
    %9 = vector.broadcast %8 : vector<32x1xf32> to vector<32x32xf32>
    %10 = arith.subf %4, %9 : vector<32x32xf32>
    %11 = arith.mulf %10, %10 : vector<32x32xf32>
    %cst_7 = arith.constant dense<0.000000e+00> : vector<32xf32>
    %12 = vector.multi_reduction <add>, %11, %cst_7 [1] : vector<32x32xf32> to vector<32xf32>
    %13 = vector.shape_cast %12 : vector<32xf32> to vector<32x1xf32>
    %cst_8 = arith.constant 3.200000e+01 : f32
    %14 = vector.broadcast %cst_8 : f32 to vector<32x1xf32>
    %15 = arith.divf %13, %14 : vector<32x1xf32>
    %16 = vector.broadcast %8 : vector<32x1xf32> to vector<32x32xf32>
    %17 = arith.subf %4, %16 : vector<32x32xf32>
    %cst_9 = arith.constant 9.99999997E-7 : f32
    %18 = vector.broadcast %cst_9 : f32 to vector<32x1xf32>
    %19 = arith.addf %15, %18 : vector<32x1xf32>
    %20 = math.rsqrt %19 : vector<32x1xf32>
    %21 = vector.broadcast %20 : vector<32x1xf32> to vector<32x32xf32>
    %22 = arith.mulf %17, %21 : vector<32x32xf32>
    %c0_10 = arith.constant 0 : index
    %c0_11 = arith.constant 0 : index
    %23 = vector.load %arg4[%c0_10, %c0_11] : memref<1x32xf32, #tpu.memory_space<vmem>>, vector<1x32xf32>
    %24 = vector.broadcast %23 : vector<1x32xf32> to vector<32x32xf32>
    %25 = arith.mulf %22, %24 : vector<32x32xf32>
    %c0_12 = arith.constant 0 : index
    %c0_13 = arith.constant 0 : index
    %26 = vector.load %arg5[%c0_12, %c0_13] : memref<1x32xf32, #tpu.memory_space<vmem>>, vector<1x32xf32>
    %27 = vector.broadcast %26 : vector<1x32xf32> to vector<32x32xf32>
    %28 = arith.addf %25, %27 : vector<32x32xf32>
    %c0_14 = arith.constant 0 : index
    %c0_15 = arith.constant 0 : index
    %29 = vector.load %arg6[%c0_14, %c0_15] : memref<32x128xf32, #tpu.memory_space<vmem>>, vector<32x128xf32>
    %cst_16 = arith.constant dense<0.000000e+00> : vector<32x128xf32>
    %30 = tpu.matmul %28, %29, %cst_16 {dimension_numbers = #tpu.dot_dimension_numbers<[1], [0], [0], [1], [0, 0, 1, 1], [], []>} : vector<32x32xf32>, vector<32x128xf32>, vector<32x128xf32> -> vector<32x128xf32>
    %c0_17 = arith.constant 0 : index
    %c0_18 = arith.constant 0 : index
    %31 = vector.load %arg7[%c0_17, %c0_18] : memref<1x128xf32, #tpu.memory_space<vmem>>, vector<1x128xf32>
    %32 = vector.broadcast %31 : vector<1x128xf32> to vector<32x128xf32>
    %33 = arith.addf %30, %32 : vector<32x128xf32>
    %cst_19 = arith.constant 5.000000e-01 : f32
    %34 = vector.broadcast %cst_19 : f32 to vector<32x128xf32>
    %35 = arith.mulf %34, %33 : vector<32x128xf32>
    %cst_20 = arith.constant 0.707106769 : f32
    %36 = vector.broadcast %cst_20 : f32 to vector<32x128xf32>
    %37 = arith.mulf %33, %36 : vector<32x128xf32>
    %38 = math.absf %37 : vector<32x128xf32>
    %cst_21 = arith.constant 0.327591091 : f32
    %39 = vector.broadcast %cst_21 : f32 to vector<32x128xf32>
    %40 = arith.mulf %39, %38 : vector<32x128xf32>
    %cst_22 = arith.constant 1.000000e+00 : f32
    %41 = vector.broadcast %cst_22 : f32 to vector<32x128xf32>
    %42 = arith.addf %41, %40 : vector<32x128xf32>
    %cst_23 = arith.constant 1.000000e+00 : f32
    %43 = vector.broadcast %cst_23 : f32 to vector<32x128xf32>
    %44 = arith.divf %43, %42 : vector<32x128xf32>
    %cst_24 = arith.constant 1.06140542 : f32
    %45 = vector.broadcast %cst_24 : f32 to vector<32x128xf32>
    %46 = arith.mulf %45, %44 : vector<32x128xf32>
    %cst_25 = arith.constant -1.45315206 : f32
    %47 = vector.broadcast %cst_25 : f32 to vector<32x128xf32>
    %48 = arith.addf %46, %47 : vector<32x128xf32>
    %49 = arith.mulf %48, %44 : vector<32x128xf32>
    %cst_26 = arith.constant 1.42141378 : f32
    %50 = vector.broadcast %cst_26 : f32 to vector<32x128xf32>
    %51 = arith.addf %49, %50 : vector<32x128xf32>
    %52 = arith.mulf %51, %44 : vector<32x128xf32>
    %cst_27 = arith.constant -0.284496725 : f32
    %53 = vector.broadcast %cst_27 : f32 to vector<32x128xf32>
    %54 = arith.addf %52, %53 : vector<32x128xf32>
    %55 = arith.mulf %54, %44 : vector<32x128xf32>
    %cst_28 = arith.constant 0.254829586 : f32
    %56 = vector.broadcast %cst_28 : f32 to vector<32x128xf32>
    %57 = arith.addf %55, %56 : vector<32x128xf32>
    %58 = arith.mulf %57, %44 : vector<32x128xf32>
    %cst_29 = arith.constant 0.000000e+00 : f32
    %59 = vector.broadcast %cst_29 : f32 to vector<32x128xf32>
    %60 = arith.subf %59, %38 : vector<32x128xf32>
    %61 = arith.mulf %60, %38 : vector<32x128xf32>
    %62 = math.exp %61 : vector<32x128xf32>
    %63 = arith.mulf %58, %62 : vector<32x128xf32>
    %cst_30 = arith.constant 1.000000e+00 : f32
    %64 = vector.broadcast %cst_30 : f32 to vector<32x128xf32>
    %65 = arith.subf %64, %63 : vector<32x128xf32>
    %cst_31 = arith.constant 0.000000e+00 : f32
    %66 = vector.broadcast %cst_31 : f32 to vector<32x128xf32>
    %67 = arith.cmpf oge, %37, %66 : vector<32x128xf32>
    %cst_32 = arith.constant 0.000000e+00 : f32
    %68 = vector.broadcast %cst_32 : f32 to vector<32x128xf32>
    %69 = arith.subf %68, %65 : vector<32x128xf32>
    %70 = arith.select %67, %65, %69 : vector<32x128xi1>, vector<32x128xf32>
    %cst_33 = arith.constant 1.000000e+00 : f32
    %71 = vector.broadcast %cst_33 : f32 to vector<32x128xf32>
    %72 = arith.addf %71, %70 : vector<32x128xf32>
    %73 = arith.mulf %35, %72 : vector<32x128xf32>
    %c0_34 = arith.constant 0 : index
    %c0_35 = arith.constant 0 : index
    %74 = vector.load %arg8[%c0_34, %c0_35] : memref<128x32xf32, #tpu.memory_space<vmem>>, vector<128x32xf32>
    %cst_36 = arith.constant dense<0.000000e+00> : vector<32x32xf32>
    %75 = tpu.matmul %73, %74, %cst_36 {dimension_numbers = #tpu.dot_dimension_numbers<[1], [0], [0], [1], [0, 0, 1, 1], [], []>} : vector<32x128xf32>, vector<128x32xf32>, vector<32x32xf32> -> vector<32x32xf32>
    %c0_37 = arith.constant 0 : index
    %c0_38 = arith.constant 0 : index
    %76 = vector.load %arg9[%c0_37, %c0_38] : memref<1x32xf32, #tpu.memory_space<vmem>>, vector<1x32xf32>
    %77 = vector.broadcast %76 : vector<1x32xf32> to vector<32x32xf32>
    %78 = arith.addf %75, %77 : vector<32x32xf32>
    %79 = arith.addf %78, %4 : vector<32x32xf32>
    %c0_39 = arith.constant 0 : index
    %c0_40 = arith.constant 0 : index
    %80 = vector.load %arg10[%c0_39, %c0_40] : memref<32x32xf32, #tpu.memory_space<vmem>>, vector<32x32xf32>
    tpu.vector_store %arg10[%c0_39, %c0_40], %79 {strides = array<i32>} : memref<32x32xf32, #tpu.memory_space<vmem>>, vector<32x32xf32>,
    return
  }
  func.func @transform_0(%arg0: i32) -> (i32, i32) {
    %c0_i32 = arith.constant 0 : i32
    %c0_i32_0 = arith.constant 0 : i32
    return %arg0, %c0_i32 : i32, i32
  }
  func.func @transform_1(%arg0: i32) -> (i32, i32) {
    %c0_i32 = arith.constant 0 : i32
    %c0_i32_0 = arith.constant 0 : i32
    return %arg0, %c0_i32 : i32, i32
  }
  func.func @transform_2(%arg0: i32) -> (i32, i32) {
    %c0_i32 = arith.constant 0 : i32
    %c0_i32_0 = arith.constant 0 : i32
    %c0_i32_1 = arith.constant 0 : i32
    return %c0_i32, %c0_i32_0 : i32, i32
  }
  func.func @transform_3(%arg0: i32) -> (i32, i32) {
    %c0_i32 = arith.constant 0 : i32
    %c0_i32_0 = arith.constant 0 : i32
    %c0_i32_1 = arith.constant 0 : i32
    return %c0_i32, %c0_i32_0 : i32, i32
  }
  func.func @transform_4(%arg0: i32) -> (i32, i32) {
    %c0_i32 = arith.constant 0 : i32
    %c0_i32_0 = arith.constant 0 : i32
    %c0_i32_1 = arith.constant 0 : i32
    return %c0_i32, %c0_i32_0 : i32, i32
  }
  func.func @transform_5(%arg0: i32) -> (i32, i32) {
    %c0_i32 = arith.constant 0 : i32
    %c0_i32_0 = arith.constant 0 : i32
    %c0_i32_1 = arith.constant 0 : i32
    return %c0_i32, %c0_i32_0 : i32, i32
  }
  func.func @transform_6(%arg0: i32) -> (i32, i32) {
    %c0_i32 = arith.constant 0 : i32
    %c0_i32_0 = arith.constant 0 : i32
    %c0_i32_1 = arith.constant 0 : i32
    return %c0_i32, %c0_i32_0 : i32, i32
  }
  func.func @transform_7(%arg0: i32) -> (i32, i32) {
    %c0_i32 = arith.constant 0 : i32
    %c0_i32_0 = arith.constant 0 : i32
    %c0_i32_1 = arith.constant 0 : i32
    return %c0_i32, %c0_i32_0 : i32, i32
  }
  func.func @transform_8(%arg0: i32) -> (i32, i32) {
    %c0_i32 = arith.constant 0 : i32
    %c0_i32_0 = arith.constant 0 : i32
    %c0_i32_1 = arith.constant 0 : i32
    return %c0_i32, %c0_i32_0 : i32, i32
  }
  func.func @transform_9(%arg0: i32) -> (i32, i32) {
    %c0_i32 = arith.constant 0 : i32
    %c0_i32_0 = arith.constant 0 : i32
    return %arg0, %c0_i32 : i32, i32
  }
}

module attributes {stable_mosaic.version = 11 : i64} {
  func.func @_layernorm_kernel(%arg0: i32, %arg1: memref<32x32xf32, #tpu.memory_space<vmem>>, %arg2: memref<1x32xf32, #tpu.memory_space<vmem>>, %arg3: memref<1x32xf32, #tpu.memory_space<vmem>>, %arg4: memref<32x32xf32, #tpu.memory_space<vmem>>) attributes {dimension_semantics = [#tpu.dimension_semantics<parallel>], iteration_bounds = array<i64: 1>, scalar_prefetch = 0 : i64, scratch_operands = 0 : i64, tpu.core_type = #tpu.core_type<tc>, window_params = [{transform_indices = @transform_0, window_bounds = array<i64: 32, 32>}, {pipeline_mode = #tpu.pipeline_mode<synchronous>, transform_indices = @transform_1, window_bounds = array<i64: 1, 32>}, {pipeline_mode = #tpu.pipeline_mode<synchronous>, transform_indices = @transform_2, window_bounds = array<i64: 1, 32>}, {transform_indices = @transform_3, window_bounds = array<i64: 32, 32>}]} {
    %c0 = arith.constant 0 : index
    %c0_0 = arith.constant 0 : index
    %0 = vector.load %arg1[%c0, %c0_0] : memref<32x32xf32, #tpu.memory_space<vmem>>, vector<32x32xf32>
    %cst = arith.constant dense<0.000000e+00> : vector<32xf32>
    %1 = vector.multi_reduction <add>, %0, %cst [1] : vector<32x32xf32> to vector<32xf32>
    %2 = vector.shape_cast %1 : vector<32xf32> to vector<32x1xf32>
    %cst_1 = arith.constant 3.200000e+01 : f32
    %3 = vector.broadcast %cst_1 : f32 to vector<32x1xf32>
    %4 = arith.divf %2, %3 : vector<32x1xf32>
    %5 = vector.broadcast %4 : vector<32x1xf32> to vector<32x32xf32>
    %6 = arith.subf %0, %5 : vector<32x32xf32>
    %7 = arith.mulf %6, %6 : vector<32x32xf32>
    %cst_2 = arith.constant dense<0.000000e+00> : vector<32xf32>
    %8 = vector.multi_reduction <add>, %7, %cst_2 [1] : vector<32x32xf32> to vector<32xf32>
    %9 = vector.shape_cast %8 : vector<32xf32> to vector<32x1xf32>
    %cst_3 = arith.constant 3.200000e+01 : f32
    %10 = vector.broadcast %cst_3 : f32 to vector<32x1xf32>
    %11 = arith.divf %9, %10 : vector<32x1xf32>
    %12 = vector.broadcast %4 : vector<32x1xf32> to vector<32x32xf32>
    %13 = arith.subf %0, %12 : vector<32x32xf32>
    %cst_4 = arith.constant 9.99999997E-7 : f32
    %14 = vector.broadcast %cst_4 : f32 to vector<32x1xf32>
    %15 = arith.addf %11, %14 : vector<32x1xf32>
    %16 = math.rsqrt %15 : vector<32x1xf32>
    %17 = vector.broadcast %16 : vector<32x1xf32> to vector<32x32xf32>
    %18 = arith.mulf %13, %17 : vector<32x32xf32>
    %c0_5 = arith.constant 0 : index
    %c0_6 = arith.constant 0 : index
    %19 = vector.load %arg2[%c0_5, %c0_6] : memref<1x32xf32, #tpu.memory_space<vmem>>, vector<1x32xf32>
    %20 = vector.broadcast %19 : vector<1x32xf32> to vector<32x32xf32>
    %21 = arith.mulf %18, %20 : vector<32x32xf32>
    %c0_7 = arith.constant 0 : index
    %c0_8 = arith.constant 0 : index
    %22 = vector.load %arg3[%c0_7, %c0_8] : memref<1x32xf32, #tpu.memory_space<vmem>>, vector<1x32xf32>
    %23 = vector.broadcast %22 : vector<1x32xf32> to vector<32x32xf32>
    %24 = arith.addf %21, %23 : vector<32x32xf32>
    %c0_9 = arith.constant 0 : index
    %c0_10 = arith.constant 0 : index
    %25 = vector.load %arg4[%c0_9, %c0_10] : memref<32x32xf32, #tpu.memory_space<vmem>>, vector<32x32xf32>
    tpu.vector_store %arg4[%c0_9, %c0_10], %24 {strides = array<i32>} : memref<32x32xf32, #tpu.memory_space<vmem>>, vector<32x32xf32>,
    return
  }
  func.func @transform_0(%arg0: i32) -> (i32, i32) {
    %c0_i32 = arith.constant 0 : i32
    %c0_i32_0 = arith.constant 0 : i32
    return %arg0, %c0_i32 : i32, i32
  }
  func.func @transform_1(%arg0: i32) -> (i32, i32) {
    %c0_i32 = arith.constant 0 : i32
    %c0_i32_0 = arith.constant 0 : i32
    %c0_i32_1 = arith.constant 0 : i32
    return %c0_i32, %c0_i32_0 : i32, i32
  }
  func.func @transform_2(%arg0: i32) -> (i32, i32) {
    %c0_i32 = arith.constant 0 : i32
    %c0_i32_0 = arith.constant 0 : i32
    %c0_i32_1 = arith.constant 0 : i32
    return %c0_i32, %c0_i32_0 : i32, i32
  }
  func.func @transform_3(%arg0: i32) -> (i32, i32) {
    %c0_i32 = arith.constant 0 : i32
    %c0_i32_0 = arith.constant 0 : i32
    return %arg0, %c0_i32 : i32, i32
  }
}

module attributes {stable_mosaic.version = 11 : i64} {
  func.func @_attnout_ffn_kernel(%arg0: i32, %arg1: memref<32x32xf32, #tpu.memory_space<vmem>>, %arg2: memref<32x32xf32, #tpu.memory_space<vmem>>, %arg3: memref<32x32xf32, #tpu.memory_space<vmem>>, %arg4: memref<1x32xf32, #tpu.memory_space<vmem>>, %arg5: memref<1x32xf32, #tpu.memory_space<vmem>>, %arg6: memref<32x128xf32, #tpu.memory_space<vmem>>, %arg7: memref<1x128xf32, #tpu.memory_space<vmem>>, %arg8: memref<128x32xf32, #tpu.memory_space<vmem>>, %arg9: memref<1x32xf32, #tpu.memory_space<vmem>>, %arg10: memref<32x32xf32, #tpu.memory_space<vmem>>) attributes {dimension_semantics = [#tpu.dimension_semantics<parallel>], iteration_bounds = array<i64: 1>, scalar_prefetch = 0 : i64, scratch_operands = 0 : i64, tpu.core_type = #tpu.core_type<tc>, window_params = [{transform_indices = @transform_0, window_bounds = array<i64: 32, 32>}, {transform_indices = @transform_1, window_bounds = array<i64: 32, 32>}, {pipeline_mode = #tpu.pipeline_mode<synchronous>, transform_indices = @transform_2, window_bounds = array<i64: 32, 32>}, {pipeline_mode = #tpu.pipeline_mode<synchronous>, transform_indices = @transform_3, window_bounds = array<i64: 1, 32>}, {pipeline_mode = #tpu.pipeline_mode<synchronous>, transform_indices = @transform_4, window_bounds = array<i64: 1, 32>}, {pipeline_mode = #tpu.pipeline_mode<synchronous>, transform_indices = @transform_5, window_bounds = array<i64: 32, 128>}, {pipeline_mode = #tpu.pipeline_mode<synchronous>, transform_indices = @transform_6, window_bounds = array<i64: 1, 128>}, {pipeline_mode = #tpu.pipeline_mode<synchronous>, transform_indices = @transform_7, window_bounds = array<i64: 128, 32>}, {pipeline_mode = #tpu.pipeline_mode<synchronous>, transform_indices = @transform_8, window_bounds = array<i64: 1, 32>}, {transform_indices = @transform_9, window_bounds = array<i64: 32, 32>}]} {
    %c0 = arith.constant 0 : index
    %c0_0 = arith.constant 0 : index
    %0 = vector.load %arg1[%c0, %c0_0] : memref<32x32xf32, #tpu.memory_space<vmem>>, vector<32x32xf32>
    %c0_1 = arith.constant 0 : index
    %c0_2 = arith.constant 0 : index
    %1 = vector.load %arg3[%c0_1, %c0_2] : memref<32x32xf32, #tpu.memory_space<vmem>>, vector<32x32xf32>
    %cst = arith.constant dense<0.000000e+00> : vector<32x32xf32>
    %2 = tpu.matmul %0, %1, %cst {dimension_numbers = #tpu.dot_dimension_numbers<[1], [0], [0], [1], [0, 0, 1, 1], [], []>} : vector<32x32xf32>, vector<32x32xf32>, vector<32x32xf32> -> vector<32x32xf32>
    %c0_3 = arith.constant 0 : index
    %c0_4 = arith.constant 0 : index
    %3 = vector.load %arg2[%c0_3, %c0_4] : memref<32x32xf32, #tpu.memory_space<vmem>>, vector<32x32xf32>
    %4 = arith.addf %3, %2 : vector<32x32xf32>
    %cst_5 = arith.constant dense<0.000000e+00> : vector<32xf32>
    %5 = vector.multi_reduction <add>, %4, %cst_5 [1] : vector<32x32xf32> to vector<32xf32>
    %6 = vector.shape_cast %5 : vector<32xf32> to vector<32x1xf32>
    %cst_6 = arith.constant 3.200000e+01 : f32
    %7 = vector.broadcast %cst_6 : f32 to vector<32x1xf32>
    %8 = arith.divf %6, %7 : vector<32x1xf32>
    %9 = vector.broadcast %8 : vector<32x1xf32> to vector<32x32xf32>
    %10 = arith.subf %4, %9 : vector<32x32xf32>
    %11 = arith.mulf %10, %10 : vector<32x32xf32>
    %cst_7 = arith.constant dense<0.000000e+00> : vector<32xf32>
    %12 = vector.multi_reduction <add>, %11, %cst_7 [1] : vector<32x32xf32> to vector<32xf32>
    %13 = vector.shape_cast %12 : vector<32xf32> to vector<32x1xf32>
    %cst_8 = arith.constant 3.200000e+01 : f32
    %14 = vector.broadcast %cst_8 : f32 to vector<32x1xf32>
    %15 = arith.divf %13, %14 : vector<32x1xf32>
    %16 = vector.broadcast %8 : vector<32x1xf32> to vector<32x32xf32>
    %17 = arith.subf %4, %16 : vector<32x32xf32>
    %cst_9 = arith.constant 9.99999997E-7 : f32
    %18 = vector.broadcast %cst_9 : f32 to vector<32x1xf32>
    %19 = arith.addf %15, %18 : vector<32x1xf32>
    %20 = math.rsqrt %19 : vector<32x1xf32>
    %21 = vector.broadcast %20 : vector<32x1xf32> to vector<32x32xf32>
    %22 = arith.mulf %17, %21 : vector<32x32xf32>
    %c0_10 = arith.constant 0 : index
    %c0_11 = arith.constant 0 : index
    %23 = vector.load %arg4[%c0_10, %c0_11] : memref<1x32xf32, #tpu.memory_space<vmem>>, vector<1x32xf32>
    %24 = vector.broadcast %23 : vector<1x32xf32> to vector<32x32xf32>
    %25 = arith.mulf %22, %24 : vector<32x32xf32>
    %c0_12 = arith.constant 0 : index
    %c0_13 = arith.constant 0 : index
    %26 = vector.load %arg5[%c0_12, %c0_13] : memref<1x32xf32, #tpu.memory_space<vmem>>, vector<1x32xf32>
    %27 = vector.broadcast %26 : vector<1x32xf32> to vector<32x32xf32>
    %28 = arith.addf %25, %27 : vector<32x32xf32>
    %c0_14 = arith.constant 0 : index
    %c0_15 = arith.constant 0 : index
    %29 = vector.load %arg6[%c0_14, %c0_15] : memref<32x128xf32, #tpu.memory_space<vmem>>, vector<32x128xf32>
    %cst_16 = arith.constant dense<0.000000e+00> : vector<32x128xf32>
    %30 = tpu.matmul %28, %29, %cst_16 {dimension_numbers = #tpu.dot_dimension_numbers<[1], [0], [0], [1], [0, 0, 1, 1], [], []>} : vector<32x32xf32>, vector<32x128xf32>, vector<32x128xf32> -> vector<32x128xf32>
    %c0_17 = arith.constant 0 : index
    %c0_18 = arith.constant 0 : index
    %31 = vector.load %arg7[%c0_17, %c0_18] : memref<1x128xf32, #tpu.memory_space<vmem>>, vector<1x128xf32>
    %32 = vector.broadcast %31 : vector<1x128xf32> to vector<32x128xf32>
    %33 = arith.addf %30, %32 : vector<32x128xf32>
    %cst_19 = arith.constant 5.000000e-01 : f32
    %34 = vector.broadcast %cst_19 : f32 to vector<32x128xf32>
    %35 = arith.mulf %34, %33 : vector<32x128xf32>
    %cst_20 = arith.constant 0.707106769 : f32
    %36 = vector.broadcast %cst_20 : f32 to vector<32x128xf32>
    %37 = arith.mulf %33, %36 : vector<32x128xf32>
    %38 = math.absf %37 : vector<32x128xf32>
    %cst_21 = arith.constant 0.327591091 : f32
    %39 = vector.broadcast %cst_21 : f32 to vector<32x128xf32>
    %40 = arith.mulf %39, %38 : vector<32x128xf32>
    %cst_22 = arith.constant 1.000000e+00 : f32
    %41 = vector.broadcast %cst_22 : f32 to vector<32x128xf32>
    %42 = arith.addf %41, %40 : vector<32x128xf32>
    %cst_23 = arith.constant 1.000000e+00 : f32
    %43 = vector.broadcast %cst_23 : f32 to vector<32x128xf32>
    %44 = arith.divf %43, %42 : vector<32x128xf32>
    %cst_24 = arith.constant 1.06140542 : f32
    %45 = vector.broadcast %cst_24 : f32 to vector<32x128xf32>
    %46 = arith.mulf %45, %44 : vector<32x128xf32>
    %cst_25 = arith.constant -1.45315206 : f32
    %47 = vector.broadcast %cst_25 : f32 to vector<32x128xf32>
    %48 = arith.addf %46, %47 : vector<32x128xf32>
    %49 = arith.mulf %48, %44 : vector<32x128xf32>
    %cst_26 = arith.constant 1.42141378 : f32
    %50 = vector.broadcast %cst_26 : f32 to vector<32x128xf32>
    %51 = arith.addf %49, %50 : vector<32x128xf32>
    %52 = arith.mulf %51, %44 : vector<32x128xf32>
    %cst_27 = arith.constant -0.284496725 : f32
    %53 = vector.broadcast %cst_27 : f32 to vector<32x128xf32>
    %54 = arith.addf %52, %53 : vector<32x128xf32>
    %55 = arith.mulf %54, %44 : vector<32x128xf32>
    %cst_28 = arith.constant 0.254829586 : f32
    %56 = vector.broadcast %cst_28 : f32 to vector<32x128xf32>
    %57 = arith.addf %55, %56 : vector<32x128xf32>
    %58 = arith.mulf %57, %44 : vector<32x128xf32>
    %cst_29 = arith.constant 0.000000e+00 : f32
    %59 = vector.broadcast %cst_29 : f32 to vector<32x128xf32>
    %60 = arith.subf %59, %38 : vector<32x128xf32>
    %61 = arith.mulf %60, %38 : vector<32x128xf32>
    %62 = math.exp %61 : vector<32x128xf32>
    %63 = arith.mulf %58, %62 : vector<32x128xf32>
    %cst_30 = arith.constant 1.000000e+00 : f32
    %64 = vector.broadcast %cst_30 : f32 to vector<32x128xf32>
    %65 = arith.subf %64, %63 : vector<32x128xf32>
    %cst_31 = arith.constant 0.000000e+00 : f32
    %66 = vector.broadcast %cst_31 : f32 to vector<32x128xf32>
    %67 = arith.cmpf oge, %37, %66 : vector<32x128xf32>
    %cst_32 = arith.constant 0.000000e+00 : f32
    %68 = vector.broadcast %cst_32 : f32 to vector<32x128xf32>
    %69 = arith.subf %68, %65 : vector<32x128xf32>
    %70 = arith.select %67, %65, %69 : vector<32x128xi1>, vector<32x128xf32>
    %cst_33 = arith.constant 1.000000e+00 : f32
    %71 = vector.broadcast %cst_33 : f32 to vector<32x128xf32>
    %72 = arith.addf %71, %70 : vector<32x128xf32>
    %73 = arith.mulf %35, %72 : vector<32x128xf32>
    %c0_34 = arith.constant 0 : index
    %c0_35 = arith.constant 0 : index
    %74 = vector.load %arg8[%c0_34, %c0_35] : memref<128x32xf32, #tpu.memory_space<vmem>>, vector<128x32xf32>
    %cst_36 = arith.constant dense<0.000000e+00> : vector<32x32xf32>
    %75 = tpu.matmul %73, %74, %cst_36 {dimension_numbers = #tpu.dot_dimension_numbers<[1], [0], [0], [1], [0, 0, 1, 1], [], []>} : vector<32x128xf32>, vector<128x32xf32>, vector<32x32xf32> -> vector<32x32xf32>
    %c0_37 = arith.constant 0 : index
    %c0_38 = arith.constant 0 : index
    %76 = vector.load %arg9[%c0_37, %c0_38] : memref<1x32xf32, #tpu.memory_space<vmem>>, vector<1x32xf32>
    %77 = vector.broadcast %76 : vector<1x32xf32> to vector<32x32xf32>
    %78 = arith.addf %75, %77 : vector<32x32xf32>
    %79 = arith.addf %78, %4 : vector<32x32xf32>
    %c0_39 = arith.constant 0 : index
    %c0_40 = arith.constant 0 : index
    %80 = vector.load %arg10[%c0_39, %c0_40] : memref<32x32xf32, #tpu.memory_space<vmem>>, vector<32x32xf32>
    tpu.vector_store %arg10[%c0_39, %c0_40], %79 {strides = array<i32>} : memref<32x32xf32, #tpu.memory_space<vmem>>, vector<32x32xf32>,
    return
  }
  func.func @transform_0(%arg0: i32) -> (i32, i32) {
    %c0_i32 = arith.constant 0 : i32
    %c0_i32_0 = arith.constant 0 : i32
    return %arg0, %c0_i32 : i32, i32
  }
  func.func @transform_1(%arg0: i32) -> (i32, i32) {
    %c0_i32 = arith.constant 0 : i32
    %c0_i32_0 = arith.constant 0 : i32
    return %arg0, %c0_i32 : i32, i32
  }
  func.func @transform_2(%arg0: i32) -> (i32, i32) {
    %c0_i32 = arith.constant 0 : i32
    %c0_i32_0 = arith.constant 0 : i32
    %c0_i32_1 = arith.constant 0 : i32
    return %c0_i32, %c0_i32_0 : i32, i32
  }
  func.func @transform_3(%arg0: i32) -> (i32, i32) {
    %c0_i32 = arith.constant 0 : i32
    %c0_i32_0 = arith.constant 0 : i32
    %c0_i32_1 = arith.constant 0 : i32
    return %c0_i32, %c0_i32_0 : i32, i32
  }
  func.func @transform_4(%arg0: i32) -> (i32, i32) {
    %c0_i32 = arith.constant 0 : i32
    %c0_i32_0 = arith.constant 0 : i32
    %c0_i32_1 = arith.constant 0 : i32
    return %c0_i32, %c0_i32_0 : i32, i32
  }
  func.func @transform_5(%arg0: i32) -> (i32, i32) {
    %c0_i32 = arith.constant 0 : i32
    %c0_i32_0 = arith.constant 0 : i32
    %c0_i32_1 = arith.constant 0 : i32
    return %c0_i32, %c0_i32_0 : i32, i32
  }
  func.func @transform_6(%arg0: i32) -> (i32, i32) {
    %c0_i32 = arith.constant 0 : i32
    %c0_i32_0 = arith.constant 0 : i32
    %c0_i32_1 = arith.constant 0 : i32
    return %c0_i32, %c0_i32_0 : i32, i32
  }
  func.func @transform_7(%arg0: i32) -> (i32, i32) {
    %c0_i32 = arith.constant 0 : i32
    %c0_i32_0 = arith.constant 0 : i32
    %c0_i32_1 = arith.constant 0 : i32
    return %c0_i32, %c0_i32_0 : i32, i32
  }
  func.func @transform_8(%arg0: i32) -> (i32, i32) {
    %c0_i32 = arith.constant 0 : i32
    %c0_i32_0 = arith.constant 0 : i32
    %c0_i32_1 = arith.constant 0 : i32
    return %c0_i32, %c0_i32_0 : i32, i32
  }
  func.func @transform_9(%arg0: i32) -> (i32, i32) {
    %c0_i32 = arith.constant 0 : i32
    %c0_i32_0 = arith.constant 0 : i32
    return %arg0, %c0_i32 : i32, i32
  }
}

module attributes {stable_mosaic.version = 11 : i64} {
  func.func @_ln_matmul_kernel(%arg0: i32, %arg1: i32, %arg2: memref<32x96xf32, #tpu.memory_space<vmem>>, %arg3: memref<1x96xf32, #tpu.memory_space<vmem>>, %arg4: memref<1x96xf32, #tpu.memory_space<vmem>>, %arg5: memref<96x768xf32, #tpu.memory_space<vmem>>, %arg6: memref<32x768xf32, #tpu.memory_space<vmem>>) attributes {dimension_semantics = [#tpu.dimension_semantics<parallel>, #tpu.dimension_semantics<parallel>], iteration_bounds = array<i64: 1, 1>, scalar_prefetch = 0 : i64, scratch_operands = 0 : i64, tpu.core_type = #tpu.core_type<tc>, window_params = [{transform_indices = @transform_0, window_bounds = array<i64: 32, 96>}, {pipeline_mode = #tpu.pipeline_mode<synchronous>, transform_indices = @transform_1, window_bounds = array<i64: 1, 96>}, {pipeline_mode = #tpu.pipeline_mode<synchronous>, transform_indices = @transform_2, window_bounds = array<i64: 1, 96>}, {transform_indices = @transform_3, window_bounds = array<i64: 96, 768>}, {transform_indices = @transform_4, window_bounds = array<i64: 32, 768>}]} {
    %c0 = arith.constant 0 : index
    %c0_0 = arith.constant 0 : index
    %0 = vector.load %arg2[%c0, %c0_0] : memref<32x96xf32, #tpu.memory_space<vmem>>, vector<32x96xf32>
    %cst = arith.constant dense<0.000000e+00> : vector<32xf32>
    %1 = vector.multi_reduction <add>, %0, %cst [1] : vector<32x96xf32> to vector<32xf32>
    %2 = vector.shape_cast %1 : vector<32xf32> to vector<32x1xf32>
    %cst_1 = arith.constant 9.600000e+01 : f32
    %3 = vector.broadcast %cst_1 : f32 to vector<32x1xf32>
    %4 = arith.divf %2, %3 : vector<32x1xf32>
    %5 = vector.broadcast %4 : vector<32x1xf32> to vector<32x96xf32>
    %6 = arith.subf %0, %5 : vector<32x96xf32>
    %7 = arith.mulf %6, %6 : vector<32x96xf32>
    %cst_2 = arith.constant dense<0.000000e+00> : vector<32xf32>
    %8 = vector.multi_reduction <add>, %7, %cst_2 [1] : vector<32x96xf32> to vector<32xf32>
    %9 = vector.shape_cast %8 : vector<32xf32> to vector<32x1xf32>
    %cst_3 = arith.constant 9.600000e+01 : f32
    %10 = vector.broadcast %cst_3 : f32 to vector<32x1xf32>
    %11 = arith.divf %9, %10 : vector<32x1xf32>
    %12 = vector.broadcast %4 : vector<32x1xf32> to vector<32x96xf32>
    %13 = arith.subf %0, %12 : vector<32x96xf32>
    %cst_4 = arith.constant 9.99999997E-7 : f32
    %14 = vector.broadcast %cst_4 : f32 to vector<32x1xf32>
    %15 = arith.addf %11, %14 : vector<32x1xf32>
    %16 = math.rsqrt %15 : vector<32x1xf32>
    %17 = vector.broadcast %16 : vector<32x1xf32> to vector<32x96xf32>
    %18 = arith.mulf %13, %17 : vector<32x96xf32>
    %c0_5 = arith.constant 0 : index
    %c0_6 = arith.constant 0 : index
    %19 = vector.load %arg3[%c0_5, %c0_6] : memref<1x96xf32, #tpu.memory_space<vmem>>, vector<1x96xf32>
    %20 = vector.broadcast %19 : vector<1x96xf32> to vector<32x96xf32>
    %21 = arith.mulf %18, %20 : vector<32x96xf32>
    %c0_7 = arith.constant 0 : index
    %c0_8 = arith.constant 0 : index
    %22 = vector.load %arg4[%c0_7, %c0_8] : memref<1x96xf32, #tpu.memory_space<vmem>>, vector<1x96xf32>
    %23 = vector.broadcast %22 : vector<1x96xf32> to vector<32x96xf32>
    %24 = arith.addf %21, %23 : vector<32x96xf32>
    %c0_9 = arith.constant 0 : index
    %c0_10 = arith.constant 0 : index
    %25 = vector.load %arg5[%c0_9, %c0_10] : memref<96x768xf32, #tpu.memory_space<vmem>>, vector<96x768xf32>
    %cst_11 = arith.constant dense<0.000000e+00> : vector<32x768xf32>
    %26 = tpu.matmul %24, %25, %cst_11 {dimension_numbers = #tpu.dot_dimension_numbers<[1], [0], [0], [1], [0, 0, 1, 1], [], []>} : vector<32x96xf32>, vector<96x768xf32>, vector<32x768xf32> -> vector<32x768xf32>
    %c0_12 = arith.constant 0 : index
    %c0_13 = arith.constant 0 : index
    %27 = vector.load %arg6[%c0_12, %c0_13] : memref<32x768xf32, #tpu.memory_space<vmem>>, vector<32x768xf32>
    tpu.vector_store %arg6[%c0_12, %c0_13], %26 {strides = array<i32>} : memref<32x768xf32, #tpu.memory_space<vmem>>, vector<32x768xf32>,
    return
  }
  func.func @transform_0(%arg0: i32, %arg1: i32) -> (i32, i32) {
    %c0_i32 = arith.constant 0 : i32
    %c0_i32_0 = arith.constant 0 : i32
    return %arg0, %c0_i32 : i32, i32
  }
  func.func @transform_1(%arg0: i32, %arg1: i32) -> (i32, i32) {
    %c0_i32 = arith.constant 0 : i32
    %c0_i32_0 = arith.constant 0 : i32
    %c0_i32_1 = arith.constant 0 : i32
    return %c0_i32, %c0_i32_0 : i32, i32
  }
  func.func @transform_2(%arg0: i32, %arg1: i32) -> (i32, i32) {
    %c0_i32 = arith.constant 0 : i32
    %c0_i32_0 = arith.constant 0 : i32
    %c0_i32_1 = arith.constant 0 : i32
    return %c0_i32, %c0_i32_0 : i32, i32
  }
  func.func @transform_3(%arg0: i32, %arg1: i32) -> (i32, i32) {
    %c0_i32 = arith.constant 0 : i32
    %c0_i32_0 = arith.constant 0 : i32
    return %c0_i32, %arg1 : i32, i32
  }
  func.func @transform_4(%arg0: i32, %arg1: i32) -> (i32, i32) {
    %c0_i32 = arith.constant 0 : i32
    return %arg0, %arg1 : i32, i32
  }
}

module attributes {stable_mosaic.version = 11 : i64} {
  func.func @_layernorm_kernel(%arg0: i32, %arg1: memref<32x32xf32, #tpu.memory_space<vmem>>, %arg2: memref<1x32xf32, #tpu.memory_space<vmem>>, %arg3: memref<1x32xf32, #tpu.memory_space<vmem>>, %arg4: memref<32x32xf32, #tpu.memory_space<vmem>>) attributes {dimension_semantics = [#tpu.dimension_semantics<parallel>], iteration_bounds = array<i64: 1>, scalar_prefetch = 0 : i64, scratch_operands = 0 : i64, tpu.core_type = #tpu.core_type<tc>, window_params = [{transform_indices = @transform_0, window_bounds = array<i64: 32, 32>}, {pipeline_mode = #tpu.pipeline_mode<synchronous>, transform_indices = @transform_1, window_bounds = array<i64: 1, 32>}, {pipeline_mode = #tpu.pipeline_mode<synchronous>, transform_indices = @transform_2, window_bounds = array<i64: 1, 32>}, {transform_indices = @transform_3, window_bounds = array<i64: 32, 32>}]} {
    %c0 = arith.constant 0 : index
    %c0_0 = arith.constant 0 : index
    %0 = vector.load %arg1[%c0, %c0_0] : memref<32x32xf32, #tpu.memory_space<vmem>>, vector<32x32xf32>
    %cst = arith.constant dense<0.000000e+00> : vector<32xf32>
    %1 = vector.multi_reduction <add>, %0, %cst [1] : vector<32x32xf32> to vector<32xf32>
    %2 = vector.shape_cast %1 : vector<32xf32> to vector<32x1xf32>
    %cst_1 = arith.constant 3.200000e+01 : f32
    %3 = vector.broadcast %cst_1 : f32 to vector<32x1xf32>
    %4 = arith.divf %2, %3 : vector<32x1xf32>
    %5 = vector.broadcast %4 : vector<32x1xf32> to vector<32x32xf32>
    %6 = arith.subf %0, %5 : vector<32x32xf32>
    %7 = arith.mulf %6, %6 : vector<32x32xf32>
    %cst_2 = arith.constant dense<0.000000e+00> : vector<32xf32>
    %8 = vector.multi_reduction <add>, %7, %cst_2 [1] : vector<32x32xf32> to vector<32xf32>
    %9 = vector.shape_cast %8 : vector<32xf32> to vector<32x1xf32>
    %cst_3 = arith.constant 3.200000e+01 : f32
    %10 = vector.broadcast %cst_3 : f32 to vector<32x1xf32>
    %11 = arith.divf %9, %10 : vector<32x1xf32>
    %12 = vector.broadcast %4 : vector<32x1xf32> to vector<32x32xf32>
    %13 = arith.subf %0, %12 : vector<32x32xf32>
    %cst_4 = arith.constant 9.99999997E-7 : f32
    %14 = vector.broadcast %cst_4 : f32 to vector<32x1xf32>
    %15 = arith.addf %11, %14 : vector<32x1xf32>
    %16 = math.rsqrt %15 : vector<32x1xf32>
    %17 = vector.broadcast %16 : vector<32x1xf32> to vector<32x32xf32>
    %18 = arith.mulf %13, %17 : vector<32x32xf32>
    %c0_5 = arith.constant 0 : index
    %c0_6 = arith.constant 0 : index
    %19 = vector.load %arg2[%c0_5, %c0_6] : memref<1x32xf32, #tpu.memory_space<vmem>>, vector<1x32xf32>
    %20 = vector.broadcast %19 : vector<1x32xf32> to vector<32x32xf32>
    %21 = arith.mulf %18, %20 : vector<32x32xf32>
    %c0_7 = arith.constant 0 : index
    %c0_8 = arith.constant 0 : index
    %22 = vector.load %arg3[%c0_7, %c0_8] : memref<1x32xf32, #tpu.memory_space<vmem>>, vector<1x32xf32>
    %23 = vector.broadcast %22 : vector<1x32xf32> to vector<32x32xf32>
    %24 = arith.addf %21, %23 : vector<32x32xf32>
    %c0_9 = arith.constant 0 : index
    %c0_10 = arith.constant 0 : index
    %25 = vector.load %arg4[%c0_9, %c0_10] : memref<32x32xf32, #tpu.memory_space<vmem>>, vector<32x32xf32>
    tpu.vector_store %arg4[%c0_9, %c0_10], %24 {strides = array<i32>} : memref<32x32xf32, #tpu.memory_space<vmem>>, vector<32x32xf32>,
    return
  }
  func.func @transform_0(%arg0: i32) -> (i32, i32) {
    %c0_i32 = arith.constant 0 : i32
    %c0_i32_0 = arith.constant 0 : i32
    return %arg0, %c0_i32 : i32, i32
  }
  func.func @transform_1(%arg0: i32) -> (i32, i32) {
    %c0_i32 = arith.constant 0 : i32
    %c0_i32_0 = arith.constant 0 : i32
    %c0_i32_1 = arith.constant 0 : i32
    return %c0_i32, %c0_i32_0 : i32, i32
  }
  func.func @transform_2(%arg0: i32) -> (i32, i32) {
    %c0_i32 = arith.constant 0 : i32
    %c0_i32_0 = arith.constant 0 : i32
    %c0_i32_1 = arith.constant 0 : i32
    return %c0_i32, %c0_i32_0 : i32, i32
  }
  func.func @transform_3(%arg0: i32) -> (i32, i32) {
    %c0_i32 = arith.constant 0 : i32
    %c0_i32_0 = arith.constant 0 : i32
    return %arg0, %c0_i32 : i32, i32
  }
}

</mosaic_0001>

<llo_original>
// kernel: channel_transformer.75
$region0: #{channel_transformer.75}
  #allocation0 [shape = 'u32[]', space=smem, size = 0x4, offset = 0x4, fixed_abs, tag = 'smem constant byte address 0x4 - core index']
  #allocation1 [shape = 'u32[144,128]{1,0:T(1,128)}', space=vmem, size = 0x12000, scoped, tag = 'internal scratch']
  %s0 = inlined_call_operand.hbm [shape: f32[32,32], index: 0, kind: input, shape index: {}]
  %s1 = inlined_call_operand.hbm [shape: f32[32,32], index: 1, kind: input, shape index: {}]
  %s2 = inlined_call_operand.hbm [shape: f32[1,32], index: 2, kind: input, shape index: {}]
  %s3 = inlined_call_operand.vmem [shape: f32[32,32], index: 3, kind: output, shape index: {}]
  %s4 = sld [smem:[#allocation0]]
  $region34: #{channel_transformer.75} parent=0
    _
  %s6 = ssub.s32 1, %s4
  %s7 = scalar_select 0, %s6, %s4
  $region1: #{channel_transformer.75} parent=0
    #allocation2 [shape = 'u8[16384]{0}', space=vmem, size = 0x4000, scoped, tag = 'input window, operand 0, single buffered']
    #allocation3 [shape = 's32[1]{0}', space=sflag, size = 0x4, scoped, tag = 'scoped memory for channel_transformer.75']
    #allocation4 [shape = 'u8[16384]{0}', space=vmem, size = 0x4000, scoped, tag = 'input window, operand 1, single buffered']
    #allocation5 [shape = 's32[1]{0}', space=sflag, size = 0x4, scoped, tag = 'scoped memory for channel_transformer.75']
    #allocation6 [shape = 'u8[512]{0}', space=vmem, size = 0x400, scoped, tag = 'input window, operand 2, single buffered']
    %8 = vsyncpa [#allocation3], 0
    %9 = vsyncpa [#allocation5], 0
    // Predicated region
    $region2: #{channel_transformer.75} parent=1 // pred_check
      _
    $region3: #{channel_transformer.75} parent=1 // pred_check_branch
      %11 = sbr.rel (0) target = $region5
    $region4: #{channel_transformer.75} parent=1 // pred_region
      %s13 = ssub.s32 512, 512
      %14 = vsyncadd [#allocation3], %s13
      %s15 = sshll.u32 [#allocation2], 4
      %s16 = int_to_ptr.vmem [resolvable:$true] %s15
      %21 = dma.hbm_to_vmem [thread:$0]  %s0, 512, %s16, [#allocation3], 128, 128, 8
    $region5: #{channel_transformer.75} parent=1 // pred_fallthru
      _
    // Predicated region
    $region6: #{channel_transformer.75} parent=1 // pred_check
      _
    $region7: #{channel_transformer.75} parent=1 // pred_check_branch
      %23 = sbr.rel (0) target = $region9
    $region8: #{channel_transformer.75} parent=1 // pred_region
      %s25 = ssub.s32 512, 512
      %26 = vsyncadd [#allocation5], %s25
      %s27 = sshll.u32 [#allocation4], 4
      %s28 = int_to_ptr.vmem [resolvable:$true] %s27
      %33 = dma.hbm_to_vmem [thread:$0]  %s1, 512, %s28, [#allocation5], 128, 128, 8
    $region9: #{channel_transformer.75} parent=1 // pred_fallthru
      _
    // Predicated region
    $region10: #{channel_transformer.75} parent=1 // pred_check
      _
    $region11: #{channel_transformer.75} parent=1 // pred_check_branch
      %35 = sbr.rel (0) target = $region13
    $region12: #{channel_transformer.75} parent=1 // pred_region
      %s37 = ssub.s32 16, 16
      %38 = vsyncadd [#allocation5], %s37
      %s40 = sshll.u32 [#allocation6], 4
      %s41 = int_to_ptr.vmem [resolvable:$true] %s40
      %43 = dma.hbm_to_vmem [thread:$0]  %s2, 16, %s41, [#allocation5]
    $region13: #{channel_transformer.75} parent=1 // pred_fallthru
      _
    // Predicated region
    $region14: #{channel_transformer.75} parent=1 // pred_check
      _
    $region15: #{channel_transformer.75} parent=1 // pred_check_branch
      %45 = sbr.rel (0) target = $region17
    $region16: #{channel_transformer.75} parent=1 // pred_region
      %46 = dma.done [#allocation3], 512
    $region17: #{channel_transformer.75} parent=1 // pred_fallthru
      _
    // Predicated region
    $region18: #{channel_transformer.75} parent=1 // pred_check
      _
    $region19: #{channel_transformer.75} parent=1 // pred_check_branch
      %48 = sbr.rel (0) target = $region21
    $region20: #{channel_transformer.75} parent=1 // pred_region
      %49 = dma.done [#allocation5], 512
    $region21: #{channel_transformer.75} parent=1 // pred_fallthru
      _
    // Predicated region
    $region22: #{channel_transformer.75} parent=1 // pred_check
      _
    $region23: #{channel_transformer.75} parent=1 // pred_check_branch
      %51 = sbr.rel (0) target = $region25
    $region24: #{channel_transformer.75} parent=1 // pred_region
      %52 = dma.done [#allocation5], 16
    $region25: #{channel_transformer.75} parent=1 // pred_fallthru
      _
    %v53 = vld [vmem:[#allocation2] sm:$0xff]
    %v54 = vld [vmem:[#allocation2 + $0x8] sm:$0xff]
    %v55 = vld [vmem:[#allocation2 + $0x10] sm:$0xff]
    %v56 = vld [vmem:[#allocation2 + $0x18] sm:$0xff]
    %v57 = vld [vmem:[#allocation4] sm:$0xff]
    %v58 = vld [vmem:[#allocation4 + $0x8] sm:$0xff]
    %v59 = vld [vmem:[#allocation4 + $0x10] sm:$0xff]
    %v60 = vld [vmem:[#allocation4 + $0x18] sm:$0xff]
    %v61 = vld [vmem:[#allocation6] sm:$0x1]
    %v63 = vlaneseq
    %v64 = vshrl.u32 %v63, 7
    %v65 = vsub.s32 0, %v64
    %v66 = vrot.slane %v61, %v65
    %vm68 = vcmask 261120
    %v70 = vsel %vm68, %v53, 0
    %v73 = vsel %vm68, %v54, 0
    %v76 = vsel %vm68, %v55, 0
    %v79 = vsel %vm68, %v56, 0
    %81 = vmatprep.subr.mxu0 0.0
    %82 = vmatpush1.msra.mxu0 %v57
    %83 = vmatprep.subr.mxu0 0.0
    %84 = vmatpush1.msra.mxu0 %v58
    %85 = vmatprep.subr.mxu0 0.0
    %86 = vmatpush1.msra.mxu0 %v59
    %87 = vmatprep.subr.mxu0 0.0
    %88 = vmatpush1.msra.mxu0 %v60
    %89 = vmatprep.subr.mxu0 0.0
    %90 = vmatpush1.msra.mxu0 0.0
    %91 = vmatprep.subr.mxu0 0.0
    %92 = vmatpush1.msra.mxu0 0.0
    %93 = vmatprep.subr.mxu0 0.0
    %94 = vmatpush1.msra.mxu0 0.0
    %95 = vmatprep.subr.mxu0 0.0
    %96 = vmatpush1.msra.mxu0 0.0
    %97 = vmatprep.subr.mxu0 0.0
    %98 = vmatpush1.msra.mxu0 0.0
    %99 = vmatprep.subr.mxu0 0.0
    %100 = vmatpush1.msra.mxu0 0.0
    %101 = vmatprep.subr.mxu0 0.0
    %102 = vmatpush1.msra.mxu0 0.0
    %103 = vmatprep.subr.mxu0 0.0
    %104 = vmatpush1.msra.mxu0 0.0
    %105 = vmatprep.subr.mxu0 0.0
    %106 = vmatpush1.msra.mxu0 0.0
    %107 = vmatprep.subr.mxu0 0.0
    %108 = vmatpush1.msra.mxu0 0.0
    %109 = vmatprep.subr.mxu0 0.0
    %110 = vmatpush1.msra.mxu0 0.0
    %111 = vmatprep.subr.mxu0 0.0
    %112 = vmatpush1.msra.mxu0 0.0
    %113 = vmatprep.subr.mxu0 0.0
    %114 = vmatpush1.msra.mxu0 0.0
    %115 = vmatprep.subr.mxu0 0.0
    %116 = vmatpush1.msra.mxu0 0.0
    %117 = vmatprep.subr.mxu0 0.0
    %118 = vmatpush1.msra.mxu0 0.0
    %119 = vmatprep.subr.mxu0 0.0
    %120 = vmatpush1.msra.mxu0 0.0
    %121 = vmatprep.subr.mxu0 0.0
    %122 = vmatpush1.msra.mxu0 0.0
    %123 = vmatprep.subr.mxu0 0.0
    %124 = vmatpush1.msra.mxu0 0.0
    %125 = vmatprep.subr.mxu0 0.0
    %126 = vmatpush1.msra.mxu0 0.0
    %127 = vmatprep.subr.mxu0 0.0
    %128 = vmatpush1.msra.mxu0 0.0
    %129 = vmatprep.subr.mxu0 0.0
    %130 = vmatpush1.msra.mxu0 0.0
    %131 = vmatprep.subr.mxu0 0.0
    %132 = vmatpush1.msra.mxu0 0.0
    %133 = vmatprep.subr.mxu0 0.0
    %134 = vmatpush1.msra.mxu0 0.0
    %135 = vmatprep.subr.mxu0 0.0
    %136 = vmatpush1.msra.mxu0 0.0
    %137 = vmatprep.subr.mxu0 0.0
    %138 = vmatpush1.msra.mxu0 0.0
    %139 = vmatprep.subr.mxu0 0.0
    %140 = vmatpush1.msra.mxu0 0.0
    %141 = vmatprep.subr.mxu0 0.0
    %142 = vmatpush1.msra.mxu0 0.0
    %143 = vmatprep.subr.mxu0 0.0
    %144 = vmatpush1.msra.mxu0 0.0
    %145 = vmatprep.mubr.f32.mxu0 0.0
    %146 = vmatmul.mubr.f32.gmra.mrb[0].mxu0 %v70
    %v147 = vpop.f32.mrb[0].mxu0
    %v148 = vadd.f32 %v66, %v147
    %v149 = vpop.f32.mrb[0].mxu0
    %150 = vmatprep.mubr.f32.mxu0 0.0
    %151 = vmatmul.mubr.f32.gmra.mrb[0].mxu0 %v73
    %v152 = vpop.f32.mrb[0].mxu0
    %v153 = vadd.f32 %v66, %v152
    %v154 = vpop.f32.mrb[0].mxu0
    %155 = vmatprep.mubr.f32.mxu0 0.0
    %156 = vmatmul.mubr.f32.gmra.mrb[0].mxu0 %v76
    %v157 = vpop.f32.mrb[0].mxu0
    %v158 = vadd.f32 %v66, %v157
    %v159 = vpop.f32.mrb[0].mxu0
    %160 = vmatprep.mubr.f32.mxu0 0.0
    %161 = vmatmul.mubr.f32.gmra.mrb[0].mxu0 %v79
    %v162 = vpop.f32.mrb[0].mxu0
    %v163 = vadd.f32 %v66, %v162
    %v164 = vpop.f32.mrb[0].mxu0
    %165 = vdwg.mxu0
    %166 = vst.msk [vmem:[%s3] sm:$0xff] %vm68, %v148
    %167 = vst.msk [vmem:[%s3 + $0x8] sm:$0xff] %vm68, %v153
    %168 = vst.msk [vmem:[%s3 + $0x10] sm:$0xff] %vm68, %v158
    %169 = vst.msk [vmem:[%s3 + $0x18] sm:$0xff] %vm68, %v163
    // Predicated region
    $region26: #{channel_transformer.75} parent=1 // pred_check
      _
    $region27: #{channel_transformer.75} parent=1 // pred_check_branch
      %171 = sbr.rel (0) target = $region29
    $region28: #{channel_transformer.75} parent=1 // pred_region
      _
    $region29: #{channel_transformer.75} parent=1 // pred_fallthru
      _
    // Predicated region
    $region30: #{channel_transformer.75} parent=1 // pred_check
      _
    $region31: #{channel_transformer.75} parent=1 // pred_check_branch
      %173 = sbr.rel (0) target = $region33
    $region32: #{channel_transformer.75} parent=1 // pred_region
      _
    $region33: #{channel_transformer.75} parent=1 // pred_fallthru
      _
    %174 = vsyncpa [#allocation3], 1
    %175 = vsyncpa [#allocation5], 1

// kernel: channel_transformer.74
$region0: #{channel_transformer.74}
  #allocation0 [shape = 'u32[]', space=smem, size = 0x4, offset = 0x4, fixed_abs, tag = 'smem constant byte address 0x4 - core index']
  #allocation1 [shape = 'u32[144,128]{1,0:T(1,128)}', space=vmem, size = 0x12000, scoped, tag = 'internal scratch']
  %s0 = inlined_call_operand.vmem [shape: f32[32,128], index: 0, kind: input, shape index: {}]
  %s1 = inlined_call_operand.vmem [shape: f32[128,32], index: 1, kind: input, shape index: {}]
  %s2 = inlined_call_operand.hbm [shape: f32[1,32], index: 2, kind: input, shape index: {}]
  %s3 = inlined_call_operand.vmem [shape: f32[32,32], index: 3, kind: output, shape index: {}]
  %s4 = sld [smem:[#allocation0]]
  $region26: #{channel_transformer.74} parent=0
    _
  %s6 = ssub.s32 1, %s4
  %s7 = scalar_select 0, %s6, %s4
  $region1: #{channel_transformer.74} parent=0
    #allocation2 [shape = 'u8[512]{0}', space=vmem, size = 0x400, scoped, tag = 'input window, operand 2, single buffered']
    #allocation3 [shape = 's32[1]{0}', space=sflag, size = 0x4, scoped, tag = 'scoped memory for channel_transformer.74']
    %8 = vsyncpa [#allocation3], 0
    // Predicated region
    $region2: #{channel_transformer.74} parent=1 // pred_check
      _
    $region3: #{channel_transformer.74} parent=1 // pred_check_branch
      %10 = sbr.rel (0) target = $region5
    $region4: #{channel_transformer.74} parent=1 // pred_region
      _
    $region5: #{channel_transformer.74} parent=1 // pred_fallthru
      _
    // Predicated region
    $region6: #{channel_transformer.74} parent=1 // pred_check
      _
    $region7: #{channel_transformer.74} parent=1 // pred_check_branch
      %12 = sbr.rel (0) target = $region9
    $region8: #{channel_transformer.74} parent=1 // pred_region
      _
    $region9: #{channel_transformer.74} parent=1 // pred_fallthru
      _
    // Predicated region
    $region10: #{channel_transformer.74} parent=1 // pred_check
      _
    $region11: #{channel_transformer.74} parent=1 // pred_check_branch
      %14 = sbr.rel (0) target = $region13
    $region12: #{channel_transformer.74} parent=1 // pred_region
      %s16 = ssub.s32 16, 16
      %17 = vsyncadd [#allocation3], %s16
      %s19 = sshll.u32 [#allocation2], 4
      %s20 = int_to_ptr.vmem [resolvable:$true] %s19
      %22 = dma.hbm_to_vmem [thread:$0]  %s2, 16, %s20, [#allocation3]
    $region13: #{channel_transformer.74} parent=1 // pred_fallthru
      _
    // Predicated region
    $region14: #{channel_transformer.74} parent=1 // pred_check
      _
    $region15: #{channel_transformer.74} parent=1 // pred_check_branch
      %24 = sbr.rel (0) target = $region17
    $region16: #{channel_transformer.74} parent=1 // pred_region
      %25 = dma.done [#allocation3], 16
    $region17: #{channel_transformer.74} parent=1 // pred_fallthru
      _
    %v26 = vld [vmem:[%s0] sm:$0xff]
    %v27 = vld [vmem:[%s0 + $0x8] sm:$0xff]
    %v28 = vld [vmem:[%s0 + $0x10] sm:$0xff]
    %v29 = vld [vmem:[%s0 + $0x18] sm:$0xff]
    %v30 = vld [vmem:[%s1] sm:$0xff]
    %v31 = vld [vmem:[%s1 + $0x8] sm:$0xff]
    %v32 = vld [vmem:[%s1 + $0x10] sm:$0xff]
    %v33 = vld [vmem:[%s1 + $0x18] sm:$0xff]
    %v34 = vld [vmem:[%s1 + $0x20] sm:$0xff]
    %v35 = vld [vmem:[%s1 + $0x28] sm:$0xff]
    %v36 = vld [vmem:[%s1 + $0x30] sm:$0xff]
    %v37 = vld [vmem:[%s1 + $0x38] sm:$0xff]
    %v38 = vld [vmem:[%s1 + $0x40] sm:$0xff]
    %v39 = vld [vmem:[%s1 + $0x48] sm:$0xff]
    %v40 = vld [vmem:[%s1 + $0x50] sm:$0xff]
    %v41 = vld [vmem:[%s1 + $0x58] sm:$0xff]
    %v42 = vld [vmem:[%s1 + $0x60] sm:$0xff]
    %v43 = vld [vmem:[%s1 + $0x68] sm:$0xff]
    %v44 = vld [vmem:[%s1 + $0x70] sm:$0xff]
    %v45 = vld [vmem:[%s1 + $0x78] sm:$0xff]
    %v46 = vld [vmem:[#allocation2] sm:$0x1]
    %v48 = vlaneseq
    %v49 = vshrl.u32 %v48, 7
    %v50 = vsub.s32 0, %v49
    %v51 = vrot.slane %v46, %v50
    %53 = vmatprep.subr.mxu0 0.0
    %54 = vmatpush1.msra.mxu0 %v30
    %55 = vmatprep.subr.mxu0 0.0
    %56 = vmatpush1.msra.mxu0 %v31
    %57 = vmatprep.subr.mxu0 0.0
    %58 = vmatpush1.msra.mxu0 %v32
    %59 = vmatprep.subr.mxu0 0.0
    %60 = vmatpush1.msra.mxu0 %v33
    %61 = vmatprep.subr.mxu0 0.0
    %62 = vmatpush1.msra.mxu0 %v34
    %63 = vmatprep.subr.mxu0 0.0
    %64 = vmatpush1.msra.mxu0 %v35
    %65 = vmatprep.subr.mxu0 0.0
    %66 = vmatpush1.msra.mxu0 %v36
    %67 = vmatprep.subr.mxu0 0.0
    %68 = vmatpush1.msra.mxu0 %v37
    %69 = vmatprep.subr.mxu0 0.0
    %70 = vmatpush1.msra.mxu0 %v38
    %71 = vmatprep.subr.mxu0 0.0
    %72 = vmatpush1.msra.mxu0 %v39
    %73 = vmatprep.subr.mxu0 0.0
    %74 = vmatpush1.msra.mxu0 %v40
    %75 = vmatprep.subr.mxu0 0.0
    %76 = vmatpush1.msra.mxu0 %v41
    %77 = vmatprep.subr.mxu0 0.0
    %78 = vmatpush1.msra.mxu0 %v42
    %79 = vmatprep.subr.mxu0 0.0
    %80 = vmatpush1.msra.mxu0 %v43
    %81 = vmatprep.subr.mxu0 0.0
    %82 = vmatpush1.msra.mxu0 %v44
    %83 = vmatprep.subr.mxu0 0.0
    %84 = vmatpush1.msra.mxu0 %v45
    %85 = vmatprep.subr.mxu0 0.0
    %86 = vmatpush1.msra.mxu0 0.0
    %87 = vmatprep.subr.mxu0 0.0
    %88 = vmatpush1.msra.mxu0 0.0
    %89 = vmatprep.subr.mxu0 0.0
    %90 = vmatpush1.msra.mxu0 0.0
    %91 = vmatprep.subr.mxu0 0.0
    %92 = vmatpush1.msra.mxu0 0.0
    %93 = vmatprep.subr.mxu0 0.0
    %94 = vmatpush1.msra.mxu0 0.0
    %95 = vmatprep.subr.mxu0 0.0
    %96 = vmatpush1.msra.mxu0 0.0
    %97 = vmatprep.subr.mxu0 0.0
    %98 = vmatpush1.msra.mxu0 0.0
    %99 = vmatprep.subr.mxu0 0.0
    %100 = vmatpush1.msra.mxu0 0.0
    %101 = vmatprep.subr.mxu0 0.0
    %102 = vmatpush1.msra.mxu0 0.0
    %103 = vmatprep.subr.mxu0 0.0
    %104 = vmatpush1.msra.mxu0 0.0
    %105 = vmatprep.subr.mxu0 0.0
    %106 = vmatpush1.msra.mxu0 0.0
    %107 = vmatprep.subr.mxu0 0.0
    %108 = vmatpush1.msra.mxu0 0.0
    %109 = vmatprep.subr.mxu0 0.0
    %110 = vmatpush1.msra.mxu0 0.0
    %111 = vmatprep.subr.mxu0 0.0
    %112 = vmatpush1.msra.mxu0 0.0
    %113 = vmatprep.subr.mxu0 0.0
    %114 = vmatpush1.msra.mxu0 0.0
    %115 = vmatprep.subr.mxu0 0.0
    %116 = vmatpush1.msra.mxu0 0.0
    %117 = vmatprep.mubr.f32.mxu0 0.0
    %118 = vmatmul.mubr.f32.gmra.mrb[0].mxu0 %v26
    %v119 = vpop.f32.mrb[0].mxu0
    %v120 = vadd.f32 %v51, %v119
    %v121 = vpop.f32.mrb[0].mxu0
    %122 = vmatprep.mubr.f32.mxu0 0.0
    %123 = vmatmul.mubr.f32.gmra.mrb[0].mxu0 %v27
    %v124 = vpop.f32.mrb[0].mxu0
    %v125 = vadd.f32 %v51, %v124
    %v126 = vpop.f32.mrb[0].mxu0
    %127 = vmatprep.mubr.f32.mxu0 0.0
    %128 = vmatmul.mubr.f32.gmra.mrb[0].mxu0 %v28
    %v129 = vpop.f32.mrb[0].mxu0
    %v130 = vadd.f32 %v51, %v129
    %v131 = vpop.f32.mrb[0].mxu0
    %132 = vmatprep.mubr.f32.mxu0 0.0
    %133 = vmatmul.mubr.f32.gmra.mrb[0].mxu0 %v29
    %v134 = vpop.f32.mrb[0].mxu0
    %v135 = vadd.f32 %v51, %v134
    %v136 = vpop.f32.mrb[0].mxu0
    %137 = vdwg.mxu0
    %vm138 = vcmask 261120
    %139 = vst.msk [vmem:[%s3] sm:$0xff] %vm138, %v120
    %140 = vst.msk [vmem:[%s3 + $0x8] sm:$0xff] %vm138, %v125
    %141 = vst.msk [vmem:[%s3 + $0x10] sm:$0xff] %vm138, %v130
    %142 = vst.msk [vmem:[%s3 + $0x18] sm:$0xff] %vm138, %v135
    // Predicated region
    $region18: #{channel_transformer.74} parent=1 // pred_check
      _
    $region19: #{channel_transformer.74} parent=1 // pred_check_branch
      %144 = sbr.rel (0) target = $region21
    $region20: #{channel_transformer.74} parent=1 // pred_region
      _
    $region21: #{channel_transformer.74} parent=1 // pred_fallthru
      _
    // Predicated region
    $region22: #{channel_transformer.74} parent=1 // pred_check
      _
    $region23: #{channel_transformer.74} parent=1 // pred_check_branch
      %146 = sbr.rel (0) target = $region25
    $region24: #{channel_transformer.74} parent=1 // pred_region
      _
    $region25: #{channel_transformer.74} parent=1 // pred_fallthru
      _
    %147 = vsyncpa [#allocation3], 1

// kernel: channel_transformer.73
$region0: #{channel_transformer.73}
  #allocation0 [shape = 'u32[]', space=smem, size = 0x4, offset = 0x4, fixed_abs, tag = 'smem constant byte address 0x4 - core index']
  #allocation1 [shape = 'u32[144,128]{1,0:T(1,128)}', space=vmem, size = 0x12000, scoped, tag = 'internal scratch']
  %s0 = inlined_call_operand.vmem [shape: f32[32,512], index: 0, kind: input, shape index: {}]
  %s1 = inlined_call_operand.vmem [shape: f32[512,32], index: 1, kind: input, shape index: {}]
  %s2 = inlined_call_operand.vmem [shape: f32[1,32], index: 2, kind: input, shape index: {}]
  %s3 = inlined_call_operand.vmem [shape: f32[32,32], index: 3, kind: output, shape index: {}]
  %s4 = sld [smem:[#allocation0]]
  $region22: #{channel_transformer.73} parent=0
    _
  %s6 = ssub.s32 1, %s4
  %s7 = scalar_select 0, %s6, %s4
  // Predicated region
  $region2: #{channel_transformer.73} parent=0 // pred_check
    _
  $region3: #{channel_transformer.73} parent=0 // pred_check_branch
    %9 = sbr.rel (0) target = $region5
  $region4: #{channel_transformer.73} parent=0 // pred_region
    _
  $region5: #{channel_transformer.73} parent=0 // pred_fallthru
    _
  // Predicated region
  $region6: #{channel_transformer.73} parent=0 // pred_check
    _
  $region7: #{channel_transformer.73} parent=0 // pred_check_branch
    %11 = sbr.rel (0) target = $region9
  $region8: #{channel_transformer.73} parent=0 // pred_region
    _
  $region9: #{channel_transformer.73} parent=0 // pred_fallthru
    _
  // Predicated region
  $region10: #{channel_transformer.73} parent=0 // pred_check
    _
  $region11: #{channel_transformer.73} parent=0 // pred_check_branch
    %13 = sbr.rel (0) target = $region13
  $region12: #{channel_transformer.73} parent=0 // pred_region
    _
  $region13: #{channel_transformer.73} parent=0 // pred_fallthru
    _
  %v14 = vld [vmem:[%s0] sm:$0xff]
  %v15 = vld [vmem:[%s0 + $0x8] sm:$0xff]
  %v16 = vld [vmem:[%s0 + $0x10] sm:$0xff]
  %v17 = vld [vmem:[%s0 + $0x18] sm:$0xff]
  %v18 = vld [vmem:[%s0 + $0x20] sm:$0xff]
  %v19 = vld [vmem:[%s0 + $0x28] sm:$0xff]
  %v20 = vld [vmem:[%s0 + $0x30] sm:$0xff]
  %v21 = vld [vmem:[%s0 + $0x38] sm:$0xff]
  %v22 = vld [vmem:[%s0 + $0x40] sm:$0xff]
  %v23 = vld [vmem:[%s0 + $0x48] sm:$0xff]
  %v24 = vld [vmem:[%s0 + $0x50] sm:$0xff]
  %v25 = vld [vmem:[%s0 + $0x58] sm:$0xff]
  %v26 = vld [vmem:[%s0 + $0x60] sm:$0xff]
  %v27 = vld [vmem:[%s0 + $0x68] sm:$0xff]
  %v28 = vld [vmem:[%s0 + $0x70] sm:$0xff]
  %v29 = vld [vmem:[%s0 + $0x78] sm:$0xff]
  %v30 = vld [vmem:[%s1] sm:$0xff]
  %v31 = vld [vmem:[%s1 + $0x8] sm:$0xff]
  %v32 = vld [vmem:[%s1 + $0x10] sm:$0xff]
  %v33 = vld [vmem:[%s1 + $0x18] sm:$0xff]
  %v34 = vld [vmem:[%s1 + $0x20] sm:$0xff]
  %v35 = vld [vmem:[%s1 + $0x28] sm:$0xff]
  %v36 = vld [vmem:[%s1 + $0x30] sm:$0xff]
  %v37 = vld [vmem:[%s1 + $0x38] sm:$0xff]
  %v38 = vld [vmem:[%s1 + $0x40] sm:$0xff]
  %v39 = vld [vmem:[%s1 + $0x48] sm:$0xff]
  %v40 = vld [vmem:[%s1 + $0x50] sm:$0xff]
  %v41 = vld [vmem:[%s1 + $0x58] sm:$0xff]
  %v42 = vld [vmem:[%s1 + $0x60] sm:$0xff]
  %v43 = vld [vmem:[%s1 + $0x68] sm:$0xff]
  %v44 = vld [vmem:[%s1 + $0x70] sm:$0xff]
  %v45 = vld [vmem:[%s1 + $0x78] sm:$0xff]
  %v46 = vld [vmem:[%s1 + $0x80] sm:$0xff]
  %v47 = vld [vmem:[%s1 + $0x88] sm:$0xff]
  %v48 = vld [vmem:[%s1 + $0x90] sm:$0xff]
  %v49 = vld [vmem:[%s1 + $0x98] sm:$0xff]
  %v50 = vld [vmem:[%s1 + $0xa0] sm:$0xff]
  %v51 = vld [vmem:[%s1 + $0xa8] sm:$0xff]
  %v52 = vld [vmem:[%s1 + $0xb0] sm:$0xff]
  %v53 = vld [vmem:[%s1 + $0xb8] sm:$0xff]
  %v54 = vld [vmem:[%s1 + $0xc0] sm:$0xff]
  %v55 = vld [vmem:[%s1 + $0xc8] sm:$0xff]
  %v56 = vld [vmem:[%s1 + $0xd0] sm:$0xff]
  %v57 = vld [vmem:[%s1 + $0xd8] sm:$0xff]
  %v58 = vld [vmem:[%s1 + $0xe0] sm:$0xff]
  %v59 = vld [vmem:[%s1 + $0xe8] sm:$0xff]
  %v60 = vld [vmem:[%s1 + $0xf0] sm:$0xff]
  %v61 = vld [vmem:[%s1 + $0xf8] sm:$0xff]
  %v62 = vld [vmem:[%s1 + $0x100] sm:$0xff]
  %v63 = vld [vmem:[%s1 + $0x108] sm:$0xff]
  %v64 = vld [vmem:[%s1 + $0x110] sm:$0xff]
  %v65 = vld [vmem:[%s1 + $0x118] sm:$0xff]
  %v66 = vld [vmem:[%s1 + $0x120] sm:$0xff]
  %v67 = vld [vmem:[%s1 + $0x128] sm:$0xff]
  %v68 = vld [vmem:[%s1 + $0x130] sm:$0xff]
  %v69 = vld [vmem:[%s1 + $0x138] sm:$0xff]
  %v70 = vld [vmem:[%s1 + $0x140] sm:$0xff]
  %v71 = vld [vmem:[%s1 + $0x148] sm:$0xff]
  %v72 = vld [vmem:[%s1 + $0x150] sm:$0xff]
  %v73 = vld [vmem:[%s1 + $0x158] sm:$0xff]
  %v74 = vld [vmem:[%s1 + $0x160] sm:$0xff]
  %v75 = vld [vmem:[%s1 + $0x168] sm:$0xff]
  %v76 = vld [vmem:[%s1 + $0x170] sm:$0xff]
  %v77 = vld [vmem:[%s1 + $0x178] sm:$0xff]
  %v78 = vld [vmem:[%s1 + $0x180] sm:$0xff]
  %v79 = vld [vmem:[%s1 + $0x188] sm:$0xff]
  %v80 = vld [vmem:[%s1 + $0x190] sm:$0xff]
  %v81 = vld [vmem:[%s1 + $0x198] sm:$0xff]
  %v82 = vld [vmem:[%s1 + $0x1a0] sm:$0xff]
  %v83 = vld [vmem:[%s1 + $0x1a8] sm:$0xff]
  %v84 = vld [vmem:[%s1 + $0x1b0] sm:$0xff]
  %v85 = vld [vmem:[%s1 + $0x1b8] sm:$0xff]
  %v86 = vld [vmem:[%s1 + $0x1c0] sm:$0xff]
  %v87 = vld [vmem:[%s1 + $0x1c8] sm:$0xff]
  %v88 = vld [vmem:[%s1 + $0x1d0] sm:$0xff]
  %v89 = vld [vmem:[%s1 + $0x1d8] sm:$0xff]
  %v90 = vld [vmem:[%s1 + $0x1e0] sm:$0xff]
  %v91 = vld [vmem:[%s1 + $0x1e8] sm:$0xff]
  %v92 = vld [vmem:[%s1 + $0x1f0] sm:$0xff]
  %v93 = vld [vmem:[%s1 + $0x1f8] sm:$0xff]
  %v94 = vld [vmem:[%s2] sm:$0x1]
  %v96 = vlaneseq
  %v97 = vshrl.u32 %v96, 7
  %v98 = vsub.s32 0, %v97
  %v99 = vrot.slane %v94, %v98
  %101 = vmatprep.subr.mxu0 0.0
  %102 = vmatpush1.msra.mxu0 %v30
  %103 = vmatprep.subr.mxu0 0.0
  %104 = vmatpush1.msra.mxu0 %v31
  %105 = vmatprep.subr.mxu0 0.0
  %106 = vmatpush1.msra.mxu0 %v32
  %107 = vmatprep.subr.mxu0 0.0
  %108 = vmatpush1.msra.mxu0 %v33
  %109 = vmatprep.subr.mxu0 0.0
  %110 = vmatpush1.msra.mxu0 %v34
  %111 = vmatprep.subr.mxu0 0.0
  %112 = vmatpush1.msra.mxu0 %v35
  %113 = vmatprep.subr.mxu0 0.0
  %114 = vmatpush1.msra.mxu0 %v36
  %115 = vmatprep.subr.mxu0 0.0
  %116 = vmatpush1.msra.mxu0 %v37
  %117 = vmatprep.subr.mxu0 0.0
  %118 = vmatpush1.msra.mxu0 %v38
  %119 = vmatprep.subr.mxu0 0.0
  %120 = vmatpush1.msra.mxu0 %v39
  %121 = vmatprep.subr.mxu0 0.0
  %122 = vmatpush1.msra.mxu0 %v40
  %123 = vmatprep.subr.mxu0 0.0
  %124 = vmatpush1.msra.mxu0 %v41
  %125 = vmatprep.subr.mxu0 0.0
  %126 = vmatpush1.msra.mxu0 %v42
  %127 = vmatprep.subr.mxu0 0.0
  %128 = vmatpush1.msra.mxu0 %v43
  %129 = vmatprep.subr.mxu0 0.0
  %130 = vmatpush1.msra.mxu0 %v44
  %131 = vmatprep.subr.mxu0 0.0
  %132 = vmatpush1.msra.mxu0 %v45
  %133 = vmatprep.subr.mxu0 0.0
  %134 = vmatpush1.msra.mxu0 %v46
  %135 = vmatprep.subr.mxu0 0.0
  %136 = vmatpush1.msra.mxu0 %v47
  %137 = vmatprep.subr.mxu0 0.0
  %138 = vmatpush1.msra.mxu0 %v48
  %139 = vmatprep.subr.mxu0 0.0
  %140 = vmatpush1.msra.mxu0 %v49
  %141 = vmatprep.subr.mxu0 0.0
  %142 = vmatpush1.msra.mxu0 %v50
  %143 = vmatprep.subr.mxu0 0.0
  %144 = vmatpush1.msra.mxu0 %v51
  %145 = vmatprep.subr.mxu0 0.0
  %146 = vmatpush1.msra.mxu0 %v52
  %147 = vmatprep.subr.mxu0 0.0
  %148 = vmatpush1.msra.mxu0 %v53
  %149 = vmatprep.subr.mxu0 0.0
  %150 = vmatpush1.msra.mxu0 %v54
  %151 = vmatprep.subr.mxu0 0.0
  %152 = vmatpush1.msra.mxu0 %v55
  %153 = vmatprep.subr.mxu0 0.0
  %154 = vmatpush1.msra.mxu0 %v56
  %155 = vmatprep.subr.mxu0 0.0
  %156 = vmatpush1.msra.mxu0 %v57
  %157 = vmatprep.subr.mxu0 0.0
  %158 = vmatpush1.msra.mxu0 %v58
  %159 = vmatprep.subr.mxu0 0.0
  %160 = vmatpush1.msra.mxu0 %v59
  %161 = vmatprep.subr.mxu0 0.0
  %162 = vmatpush1.msra.mxu0 %v60
  %163 = vmatprep.subr.mxu0 0.0
  %164 = vmatpush1.msra.mxu0 %v61
  %165 = vmatprep.mubr.f32.mxu0 %v15
  %166 = vmatmul.mubr.f32.gmra.mrb[0].mxu0 %v14
  %v167 = vpop.f32.mrb[0].mxu0
  %v168 = vadd.f32 %v99, %v167
  %v169 = vpop.f32.mrb[0].mxu0
  %170 = vmatprep.mubr.f32.mxu0 %v19
  %171 = vmatmul.mubr.f32.gmra.mrb[0].mxu0 %v18
  %v172 = vpop.f32.mrb[0].mxu0
  %v173 = vadd.f32 %v99, %v172
  %v174 = vpop.f32.mrb[0].mxu0
  %175 = vmatprep.mubr.f32.mxu0 %v23
  %176 = vmatmul.mubr.f32.gmra.mrb[0].mxu0 %v22
  %v177 = vpop.f32.mrb[0].mxu0
  %v178 = vadd.f32 %v99, %v177
  %v179 = vpop.f32.mrb[0].mxu0
  %180 = vmatprep.mubr.f32.mxu0 %v27
  %181 = vmatmul.mubr.f32.gmra.mrb[0].mxu0 %v26
  %v182 = vpop.f32.mrb[0].mxu0
  %v183 = vadd.f32 %v99, %v182
  %v184 = vpop.f32.mrb[0].mxu0
  %185 = vdwg.mxu0
  %186 = vmatprep.subr.mxu0 0.0
  %187 = vmatpush1.msra.mxu0 %v62
  %188 = vmatprep.subr.mxu0 0.0
  %189 = vmatpush1.msra.mxu0 %v63
  %190 = vmatprep.subr.mxu0 0.0
  %191 = vmatpush1.msra.mxu0 %v64
  %192 = vmatprep.subr.mxu0 0.0
  %193 = vmatpush1.msra.mxu0 %v65
  %194 = vmatprep.subr.mxu0 0.0
  %195 = vmatpush1.msra.mxu0 %v66
  %196 = vmatprep.subr.mxu0 0.0
  %197 = vmatpush1.msra.mxu0 %v67
  %198 = vmatprep.subr.mxu0 0.0
  %199 = vmatpush1.msra.mxu0 %v68
  %200 = vmatprep.subr.mxu0 0.0
  %201 = vmatpush1.msra.mxu0 %v69
  %202 = vmatprep.subr.mxu0 0.0
  %203 = vmatpush1.msra.mxu0 %v70
  %204 = vmatprep.subr.mxu0 0.0
  %205 = vmatpush1.msra.mxu0 %v71
  %206 = vmatprep.subr.mxu0 0.0
  %207 = vmatpush1.msra.mxu0 %v72
  %208 = vmatprep.subr.mxu0 0.0
  %209 = vmatpush1.msra.mxu0 %v73
  %210 = vmatprep.subr.mxu0 0.0
  %211 = vmatpush1.msra.mxu0 %v74
  %212 = vmatprep.subr.mxu0 0.0
  %213 = vmatpush1.msra.mxu0 %v75
  %214 = vmatprep.subr.mxu0 0.0
  %215 = vmatpush1.msra.mxu0 %v76
  %216 = vmatprep.subr.mxu0 0.0
  %217 = vmatpush1.msra.mxu0 %v77
  %218 = vmatprep.subr.mxu0 0.0
  %219 = vmatpush1.msra.mxu0 %v78
  %220 = vmatprep.subr.mxu0 0.0
  %221 = vmatpush1.msra.mxu0 %v79
  %222 = vmatprep.subr.mxu0 0.0
  %223 = vmatpush1.msra.mxu0 %v80
  %224 = vmatprep.subr.mxu0 0.0
  %225 = vmatpush1.msra.mxu0 %v81
  %226 = vmatprep.subr.mxu0 0.0
  %227 = vmatpush1.msra.mxu0 %v82
  %228 = vmatprep.subr.mxu0 0.0
  %229 = vmatpush1.msra.mxu0 %v83
  %230 = vmatprep.subr.mxu0 0.0
  %231 = vmatpush1.msra.mxu0 %v84
  %232 = vmatprep.subr.mxu0 0.0
  %233 = vmatpush1.msra.mxu0 %v85
  %234 = vmatprep.subr.mxu0 0.0
  %235 = vmatpush1.msra.mxu0 %v86
  %236 = vmatprep.subr.mxu0 0.0
  %237 = vmatpush1.msra.mxu0 %v87
  %238 = vmatprep.subr.mxu0 0.0
  %239 = vmatpush1.msra.mxu0 %v88
  %240 = vmatprep.subr.mxu0 0.0
  %241 = vmatpush1.msra.mxu0 %v89
  %242 = vmatprep.subr.mxu0 0.0
  %243 = vmatpush1.msra.mxu0 %v90
  %244 = vmatprep.subr.mxu0 0.0
  %245 = vmatpush1.msra.mxu0 %v91
  %246 = vmatprep.subr.mxu0 0.0
  %247 = vmatpush1.msra.mxu0 %v92
  %248 = vmatprep.subr.mxu0 0.0
  %249 = vmatpush1.msra.mxu0 %v93
  %250 = vmatprep.mubr.f32.mxu0 %v17
  %251 = vmatmul.mubr.f32.gmra.mrb[0].mxu0 %v16
  %v252 = vpop.f32.mrb[0].mxu0
  %v253 = vadd.f32 %v168, %v252
  %v254 = vpop.f32.mrb[0].mxu0
  %255 = vmatprep.mubr.f32.mxu0 %v21
  %256 = vmatmul.mubr.f32.gmra.mrb[0].mxu0 %v20
  %v257 = vpop.f32.mrb[0].mxu0
  %v258 = vadd.f32 %v173, %v257
  %v259 = vpop.f32.mrb[0].mxu0
  %260 = vmatprep.mubr.f32.mxu0 %v25
  %261 = vmatmul.mubr.f32.gmra.mrb[0].mxu0 %v24
  %v262 = vpop.f32.mrb[0].mxu0
  %v263 = vadd.f32 %v178, %v262
  %v264 = vpop.f32.mrb[0].mxu0
  %265 = vmatprep.mubr.f32.mxu0 %v29
  %266 = vmatmul.mubr.f32.gmra.mrb[0].mxu0 %v28
  %v267 = vpop.f32.mrb[0].mxu0
  %v268 = vadd.f32 %v183, %v267
  %v269 = vpop.f32.mrb[0].mxu0
  %270 = vdwg.mxu0
  %vm271 = vcmask 261120
  %272 = vst.msk [vmem:[%s3] sm:$0xff] %vm271, %v253
  %273 = vst.msk [vmem:[%s3 + $0x8] sm:$0xff] %vm271, %v258
  %274 = vst.msk [vmem:[%s3 + $0x10] sm:$0xff] %vm271, %v263
  %275 = vst.msk [vmem:[%s3 + $0x18] sm:$0xff] %vm271, %v268
  // Predicated region
  $region14: #{channel_transformer.73} parent=0 // pred_check
    _
  $region15: #{channel_transformer.73} parent=0 // pred_check_branch
    %277 = sbr.rel (0) target = $region17
  $region16: #{channel_transformer.73} parent=0 // pred_region
    _
  $region17: #{channel_transformer.73} parent=0 // pred_fallthru
    _
  // Predicated region
  $region18: #{channel_transformer.73} parent=0 // pred_check
    _
  $region19: #{channel_transformer.73} parent=0 // pred_check_branch
    %279 = sbr.rel (0) target = $region21
  $region20: #{channel_transformer.73} parent=0 // pred_region
    _
  $region21: #{channel_transformer.73} parent=0 // pred_fallthru
    _

// kernel: channel_transformer.76
$region0: #{channel_transformer.76}
  #allocation0 [shape = 'u32[]', space=smem, size = 0x4, offset = 0x4, fixed_abs, tag = 'smem constant byte address 0x4 - core index']
  #allocation1 [shape = 'u32[144,128]{1,0:T(1,128)}', space=vmem, size = 0x12000, scoped, tag = 'internal scratch']
  %s0 = inlined_call_operand.vmem [shape: f32[32,96], index: 0, kind: input, shape index: {}]
  %s1 = inlined_call_operand.vmem [shape: f32[1,96], index: 1, kind: input, shape index: {}]
  %s2 = inlined_call_operand.vmem [shape: f32[1,96], index: 2, kind: input, shape index: {}]
  %s3 = inlined_call_operand.vmem [shape: f32[96,768], index: 3, kind: input, shape index: {}]
  %s4 = inlined_call_operand.vmem [shape: f32[32,768], index: 4, kind: output, shape index: {}]
  %s5 = sld [smem:[#allocation0]]
  $region26: #{channel_transformer.76} parent=0
    _
  %s7 = ssub.s32 1, %s5
  %s8 = scalar_select 0, %s7, %s5
  // Predicated region
  $region2: #{channel_transformer.76} parent=0 // pred_check
    _
  $region3: #{channel_transformer.76} parent=0 // pred_check_branch
    %10 = sbr.rel (0) target = $region5
  $region4: #{channel_transformer.76} parent=0 // pred_region
    _
  $region5: #{channel_transformer.76} parent=0 // pred_fallthru
    _
  // Predicated region
  $region6: #{channel_transformer.76} parent=0 // pred_check
    _
  $region7: #{channel_transformer.76} parent=0 // pred_check_branch
    %12 = sbr.rel (0) target = $region9
  $region8: #{channel_transformer.76} parent=0 // pred_region
    _
  $region9: #{channel_transformer.76} parent=0 // pred_fallthru
    _
  // Predicated region
  $region10: #{channel_transformer.76} parent=0 // pred_check
    _
  $region11: #{channel_transformer.76} parent=0 // pred_check_branch
    %14 = sbr.rel (0) target = $region13
  $region12: #{channel_transformer.76} parent=0 // pred_region
    _
  $region13: #{channel_transformer.76} parent=0 // pred_fallthru
    _
  // Predicated region
  $region14: #{channel_transformer.76} parent=0 // pred_check
    _
  $region15: #{channel_transformer.76} parent=0 // pred_check_branch
    %16 = sbr.rel (0) target = $region17
  $region16: #{channel_transformer.76} parent=0 // pred_region
    _
  $region17: #{channel_transformer.76} parent=0 // pred_fallthru
    _
  %v17 = vld [vmem:[%s0] sm:$0xff]
  %v18 = vld [vmem:[%s0 + $0x8] sm:$0xff]
  %v19 = vld [vmem:[%s0 + $0x10] sm:$0xff]
  %v20 = vld [vmem:[%s0 + $0x18] sm:$0xff]
  %vm21 = vcmask 785408
  %v22 = vsel %vm21, %v17, 0.0
  %23 = vadd.xlane.f32.xlu0 %v22
  %v24 = vpop.xlane.xlu0 %23
  %v25 = vsel %vm21, %v18, 0.0
  %26 = vadd.xlane.f32.xlu0 %v25
  %v27 = vpop.xlane.xlu0 %26
  %v28 = vsel %vm21, %v19, 0.0
  %29 = vadd.xlane.f32.xlu0 %v28
  %v30 = vpop.xlane.xlu0 %29
  %v31 = vsel %vm21, %v20, 0.0
  %32 = vadd.xlane.f32.xlu0 %v31
  %v33 = vpop.xlane.xlu0 %32
  %v34 = vrcp.pop 96.0
  %v35 = vmul.f32 %v24, %v34
  %v36 = vmul.f32 %v27, %v34
  %v37 = vmul.f32 %v30, %v34
  %v38 = vmul.f32 %v33, %v34
  %v39 = vsub.f32 %v17, %v35
  %v40 = vsub.f32 %v18, %v36
  %v41 = vsub.f32 %v19, %v37
  %v42 = vsub.f32 %v20, %v38
  %v43 = vmul.f32 %v39, %v39
  %v44 = vmul.f32 %v40, %v40
  %v45 = vmul.f32 %v41, %v41
  %v46 = vmul.f32 %v42, %v42
  %v47 = vsel %vm21, %v43, 0.0
  %48 = vadd.xlane.f32.xlu0 %v47
  %v49 = vpop.xlane.xlu0 %48
  %v50 = vsel %vm21, %v44, 0.0
  %51 = vadd.xlane.f32.xlu0 %v50
  %v52 = vpop.xlane.xlu0 %51
  %v53 = vsel %vm21, %v45, 0.0
  %54 = vadd.xlane.f32.xlu0 %v53
  %v55 = vpop.xlane.xlu0 %54
  %v56 = vsel %vm21, %v46, 0.0
  %57 = vadd.xlane.f32.xlu0 %v56
  %v58 = vpop.xlane.xlu0 %57
  %v59 = vmul.f32 %v49, %v34
  %v60 = vmul.f32 %v52, %v34
  %v61 = vmul.f32 %v55, %v34
  %v62 = vmul.f32 %v58, %v34
  %v63 = vadd.f32 %v59, 1e-06
  %v64 = vadd.f32 %v60, 1e-06
  %v65 = vadd.f32 %v61, 1e-06
  %v66 = vadd.f32 %v62, 1e-06
  %v67 = vrsqrt.pop %v63
  %v68 = vrsqrt.pop %v64
  %v69 = vrsqrt.pop %v65
  %v70 = vrsqrt.pop %v66
  %v71 = vmul.f32 %v39, %v67
  %v72 = vmul.f32 %v40, %v68
  %v73 = vmul.f32 %v41, %v69
  %v74 = vmul.f32 %v42, %v70
  %v75 = vld [vmem:[%s1] sm:$0x1]
  %v77 = vlaneseq
  %v78 = vshrl.u32 %v77, 7
  %v79 = vsub.s32 0, %v78
  %v80 = vrot.slane %v75, %v79
  %v82 = vmul.f32 %v71, %v80
  %v83 = vmul.f32 %v72, %v80
  %v84 = vmul.f32 %v73, %v80
  %v85 = vmul.f32 %v74, %v80
  %v86 = vld [vmem:[%s2] sm:$0x1]
  %v88 = vlaneseq
  %v89 = vshrl.u32 %v88, 7
  %v90 = vsub.s32 0, %v89
  %v91 = vrot.slane %v86, %v90
  %v93 = vadd.f32 %v82, %v91
  %v94 = vadd.f32 %v83, %v91
  %v95 = vadd.f32 %v84, %v91
  %v96 = vadd.f32 %v85, %v91
  %v97 = vld [vmem:[%s3] sm:$0xff]
  %v98 = vld [vmem:[%s3 + $0x8] sm:$0xff]
  %v99 = vld [vmem:[%s3 + $0x10] sm:$0xff]
  %v100 = vld [vmem:[%s3 + $0x18] sm:$0xff]
  %v101 = vld [vmem:[%s3 + $0x20] sm:$0xff]
  %v102 = vld [vmem:[%s3 + $0x28] sm:$0xff]
  %v103 = vld [vmem:[%s3 + $0x30] sm:$0xff]
  %v104 = vld [vmem:[%s3 + $0x38] sm:$0xff]
  %v105 = vld [vmem:[%s3 + $0x40] sm:$0xff]
  %v106 = vld [vmem:[%s3 + $0x48] sm:$0xff]
  %v107 = vld [vmem:[%s3 + $0x50] sm:$0xff]
  %v108 = vld [vmem:[%s3 + $0x58] sm:$0xff]
  %v109 = vld [vmem:[%s3 + $0x60] sm:$0xff]
  %v110 = vld [vmem:[%s3 + $0x68] sm:$0xff]
  %v111 = vld [vmem:[%s3 + $0x70] sm:$0xff]
  %v112 = vld [vmem:[%s3 + $0x78] sm:$0xff]
  %v113 = vld [vmem:[%s3 + $0x80] sm:$0xff]
  %v114 = vld [vmem:[%s3 + $0x88] sm:$0xff]
  %v115 = vld [vmem:[%s3 + $0x90] sm:$0xff]
  %v116 = vld [vmem:[%s3 + $0x98] sm:$0xff]
  %v117 = vld [vmem:[%s3 + $0xa0] sm:$0xff]
  %v118 = vld [vmem:[%s3 + $0xa8] sm:$0xff]
  %v119 = vld [vmem:[%s3 + $0xb0] sm:$0xff]
  %v120 = vld [vmem:[%s3 + $0xb8] sm:$0xff]
  %v121 = vld [vmem:[%s3 + $0xc0] sm:$0xff]
  %v122 = vld [vmem:[%s3 + $0xc8] sm:$0xff]
  %v123 = vld [vmem:[%s3 + $0xd0] sm:$0xff]
  %v124 = vld [vmem:[%s3 + $0xd8] sm:$0xff]
  %v125 = vld [vmem:[%s3 + $0xe0] sm:$0xff]
  %v126 = vld [vmem:[%s3 + $0xe8] sm:$0xff]
  %v127 = vld [vmem:[%s3 + $0xf0] sm:$0xff]
  %v128 = vld [vmem:[%s3 + $0xf8] sm:$0xff]
  %v129 = vld [vmem:[%s3 + $0x100] sm:$0xff]
  %v130 = vld [vmem:[%s3 + $0x108] sm:$0xff]
  %v131 = vld [vmem:[%s3 + $0x110] sm:$0xff]
  %v132 = vld [vmem:[%s3 + $0x118] sm:$0xff]
  %v133 = vld [vmem:[%s3 + $0x120] sm:$0xff]
  %v134 = vld [vmem:[%s3 + $0x128] sm:$0xff]
  %v135 = vld [vmem:[%s3 + $0x130] sm:$0xff]
  %v136 = vld [vmem:[%s3 + $0x138] sm:$0xff]
  %v137 = vld [vmem:[%s3 + $0x140] sm:$0xff]
  %v138 = vld [vmem:[%s3 + $0x148] sm:$0xff]
  %v139 = vld [vmem:[%s3 + $0x150] sm:$0xff]
  %v140 = vld [vmem:[%s3 + $0x158] sm:$0xff]
  %v141 = vld [vmem:[%s3 + $0x160] sm:$0xff]
  %v142 = vld [vmem:[%s3 + $0x168] sm:$0xff]
  %v143 = vld [vmem:[%s3 + $0x170] sm:$0xff]
  %v144 = vld [vmem:[%s3 + $0x178] sm:$0xff]
  %v145 = vld [vmem:[%s3 + $0x180] sm:$0xff]
  %v146 = vld [vmem:[%s3 + $0x188] sm:$0xff]
  %v147 = vld [vmem:[%s3 + $0x190] sm:$0xff]
  %v148 = vld [vmem:[%s3 + $0x198] sm:$0xff]
  %v149 = vld [vmem:[%s3 + $0x1a0] sm:$0xff]
  %v150 = vld [vmem:[%s3 + $0x1a8] sm:$0xff]
  %v151 = vld [vmem:[%s3 + $0x1b0] sm:$0xff]
  %v152 = vld [vmem:[%s3 + $0x1b8] sm:$0xff]
  %v153 = vld [vmem:[%s3 + $0x1c0] sm:$0xff]
  %v154 = vld [vmem:[%s3 + $0x1c8] sm:$0xff]
  %v155 = vld [vmem:[%s3 + $0x1d0] sm:$0xff]
  %v156 = vld [vmem:[%s3 + $0x1d8] sm:$0xff]
  %v157 = vld [vmem:[%s3 + $0x1e0] sm:$0xff]
  %v158 = vld [vmem:[%s3 + $0x1e8] sm:$0xff]
  %v159 = vld [vmem:[%s3 + $0x1f0] sm:$0xff]
  %v160 = vld [vmem:[%s3 + $0x1f8] sm:$0xff]
  %v161 = vld [vmem:[%s3 + $0x200] sm:$0xff]
  %v162 = vld [vmem:[%s3 + $0x208] sm:$0xff]
  %v163 = vld [vmem:[%s3 + $0x210] sm:$0xff]
  %v164 = vld [vmem:[%s3 + $0x218] sm:$0xff]
  %v165 = vld [vmem:[%s3 + $0x220] sm:$0xff]
  %v166 = vld [vmem:[%s3 + $0x228] sm:$0xff]
  %v167 = vld [vmem:[%s3 + $0x230] sm:$0xff]
  %v168 = vld [vmem:[%s3 + $0x238] sm:$0xff]
  %v170 = vsel %vm21, %v93, 0
  %v173 = vsel %vm21, %v94, 0
  %v176 = vsel %vm21, %v95, 0
  %v179 = vsel %vm21, %v96, 0
  %181 = vmatprep.subr.mxu0 %v98
  %182 = vmatpush1.msra.mxu0 %v97
  %183 = vmatprep.subr.mxu0 %v104
  %184 = vmatpush1.msra.mxu0 %v103
  %185 = vmatprep.subr.mxu0 %v110
  %186 = vmatpush1.msra.mxu0 %v109
  %187 = vmatprep.subr.mxu0 %v116
  %188 = vmatpush1.msra.mxu0 %v115
  %189 = vmatprep.subr.mxu0 %v122
  %190 = vmatpush1.msra.mxu0 %v121
  %191 = vmatprep.subr.mxu0 %v128
  %192 = vmatpush1.msra.mxu0 %v127
  %193 = vmatprep.subr.mxu0 %v134
  %194 = vmatpush1.msra.mxu0 %v133
  %195 = vmatprep.subr.mxu0 %v140
  %196 = vmatpush1.msra.mxu0 %v139
  %197 = vmatprep.subr.mxu0 %v146
  %198 = vmatpush1.msra.mxu0 %v145
  %199 = vmatprep.subr.mxu0 %v152
  %200 = vmatpush1.msra.mxu0 %v151
  %201 = vmatprep.subr.mxu0 %v158
  %202 = vmatpush1.msra.mxu0 %v157
  %203 = vmatprep.subr.mxu0 %v164
  %204 = vmatpush1.msra.mxu0 %v163
  %205 = vmatprep.subr.mxu0 0.0
  %206 = vmatpush1.msra.mxu0 0.0
  %207 = vmatprep.subr.mxu0 0.0
  %208 = vmatpush1.msra.mxu0 0.0
  %209 = vmatprep.subr.mxu0 0.0
  %210 = vmatpush1.msra.mxu0 0.0
  %211 = vmatprep.subr.mxu0 0.0
  %212 = vmatpush1.msra.mxu0 0.0
  %213 = vmatprep.subr.mxu0 0.0
  %214 = vmatpush1.msra.mxu0 0.0
  %215 = vmatprep.subr.mxu0 0.0
  %216 = vmatpush1.msra.mxu0 0.0
  %217 = vmatprep.subr.mxu0 0.0
  %218 = vmatpush1.msra.mxu0 0.0
  %219 = vmatprep.subr.mxu0 0.0
  %220 = vmatpush1.msra.mxu0 0.0
  %221 = vmatprep.subr.mxu0 0.0
  %222 = vmatpush1.msra.mxu0 0.0
  %223 = vmatprep.subr.mxu0 0.0
  %224 = vmatpush1.msra.mxu0 0.0
  %225 = vmatprep.subr.mxu0 0.0
  %226 = vmatpush1.msra.mxu0 0.0
  %227 = vmatprep.subr.mxu0 0.0
  %228 = vmatpush1.msra.mxu0 0.0
  %229 = vmatprep.subr.mxu0 0.0
  %230 = vmatpush1.msra.mxu0 0.0
  %231 = vmatprep.subr.mxu0 0.0
  %232 = vmatpush1.msra.mxu0 0.0
  %233 = vmatprep.subr.mxu0 0.0
  %234 = vmatpush1.msra.mxu0 0.0
  %235 = vmatprep.subr.mxu0 0.0
  %236 = vmatpush1.msra.mxu0 0.0
  %237 = vmatprep.subr.mxu0 0.0
  %238 = vmatpush1.msra.mxu0 0.0
  %239 = vmatprep.subr.mxu0 0.0
  %240 = vmatpush1.msra.mxu0 0.0
  %241 = vmatprep.subr.mxu0 0.0
  %242 = vmatpush1.msra.mxu0 0.0
  %243 = vmatprep.subr.mxu0 0.0
  %244 = vmatpush1.msra.mxu0 0.0
  %245 = vmatprep.mubr.f32.mxu0 0.0
  %246 = vmatmul.mubr.f32.gmra.mrb[0].mxu0 %v170
  %v247 = vpop.f32.mrb[0].mxu0
  %v248 = vadd.f32 0.0, %v247
  %v249 = vpop.f32.mrb[0].mxu0
  %v250 = vadd.f32 0.0, %v249
  %251 = vmatprep.mubr.f32.mxu0 0.0
  %252 = vmatmul.mubr.f32.gmra.mrb[0].mxu0 %v173
  %v253 = vpop.f32.mrb[0].mxu0
  %v254 = vadd.f32 0.0, %v253
  %v255 = vpop.f32.mrb[0].mxu0
  %v256 = vadd.f32 0.0, %v255
  %257 = vmatprep.mubr.f32.mxu0 0.0
  %258 = vmatmul.mubr.f32.gmra.mrb[0].mxu0 %v176
  %v259 = vpop.f32.mrb[0].mxu0
  %v260 = vadd.f32 0.0, %v259
  %v261 = vpop.f32.mrb[0].mxu0
  %v262 = vadd.f32 0.0, %v261
  %263 = vmatprep.mubr.f32.mxu0 0.0
  %264 = vmatmul.mubr.f32.gmra.mrb[0].mxu0 %v179
  %v265 = vpop.f32.mrb[0].mxu0
  %v266 = vadd.f32 0.0, %v265
  %v267 = vpop.f32.mrb[0].mxu0
  %v268 = vadd.f32 0.0, %v267
  %269 = vdwg.mxu0
  %270 = vmatprep.subr.mxu0 %v100
  %271 = vmatpush1.msra.mxu0 %v99
  %272 = vmatprep.subr.mxu0 %v106
  %273 = vmatpush1.msra.mxu0 %v105
  %274 = vmatprep.subr.mxu0 %v112
  %275 = vmatpush1.msra.mxu0 %v111
  %276 = vmatprep.subr.mxu0 %v118
  %277 = vmatpush1.msra.mxu0 %v117
  %278 = vmatprep.subr.mxu0 %v124
  %279 = vmatpush1.msra.mxu0 %v123
  %280 = vmatprep.subr.mxu0 %v130
  %281 = vmatpush1.msra.mxu0 %v129
  %282 = vmatprep.subr.mxu0 %v136
  %283 = vmatpush1.msra.mxu0 %v135
  %284 = vmatprep.subr.mxu0 %v142
  %285 = vmatpush1.msra.mxu0 %v141
  %286 = vmatprep.subr.mxu0 %v148
  %287 = vmatpush1.msra.mxu0 %v147
  %288 = vmatprep.subr.mxu0 %v154
  %289 = vmatpush1.msra.mxu0 %v153
  %290 = vmatprep.subr.mxu0 %v160
  %291 = vmatpush1.msra.mxu0 %v159
  %292 = vmatprep.subr.mxu0 %v166
  %293 = vmatpush1.msra.mxu0 %v165
  %294 = vmatprep.subr.mxu0 0.0
  %295 = vmatpush1.msra.mxu0 0.0
  %296 = vmatprep.subr.mxu0 0.0
  %297 = vmatpush1.msra.mxu0 0.0
  %298 = vmatprep.subr.mxu0 0.0
  %299 = vmatpush1.msra.mxu0 0.0
  %300 = vmatprep.subr.mxu0 0.0
  %301 = vmatpush1.msra.mxu0 0.0
  %302 = vmatprep.subr.mxu0 0.0
  %303 = vmatpush1.msra.mxu0 0.0
  %304 = vmatprep.subr.mxu0 0.0
  %305 = vmatpush1.msra.mxu0 0.0
  %306 = vmatprep.subr.mxu0 0.0
  %307 = vmatpush1.msra.mxu0 0.0
  %308 = vmatprep.subr.mxu0 0.0
  %309 = vmatpush1.msra.mxu0 0.0
  %310 = vmatprep.subr.mxu0 0.0
  %311 = vmatpush1.msra.mxu0 0.0
  %312 = vmatprep.subr.mxu0 0.0
  %313 = vmatpush1.msra.mxu0 0.0
  %314 = vmatprep.subr.mxu0 0.0
  %315 = vmatpush1.msra.mxu0 0.0
  %316 = vmatprep.subr.mxu0 0.0
  %317 = vmatpush1.msra.mxu0 0.0
  %318 = vmatprep.subr.mxu0 0.0
  %319 = vmatpush1.msra.mxu0 0.0
  %320 = vmatprep.subr.mxu0 0.0
  %321 = vmatpush1.msra.mxu0 0.0
  %322 = vmatprep.subr.mxu0 0.0
  %323 = vmatpush1.msra.mxu0 0.0
  %324 = vmatprep.subr.mxu0 0.0
  %325 = vmatpush1.msra.mxu0 0.0
  %326 = vmatprep.subr.mxu0 0.0
  %327 = vmatpush1.msra.mxu0 0.0
  %328 = vmatprep.subr.mxu0 0.0
  %329 = vmatpush1.msra.mxu0 0.0
  %330 = vmatprep.subr.mxu0 0.0
  %331 = vmatpush1.msra.mxu0 0.0
  %332 = vmatprep.subr.mxu0 0.0
  %333 = vmatpush1.msra.mxu0 0.0
  %334 = vmatprep.mubr.f32.mxu0 0.0
  %335 = vmatmul.mubr.f32.gmra.mrb[0].mxu0 %v170
  %v336 = vpop.f32.mrb[0].mxu0
  %v337 = vadd.f32 0.0, %v336
  %v338 = vpop.f32.mrb[0].mxu0
  %v339 = vadd.f32 0.0, %v338
  %340 = vmatprep.mubr.f32.mxu0 0.0
  %341 = vmatmul.mubr.f32.gmra.mrb[0].mxu0 %v173
  %v342 = vpop.f32.mrb[0].mxu0
  %v343 = vadd.f32 0.0, %v342
  %v344 = vpop.f32.mrb[0].mxu0
  %v345 = vadd.f32 0.0, %v344
  %346 = vmatprep.mubr.f32.mxu0 0.0
  %347 = vmatmul.mubr.f32.gmra.mrb[0].mxu0 %v176
  %v348 = vpop.f32.mrb[0].mxu0
  %v349 = vadd.f32 0.0, %v348
  %v350 = vpop.f32.mrb[0].mxu0
  %v351 = vadd.f32 0.0, %v350
  %352 = vmatprep.mubr.f32.mxu0 0.0
  %353 = vmatmul.mubr.f32.gmra.mrb[0].mxu0 %v179
  %v354 = vpop.f32.mrb[0].mxu0
  %v355 = vadd.f32 0.0, %v354
  %v356 = vpop.f32.mrb[0].mxu0
  %v357 = vadd.f32 0.0, %v356
  %358 = vdwg.mxu0
  %359 = vmatprep.subr.mxu0 %v102
  %360 = vmatpush1.msra.mxu0 %v101
  %361 = vmatprep.subr.mxu0 %v108
  %362 = vmatpush1.msra.mxu0 %v107
  %363 = vmatprep.subr.mxu0 %v114
  %364 = vmatpush1.msra.mxu0 %v113
  %365 = vmatprep.subr.mxu0 %v120
  %366 = vmatpush1.msra.mxu0 %v119
  %367 = vmatprep.subr.mxu0 %v126
  %368 = vmatpush1.msra.mxu0 %v125
  %369 = vmatprep.subr.mxu0 %v132
  %370 = vmatpush1.msra.mxu0 %v131
  %371 = vmatprep.subr.mxu0 %v138
  %372 = vmatpush1.msra.mxu0 %v137
  %373 = vmatprep.subr.mxu0 %v144
  %374 = vmatpush1.msra.mxu0 %v143
  %375 = vmatprep.subr.mxu0 %v150
  %376 = vmatpush1.msra.mxu0 %v149
  %377 = vmatprep.subr.mxu0 %v156
  %378 = vmatpush1.msra.mxu0 %v155
  %379 = vmatprep.subr.mxu0 %v162
  %380 = vmatpush1.msra.mxu0 %v161
  %381 = vmatprep.subr.mxu0 %v168
  %382 = vmatpush1.msra.mxu0 %v167
  %383 = vmatprep.subr.mxu0 0.0
  %384 = vmatpush1.msra.mxu0 0.0
  %385 = vmatprep.subr.mxu0 0.0
  %386 = vmatpush1.msra.mxu0 0.0
  %387 = vmatprep.subr.mxu0 0.0
  %388 = vmatpush1.msra.mxu0 0.0
  %389 = vmatprep.subr.mxu0 0.0
  %390 = vmatpush1.msra.mxu0 0.0
  %391 = vmatprep.subr.mxu0 0.0
  %392 = vmatpush1.msra.mxu0 0.0
  %393 = vmatprep.subr.mxu0 0.0
  %394 = vmatpush1.msra.mxu0 0.0
  %395 = vmatprep.subr.mxu0 0.0
  %396 = vmatpush1.msra.mxu0 0.0
  %397 = vmatprep.subr.mxu0 0.0
  %398 = vmatpush1.msra.mxu0 0.0
  %399 = vmatprep.subr.mxu0 0.0
  %400 = vmatpush1.msra.mxu0 0.0
  %401 = vmatprep.subr.mxu0 0.0
  %402 = vmatpush1.msra.mxu0 0.0
  %403 = vmatprep.subr.mxu0 0.0
  %404 = vmatpush1.msra.mxu0 0.0
  %405 = vmatprep.subr.mxu0 0.0
  %406 = vmatpush1.msra.mxu0 0.0
  %407 = vmatprep.subr.mxu0 0.0
  %408 = vmatpush1.msra.mxu0 0.0
  %409 = vmatprep.subr.mxu0 0.0
  %410 = vmatpush1.msra.mxu0 0.0
  %411 = vmatprep.subr.mxu0 0.0
  %412 = vmatpush1.msra.mxu0 0.0
  %413 = vmatprep.subr.mxu0 0.0
  %414 = vmatpush1.msra.mxu0 0.0
  %415 = vmatprep.subr.mxu0 0.0
  %416 = vmatpush1.msra.mxu0 0.0
  %417 = vmatprep.subr.mxu0 0.0
  %418 = vmatpush1.msra.mxu0 0.0
  %419 = vmatprep.subr.mxu0 0.0
  %420 = vmatpush1.msra.mxu0 0.0
  %421 = vmatprep.subr.mxu0 0.0
  %422 = vmatpush1.msra.mxu0 0.0
  %423 = vmatprep.mubr.f32.mxu0 0.0
  %424 = vmatmul.mubr.f32.gmra.mrb[0].mxu0 %v170
  %v425 = vpop.f32.mrb[0].mxu0
  %v426 = vadd.f32 0.0, %v425
  %v427 = vpop.f32.mrb[0].mxu0
  %v428 = vadd.f32 0.0, %v427
  %429 = vmatprep.mubr.f32.mxu0 0.0
  %430 = vmatmul.mubr.f32.gmra.mrb[0].mxu0 %v173
  %v431 = vpop.f32.mrb[0].mxu0
  %v432 = vadd.f32 0.0, %v431
  %v433 = vpop.f32.mrb[0].mxu0
  %v434 = vadd.f32 0.0, %v433
  %435 = vmatprep.mubr.f32.mxu0 0.0
  %436 = vmatmul.mubr.f32.gmra.mrb[0].mxu0 %v176
  %v437 = vpop.f32.mrb[0].mxu0
  %v438 = vadd.f32 0.0, %v437
  %v439 = vpop.f32.mrb[0].mxu0
  %v440 = vadd.f32 0.0, %v439
  %441 = vmatprep.mubr.f32.mxu0 0.0
  %442 = vmatmul.mubr.f32.gmra.mrb[0].mxu0 %v179
  %v443 = vpop.f32.mrb[0].mxu0
  %v444 = vadd.f32 0.0, %v443
  %v445 = vpop.f32.mrb[0].mxu0
  %v446 = vadd.f32 0.0, %v445
  %447 = vdwg.mxu0
  %448 = vst [vmem:[%s4] sm:$0xff] %v248
  %449 = vst [vmem:[%s4 + $0x8] sm:$0xff] %v250
  %450 = vst [vmem:[%s4 + $0x10] sm:$0xff] %v337
  %451 = vst [vmem:[%s4 + $0x18] sm:$0xff] %v339
  %452 = vst [vmem:[%s4 + $0x20] sm:$0xff] %v426
  %453 = vst [vmem:[%s4 + $0x28] sm:$0xff] %v428
  %454 = vst [vmem:[%s4 + $0x30] sm:$0xff] %v254
  %455 = vst [vmem:[%s4 + $0x38] sm:$0xff] %v256
  %456 = vst [vmem:[%s4 + $0x40] sm:$0xff] %v343
  %457 = vst [vmem:[%s4 + $0x48] sm:$0xff] %v345
  %458 = vst [vmem:[%s4 + $0x50] sm:$0xff] %v432
  %459 = vst [vmem:[%s4 + $0x58] sm:$0xff] %v434
  %460 = vst [vmem:[%s4 + $0x60] sm:$0xff] %v260
  %461 = vst [vmem:[%s4 + $0x68] sm:$0xff] %v262
  %462 = vst [vmem:[%s4 + $0x70] sm:$0xff] %v349
  %463 = vst [vmem:[%s4 + $0x78] sm:$0xff] %v351
  %464 = vst [vmem:[%s4 + $0x80] sm:$0xff] %v438
  %465 = vst [vmem:[%s4 + $0x88] sm:$0xff] %v440
  %466 = vst [vmem:[%s4 + $0x90] sm:$0xff] %v266
  %467 = vst [vmem:[%s4 + $0x98] sm:$0xff] %v268
  %468 = vst [vmem:[%s4 + $0xa0] sm:$0xff] %v355
  %469 = vst [vmem:[%s4 + $0xa8] sm:$0xff] %v357
  %470 = vst [vmem:[%s4 + $0xb0] sm:$0xff] %v444
  %471 = vst [vmem:[%s4 + $0xb8] sm:$0xff] %v446
  // Predicated region
  $region18: #{channel_transformer.76} parent=0 // pred_check
    _
  $region19: #{channel_transformer.76} parent=0 // pred_check_branch
    %473 = sbr.rel (0) target = $region21
  $region20: #{channel_transformer.76} parent=0 // pred_region
    _
  $region21: #{channel_transformer.76} parent=0 // pred_fallthru
    _
  // Predicated region
  $region22: #{channel_transformer.76} parent=0 // pred_check
    _
  $region23: #{channel_transformer.76} parent=0 // pred_check_branch
    %475 = sbr.rel (0) target = $region25
  $region24: #{channel_transformer.76} parent=0 // pred_region
    _
  $region25: #{channel_transformer.76} parent=0 // pred_fallthru
    _

// kernel: channel_transformer.79
$region0: #{channel_transformer.79}
  #allocation0 [shape = 'u32[]', space=smem, size = 0x4, offset = 0x4, fixed_abs, tag = 'smem constant byte address 0x4 - core index']
  #allocation1 [shape = 'u32[144,128]{1,0:T(1,128)}', space=vmem, size = 0x12000, scoped, tag = 'internal scratch']
  %s0 = inlined_call_operand.vmem [shape: f32[32,32], index: 0, kind: input, shape index: {}]
  %s1 = inlined_call_operand.vmem [shape: f32[1,32], index: 1, kind: input, shape index: {}]
  %s2 = inlined_call_operand.vmem [shape: f32[1,32], index: 2, kind: input, shape index: {}]
  %s3 = inlined_call_operand.vmem [shape: f32[32,128], index: 3, kind: input, shape index: {}]
  %s4 = inlined_call_operand.vmem [shape: f32[32,128], index: 4, kind: output, shape index: {}]
  %s5 = sld [smem:[#allocation0]]
  $region26: #{channel_transformer.79} parent=0
    _
  %s7 = ssub.s32 1, %s5
  %s8 = scalar_select 0, %s7, %s5
  // Predicated region
  $region2: #{channel_transformer.79} parent=0 // pred_check
    _
  $region3: #{channel_transformer.79} parent=0 // pred_check_branch
    %10 = sbr.rel (0) target = $region5
  $region4: #{channel_transformer.79} parent=0 // pred_region
    _
  $region5: #{channel_transformer.79} parent=0 // pred_fallthru
    _
  // Predicated region
  $region6: #{channel_transformer.79} parent=0 // pred_check
    _
  $region7: #{channel_transformer.79} parent=0 // pred_check_branch
    %12 = sbr.rel (0) target = $region9
  $region8: #{channel_transformer.79} parent=0 // pred_region
    _
  $region9: #{channel_transformer.79} parent=0 // pred_fallthru
    _
  // Predicated region
  $region10: #{channel_transformer.79} parent=0 // pred_check
    _
  $region11: #{channel_transformer.79} parent=0 // pred_check_branch
    %14 = sbr.rel (0) target = $region13
  $region12: #{channel_transformer.79} parent=0 // pred_region
    _
  $region13: #{channel_transformer.79} parent=0 // pred_fallthru
    _
  // Predicated region
  $region14: #{channel_transformer.79} parent=0 // pred_check
    _
  $region15: #{channel_transformer.79} parent=0 // pred_check_branch
    %16 = sbr.rel (0) target = $region17
  $region16: #{channel_transformer.79} parent=0 // pred_region
    _
  $region17: #{channel_transformer.79} parent=0 // pred_fallthru
    _
  %v17 = vld [vmem:[%s0] sm:$0xff]
  %v18 = vld [vmem:[%s0 + $0x8] sm:$0xff]
  %v19 = vld [vmem:[%s0 + $0x10] sm:$0xff]
  %v20 = vld [vmem:[%s0 + $0x18] sm:$0xff]
  %vm21 = vcmask 261120
  %v22 = vsel %vm21, %v17, 0.0
  %23 = vadd.xlane.f32.xlu0 %v22
  %v24 = vpop.xlane.xlu0 %23
  %v25 = vsel %vm21, %v18, 0.0
  %26 = vadd.xlane.f32.xlu0 %v25
  %v27 = vpop.xlane.xlu0 %26
  %v28 = vsel %vm21, %v19, 0.0
  %29 = vadd.xlane.f32.xlu0 %v28
  %v30 = vpop.xlane.xlu0 %29
  %v31 = vsel %vm21, %v20, 0.0
  %32 = vadd.xlane.f32.xlu0 %v31
  %v33 = vpop.xlane.xlu0 %32
  %v34 = vrcp.pop 32.0
  %v35 = vmul.f32 %v24, %v34
  %v36 = vmul.f32 %v27, %v34
  %v37 = vmul.f32 %v30, %v34
  %v38 = vmul.f32 %v33, %v34
  %v39 = vsub.f32 %v17, %v35
  %v40 = vsub.f32 %v18, %v36
  %v41 = vsub.f32 %v19, %v37
  %v42 = vsub.f32 %v20, %v38
  %v43 = vmul.f32 %v39, %v39
  %v44 = vmul.f32 %v40, %v40
  %v45 = vmul.f32 %v41, %v41
  %v46 = vmul.f32 %v42, %v42
  %v47 = vsel %vm21, %v43, 0.0
  %48 = vadd.xlane.f32.xlu0 %v47
  %v49 = vpop.xlane.xlu0 %48
  %v50 = vsel %vm21, %v44, 0.0
  %51 = vadd.xlane.f32.xlu0 %v50
  %v52 = vpop.xlane.xlu0 %51
  %v53 = vsel %vm21, %v45, 0.0
  %54 = vadd.xlane.f32.xlu0 %v53
  %v55 = vpop.xlane.xlu0 %54
  %v56 = vsel %vm21, %v46, 0.0
  %57 = vadd.xlane.f32.xlu0 %v56
  %v58 = vpop.xlane.xlu0 %57
  %v59 = vmul.f32 %v49, %v34
  %v60 = vmul.f32 %v52, %v34
  %v61 = vmul.f32 %v55, %v34
  %v62 = vmul.f32 %v58, %v34
  %v63 = vadd.f32 %v59, 1e-06
  %v64 = vadd.f32 %v60, 1e-06
  %v65 = vadd.f32 %v61, 1e-06
  %v66 = vadd.f32 %v62, 1e-06
  %v67 = vrsqrt.pop %v63
  %v68 = vrsqrt.pop %v64
  %v69 = vrsqrt.pop %v65
  %v70 = vrsqrt.pop %v66
  %v71 = vmul.f32 %v39, %v67
  %v72 = vmul.f32 %v40, %v68
  %v73 = vmul.f32 %v41, %v69
  %v74 = vmul.f32 %v42, %v70
  %v75 = vld [vmem:[%s1] sm:$0x1]
  %v77 = vlaneseq
  %v78 = vshrl.u32 %v77, 7
  %v79 = vsub.s32 0, %v78
  %v80 = vrot.slane %v75, %v79
  %v82 = vmul.f32 %v71, %v80
  %v83 = vmul.f32 %v72, %v80
  %v84 = vmul.f32 %v73, %v80
  %v85 = vmul.f32 %v74, %v80
  %v86 = vld [vmem:[%s2] sm:$0x1]
  %v88 = vlaneseq
  %v89 = vshrl.u32 %v88, 7
  %v90 = vsub.s32 0, %v89
  %v91 = vrot.slane %v86, %v90
  %v93 = vadd.f32 %v82, %v91
  %v94 = vadd.f32 %v83, %v91
  %v95 = vadd.f32 %v84, %v91
  %v96 = vadd.f32 %v85, %v91
  %v97 = vld [vmem:[%s3] sm:$0xff]
  %v98 = vld [vmem:[%s3 + $0x8] sm:$0xff]
  %v99 = vld [vmem:[%s3 + $0x10] sm:$0xff]
  %v100 = vld [vmem:[%s3 + $0x18] sm:$0xff]
  %v102 = vsel %vm21, %v93, 0
  %v105 = vsel %vm21, %v94, 0
  %v108 = vsel %vm21, %v95, 0
  %v111 = vsel %vm21, %v96, 0
  %113 = vmatprep.subr.mxu0 0.0
  %114 = vmatpush1.msra.mxu0 %v97
  %115 = vmatprep.subr.mxu0 0.0
  %116 = vmatpush1.msra.mxu0 %v98
  %117 = vmatprep.subr.mxu0 0.0
  %118 = vmatpush1.msra.mxu0 %v99
  %119 = vmatprep.subr.mxu0 0.0
  %120 = vmatpush1.msra.mxu0 %v100
  %121 = vmatprep.subr.mxu0 0.0
  %122 = vmatpush1.msra.mxu0 0.0
  %123 = vmatprep.subr.mxu0 0.0
  %124 = vmatpush1.msra.mxu0 0.0
  %125 = vmatprep.subr.mxu0 0.0
  %126 = vmatpush1.msra.mxu0 0.0
  %127 = vmatprep.subr.mxu0 0.0
  %128 = vmatpush1.msra.mxu0 0.0
  %129 = vmatprep.subr.mxu0 0.0
  %130 = vmatpush1.msra.mxu0 0.0
  %131 = vmatprep.subr.mxu0 0.0
  %132 = vmatpush1.msra.mxu0 0.0
  %133 = vmatprep.subr.mxu0 0.0
  %134 = vmatpush1.msra.mxu0 0.0
  %135 = vmatprep.subr.mxu0 0.0
  %136 = vmatpush1.msra.mxu0 0.0
  %137 = vmatprep.subr.mxu0 0.0
  %138 = vmatpush1.msra.mxu0 0.0
  %139 = vmatprep.subr.mxu0 0.0
  %140 = vmatpush1.msra.mxu0 0.0
  %141 = vmatprep.subr.mxu0 0.0
  %142 = vmatpush1.msra.mxu0 0.0
  %143 = vmatprep.subr.mxu0 0.0
  %144 = vmatpush1.msra.mxu0 0.0
  %145 = vmatprep.subr.mxu0 0.0
  %146 = vmatpush1.msra.mxu0 0.0
  %147 = vmatprep.subr.mxu0 0.0
  %148 = vmatpush1.msra.mxu0 0.0
  %149 = vmatprep.subr.mxu0 0.0
  %150 = vmatpush1.msra.mxu0 0.0
  %151 = vmatprep.subr.mxu0 0.0
  %152 = vmatpush1.msra.mxu0 0.0
  %153 = vmatprep.subr.mxu0 0.0
  %154 = vmatpush1.msra.mxu0 0.0
  %155 = vmatprep.subr.mxu0 0.0
  %156 = vmatpush1.msra.mxu0 0.0
  %157 = vmatprep.subr.mxu0 0.0
  %158 = vmatpush1.msra.mxu0 0.0
  %159 = vmatprep.subr.mxu0 0.0
  %160 = vmatpush1.msra.mxu0 0.0
  %161 = vmatprep.subr.mxu0 0.0
  %162 = vmatpush1.msra.mxu0 0.0
  %163 = vmatprep.subr.mxu0 0.0
  %164 = vmatpush1.msra.mxu0 0.0
  %165 = vmatprep.subr.mxu0 0.0
  %166 = vmatpush1.msra.mxu0 0.0
  %167 = vmatprep.subr.mxu0 0.0
  %168 = vmatpush1.msra.mxu0 0.0
  %169 = vmatprep.subr.mxu0 0.0
  %170 = vmatpush1.msra.mxu0 0.0
  %171 = vmatprep.subr.mxu0 0.0
  %172 = vmatpush1.msra.mxu0 0.0
  %173 = vmatprep.subr.mxu0 0.0
  %174 = vmatpush1.msra.mxu0 0.0
  %175 = vmatprep.subr.mxu0 0.0
  %176 = vmatpush1.msra.mxu0 0.0
  %177 = vmatprep.mubr.f32.mxu0 0.0
  %178 = vmatmul.mubr.f32.gmra.mrb[0].mxu0 %v102
  %v179 = vpop.f32.mrb[0].mxu0
  %v180 = vadd.f32 0.0, %v179
  %v181 = vpop.f32.mrb[0].mxu0
  %182 = vmatprep.mubr.f32.mxu0 0.0
  %183 = vmatmul.mubr.f32.gmra.mrb[0].mxu0 %v105
  %v184 = vpop.f32.mrb[0].mxu0
  %v185 = vadd.f32 0.0, %v184
  %v186 = vpop.f32.mrb[0].mxu0
  %187 = vmatprep.mubr.f32.mxu0 0.0
  %188 = vmatmul.mubr.f32.gmra.mrb[0].mxu0 %v108
  %v189 = vpop.f32.mrb[0].mxu0
  %v190 = vadd.f32 0.0, %v189
  %v191 = vpop.f32.mrb[0].mxu0
  %192 = vmatprep.mubr.f32.mxu0 0.0
  %193 = vmatmul.mubr.f32.gmra.mrb[0].mxu0 %v111
  %v194 = vpop.f32.mrb[0].mxu0
  %v195 = vadd.f32 0.0, %v194
  %v196 = vpop.f32.mrb[0].mxu0
  %197 = vdwg.mxu0
  %198 = vst [vmem:[%s4] sm:$0xff] %v180
  %199 = vst [vmem:[%s4 + $0x8] sm:$0xff] %v185
  %200 = vst [vmem:[%s4 + $0x10] sm:$0xff] %v190
  %201 = vst [vmem:[%s4 + $0x18] sm:$0xff] %v195
  // Predicated region
  $region18: #{channel_transformer.79} parent=0 // pred_check
    _
  $region19: #{channel_transformer.79} parent=0 // pred_check_branch
    %203 = sbr.rel (0) target = $region21
  $region20: #{channel_transformer.79} parent=0 // pred_region
    _
  $region21: #{channel_transformer.79} parent=0 // pred_fallthru
    _
  // Predicated region
  $region22: #{channel_transformer.79} parent=0 // pred_check
    _
  $region23: #{channel_transformer.79} parent=0 // pred_check_branch
    %205 = sbr.rel (0) target = $region25
  $region24: #{channel_transformer.79} parent=0 // pred_region
    _
  $region25: #{channel_transformer.79} parent=0 // pred_fallthru
    _

// kernel: channel_transformer.80
$region0: #{channel_transformer.80}
  #allocation0 [shape = 'u32[]', space=smem, size = 0x4, offset = 0x4, fixed_abs, tag = 'smem constant byte address 0x4 - core index']
  #allocation1 [shape = 'u32[144,128]{1,0:T(1,128)}', space=vmem, size = 0x12000, scoped, tag = 'internal scratch']
  %s0 = inlined_call_operand.vmem [shape: f32[2,4,96,16], index: 0, kind: input, shape index: {}]
  %s1 = inlined_call_operand.vmem [shape: f32[2,4,16,96], index: 1, kind: input, shape index: {}]
  %s2 = inlined_call_operand.vmem [shape: f32[2,4,16,96], index: 2, kind: input, shape index: {}]
  %s3 = inlined_call_operand.vmem [shape: f32[2,16,96], index: 3, kind: output, shape index: {}]
  %s4 = sld [smem:[#allocation0]]
  $region53: #{channel_transformer.80} parent=0
    _
  %s6 = ssub.s32 1, %s4
  %s7 = scalar_select 0, %s6, %s4
  loop: start=0, step=1, limit=10
  $region2: #{channel_transformer.80} parent=0 // loop_pre_header
    _
  $region3: #{channel_transformer.80} parent=0 // loop_header
    %s9 = sphi 0, %s13
    %p10 = scmp.ge.s32.totalorder %s9, 10
    %s16 = sphi 0, %s28
    %s17 = sphi 0, %s24
    %s18 = sphi 0, %s16
    %s19 = sphi 0, %s17
    %s20 = sphi 0, %s18
    %s21 = sphi 0, %s19
    %s33 = sphi 0, %s35
    %s36 = sphi 0, %s33
    %s37 = sphi 0, %s36
    %s53 = sphi 0, %s37
    %s61 = sphi 0, %s63
    %s64 = sphi 0, %s61
    %s65 = sphi 0, %s64
    %s81 = sphi 0, %s65
    %s89 = sphi 0, %s91
    %s92 = sphi 0, %s89
    %s93 = sphi 0, %s92
    %s109 = sphi 0, %s93
    %s115 = sphi 0, %s117
    %s118 = sphi 0, %s115
    %s119 = sphi 0, %s118
    %s135 = sphi 0, %s119
  $region4: #{channel_transformer.80} parent=0 // loop_header_branch
    %12 = sbr.rel (%p10) target = $region8
  $region5: #{channel_transformer.80} parent=0 // loop_body
    %s14 = ssub.s32 %s9, 1
    %s15 = ssub.s32 %s9, 2
    %s22 = sadd.s32 1, %s17
    %p23 = scmp.ge.s32.totalorder %s22, 4
    %s24 = scalar_select %p23, 0, %s22
    %s25 = sadd.s32 1, %s16
    %s26 = scalar_select %p23, %s25, %s16
    %p27 = scmp.ge.s32.totalorder %s26, 2
    %s28 = scalar_select %p27, 0, %s26
    %s29 = ssub.s32 %s16, %s28
    %s30 = ssub.s32 %s17, %s24
    %s31 = sor.u32 %s29, %s30
    %p32 = scmp.eq.s32.totalorder %s31, 0
    %s34 = sadd.s32 %s33, 1
    %s35 = scalar_select %p32, %s33, %s34
    %p38 = pneg %p32
    %p39 = scmp.eq.s32.totalorder %s9, 7
    %p40 = por %p38, %p39
    %p41 = scmp.ne.s32.totalorder %s33, %s36
    %p42 = scmp.eq.s32.totalorder %s9, 0
    %p43 = por %p41, %p42
    %p44 = scmp.ne.s32.totalorder %s33, %s36
    %p45 = scmp.eq.s32.totalorder %s14, 7
    %p46 = por %p44, %p45
    %p47 = scmp.ne.s32.totalorder %s36, %s37
    %p48 = scmp.eq.s32.totalorder %s14, 0
    %p49 = por %p47, %p48
    %p50 = scmp.ne.s32.totalorder %s36, %s37
    %p51 = scmp.eq.s32.totalorder %s15, 7
    %p52 = por %p50, %p51
    %p54 = scmp.ne.s32.totalorder %s37, %s53
    %p55 = scmp.eq.s32.totalorder %s15, 0
    %p56 = por %p54, %p55
    %s57 = ssub.s32 %s16, %s28
    %s58 = ssub.s32 %s17, %s24
    %s59 = sor.u32 %s57, %s58
    %p60 = scmp.eq.s32.totalorder %s59, 0
    %s62 = sadd.s32 %s61, 1
    %s63 = scalar_select %p60, %s61, %s62
    %p66 = pneg %p60
    %p67 = scmp.eq.s32.totalorder %s9, 7
    %p68 = por %p66, %p67
    %p69 = scmp.ne.s32.totalorder %s61, %s64
    %p70 = scmp.eq.s32.totalorder %s9, 0
    %p71 = por %p69, %p70
    %p72 = scmp.ne.s32.totalorder %s61, %s64
    %p73 = scmp.eq.s32.totalorder %s14, 7
    %p74 = por %p72, %p73
    %p75 = scmp.ne.s32.totalorder %s64, %s65
    %p76 = scmp.eq.s32.totalorder %s14, 0
    %p77 = por %p75, %p76
    %p78 = scmp.ne.s32.totalorder %s64, %s65
    %p79 = scmp.eq.s32.totalorder %s15, 7
    %p80 = por %p78, %p79
    %p82 = scmp.ne.s32.totalorder %s65, %s81
    %p83 = scmp.eq.s32.totalorder %s15, 0
    %p84 = por %p82, %p83
    %s85 = ssub.s32 %s16, %s28
    %s86 = ssub.s32 %s17, %s24
    %s87 = sor.u32 %s85, %s86
    %p88 = scmp.eq.s32.totalorder %s87, 0
    %s90 = sadd.s32 %s89, 1
    %s91 = scalar_select %p88, %s89, %s90
    %p94 = pneg %p88
    %p95 = scmp.eq.s32.totalorder %s9, 7
    %p96 = por %p94, %p95
    %p97 = scmp.ne.s32.totalorder %s89, %s92
    %p98 = scmp.eq.s32.totalorder %s9, 0
    %p99 = por %p97, %p98
    %p100 = scmp.ne.s32.totalorder %s89, %s92
    %p101 = scmp.eq.s32.totalorder %s14, 7
    %p102 = por %p100, %p101
    %p103 = scmp.ne.s32.totalorder %s92, %s93
    %p104 = scmp.eq.s32.totalorder %s14, 0
    %p105 = por %p103, %p104
    %p106 = scmp.ne.s32.totalorder %s92, %s93
    %p107 = scmp.eq.s32.totalorder %s15, 7
    %p108 = por %p106, %p107
    %p110 = scmp.ne.s32.totalorder %s93, %s109
    %p111 = scmp.eq.s32.totalorder %s15, 0
    %p112 = por %p110, %p111
    %s113 = ssub.s32 %s16, %s28
    %p114 = scmp.eq.s32.totalorder %s113, 0
    %s116 = sadd.s32 %s115, 1
    %s117 = scalar_select %p114, %s115, %s116
    %p120 = pneg %p114
    %p121 = scmp.eq.s32.totalorder %s9, 7
    %p122 = por %p120, %p121
    %p123 = scmp.ne.s32.totalorder %s115, %s118
    %p124 = scmp.eq.s32.totalorder %s9, 0
    %p125 = por %p123, %p124
    %p126 = scmp.ne.s32.totalorder %s115, %s118
    %p127 = scmp.eq.s32.totalorder %s14, 7
    %p128 = por %p126, %p127
    %p129 = scmp.ne.s32.totalorder %s118, %s119
    %p130 = scmp.eq.s32.totalorder %s14, 0
    %p131 = por %p129, %p130
    %p132 = scmp.ne.s32.totalorder %s118, %s119
    %p133 = scmp.eq.s32.totalorder %s15, 7
    %p134 = por %p132, %p133
    %p136 = scmp.ne.s32.totalorder %s119, %s135
    %p137 = scmp.eq.s32.totalorder %s15, 0
    %p138 = por %p136, %p137
    %p139 = scmp.le.s32.totalorder 1, %s9
    %p140 = scmp.lt.s32.totalorder %s9, 9
    %p141 = pnand %p139, %p140
    %p142 = pneg %p141
    // Predicated region
    $region9: #{channel_transformer.80} parent=5 // pred_check
      _
    $region10: #{channel_transformer.80} parent=5 // pred_check_branch
      %144 = sbr.rel (%p141) target = $region12
    $region11: #{channel_transformer.80} parent=5 // pred_region
      %s145 = ssub.s32 %s9, 1
    $region12: #{channel_transformer.80} parent=5 // pred_fallthru
      _
    %p146 = scmp.lt.s32.totalorder %s9, 8
    // Predicated region
    $region13: #{channel_transformer.80} parent=5 // pred_check
      %p147 = pneg %p146
    $region14: #{channel_transformer.80} parent=5 // pred_check_branch
      %149 = sbr.rel (%p147) target = $region16
    $region15: #{channel_transformer.80} parent=5 // pred_region
      // Predicated region
      $region17: #{channel_transformer.80} parent=15 // pred_check
        %p150 = pneg %p43
      $region18: #{channel_transformer.80} parent=15 // pred_check_branch
        %152 = sbr.rel (%p150) target = $region20
      $region19: #{channel_transformer.80} parent=15 // pred_region
        %p153 = scmp.lt.s32.totalorder %s16, 1
        %s154 = scalar_select %p153, %s16, 1
        %p155 = scmp.lt.s32.totalorder %s17, 3
        %s156 = scalar_select %p155, %s17, 3
        %s157 = smul.addr %s156, 12
        %s158 = smul.addr %s154, 48
        %s159 = sadd.s32 %s157, %s158
        %s160 = smul.addr %s159, 8
        %s161 = scalar_lea.vmem %s0, %s160
      $region20: #{channel_transformer.80} parent=15 // pred_fallthru
        _
      // Predicated region
      $region21: #{channel_transformer.80} parent=15 // pred_check
        %p162 = pneg %p71
      $region22: #{channel_transformer.80} parent=15 // pred_check_branch
        %164 = sbr.rel (%p162) target = $region24
      $region23: #{channel_transformer.80} parent=15 // pred_region
        %p165 = scmp.lt.s32.totalorder %s16, 1
        %s166 = scalar_select %p165, %s16, 1
        %p167 = scmp.lt.s32.totalorder %s17, 3
        %s168 = scalar_select %p167, %s17, 3
        %s169 = smul.addr %s168, 2
        %s170 = smul.addr %s166, 8
        %s171 = sadd.s32 %s169, %s170
        %s172 = smul.addr %s171, 8
        %s173 = scalar_lea.vmem %s1, %s172
      $region24: #{channel_transformer.80} parent=15 // pred_fallthru
        _
      // Predicated region
      $region25: #{channel_transformer.80} parent=15 // pred_check
        %p174 = pneg %p99
      $region26: #{channel_transformer.80} parent=15 // pred_check_branch
        %176 = sbr.rel (%p174) target = $region28
      $region27: #{channel_transformer.80} parent=15 // pred_region
        %p177 = scmp.lt.s32.totalorder %s16, 1
        %s178 = scalar_select %p177, %s16, 1
        %p179 = scmp.lt.s32.totalorder %s17, 3
        %s180 = scalar_select %p179, %s17, 3
        %s181 = smul.addr %s180, 2
        %s182 = smul.addr %s178, 8
        %s183 = sadd.s32 %s181, %s182
        %s184 = smul.addr %s183, 8
        %s185 = scalar_lea.vmem %s2, %s184
      $region28: #{channel_transformer.80} parent=15 // pred_fallthru
        _
    $region16: #{channel_transformer.80} parent=5 // pred_fallthru
      _
    %p186 = scmp.le.s32.totalorder 1, %s9
    %p187 = scmp.lt.s32.totalorder %s9, 9
    %p188 = pnand %p186, %p187
    %p189 = pneg %p188
    // Predicated region
    $region29: #{channel_transformer.80} parent=5 // pred_check
      _
    $region30: #{channel_transformer.80} parent=5 // pred_check_branch
      %191 = sbr.rel (%p188) target = $region32
    $region31: #{channel_transformer.80} parent=5 // pred_region
      %s192 = ssub.s32 %s9, 1
      %p193 = scmp.lt.s32.totalorder %s18, 1
      %s194 = scalar_select %p193, %s18, 1
      %p195 = scmp.lt.s32.totalorder %s19, 3
      %s196 = scalar_select %p195, %s19, 3
      %s197 = smul.addr %s196, 12
      %s198 = smul.addr %s194, 48
      %s199 = sadd.s32 %s197, %s198
      %s200 = smul.addr %s199, 8
      %s201 = scalar_lea.vmem %s0, %s200
      %p202 = pneg %p49
      %p203 = pneg %p46
      %p204 = scmp.lt.s32.totalorder %s18, 1
      %s205 = scalar_select %p204, %s18, 1
      %p206 = scmp.lt.s32.totalorder %s19, 3
      %s207 = scalar_select %p206, %s19, 3
      %s208 = smul.addr %s207, 2
      %s209 = smul.addr %s205, 8
      %s210 = sadd.s32 %s208, %s209
      %s211 = smul.addr %s210, 8
      %s212 = scalar_lea.vmem %s1, %s211
      %p213 = pneg %p77
      %p214 = pneg %p74
      %p215 = scmp.lt.s32.totalorder %s18, 1
      %s216 = scalar_select %p215, %s18, 1
      %p217 = scmp.lt.s32.totalorder %s19, 3
      %s218 = scalar_select %p217, %s19, 3
      %s219 = smul.addr %s218, 2
      %s220 = smul.addr %s216, 8
      %s221 = sadd.s32 %s219, %s220
      %s222 = smul.addr %s221, 8
      %s223 = scalar_lea.vmem %s2, %s222
      %p224 = pneg %p105
      %p225 = pneg %p102
      %p226 = pneg %p131
      %p227 = pneg %p128
      %p228 = scmp.lt.s32.totalorder %s18, 1
      %s229 = scalar_select %p228, %s18, 1
      %s230 = smul.addr %s229, 2
      %s231 = smul.addr %s230, 8
      %s232 = scalar_lea.vmem %s3, %s231
      %p233 = scmp.lt.s32.totalorder %s18, 1
      %s234 = scalar_select %p233, %s18, 1
      %p235 = scmp.lt.s32.totalorder %s19, 3
      %s236 = scalar_select %p235, %s19, 3
      %s237 = smul.addr %s236, 12
      %s238 = smul.addr %s234, 48
      %s239 = sadd.s32 %s237, %s238
      %s240 = smul.addr %s239, 8
      %s241 = scalar_lea.vmem %s0, %s240
      %p242 = scmp.lt.s32.totalorder %s18, 1
      %s243 = scalar_select %p242, %s18, 1
      %p244 = scmp.lt.s32.totalorder %s19, 3
      %s245 = scalar_select %p244, %s19, 3
      %s246 = smul.addr %s245, 2
      %s247 = smul.addr %s243, 8
      %s248 = sadd.s32 %s246, %s247
      %s249 = smul.addr %s248, 8
      %s250 = scalar_lea.vmem %s1, %s249
      %p251 = scmp.lt.s32.totalorder %s18, 1
      %s252 = scalar_select %p251, %s18, 1
      %p253 = scmp.lt.s32.totalorder %s19, 3
      %s254 = scalar_select %p253, %s19, 3
      %s255 = smul.addr %s254, 2
      %s256 = smul.addr %s252, 8
      %s257 = sadd.s32 %s255, %s256
      %s258 = smul.addr %s257, 8
      %s259 = scalar_lea.vmem %s2, %s258
      %p260 = scmp.lt.s32.totalorder %s18, 1
      %s261 = scalar_select %p260, %s18, 1
      %s262 = smul.addr %s261, 2
      %s263 = smul.addr %s262, 8
      %s264 = scalar_lea.vmem %s3, %s263
      %v265 = vld [vmem:[%s241] sm:$0xff]
      %v266 = vld [vmem:[%s241 + $0x8] sm:$0xff]
      %v267 = vld [vmem:[%s241 + $0x10] sm:$0xff]
      %v268 = vld [vmem:[%s241 + $0x18] sm:$0xff]
      %v269 = vld [vmem:[%s241 + $0x20] sm:$0xff]
      %v270 = vld [vmem:[%s241 + $0x28] sm:$0xff]
      %v271 = vld [vmem:[%s241 + $0x30] sm:$0xff]
      %v272 = vld [vmem:[%s241 + $0x38] sm:$0xff]
      %v273 = vld [vmem:[%s241 + $0x40] sm:$0xff]
      %v274 = vld [vmem:[%s241 + $0x48] sm:$0xff]
      %v275 = vld [vmem:[%s241 + $0x50] sm:$0xff]
      %v276 = vld [vmem:[%s241 + $0x58] sm:$0xff]
      %v277 = vld [vmem:[%s250] sm:$0xff]
      %v278 = vld [vmem:[%s250 + $0x8] sm:$0xff]
      %v279 = vld [vmem:[%s259] sm:$0xff]
      %v280 = vld [vmem:[%s259 + $0x8] sm:$0xff]
      %vm281 = vcmask 130048
      %v283 = vsel %vm281, %v265, 0
      %v286 = vsel %vm281, %v266, 0
      %v289 = vsel %vm281, %v267, 0
      %v292 = vsel %vm281, %v268, 0
      %v295 = vsel %vm281, %v269, 0
      %v298 = vsel %vm281, %v270, 0
      %v301 = vsel %vm281, %v271, 0
      %v304 = vsel %vm281, %v272, 0
      %v307 = vsel %vm281, %v273, 0
      %v310 = vsel %vm281, %v274, 0
      %v313 = vsel %vm281, %v275, 0
      %v316 = vsel %vm281, %v276, 0
      %318 = vmatprep.subr.mxu0 0.0
      %319 = vmatpush1.msra.mxu0 %v277
      %320 = vmatprep.subr.mxu0 0.0
      %321 = vmatpush1.msra.mxu0 %v278
      %322 = vmatprep.subr.mxu0 0.0
      %323 = vmatpush1.msra.mxu0 0.0
      %324 = vmatprep.subr.mxu0 0.0
      %325 = vmatpush1.msra.mxu0 0.0
      %326 = vmatprep.subr.mxu0 0.0
      %327 = vmatpush1.msra.mxu0 0.0
      %328 = vmatprep.subr.mxu0 0.0
      %329 = vmatpush1.msra.mxu0 0.0
      %330 = vmatprep.subr.mxu0 0.0
      %331 = vmatpush1.msra.mxu0 0.0
      %332 = vmatprep.subr.mxu0 0.0
      %333 = vmatpush1.msra.mxu0 0.0
      %334 = vmatprep.subr.mxu0 0.0
      %335 = vmatpush1.msra.mxu0 0.0
      %336 = vmatprep.subr.mxu0 0.0
      %337 = vmatpush1.msra.mxu0 0.0
      %338 = vmatprep.subr.mxu0 0.0
      %339 = vmatpush1.msra.mxu0 0.0
      %340 = vmatprep.subr.mxu0 0.0
      %341 = vmatpush1.msra.mxu0 0.0
      %342 = vmatprep.subr.mxu0 0.0
      %343 = vmatpush1.msra.mxu0 0.0
      %344 = vmatprep.subr.mxu0 0.0
      %345 = vmatpush1.msra.mxu0 0.0
      %346 = vmatprep.subr.mxu0 0.0
      %347 = vmatpush1.msra.mxu0 0.0
      %348 = vmatprep.subr.mxu0 0.0
      %349 = vmatpush1.msra.mxu0 0.0
      %350 = vmatprep.subr.mxu0 0.0
      %351 = vmatpush1.msra.mxu0 0.0
      %352 = vmatprep.subr.mxu0 0.0
      %353 = vmatpush1.msra.mxu0 0.0
      %354 = vmatprep.subr.mxu0 0.0
      %355 = vmatpush1.msra.mxu0 0.0
      %356 = vmatprep.subr.mxu0 0.0
      %357 = vmatpush1.msra.mxu0 0.0
      %358 = vmatprep.subr.mxu0 0.0
      %359 = vmatpush1.msra.mxu0 0.0
      %360 = vmatprep.subr.mxu0 0.0
      %361 = vmatpush1.msra.mxu0 0.0
      %362 = vmatprep.subr.mxu0 0.0
      %363 = vmatpush1.msra.mxu0 0.0
      %364 = vmatprep.subr.mxu0 0.0
      %365 = vmatpush1.msra.mxu0 0.0
      %366 = vmatprep.subr.mxu0 0.0
      %367 = vmatpush1.msra.mxu0 0.0
      %368 = vmatprep.subr.mxu0 0.0
      %369 = vmatpush1.msra.mxu0 0.0
      %370 = vmatprep.subr.mxu0 0.0
      %371 = vmatpush1.msra.mxu0 0.0
      %372 = vmatprep.subr.mxu0 0.0
      %373 = vmatpush1.msra.mxu0 0.0
      %374 = vmatprep.subr.mxu0 0.0
      %375 = vmatpush1.msra.mxu0 0.0
      %376 = vmatprep.subr.mxu0 0.0
      %377 = vmatpush1.msra.mxu0 0.0
      %378 = vmatprep.subr.mxu0 0.0
      %379 = vmatpush1.msra.mxu0 0.0
      %380 = vmatprep.subr.mxu0 0.0
      %381 = vmatpush1.msra.mxu0 0.0
      %382 = vmatprep.mubr.f32.mxu0 0.0
      %383 = vmatmul.mubr.f32.gmra.mrb[0].mxu0 %v283
      %v384 = vpop.f32.mrb[0].mxu0
      %v385 = vadd.f32 0.0, %v384
      %v386 = vpop.f32.mrb[0].mxu0
      %387 = vmatprep.mubr.f32.mxu0 0.0
      %388 = vmatmul.mubr.f32.gmra.mrb[0].mxu0 %v286
      %v389 = vpop.f32.mrb[0].mxu0
      %v390 = vadd.f32 0.0, %v389
      %v391 = vpop.f32.mrb[0].mxu0
      %392 = vmatprep.mubr.f32.mxu0 0.0
      %393 = vmatmul.mubr.f32.gmra.mrb[0].mxu0 %v289
      %v394 = vpop.f32.mrb[0].mxu0
      %v395 = vadd.f32 0.0, %v394
      %v396 = vpop.f32.mrb[0].mxu0
      %397 = vmatprep.mubr.f32.mxu0 0.0
      %398 = vmatmul.mubr.f32.gmra.mrb[0].mxu0 %v292
      %v399 = vpop.f32.mrb[0].mxu0
      %v400 = vadd.f32 0.0, %v399
      %v401 = vpop.f32.mrb[0].mxu0
      %402 = vmatprep.mubr.f32.mxu0 0.0
      %403 = vmatmul.mubr.f32.gmra.mrb[0].mxu0 %v295
      %v404 = vpop.f32.mrb[0].mxu0
      %v405 = vadd.f32 0.0, %v404
      %v406 = vpop.f32.mrb[0].mxu0
      %407 = vmatprep.mubr.f32.mxu0 0.0
      %408 = vmatmul.mubr.f32.gmra.mrb[0].mxu0 %v298
      %v409 = vpop.f32.mrb[0].mxu0
      %v410 = vadd.f32 0.0, %v409
      %v411 = vpop.f32.mrb[0].mxu0
      %412 = vmatprep.mubr.f32.mxu0 0.0
      %413 = vmatmul.mubr.f32.gmra.mrb[0].mxu0 %v301
      %v414 = vpop.f32.mrb[0].mxu0
      %v415 = vadd.f32 0.0, %v414
      %v416 = vpop.f32.mrb[0].mxu0
      %417 = vmatprep.mubr.f32.mxu0 0.0
      %418 = vmatmul.mubr.f32.gmra.mrb[0].mxu0 %v304
      %v419 = vpop.f32.mrb[0].mxu0
      %v420 = vadd.f32 0.0, %v419
      %v421 = vpop.f32.mrb[0].mxu0
      %422 = vmatprep.mubr.f32.mxu0 0.0
      %423 = vmatmul.mubr.f32.gmra.mrb[0].mxu0 %v307
      %v424 = vpop.f32.mrb[0].mxu0
      %v425 = vadd.f32 0.0, %v424
      %v426 = vpop.f32.mrb[0].mxu0
      %427 = vmatprep.mubr.f32.mxu0 0.0
      %428 = vmatmul.mubr.f32.gmra.mrb[0].mxu0 %v310
      %v429 = vpop.f32.mrb[0].mxu0
      %v430 = vadd.f32 0.0, %v429
      %v431 = vpop.f32.mrb[0].mxu0
      %432 = vmatprep.mubr.f32.mxu0 0.0
      %433 = vmatmul.mubr.f32.gmra.mrb[0].mxu0 %v313
      %v434 = vpop.f32.mrb[0].mxu0
      %v435 = vadd.f32 0.0, %v434
      %v436 = vpop.f32.mrb[0].mxu0
      %437 = vmatprep.mubr.f32.mxu0 0.0
      %438 = vmatmul.mubr.f32.gmra.mrb[0].mxu0 %v316
      %v439 = vpop.f32.mrb[0].mxu0
      %v440 = vadd.f32 0.0, %v439
      %v441 = vpop.f32.mrb[0].mxu0
      %442 = vdwg.mxu0
      %v443 = vmul.f32 %v385, 0.03227486
      %v444 = vmul.f32 %v390, 0.03227486
      %v445 = vmul.f32 %v395, 0.03227486
      %v446 = vmul.f32 %v400, 0.03227486
      %v447 = vmul.f32 %v405, 0.03227486
      %v448 = vmul.f32 %v410, 0.03227486
      %v449 = vmul.f32 %v415, 0.03227486
      %v450 = vmul.f32 %v420, 0.03227486
      %v451 = vmul.f32 %v425, 0.03227486
      %v452 = vmul.f32 %v430, 0.03227486
      %v453 = vmul.f32 %v435, 0.03227486
      %v454 = vmul.f32 %v440, 0.03227486
      %v455 = vlaneseq
      %v456 = vand.u32 %v455, 127
      %vm457 = vcmp.ge.s32.totalorder %v456, 0
      %vm458 = vcmp.lt.s32.totalorder %v456, 32
      %vm459 = vmand %vm457, %vm458
      %v460 = vsel %vm459, 1, 0
      %v461 = vcvt.s32.f32 %v460
      %v462 = vsel %vm459, %v443, 0.0
      %v463 = vsel %vm459, %v444, 0.0
      %v464 = vsel %vm459, %v445, 0.0
      %v465 = vsel %vm459, %v446, 0.0
      %v466 = vsel %vm459, %v447, 0.0
      %v467 = vsel %vm459, %v448, 0.0
      %v468 = vsel %vm459, %v449, 0.0
      %v469 = vsel %vm459, %v450, 0.0
      %v470 = vsel %vm459, %v451, 0.0
      %v471 = vsel %vm459, %v452, 0.0
      %v472 = vsel %vm459, %v453, 0.0
      %v473 = vsel %vm459, %v454, 0.0
      %vm474 = vcmask 785408
      %v475 = vsel %vm474, %v462, 0.0
      %v476 = vsel %vm474, %v463, 0.0
      %v477 = vadd.f32 %v475, %v476
      %v478 = vsel %vm474, %v464, 0.0
      %v479 = vadd.f32 %v477, %v478
      %v480 = vsel %vm474, %v465, 0.0
      %v481 = vadd.f32 %v479, %v480
      %v482 = vsel %vm474, %v466, 0.0
      %v483 = vadd.f32 %v481, %v482
      %v484 = vsel %vm474, %v467, 0.0
      %v485 = vadd.f32 %v483, %v484
      %v486 = vsel %vm474, %v468, 0.0
      %v487 = vadd.f32 %v485, %v486
      %v488 = vsel %vm474, %v469, 0.0
      %v489 = vadd.f32 %v487, %v488
      %v490 = vsel %vm474, %v470, 0.0
      %v491 = vadd.f32 %v489, %v490
      %v492 = vsel %vm474, %v471, 0.0
      %v493 = vadd.f32 %v491, %v492
      %v494 = vsel %vm474, %v472, 0.0
      %v495 = vadd.f32 %v493, %v494
      %v496 = vsel %vm474, %v473, 0.0
      %v497 = vadd.f32 %v495, %v496
      %498 = vadd.xlane.f32.xlu0 %v497
      %v499 = vpop.xlane.xlu0 %498
      %v500 = vrot.slane %v499, 4
      %v501 = vadd.f32 %v499, %v500
      %v502 = vrot.slane %v501, 2
      %v503 = vadd.f32 %v501, %v502
      %v504 = vrot.slane %v503, 1
      %v505 = vadd.f32 %v503, %v504
      %s506 = vtos %v505
      %v507 = vstv %s506
      %v508 = vrcp.pop 3072.0
      %v509 = vmul.f32 %v507, %v508
      %v510 = vsub.f32 %v443, %v509
      %v511 = vsub.f32 %v444, %v509
      %v512 = vsub.f32 %v445, %v509
      %v513 = vsub.f32 %v446, %v509
      %v514 = vsub.f32 %v447, %v509
      %v515 = vsub.f32 %v448, %v509
      %v516 = vsub.f32 %v449, %v509
      %v517 = vsub.f32 %v450, %v509
      %v518 = vsub.f32 %v451, %v509
      %v519 = vsub.f32 %v452, %v509
      %v520 = vsub.f32 %v453, %v509
      %v521 = vsub.f32 %v454, %v509
      %v522 = vmul.f32 %v510, %v510
      %v523 = vmul.f32 %v511, %v511
      %v524 = vmul.f32 %v512, %v512
      %v525 = vmul.f32 %v513, %v513
      %v526 = vmul.f32 %v514, %v514
      %v527 = vmul.f32 %v515, %v515
      %v528 = vmul.f32 %v516, %v516
      %v529 = vmul.f32 %v517, %v517
      %v530 = vmul.f32 %v518, %v518
      %v531 = vmul.f32 %v519, %v519
      %v532 = vmul.f32 %v520, %v520
      %v533 = vmul.f32 %v521, %v521
      %v534 = vsel %vm459, %v522, 0.0
      %v535 = vsel %vm459, %v523, 0.0
      %v536 = vsel %vm459, %v524, 0.0
      %v537 = vsel %vm459, %v525, 0.0
      %v538 = vsel %vm459, %v526, 0.0
      %v539 = vsel %vm459, %v527, 0.0
      %v540 = vsel %vm459, %v528, 0.0
      %v541 = vsel %vm459, %v529, 0.0
      %v542 = vsel %vm459, %v530, 0.0
      %v543 = vsel %vm459, %v531, 0.0
      %v544 = vsel %vm459, %v532, 0.0
      %v545 = vsel %vm459, %v533, 0.0
      %v546 = vsel %vm474, %v534, 0.0
      %v547 = vsel %vm474, %v535, 0.0
      %v548 = vadd.f32 %v546, %v547
      %v549 = vsel %vm474, %v536, 0.0
      %v550 = vadd.f32 %v548, %v549
      %v551 = vsel %vm474, %v537, 0.0
      %v552 = vadd.f32 %v550, %v551
      %v553 = vsel %vm474, %v538, 0.0
      %v554 = vadd.f32 %v552, %v553
      %v555 = vsel %vm474, %v539, 0.0
      %v556 = vadd.f32 %v554, %v555
      %v557 = vsel %vm474, %v540, 0.0
      %v558 = vadd.f32 %v556, %v557
      %v559 = vsel %vm474, %v541, 0.0
      %v560 = vadd.f32 %v558, %v559
      %v561 = vsel %vm474, %v542, 0.0
      %v562 = vadd.f32 %v560, %v561
      %v563 = vsel %vm474, %v543, 0.0
      %v564 = vadd.f32 %v562, %v563
      %v565 = vsel %vm474, %v544, 0.0
      %v566 = vadd.f32 %v564, %v565
      %v567 = vsel %vm474, %v545, 0.0
      %v568 = vadd.f32 %v566, %v567
      %569 = vadd.xlane.f32.xlu0 %v568
      %v570 = vpop.xlane.xlu0 %569
      %v571 = vrot.slane %v570, 4
      %v572 = vadd.f32 %v570, %v571
      %v573 = vrot.slane %v572, 2
      %v574 = vadd.f32 %v572, %v573
      %v575 = vrot.slane %v574, 1
      %v576 = vadd.f32 %v574, %v575
      %s577 = vtos %v576
      %v578 = vstv %s577
      %v579 = vmul.f32 %v578, %v508
      %v580 = vmul.f32 %v461, %v509
      %v581 = vadd.f32 %v580, 0.0
      %v582 = vadd.f32 %v579, 1e-05
      %v583 = vrsqrt.pop %v582
      %v584 = vmul.f32 %v461, %v583
      %v585 = vadd.f32 %v584, 0.0
      %vm586 = vcmp.ge.s32.totalorder %v456, 32
      %vm587 = vcmp.lt.s32.totalorder %v456, 64
      %vm588 = vmand %vm586, %vm587
      %v589 = vsel %vm588, 1, 0
      %v590 = vcvt.s32.f32 %v589
      %v591 = vsel %vm588, %v443, 0.0
      %v592 = vsel %vm588, %v444, 0.0
      %v593 = vsel %vm588, %v445, 0.0
      %v594 = vsel %vm588, %v446, 0.0
      %v595 = vsel %vm588, %v447, 0.0
      %v596 = vsel %vm588, %v448, 0.0
      %v597 = vsel %vm588, %v449, 0.0
      %v598 = vsel %vm588, %v450, 0.0
      %v599 = vsel %vm588, %v451, 0.0
      %v600 = vsel %vm588, %v452, 0.0
      %v601 = vsel %vm588, %v453, 0.0
      %v602 = vsel %vm588, %v454, 0.0
      %v603 = vsel %vm474, %v591, 0.0
      %v604 = vsel %vm474, %v592, 0.0
      %v605 = vadd.f32 %v603, %v604
      %v606 = vsel %vm474, %v593, 0.0
      %v607 = vadd.f32 %v605, %v606
      %v608 = vsel %vm474, %v594, 0.0
      %v609 = vadd.f32 %v607, %v608
      %v610 = vsel %vm474, %v595, 0.0
      %v611 = vadd.f32 %v609, %v610
      %v612 = vsel %vm474, %v596, 0.0
      %v613 = vadd.f32 %v611, %v612
      %v614 = vsel %vm474, %v597, 0.0
      %v615 = vadd.f32 %v613, %v614
      %v616 = vsel %vm474, %v598, 0.0
      %v617 = vadd.f32 %v615, %v616
      %v618 = vsel %vm474, %v599, 0.0
      %v619 = vadd.f32 %v617, %v618
      %v620 = vsel %vm474, %v600, 0.0
      %v621 = vadd.f32 %v619, %v620
      %v622 = vsel %vm474, %v601, 0.0
      %v623 = vadd.f32 %v621, %v622
      %v624 = vsel %vm474, %v602, 0.0
      %v625 = vadd.f32 %v623, %v624
      %626 = vadd.xlane.f32.xlu0 %v625
      %v627 = vpop.xlane.xlu0 %626
      %v628 = vrot.slane %v627, 4
      %v629 = vadd.f32 %v627, %v628
      %v630 = vrot.slane %v629, 2
      %v631 = vadd.f32 %v629, %v630
      %v632 = vrot.slane %v631, 1
      %v633 = vadd.f32 %v631, %v632
      %s634 = vtos %v633
      %v635 = vstv %s634
      %v636 = vmul.f32 %v635, %v508
      %v637 = vsub.f32 %v443, %v636
      %v638 = vsub.f32 %v444, %v636
      %v639 = vsub.f32 %v445, %v636
      %v640 = vsub.f32 %v446, %v636
      %v641 = vsub.f32 %v447, %v636
      %v642 = vsub.f32 %v448, %v636
      %v643 = vsub.f32 %v449, %v636
      %v644 = vsub.f32 %v450, %v636
      %v645 = vsub.f32 %v451, %v636
      %v646 = vsub.f32 %v452, %v636
      %v647 = vsub.f32 %v453, %v636
      %v648 = vsub.f32 %v454, %v636
      %v649 = vmul.f32 %v637, %v637
      %v650 = vmul.f32 %v638, %v638
      %v651 = vmul.f32 %v639, %v639
      %v652 = vmul.f32 %v640, %v640
      %v653 = vmul.f32 %v641, %v641
      %v654 = vmul.f32 %v642, %v642
      %v655 = vmul.f32 %v643, %v643
      %v656 = vmul.f32 %v644, %v644
      %v657 = vmul.f32 %v645, %v645
      %v658 = vmul.f32 %v646, %v646
      %v659 = vmul.f32 %v647, %v647
      %v660 = vmul.f32 %v648, %v648
      %v661 = vsel %vm588, %v649, 0.0
      %v662 = vsel %vm588, %v650, 0.0
      %v663 = vsel %vm588, %v651, 0.0
      %v664 = vsel %vm588, %v652, 0.0
      %v665 = vsel %vm588, %v653, 0.0
      %v666 = vsel %vm588, %v654, 0.0
      %v667 = vsel %vm588, %v655, 0.0
      %v668 = vsel %vm588, %v656, 0.0
      %v669 = vsel %vm588, %v657, 0.0
      %v670 = vsel %vm588, %v658, 0.0
      %v671 = vsel %vm588, %v659, 0.0
      %v672 = vsel %vm588, %v660, 0.0
      %v673 = vsel %vm474, %v661, 0.0
      %v674 = vsel %vm474, %v662, 0.0
      %v675 = vadd.f32 %v673, %v674
      %v676 = vsel %vm474, %v663, 0.0
      %v677 = vadd.f32 %v675, %v676
      %v678 = vsel %vm474, %v664, 0.0
      %v679 = vadd.f32 %v677, %v678
      %v680 = vsel %vm474, %v665, 0.0
      %v681 = vadd.f32 %v679, %v680
      %v682 = vsel %vm474, %v666, 0.0
      %v683 = vadd.f32 %v681, %v682
      %v684 = vsel %vm474, %v667, 0.0
      %v685 = vadd.f32 %v683, %v684
      %v686 = vsel %vm474, %v668, 0.0
      %v687 = vadd.f32 %v685, %v686
      %v688 = vsel %vm474, %v669, 0.0
      %v689 = vadd.f32 %v687, %v688
      %v690 = vsel %vm474, %v670, 0.0
      %v691 = vadd.f32 %v689, %v690
      %v692 = vsel %vm474, %v671, 0.0
      %v693 = vadd.f32 %v691, %v692
      %v694 = vsel %vm474, %v672, 0.0
      %v695 = vadd.f32 %v693, %v694
      %696 = vadd.xlane.f32.xlu0 %v695
      %v697 = vpop.xlane.xlu0 %696
      %v698 = vrot.slane %v697, 4
      %v699 = vadd.f32 %v697, %v698
      %v700 = vrot.slane %v699, 2
      %v701 = vadd.f32 %v699, %v700
      %v702 = vrot.slane %v701, 1
      %v703 = vadd.f32 %v701, %v702
      %s704 = vtos %v703
      %v705 = vstv %s704
      %v706 = vmul.f32 %v705, %v508
      %v707 = vmul.f32 %v590, %v636
      %v708 = vadd.f32 %v581, %v707
      %v709 = vadd.f32 %v706, 1e-05
      %v710 = vrsqrt.pop %v709
      %v711 = vmul.f32 %v590, %v710
      %v712 = vadd.f32 %v585, %v711
      %vm713 = vcmp.ge.s32.totalorder %v456, 64
      %vm714 = vcmp.lt.s32.totalorder %v456, 96
      %vm715 = vmand %vm713, %vm714
      %v716 = vsel %vm715, 1, 0
      %v717 = vcvt.s32.f32 %v716
      %v718 = vsel %vm715, %v443, 0.0
      %v719 = vsel %vm715, %v444, 0.0
      %v720 = vsel %vm715, %v445, 0.0
      %v721 = vsel %vm715, %v446, 0.0
      %v722 = vsel %vm715, %v447, 0.0
      %v723 = vsel %vm715, %v448, 0.0
      %v724 = vsel %vm715, %v449, 0.0
      %v725 = vsel %vm715, %v450, 0.0
      %v726 = vsel %vm715, %v451, 0.0
      %v727 = vsel %vm715, %v452, 0.0
      %v728 = vsel %vm715, %v453, 0.0
      %v729 = vsel %vm715, %v454, 0.0
      %v730 = vsel %vm474, %v718, 0.0
      %v731 = vsel %vm474, %v719, 0.0
      %v732 = vadd.f32 %v730, %v731
      %v733 = vsel %vm474, %v720, 0.0
      %v734 = vadd.f32 %v732, %v733
      %v735 = vsel %vm474, %v721, 0.0
      %v736 = vadd.f32 %v734, %v735
      %v737 = vsel %vm474, %v722, 0.0
      %v738 = vadd.f32 %v736, %v737
      %v739 = vsel %vm474, %v723, 0.0
      %v740 = vadd.f32 %v738, %v739
      %v741 = vsel %vm474, %v724, 0.0
      %v742 = vadd.f32 %v740, %v741
      %v743 = vsel %vm474, %v725, 0.0
      %v744 = vadd.f32 %v742, %v743
      %v745 = vsel %vm474, %v726, 0.0
      %v746 = vadd.f32 %v744, %v745
      %v747 = vsel %vm474, %v727, 0.0
      %v748 = vadd.f32 %v746, %v747
      %v749 = vsel %vm474, %v728, 0.0
      %v750 = vadd.f32 %v748, %v749
      %v751 = vsel %vm474, %v729, 0.0
      %v752 = vadd.f32 %v750, %v751
      %753 = vadd.xlane.f32.xlu0 %v752
      %v754 = vpop.xlane.xlu0 %753
      %v755 = vrot.slane %v754, 4
      %v756 = vadd.f32 %v754, %v755
      %v757 = vrot.slane %v756, 2
      %v758 = vadd.f32 %v756, %v757
      %v759 = vrot.slane %v758, 1
      %v760 = vadd.f32 %v758, %v759
      %s761 = vtos %v760
      %v762 = vstv %s761
      %v763 = vmul.f32 %v762, %v508
      %v764 = vsub.f32 %v443, %v763
      %v765 = vsub.f32 %v444, %v763
      %v766 = vsub.f32 %v445, %v763
      %v767 = vsub.f32 %v446, %v763
      %v768 = vsub.f32 %v447, %v763
      %v769 = vsub.f32 %v448, %v763
      %v770 = vsub.f32 %v449, %v763
      %v771 = vsub.f32 %v450, %v763
      %v772 = vsub.f32 %v451, %v763
      %v773 = vsub.f32 %v452, %v763
      %v774 = vsub.f32 %v453, %v763
      %v775 = vsub.f32 %v454, %v763
      %v776 = vmul.f32 %v764, %v764
      %v777 = vmul.f32 %v765, %v765
      %v778 = vmul.f32 %v766, %v766
      %v779 = vmul.f32 %v767, %v767
      %v780 = vmul.f32 %v768, %v768
      %v781 = vmul.f32 %v769, %v769
      %v782 = vmul.f32 %v770, %v770
      %v783 = vmul.f32 %v771, %v771
      %v784 = vmul.f32 %v772, %v772
      %v785 = vmul.f32 %v773, %v773
      %v786 = vmul.f32 %v774, %v774
      %v787 = vmul.f32 %v775, %v775
      %v788 = vsel %vm715, %v776, 0.0
      %v789 = vsel %vm715, %v777, 0.0
      %v790 = vsel %vm715, %v778, 0.0
      %v791 = vsel %vm715, %v779, 0.0
      %v792 = vsel %vm715, %v780, 0.0
      %v793 = vsel %vm715, %v781, 0.0
      %v794 = vsel %vm715, %v782, 0.0
      %v795 = vsel %vm715, %v783, 0.0
      %v796 = vsel %vm715, %v784, 0.0
      %v797 = vsel %vm715, %v785, 0.0
      %v798 = vsel %vm715, %v786, 0.0
      %v799 = vsel %vm715, %v787, 0.0
      %v800 = vsel %vm474, %v788, 0.0
      %v801 = vsel %vm474, %v789, 0.0
      %v802 = vadd.f32 %v800, %v801
      %v803 = vsel %vm474, %v790, 0.0
      %v804 = vadd.f32 %v802, %v803
      %v805 = vsel %vm474, %v791, 0.0
      %v806 = vadd.f32 %v804, %v805
      %v807 = vsel %vm474, %v792, 0.0
      %v808 = vadd.f32 %v806, %v807
      %v809 = vsel %vm474, %v793, 0.0
      %v810 = vadd.f32 %v808, %v809
      %v811 = vsel %vm474, %v794, 0.0
      %v812 = vadd.f32 %v810, %v811
      %v813 = vsel %vm474, %v795, 0.0
      %v814 = vadd.f32 %v812, %v813
      %v815 = vsel %vm474, %v796, 0.0
      %v816 = vadd.f32 %v814, %v815
      %v817 = vsel %vm474, %v797, 0.0
      %v818 = vadd.f32 %v816, %v817
      %v819 = vsel %vm474, %v798, 0.0
      %v820 = vadd.f32 %v818, %v819
      %v821 = vsel %vm474, %v799, 0.0
      %v822 = vadd.f32 %v820, %v821
      %823 = vadd.xlane.f32.xlu0 %v822
      %v824 = vpop.xlane.xlu0 %823
      %v825 = vrot.slane %v824, 4
      %v826 = vadd.f32 %v824, %v825
      %v827 = vrot.slane %v826, 2
      %v828 = vadd.f32 %v826, %v827
      %v829 = vrot.slane %v828, 1
      %v830 = vadd.f32 %v828, %v829
      %s831 = vtos %v830
      %v832 = vstv %s831
      %v833 = vmul.f32 %v832, %v508
      %v834 = vmul.f32 %v717, %v763
      %v835 = vadd.f32 %v708, %v834
      %v836 = vadd.f32 %v833, 1e-05
      %v837 = vrsqrt.pop %v836
      %v838 = vmul.f32 %v717, %v837
      %v839 = vadd.f32 %v712, %v838
      %v840 = vsub.f32 %v443, %v835
      %v841 = vsub.f32 %v444, %v835
      %v842 = vsub.f32 %v445, %v835
      %v843 = vsub.f32 %v446, %v835
      %v844 = vsub.f32 %v447, %v835
      %v845 = vsub.f32 %v448, %v835
      %v846 = vsub.f32 %v449, %v835
      %v847 = vsub.f32 %v450, %v835
      %v848 = vsub.f32 %v451, %v835
      %v849 = vsub.f32 %v452, %v835
      %v850 = vsub.f32 %v453, %v835
      %v851 = vsub.f32 %v454, %v835
      %v852 = vmul.f32 %v840, %v839
      %v853 = vmul.f32 %v841, %v839
      %v854 = vmul.f32 %v842, %v839
      %v855 = vmul.f32 %v843, %v839
      %v856 = vmul.f32 %v844, %v839
      %v857 = vmul.f32 %v845, %v839
      %v858 = vmul.f32 %v846, %v839
      %v859 = vmul.f32 %v847, %v839
      %v860 = vmul.f32 %v848, %v839
      %v861 = vmul.f32 %v849, %v839
      %v862 = vmul.f32 %v850, %v839
      %v863 = vmul.f32 %v851, %v839
      %v864 = vsel %vm474, %v852, -inf
      %v865 = vsel %vm474, %v853, -inf
      %v866 = vsel %vm474, %v854, -inf
      %v867 = vsel %vm474, %v855, -inf
      %v868 = vsel %vm474, %v856, -inf
      %v869 = vmax.f32 %v864, %v868
      %v870 = vsel %vm474, %v857, -inf
      %v871 = vmax.f32 %v865, %v870
      %v872 = vsel %vm474, %v858, -inf
      %v873 = vmax.f32 %v866, %v872
      %v874 = vsel %vm474, %v859, -inf
      %v875 = vmax.f32 %v867, %v874
      %v876 = vsel %vm474, %v860, -inf
      %v877 = vmax.f32 %v869, %v876
      %v878 = vsel %vm474, %v861, -inf
      %v879 = vmax.f32 %v871, %v878
      %v880 = vsel %vm474, %v862, -inf
      %v881 = vmax.f32 %v873, %v880
      %v882 = vsel %vm474, %v863, -inf
      %v883 = vmax.f32 %v875, %v882
      %v884 = vmax.f32 %v877, %v879
      %v885 = vmax.f32 %v881, %v883
      %v886 = vmax.f32 %v884, %v885
      %v887 = vrot.slane %v886, 4
      %v888 = vmax.f32 %v886, %v887
      %v889 = vrot.slane %v888, 2
      %v890 = vmax.f32 %v888, %v889
      %v891 = vrot.slane %v890, 1
      %v892 = vmax.f32 %v890, %v891
      %v893 = vsub.f32 %v852, %v892
      %v894 = vsub.f32 %v853, %v892
      %v895 = vsub.f32 %v854, %v892
      %v896 = vsub.f32 %v855, %v892
      %v897 = vsub.f32 %v856, %v892
      %v898 = vsub.f32 %v857, %v892
      %v899 = vsub.f32 %v858, %v892
      %v900 = vsub.f32 %v859, %v892
      %v901 = vsub.f32 %v860, %v892
      %v902 = vsub.f32 %v861, %v892
      %v903 = vsub.f32 %v862, %v892
      %v904 = vsub.f32 %v863, %v892
      %v905 = vmul.f32 %v893, 1.442695
      %v906 = vpow.pop %v905
      %v907 = vmul.f32 %v894, 1.442695
      %v908 = vpow.pop %v907
      %v909 = vmul.f32 %v895, 1.442695
      %v910 = vpow.pop %v909
      %v911 = vmul.f32 %v896, 1.442695
      %v912 = vpow.pop %v911
      %v913 = vmul.f32 %v897, 1.442695
      %v914 = vpow.pop %v913
      %v915 = vmul.f32 %v898, 1.442695
      %v916 = vpow.pop %v915
      %v917 = vmul.f32 %v899, 1.442695
      %v918 = vpow.pop %v917
      %v919 = vmul.f32 %v900, 1.442695
      %v920 = vpow.pop %v919
      %v921 = vmul.f32 %v901, 1.442695
      %v922 = vpow.pop %v921
      %v923 = vmul.f32 %v902, 1.442695
      %v924 = vpow.pop %v923
      %v925 = vmul.f32 %v903, 1.442695
      %v926 = vpow.pop %v925
      %v927 = vmul.f32 %v904, 1.442695
      %v928 = vpow.pop %v927
      %v929 = vsel %vm474, %v906, 0.0
      %v930 = vsel %vm474, %v908, 0.0
      %v931 = vadd.f32 %v929, %v930
      %v932 = vsel %vm474, %v910, 0.0
      %v933 = vadd.f32 %v931, %v932
      %v934 = vsel %vm474, %v912, 0.0
      %v935 = vadd.f32 %v933, %v934
      %v936 = vsel %vm474, %v914, 0.0
      %v937 = vadd.f32 %v935, %v936
      %v938 = vsel %vm474, %v916, 0.0
      %v939 = vadd.f32 %v937, %v938
      %v940 = vsel %vm474, %v918, 0.0
      %v941 = vadd.f32 %v939, %v940
      %v942 = vsel %vm474, %v920, 0.0
      %v943 = vadd.f32 %v941, %v942
      %v944 = vsel %vm474, %v922, 0.0
      %v945 = vadd.f32 %v943, %v944
      %v946 = vsel %vm474, %v924, 0.0
      %v947 = vadd.f32 %v945, %v946
      %v948 = vsel %vm474, %v926, 0.0
      %v949 = vadd.f32 %v947, %v948
      %v950 = vsel %vm474, %v928, 0.0
      %v951 = vadd.f32 %v949, %v950
      %v952 = vrot.slane %v951, 4
      %v953 = vadd.f32 %v951, %v952
      %v954 = vrot.slane %v953, 2
      %v955 = vadd.f32 %v953, %v954
      %v956 = vrot.slane %v955, 1
      %v957 = vadd.f32 %v955, %v956
      %v958 = vrcp.pop %v957
      %v959 = vmul.f32 %v906, %v958
      %v960 = vmul.f32 %v908, %v958
      %v961 = vmul.f32 %v910, %v958
      %v962 = vmul.f32 %v912, %v958
      %v963 = vmul.f32 %v914, %v958
      %v964 = vmul.f32 %v916, %v958
      %v965 = vmul.f32 %v918, %v958
      %v966 = vmul.f32 %v920, %v958
      %v967 = vmul.f32 %v922, %v958
      %v968 = vmul.f32 %v924, %v958
      %v969 = vmul.f32 %v926, %v958
      %v970 = vmul.f32 %v928, %v958
      %v972 = vsel %vm474, %v279, 0
      %v975 = vsel %vm474, %v280, 0
      %977 = vmatprep.subr.mxu0 0.0
      %978 = vmatpush1.msra.mxu0 %v959
      %979 = vmatprep.subr.mxu0 0.0
      %980 = vmatpush1.msra.mxu0 %v960
      %981 = vmatprep.subr.mxu0 0.0
      %982 = vmatpush1.msra.mxu0 %v961
      %983 = vmatprep.subr.mxu0 0.0
      %984 = vmatpush1.msra.mxu0 %v962
      %985 = vmatprep.subr.mxu0 0.0
      %986 = vmatpush1.msra.mxu0 %v963
      %987 = vmatprep.subr.mxu0 0.0
      %988 = vmatpush1.msra.mxu0 %v964
      %989 = vmatprep.subr.mxu0 0.0
      %990 = vmatpush1.msra.mxu0 %v965
      %991 = vmatprep.subr.mxu0 0.0
      %992 = vmatpush1.msra.mxu0 %v966
      %993 = vmatprep.subr.mxu0 0.0
      %994 = vmatpush1.msra.mxu0 %v967
      %995 = vmatprep.subr.mxu0 0.0
      %996 = vmatpush1.msra.mxu0 %v968
      %997 = vmatprep.subr.mxu0 0.0
      %998 = vmatpush1.msra.mxu0 %v969
      %999 = vmatprep.subr.mxu0 0.0
      %1000 = vmatpush1.msra.mxu0 %v970
      %1001 = vmatprep.subr.mxu0 0.0
      %1002 = vmatpush1.msra.mxu0 0.0
      %1003 = vmatprep.subr.mxu0 0.0
      %1004 = vmatpush1.msra.mxu0 0.0
      %1005 = vmatprep.subr.mxu0 0.0
      %1006 = vmatpush1.msra.mxu0 0.0
      %1007 = vmatprep.subr.mxu0 0.0
      %1008 = vmatpush1.msra.mxu0 0.0
      %1009 = vmatprep.subr.mxu0 0.0
      %1010 = vmatpush1.msra.mxu0 0.0
      %1011 = vmatprep.subr.mxu0 0.0
      %1012 = vmatpush1.msra.mxu0 0.0
      %1013 = vmatprep.subr.mxu0 0.0
      %1014 = vmatpush1.msra.mxu0 0.0
      %1015 = vmatprep.subr.mxu0 0.0
      %1016 = vmatpush1.msra.mxu0 0.0
      %1017 = vmatprep.subr.mxu0 0.0
      %1018 = vmatpush1.msra.mxu0 0.0
      %1019 = vmatprep.subr.mxu0 0.0
      %1020 = vmatpush1.msra.mxu0 0.0
      %1021 = vmatprep.subr.mxu0 0.0
      %1022 = vmatpush1.msra.mxu0 0.0
      %1023 = vmatprep.subr.mxu0 0.0
      %1024 = vmatpush1.msra.mxu0 0.0
      %1025 = vmatprep.subr.mxu0 0.0
      %1026 = vmatpush1.msra.mxu0 0.0
      %1027 = vmatprep.subr.mxu0 0.0
      %1028 = vmatpush1.msra.mxu0 0.0
      %1029 = vmatprep.subr.mxu0 0.0
      %1030 = vmatpush1.msra.mxu0 0.0
      %1031 = vmatprep.subr.mxu0 0.0
      %1032 = vmatpush1.msra.mxu0 0.0
      %1033 = vmatprep.subr.mxu0 0.0
      %1034 = vmatpush1.msra.mxu0 0.0
      %1035 = vmatprep.subr.mxu0 0.0
      %1036 = vmatpush1.msra.mxu0 0.0
      %1037 = vmatprep.subr.mxu0 0.0
      %1038 = vmatpush1.msra.mxu0 0.0
      %1039 = vmatprep.subr.mxu0 0.0
      %1040 = vmatpush1.msra.mxu0 0.0
      %1041 = vmatprep.mubr.f32.mxu0 0.0
      %1042 = vmatmul.mubr.f32.gmra.mrb[0].mxu0 %v972
      %v1043 = vpop.f32.mrb[0].mxu0
      %v1044 = vadd.f32 0.0, %v1043
      %v1045 = vpop.f32.mrb[0].mxu0
      %1046 = vmatprep.mubr.f32.mxu0 0.0
      %1047 = vmatmul.mubr.f32.gmra.mrb[0].mxu0 %v975
      %v1048 = vpop.f32.mrb[0].mxu0
      %v1049 = vadd.f32 0.0, %v1048
      %v1050 = vpop.f32.mrb[0].mxu0
      %1051 = vdwg.mxu0
      %v1052 = vmul.f32 %v1044, 0.25
      %v1053 = vmul.f32 %v1049, 0.25
      %p1054 = scmp.eq.s32.totalorder %s19, 0
      // Predicated region
      $region33: #{channel_transformer.80} parent=31 // pred_check
        %p1055 = pneg %p1054
      $region34: #{channel_transformer.80} parent=31 // pred_check_branch
        %1057 = sbr.rel (%p1055) target = $region36
      $region35: #{channel_transformer.80} parent=31 // pred_region
        %1058 = vst.msk [vmem:[%s264] sm:$0xff] %vm474, %v1052
        %1059 = vst.msk [vmem:[%s264 + $0x8] sm:$0xff] %vm474, %v1053
      $region36: #{channel_transformer.80} parent=31 // pred_fallthru
        _
      %p1060 = scmp.gt.s32.totalorder %s19, 0
      // Predicated region
      $region37: #{channel_transformer.80} parent=31 // pred_check
        %p1061 = pneg %p1060
      $region38: #{channel_transformer.80} parent=31 // pred_check_branch
        %1063 = sbr.rel (%p1061) target = $region40
      $region39: #{channel_transformer.80} parent=31 // pred_region
        %v1064 = vld [vmem:[%s264] sm:$0xff]
        %v1065 = vld [vmem:[%s264 + $0x8] sm:$0xff]
        %v1066 = vadd.f32 %v1064, %v1052
        %v1067 = vadd.f32 %v1065, %v1053
        %1068 = vst.msk [vmem:[%s264] sm:$0xff] %vm474, %v1066
        %1069 = vst.msk [vmem:[%s264 + $0x8] sm:$0xff] %vm474, %v1067
      $region40: #{channel_transformer.80} parent=31 // pred_fallthru
        _
      %p1070 = scmp.lt.s32.totalorder %s18, 1
      %s1071 = scalar_select %p1070, %s18, 1
      %s1072 = smul.addr %s1071, 2
      %s1073 = smul.addr %s1072, 8
      %s1074 = scalar_lea.vmem %s3, %s1073
      // Predicated region
      $region41: #{channel_transformer.80} parent=31 // pred_check
        %p1075 = pneg %p128
      $region42: #{channel_transformer.80} parent=31 // pred_check_branch
        %1077 = sbr.rel (%p1075) target = $region44
      $region43: #{channel_transformer.80} parent=31 // pred_region
        _
      $region44: #{channel_transformer.80} parent=31 // pred_fallthru
        _
    $region32: #{channel_transformer.80} parent=5 // pred_fallthru
      _
    %p1078 = scmp.le.s32.totalorder 2, %s9
    // Predicated region
    $region45: #{channel_transformer.80} parent=5 // pred_check
      %p1079 = pneg %p1078
    $region46: #{channel_transformer.80} parent=5 // pred_check_branch
      %1081 = sbr.rel (%p1079) target = $region48
    $region47: #{channel_transformer.80} parent=5 // pred_region
      %s1082 = ssub.s32 %s9, 2
      // Predicated region
      $region49: #{channel_transformer.80} parent=47 // pred_check
        %p1083 = pneg %p134
      $region50: #{channel_transformer.80} parent=47 // pred_check_branch
        %1085 = sbr.rel (%p1083) target = $region52
      $region51: #{channel_transformer.80} parent=47 // pred_region
        %p1086 = scmp.lt.s32.totalorder %s20, 1
        %s1087 = scalar_select %p1086, %s20, 1
        %s1088 = smul.addr %s1087, 2
        %s1089 = smul.addr %s1088, 8
        %s1090 = scalar_lea.vmem %s3, %s1089
      $region52: #{channel_transformer.80} parent=47 // pred_fallthru
        _
    $region48: #{channel_transformer.80} parent=5 // pred_fallthru
      _
  $region6: #{channel_transformer.80} parent=0 // loop_footer
    %s13 = sadd.s32 1, %s9
  $region7: #{channel_transformer.80} parent=0 // loop_footer_branch
    %8 = sbr.rel target = $region3
  $region8: #{channel_transformer.80} parent=0 // loop_exit
    _

// kernel: channel_transformer.89
$region0: #{channel_transformer.89}
  #allocation0 [shape = 'u32[]', space=smem, size = 0x4, offset = 0x4, fixed_abs, tag = 'smem constant byte address 0x4 - core index']
  #allocation1 [shape = 'u32[144,128]{1,0:T(1,128)}', space=vmem, size = 0x12000, scoped, tag = 'internal scratch']
  %s0 = inlined_call_operand.vmem [shape: f32[32,32], index: 0, kind: input, shape index: {}]
  %s1 = inlined_call_operand.vmem [shape: f32[32,32], index: 1, kind: input, shape index: {}]
  %s2 = inlined_call_operand.vmem [shape: f32[32,32], index: 2, kind: input, shape index: {}]
  %s3 = inlined_call_operand.vmem [shape: f32[1,32], index: 3, kind: input, shape index: {}]
  %s4 = inlined_call_operand.vmem [shape: f32[1,32], index: 4, kind: input, shape index: {}]
  %s5 = inlined_call_operand.vmem [shape: f32[32,128], index: 5, kind: input, shape index: {}]
  %s6 = inlined_call_operand.vmem [shape: f32[1,128], index: 6, kind: input, shape index: {}]
  %s7 = inlined_call_operand.vmem [shape: f32[128,32], index: 7, kind: input, shape index: {}]
  %s8 = inlined_call_operand.hbm [shape: f32[1,32], index: 8, kind: input, shape index: {}]
  %s9 = inlined_call_operand.vmem [shape: f32[32,32], index: 9, kind: output, shape index: {}]
  %s10 = sld [smem:[#allocation0]]
  $region50: #{channel_transformer.89} parent=0
    _
  %s12 = ssub.s32 1, %s10
  %s13 = scalar_select 0, %s12, %s10
  $region1: #{channel_transformer.89} parent=0
    #allocation2 [shape = 'u8[512]{0}', space=vmem, size = 0x400, scoped, tag = 'input window, operand 8, single buffered']
    #allocation3 [shape = 's32[1]{0}', space=sflag, size = 0x4, scoped, tag = 'scoped memory for channel_transformer.89']
    %14 = vsyncpa [#allocation3], 0
    // Predicated region
    $region2: #{channel_transformer.89} parent=1 // pred_check
      _
    $region3: #{channel_transformer.89} parent=1 // pred_check_branch
      %16 = sbr.rel (0) target = $region5
    $region4: #{channel_transformer.89} parent=1 // pred_region
      _
    $region5: #{channel_transformer.89} parent=1 // pred_fallthru
      _
    // Predicated region
    $region6: #{channel_transformer.89} parent=1 // pred_check
      _
    $region7: #{channel_transformer.89} parent=1 // pred_check_branch
      %18 = sbr.rel (0) target = $region9
    $region8: #{channel_transformer.89} parent=1 // pred_region
      _
    $region9: #{channel_transformer.89} parent=1 // pred_fallthru
      _
    // Predicated region
    $region10: #{channel_transformer.89} parent=1 // pred_check
      _
    $region11: #{channel_transformer.89} parent=1 // pred_check_branch
      %20 = sbr.rel (0) target = $region13
    $region12: #{channel_transformer.89} parent=1 // pred_region
      _
    $region13: #{channel_transformer.89} parent=1 // pred_fallthru
      _
    // Predicated region
    $region14: #{channel_transformer.89} parent=1 // pred_check
      _
    $region15: #{channel_transformer.89} parent=1 // pred_check_branch
      %22 = sbr.rel (0) target = $region17
    $region16: #{channel_transformer.89} parent=1 // pred_region
      _
    $region17: #{channel_transformer.89} parent=1 // pred_fallthru
      _
    // Predicated region
    $region18: #{channel_transformer.89} parent=1 // pred_check
      _
    $region19: #{channel_transformer.89} parent=1 // pred_check_branch
      %24 = sbr.rel (0) target = $region21
    $region20: #{channel_transformer.89} parent=1 // pred_region
      _
    $region21: #{channel_transformer.89} parent=1 // pred_fallthru
      _
    // Predicated region
    $region22: #{channel_transformer.89} parent=1 // pred_check
      _
    $region23: #{channel_transformer.89} parent=1 // pred_check_branch
      %26 = sbr.rel (0) target = $region25
    $region24: #{channel_transformer.89} parent=1 // pred_region
      _
    $region25: #{channel_transformer.89} parent=1 // pred_fallthru
      _
    // Predicated region
    $region26: #{channel_transformer.89} parent=1 // pred_check
      _
    $region27: #{channel_transformer.89} parent=1 // pred_check_branch
      %28 = sbr.rel (0) target = $region29
    $region28: #{channel_transformer.89} parent=1 // pred_region
      _
    $region29: #{channel_transformer.89} parent=1 // pred_fallthru
      _
    // Predicated region
    $region30: #{channel_transformer.89} parent=1 // pred_check
      _
    $region31: #{channel_transformer.89} parent=1 // pred_check_branch
      %30 = sbr.rel (0) target = $region33
    $region32: #{channel_transformer.89} parent=1 // pred_region
      _
    $region33: #{channel_transformer.89} parent=1 // pred_fallthru
      _
    // Predicated region
    $region34: #{channel_transformer.89} parent=1 // pred_check
      _
    $region35: #{channel_transformer.89} parent=1 // pred_check_branch
      %32 = sbr.rel (0) target = $region37
    $region36: #{channel_transformer.89} parent=1 // pred_region
      %s34 = ssub.s32 16, 16
      %35 = vsyncadd [#allocation3], %s34
      %s37 = sshll.u32 [#allocation2], 4
      %s38 = int_to_ptr.vmem [resolvable:$true] %s37
      %40 = dma.hbm_to_vmem [thread:$0]  %s8, 16, %s38, [#allocation3]
    $region37: #{channel_transformer.89} parent=1 // pred_fallthru
      _
    // Predicated region
    $region38: #{channel_transformer.89} parent=1 // pred_check
      _
    $region39: #{channel_transformer.89} parent=1 // pred_check_branch
      %42 = sbr.rel (0) target = $region41
    $region40: #{channel_transformer.89} parent=1 // pred_region
      %43 = dma.done [#allocation3], 16
    $region41: #{channel_transformer.89} parent=1 // pred_fallthru
      _
    %v44 = vld [vmem:[%s0] sm:$0xff]
    %v45 = vld [vmem:[%s0 + $0x8] sm:$0xff]
    %v46 = vld [vmem:[%s0 + $0x10] sm:$0xff]
    %v47 = vld [vmem:[%s0 + $0x18] sm:$0xff]
    %v48 = vld [vmem:[%s2] sm:$0xff]
    %v49 = vld [vmem:[%s2 + $0x8] sm:$0xff]
    %v50 = vld [vmem:[%s2 + $0x10] sm:$0xff]
    %v51 = vld [vmem:[%s2 + $0x18] sm:$0xff]
    %vm52 = vcmask 261120
    %v54 = vsel %vm52, %v44, 0
    %v57 = vsel %vm52, %v45, 0
    %v60 = vsel %vm52, %v46, 0
    %v63 = vsel %vm52, %v47, 0
    %65 = vmatprep.subr.mxu0 0.0
    %66 = vmatpush1.msra.mxu0 %v48
    %67 = vmatprep.subr.mxu0 0.0
    %68 = vmatpush1.msra.mxu0 %v49
    %69 = vmatprep.subr.mxu0 0.0
    %70 = vmatpush1.msra.mxu0 %v50
    %71 = vmatprep.subr.mxu0 0.0
    %72 = vmatpush1.msra.mxu0 %v51
    %73 = vmatprep.subr.mxu0 0.0
    %74 = vmatpush1.msra.mxu0 0.0
    %75 = vmatprep.subr.mxu0 0.0
    %76 = vmatpush1.msra.mxu0 0.0
    %77 = vmatprep.subr.mxu0 0.0
    %78 = vmatpush1.msra.mxu0 0.0
    %79 = vmatprep.subr.mxu0 0.0
    %80 = vmatpush1.msra.mxu0 0.0
    %81 = vmatprep.subr.mxu0 0.0
    %82 = vmatpush1.msra.mxu0 0.0
    %83 = vmatprep.subr.mxu0 0.0
    %84 = vmatpush1.msra.mxu0 0.0
    %85 = vmatprep.subr.mxu0 0.0
    %86 = vmatpush1.msra.mxu0 0.0
    %87 = vmatprep.subr.mxu0 0.0
    %88 = vmatpush1.msra.mxu0 0.0
    %89 = vmatprep.subr.mxu0 0.0
    %90 = vmatpush1.msra.mxu0 0.0
    %91 = vmatprep.subr.mxu0 0.0
    %92 = vmatpush1.msra.mxu0 0.0
    %93 = vmatprep.subr.mxu0 0.0
    %94 = vmatpush1.msra.mxu0 0.0
    %95 = vmatprep.subr.mxu0 0.0
    %96 = vmatpush1.msra.mxu0 0.0
    %97 = vmatprep.subr.mxu0 0.0
    %98 = vmatpush1.msra.mxu0 0.0
    %99 = vmatprep.subr.mxu0 0.0
    %100 = vmatpush1.msra.mxu0 0.0
    %101 = vmatprep.subr.mxu0 0.0
    %102 = vmatpush1.msra.mxu0 0.0
    %103 = vmatprep.subr.mxu0 0.0
    %104 = vmatpush1.msra.mxu0 0.0
    %105 = vmatprep.subr.mxu0 0.0
    %106 = vmatpush1.msra.mxu0 0.0
    %107 = vmatprep.subr.mxu0 0.0
    %108 = vmatpush1.msra.mxu0 0.0
    %109 = vmatprep.subr.mxu0 0.0
    %110 = vmatpush1.msra.mxu0 0.0
    %111 = vmatprep.subr.mxu0 0.0
    %112 = vmatpush1.msra.mxu0 0.0
    %113 = vmatprep.subr.mxu0 0.0
    %114 = vmatpush1.msra.mxu0 0.0
    %115 = vmatprep.subr.mxu0 0.0
    %116 = vmatpush1.msra.mxu0 0.0
    %117 = vmatprep.subr.mxu0 0.0
    %118 = vmatpush1.msra.mxu0 0.0
    %119 = vmatprep.subr.mxu0 0.0
    %120 = vmatpush1.msra.mxu0 0.0
    %121 = vmatprep.subr.mxu0 0.0
    %122 = vmatpush1.msra.mxu0 0.0
    %123 = vmatprep.subr.mxu0 0.0
    %124 = vmatpush1.msra.mxu0 0.0
    %125 = vmatprep.subr.mxu0 0.0
    %126 = vmatpush1.msra.mxu0 0.0
    %127 = vmatprep.subr.mxu0 0.0
    %128 = vmatpush1.msra.mxu0 0.0
    %129 = vmatprep.mubr.f32.mxu0 0.0
    %130 = vmatmul.mubr.f32.gmra.mrb[0].mxu0 %v54
    %v131 = vpop.f32.mrb[0].mxu0
    %v132 = vadd.f32 0.0, %v131
    %v133 = vpop.f32.mrb[0].mxu0
    %134 = vmatprep.mubr.f32.mxu0 0.0
    %135 = vmatmul.mubr.f32.gmra.mrb[0].mxu0 %v57
    %v136 = vpop.f32.mrb[0].mxu0
    %v137 = vadd.f32 0.0, %v136
    %v138 = vpop.f32.mrb[0].mxu0
    %139 = vmatprep.mubr.f32.mxu0 0.0
    %140 = vmatmul.mubr.f32.gmra.mrb[0].mxu0 %v60
    %v141 = vpop.f32.mrb[0].mxu0
    %v142 = vadd.f32 0.0, %v141
    %v143 = vpop.f32.mrb[0].mxu0
    %144 = vmatprep.mubr.f32.mxu0 0.0
    %145 = vmatmul.mubr.f32.gmra.mrb[0].mxu0 %v63
    %v146 = vpop.f32.mrb[0].mxu0
    %v147 = vadd.f32 0.0, %v146
    %v148 = vpop.f32.mrb[0].mxu0
    %149 = vdwg.mxu0
    %v150 = vld [vmem:[%s1] sm:$0xff]
    %v151 = vld [vmem:[%s1 + $0x8] sm:$0xff]
    %v152 = vld [vmem:[%s1 + $0x10] sm:$0xff]
    %v153 = vld [vmem:[%s1 + $0x18] sm:$0xff]
    %v154 = vadd.f32 %v150, %v132
    %v155 = vadd.f32 %v151, %v137
    %v156 = vadd.f32 %v152, %v142
    %v157 = vadd.f32 %v153, %v147
    %v158 = vsel %vm52, %v154, 0.0
    %159 = vadd.xlane.f32.xlu0 %v158
    %v160 = vpop.xlane.xlu0 %159
    %v161 = vsel %vm52, %v155, 0.0
    %162 = vadd.xlane.f32.xlu0 %v161
    %v163 = vpop.xlane.xlu0 %162
    %v164 = vsel %vm52, %v156, 0.0
    %165 = vadd.xlane.f32.xlu0 %v164
    %v166 = vpop.xlane.xlu0 %165
    %v167 = vsel %vm52, %v157, 0.0
    %168 = vadd.xlane.f32.xlu0 %v167
    %v169 = vpop.xlane.xlu0 %168
    %v170 = vrcp.pop 32.0
    %v171 = vmul.f32 %v160, %v170
    %v172 = vmul.f32 %v163, %v170
    %v173 = vmul.f32 %v166, %v170
    %v174 = vmul.f32 %v169, %v170
    %v175 = vsub.f32 %v154, %v171
    %v176 = vsub.f32 %v155, %v172
    %v177 = vsub.f32 %v156, %v173
    %v178 = vsub.f32 %v157, %v174
    %v179 = vmul.f32 %v175, %v175
    %v180 = vmul.f32 %v176, %v176
    %v181 = vmul.f32 %v177, %v177
    %v182 = vmul.f32 %v178, %v178
    %v183 = vsel %vm52, %v179, 0.0
    %184 = vadd.xlane.f32.xlu0 %v183
    %v185 = vpop.xlane.xlu0 %184
    %v186 = vsel %vm52, %v180, 0.0
    %187 = vadd.xlane.f32.xlu0 %v186
    %v188 = vpop.xlane.xlu0 %187
    %v189 = vsel %vm52, %v181, 0.0
    %190 = vadd.xlane.f32.xlu0 %v189
    %v191 = vpop.xlane.xlu0 %190
    %v192 = vsel %vm52, %v182, 0.0
    %193 = vadd.xlane.f32.xlu0 %v192
    %v194 = vpop.xlane.xlu0 %193
    %v195 = vmul.f32 %v185, %v170
    %v196 = vmul.f32 %v188, %v170
    %v197 = vmul.f32 %v191, %v170
    %v198 = vmul.f32 %v194, %v170
    %v199 = vadd.f32 %v195, 1e-06
    %v200 = vadd.f32 %v196, 1e-06
    %v201 = vadd.f32 %v197, 1e-06
    %v202 = vadd.f32 %v198, 1e-06
    %v203 = vrsqrt.pop %v199
    %v204 = vrsqrt.pop %v200
    %v205 = vrsqrt.pop %v201
    %v206 = vrsqrt.pop %v202
    %v207 = vmul.f32 %v175, %v203
    %v208 = vmul.f32 %v176, %v204
    %v209 = vmul.f32 %v177, %v205
    %v210 = vmul.f32 %v178, %v206
    %v211 = vld [vmem:[%s3] sm:$0x1]
    %v213 = vlaneseq
    %v214 = vshrl.u32 %v213, 7
    %v215 = vsub.s32 0, %v214
    %v216 = vrot.slane %v211, %v215
    %v218 = vmul.f32 %v207, %v216
    %v219 = vmul.f32 %v208, %v216
    %v220 = vmul.f32 %v209, %v216
    %v221 = vmul.f32 %v210, %v216
    %v222 = vld [vmem:[%s4] sm:$0x1]
    %v224 = vlaneseq
    %v225 = vshrl.u32 %v224, 7
    %v226 = vsub.s32 0, %v225
    %v227 = vrot.slane %v222, %v226
    %v229 = vadd.f32 %v218, %v227
    %v230 = vadd.f32 %v219, %v227
    %v231 = vadd.f32 %v220, %v227
    %v232 = vadd.f32 %v221, %v227
    %v233 = vld [vmem:[%s5] sm:$0xff]
    %v234 = vld [vmem:[%s5 + $0x8] sm:$0xff]
    %v235 = vld [vmem:[%s5 + $0x10] sm:$0xff]
    %v236 = vld [vmem:[%s5 + $0x18] sm:$0xff]
    %v237 = vld [vmem:[%s6] sm:$0x1]
    %v239 = vlaneseq
    %v240 = vshrl.u32 %v239, 7
    %v241 = vsub.s32 0, %v240
    %v242 = vrot.slane %v237, %v241
    %v245 = vsel %vm52, %v229, 0
    %v248 = vsel %vm52, %v230, 0
    %v251 = vsel %vm52, %v231, 0
    %v254 = vsel %vm52, %v232, 0
    %256 = vmatprep.subr.mxu0 0.0
    %257 = vmatpush1.msra.mxu0 %v233
    %258 = vmatprep.subr.mxu0 0.0
    %259 = vmatpush1.msra.mxu0 %v234
    %260 = vmatprep.subr.mxu0 0.0
    %261 = vmatpush1.msra.mxu0 %v235
    %262 = vmatprep.subr.mxu0 0.0
    %263 = vmatpush1.msra.mxu0 %v236
    %264 = vmatprep.subr.mxu0 0.0
    %265 = vmatpush1.msra.mxu0 0.0
    %266 = vmatprep.subr.mxu0 0.0
    %267 = vmatpush1.msra.mxu0 0.0
    %268 = vmatprep.subr.mxu0 0.0
    %269 = vmatpush1.msra.mxu0 0.0
    %270 = vmatprep.subr.mxu0 0.0
    %271 = vmatpush1.msra.mxu0 0.0
    %272 = vmatprep.subr.mxu0 0.0
    %273 = vmatpush1.msra.mxu0 0.0
    %274 = vmatprep.subr.mxu0 0.0
    %275 = vmatpush1.msra.mxu0 0.0
    %276 = vmatprep.subr.mxu0 0.0
    %277 = vmatpush1.msra.mxu0 0.0
    %278 = vmatprep.subr.mxu0 0.0
    %279 = vmatpush1.msra.mxu0 0.0
    %280 = vmatprep.subr.mxu0 0.0
    %281 = vmatpush1.msra.mxu0 0.0
    %282 = vmatprep.subr.mxu0 0.0
    %283 = vmatpush1.msra.mxu0 0.0
    %284 = vmatprep.subr.mxu0 0.0
    %285 = vmatpush1.msra.mxu0 0.0
    %286 = vmatprep.subr.mxu0 0.0
    %287 = vmatpush1.msra.mxu0 0.0
    %288 = vmatprep.subr.mxu0 0.0
    %289 = vmatpush1.msra.mxu0 0.0
    %290 = vmatprep.subr.mxu0 0.0
    %291 = vmatpush1.msra.mxu0 0.0
    %292 = vmatprep.subr.mxu0 0.0
    %293 = vmatpush1.msra.mxu0 0.0
    %294 = vmatprep.subr.mxu0 0.0
    %295 = vmatpush1.msra.mxu0 0.0
    %296 = vmatprep.subr.mxu0 0.0
    %297 = vmatpush1.msra.mxu0 0.0
    %298 = vmatprep.subr.mxu0 0.0
    %299 = vmatpush1.msra.mxu0 0.0
    %300 = vmatprep.subr.mxu0 0.0
    %301 = vmatpush1.msra.mxu0 0.0
    %302 = vmatprep.subr.mxu0 0.0
    %303 = vmatpush1.msra.mxu0 0.0
    %304 = vmatprep.subr.mxu0 0.0
    %305 = vmatpush1.msra.mxu0 0.0
    %306 = vmatprep.subr.mxu0 0.0
    %307 = vmatpush1.msra.mxu0 0.0
    %308 = vmatprep.subr.mxu0 0.0
    %309 = vmatpush1.msra.mxu0 0.0
    %310 = vmatprep.subr.mxu0 0.0
    %311 = vmatpush1.msra.mxu0 0.0
    %312 = vmatprep.subr.mxu0 0.0
    %313 = vmatpush1.msra.mxu0 0.0
    %314 = vmatprep.subr.mxu0 0.0
    %315 = vmatpush1.msra.mxu0 0.0
    %316 = vmatprep.subr.mxu0 0.0
    %317 = vmatpush1.msra.mxu0 0.0
    %318 = vmatprep.subr.mxu0 0.0
    %319 = vmatpush1.msra.mxu0 0.0
    %320 = vmatprep.mubr.f32.mxu0 0.0
    %321 = vmatmul.mubr.f32.gmra.mrb[0].mxu0 %v245
    %v322 = vpop.f32.mrb[0].mxu0
    %v323 = vadd.f32 %v242, %v322
    %v324 = vpop.f32.mrb[0].mxu0
    %325 = vmatprep.mubr.f32.mxu0 0.0
    %326 = vmatmul.mubr.f32.gmra.mrb[0].mxu0 %v248
    %v327 = vpop.f32.mrb[0].mxu0
    %v328 = vadd.f32 %v242, %v327
    %v329 = vpop.f32.mrb[0].mxu0
    %330 = vmatprep.mubr.f32.mxu0 0.0
    %331 = vmatmul.mubr.f32.gmra.mrb[0].mxu0 %v251
    %v332 = vpop.f32.mrb[0].mxu0
    %v333 = vadd.f32 %v242, %v332
    %v334 = vpop.f32.mrb[0].mxu0
    %335 = vmatprep.mubr.f32.mxu0 0.0
    %336 = vmatmul.mubr.f32.gmra.mrb[0].mxu0 %v254
    %v337 = vpop.f32.mrb[0].mxu0
    %v338 = vadd.f32 %v242, %v337
    %v339 = vpop.f32.mrb[0].mxu0
    %340 = vdwg.mxu0
    %v341 = vmul.f32 %v323, 0.5
    %v342 = vmul.f32 %v328, 0.5
    %v343 = vmul.f32 %v333, 0.5
    %v344 = vmul.f32 %v338, 0.5
    %v345 = vmul.f32 %v323, 0.70710677
    %v346 = vmul.f32 %v328, 0.70710677
    %v347 = vmul.f32 %v333, 0.70710677
    %v348 = vmul.f32 %v338, 0.70710677
    %v349 = vand.u32 2147483647, %v345
    %v350 = vand.u32 2147483647, %v346
    %v351 = vand.u32 2147483647, %v347
    %v352 = vand.u32 2147483647, %v348
    %v353 = vmul.f32 %v349, 0.3275911
    %v354 = vmul.f32 %v350, 0.3275911
    %v355 = vmul.f32 %v351, 0.3275911
    %v356 = vmul.f32 %v352, 0.3275911
    %v357 = vadd.f32 %v353, 1.0
    %v358 = vadd.f32 %v354, 1.0
    %v359 = vadd.f32 %v355, 1.0
    %v360 = vadd.f32 %v356, 1.0
    %v361 = vrcp.pop %v357
    %v362 = vmul.f32 1.0, %v361
    %v363 = vrcp.pop %v358
    %v364 = vmul.f32 1.0, %v363
    %v365 = vrcp.pop %v359
    %v366 = vmul.f32 1.0, %v365
    %v367 = vrcp.pop %v360
    %v368 = vmul.f32 1.0, %v367
    %v369 = vmul.f32 %v362, 1.0614054
    %v370 = vmul.f32 %v364, 1.0614054
    %v371 = vmul.f32 %v366, 1.0614054
    %v372 = vmul.f32 %v368, 1.0614054
    %v373 = vadd.f32 %v369, -1.4531521
    %v374 = vadd.f32 %v370, -1.4531521
    %v375 = vadd.f32 %v371, -1.4531521
    %v376 = vadd.f32 %v372, -1.4531521
    %v377 = vmul.f32 %v373, %v362
    %v378 = vmul.f32 %v374, %v364
    %v379 = vmul.f32 %v375, %v366
    %v380 = vmul.f32 %v376, %v368
    %v381 = vadd.f32 %v377, 1.4214138
    %v382 = vadd.f32 %v378, 1.4214138
    %v383 = vadd.f32 %v379, 1.4214138
    %v384 = vadd.f32 %v380, 1.4214138
    %v385 = vmul.f32 %v381, %v362
    %v386 = vmul.f32 %v382, %v364
    %v387 = vmul.f32 %v383, %v366
    %v388 = vmul.f32 %v384, %v368
    %v389 = vadd.f32 %v385, -0.28449672
    %v390 = vadd.f32 %v386, -0.28449672
    %v391 = vadd.f32 %v387, -0.28449672
    %v392 = vadd.f32 %v388, -0.28449672
    %v393 = vmul.f32 %v389, %v362
    %v394 = vmul.f32 %v390, %v364
    %v395 = vmul.f32 %v391, %v366
    %v396 = vmul.f32 %v392, %v368
    %v397 = vadd.f32 %v393, 0.2548296
    %v398 = vadd.f32 %v394, 0.2548296
    %v399 = vadd.f32 %v395, 0.2548296
    %v400 = vadd.f32 %v396, 0.2548296
    %v401 = vmul.f32 %v397, %v362
    %v402 = vmul.f32 %v398, %v364
    %v403 = vmul.f32 %v399, %v366
    %v404 = vmul.f32 %v400, %v368
    %v405 = vsub.f32 0.0, %v349
    %v406 = vsub.f32 0.0, %v350
    %v407 = vsub.f32 0.0, %v351
    %v408 = vsub.f32 0.0, %v352
    %v409 = vmul.f32 %v405, %v349
    %v410 = vmul.f32 %v406, %v350
    %v411 = vmul.f32 %v407, %v351
    %v412 = vmul.f32 %v408, %v352
    %v413 = vmul.f32 %v409, 1.442695
    %v414 = vpow.pop %v413
    %v415 = vmul.f32 %v410, 1.442695
    %v416 = vpow.pop %v415
    %v417 = vmul.f32 %v411, 1.442695
    %v418 = vpow.pop %v417
    %v419 = vmul.f32 %v412, 1.442695
    %v420 = vpow.pop %v419
    %v421 = vmul.f32 %v401, %v414
    %v422 = vmul.f32 %v402, %v416
    %v423 = vmul.f32 %v403, %v418
    %v424 = vmul.f32 %v404, %v420
    %v425 = vsub.f32 1.0, %v421
    %v426 = vsub.f32 1.0, %v422
    %v427 = vsub.f32 1.0, %v423
    %v428 = vsub.f32 1.0, %v424
    %vm429 = vcmp.ge.f32.partialorder %v345, 0.0
    %vm430 = vcmp.ge.f32.partialorder %v346, 0.0
    %vm431 = vcmp.ge.f32.partialorder %v347, 0.0
    %vm432 = vcmp.ge.f32.partialorder %v348, 0.0
    %v433 = vsub.f32 0.0, %v425
    %v434 = vsub.f32 0.0, %v426
    %v435 = vsub.f32 0.0, %v427
    %v436 = vsub.f32 0.0, %v428
    %v437 = vsel %vm429, %v425, %v433
    %v438 = vsel %vm430, %v426, %v434
    %v439 = vsel %vm431, %v427, %v435
    %v440 = vsel %vm432, %v428, %v436
    %v441 = vadd.f32 %v437, 1.0
    %v442 = vadd.f32 %v438, 1.0
    %v443 = vadd.f32 %v439, 1.0
    %v444 = vadd.f32 %v440, 1.0
    %v445 = vmul.f32 %v341, %v441
    %v446 = vmul.f32 %v342, %v442
    %v447 = vmul.f32 %v343, %v443
    %v448 = vmul.f32 %v344, %v444
    %v449 = vld [vmem:[%s7] sm:$0xff]
    %v450 = vld [vmem:[%s7 + $0x8] sm:$0xff]
    %v451 = vld [vmem:[%s7 + $0x10] sm:$0xff]
    %v452 = vld [vmem:[%s7 + $0x18] sm:$0xff]
    %v453 = vld [vmem:[%s7 + $0x20] sm:$0xff]
    %v454 = vld [vmem:[%s7 + $0x28] sm:$0xff]
    %v455 = vld [vmem:[%s7 + $0x30] sm:$0xff]
    %v456 = vld [vmem:[%s7 + $0x38] sm:$0xff]
    %v457 = vld [vmem:[%s7 + $0x40] sm:$0xff]
    %v458 = vld [vmem:[%s7 + $0x48] sm:$0xff]
    %v459 = vld [vmem:[%s7 + $0x50] sm:$0xff]
    %v460 = vld [vmem:[%s7 + $0x58] sm:$0xff]
    %v461 = vld [vmem:[%s7 + $0x60] sm:$0xff]
    %v462 = vld [vmem:[%s7 + $0x68] sm:$0xff]
    %v463 = vld [vmem:[%s7 + $0x70] sm:$0xff]
    %v464 = vld [vmem:[%s7 + $0x78] sm:$0xff]
    %v465 = vld [vmem:[#allocation2] sm:$0x1]
    %v467 = vlaneseq
    %v468 = vshrl.u32 %v467, 7
    %v469 = vsub.s32 0, %v468
    %v470 = vrot.slane %v465, %v469
    %472 = vmatprep.subr.mxu0 0.0
    %473 = vmatpush1.msra.mxu0 %v449
    %474 = vmatprep.subr.mxu0 0.0
    %475 = vmatpush1.msra.mxu0 %v450
    %476 = vmatprep.subr.mxu0 0.0
    %477 = vmatpush1.msra.mxu0 %v451
    %478 = vmatprep.subr.mxu0 0.0
    %479 = vmatpush1.msra.mxu0 %v452
    %480 = vmatprep.subr.mxu0 0.0
    %481 = vmatpush1.msra.mxu0 %v453
    %482 = vmatprep.subr.mxu0 0.0
    %483 = vmatpush1.msra.mxu0 %v454
    %484 = vmatprep.subr.mxu0 0.0
    %485 = vmatpush1.msra.mxu0 %v455
    %486 = vmatprep.subr.mxu0 0.0
    %487 = vmatpush1.msra.mxu0 %v456
    %488 = vmatprep.subr.mxu0 0.0
    %489 = vmatpush1.msra.mxu0 %v457
    %490 = vmatprep.subr.mxu0 0.0
    %491 = vmatpush1.msra.mxu0 %v458
    %492 = vmatprep.subr.mxu0 0.0
    %493 = vmatpush1.msra.mxu0 %v459
    %494 = vmatprep.subr.mxu0 0.0
    %495 = vmatpush1.msra.mxu0 %v460
    %496 = vmatprep.subr.mxu0 0.0
    %497 = vmatpush1.msra.mxu0 %v461
    %498 = vmatprep.subr.mxu0 0.0
    %499 = vmatpush1.msra.mxu0 %v462
    %500 = vmatprep.subr.mxu0 0.0
    %501 = vmatpush1.msra.mxu0 %v463
    %502 = vmatprep.subr.mxu0 0.0
    %503 = vmatpush1.msra.mxu0 %v464
    %504 = vmatprep.subr.mxu0 0.0
    %505 = vmatpush1.msra.mxu0 0.0
    %506 = vmatprep.subr.mxu0 0.0
    %507 = vmatpush1.msra.mxu0 0.0
    %508 = vmatprep.subr.mxu0 0.0
    %509 = vmatpush1.msra.mxu0 0.0
    %510 = vmatprep.subr.mxu0 0.0
    %511 = vmatpush1.msra.mxu0 0.0
    %512 = vmatprep.subr.mxu0 0.0
    %513 = vmatpush1.msra.mxu0 0.0
    %514 = vmatprep.subr.mxu0 0.0
    %515 = vmatpush1.msra.mxu0 0.0
    %516 = vmatprep.subr.mxu0 0.0
    %517 = vmatpush1.msra.mxu0 0.0
    %518 = vmatprep.subr.mxu0 0.0
    %519 = vmatpush1.msra.mxu0 0.0
    %520 = vmatprep.subr.mxu0 0.0
    %521 = vmatpush1.msra.mxu0 0.0
    %522 = vmatprep.subr.mxu0 0.0
    %523 = vmatpush1.msra.mxu0 0.0
    %524 = vmatprep.subr.mxu0 0.0
    %525 = vmatpush1.msra.mxu0 0.0
    %526 = vmatprep.subr.mxu0 0.0
    %527 = vmatpush1.msra.mxu0 0.0
    %528 = vmatprep.subr.mxu0 0.0
    %529 = vmatpush1.msra.mxu0 0.0
    %530 = vmatprep.subr.mxu0 0.0
    %531 = vmatpush1.msra.mxu0 0.0
    %532 = vmatprep.subr.mxu0 0.0
    %533 = vmatpush1.msra.mxu0 0.0
    %534 = vmatprep.subr.mxu0 0.0
    %535 = vmatpush1.msra.mxu0 0.0
    %536 = vmatprep.mubr.f32.mxu0 0.0
    %537 = vmatmul.mubr.f32.gmra.mrb[0].mxu0 %v445
    %v538 = vpop.f32.mrb[0].mxu0
    %v539 = vadd.f32 %v470, %v538
    %v540 = vpop.f32.mrb[0].mxu0
    %541 = vmatprep.mubr.f32.mxu0 0.0
    %542 = vmatmul.mubr.f32.gmra.mrb[0].mxu0 %v446
    %v543 = vpop.f32.mrb[0].mxu0
    %v544 = vadd.f32 %v470, %v543
    %v545 = vpop.f32.mrb[0].mxu0
    %546 = vmatprep.mubr.f32.mxu0 0.0
    %547 = vmatmul.mubr.f32.gmra.mrb[0].mxu0 %v447
    %v548 = vpop.f32.mrb[0].mxu0
    %v549 = vadd.f32 %v470, %v548
    %v550 = vpop.f32.mrb[0].mxu0
    %551 = vmatprep.mubr.f32.mxu0 0.0
    %552 = vmatmul.mubr.f32.gmra.mrb[0].mxu0 %v448
    %v553 = vpop.f32.mrb[0].mxu0
    %v554 = vadd.f32 %v470, %v553
    %v555 = vpop.f32.mrb[0].mxu0
    %556 = vdwg.mxu0
    %v557 = vadd.f32 %v539, %v154
    %v558 = vadd.f32 %v544, %v155
    %v559 = vadd.f32 %v549, %v156
    %v560 = vadd.f32 %v554, %v157
    %561 = vst.msk [vmem:[%s9] sm:$0xff] %vm52, %v557
    %562 = vst.msk [vmem:[%s9 + $0x8] sm:$0xff] %vm52, %v558
    %563 = vst.msk [vmem:[%s9 + $0x10] sm:$0xff] %vm52, %v559
    %564 = vst.msk [vmem:[%s9 + $0x18] sm:$0xff] %vm52, %v560
    // Predicated region
    $region42: #{channel_transformer.89} parent=1 // pred_check
      _
    $region43: #{channel_transformer.89} parent=1 // pred_check_branch
      %566 = sbr.rel (0) target = $region45
    $region44: #{channel_transformer.89} parent=1 // pred_region
      _
    $region45: #{channel_transformer.89} parent=1 // pred_fallthru
      _
    // Predicated region
    $region46: #{channel_transformer.89} parent=1 // pred_check
      _
    $region47: #{channel_transformer.89} parent=1 // pred_check_branch
      %568 = sbr.rel (0) target = $region49
    $region48: #{channel_transformer.89} parent=1 // pred_region
      _
    $region49: #{channel_transformer.89} parent=1 // pred_fallthru
      _
    %569 = vsyncpa [#allocation3], 1

// kernel: channel_transformer.83
$region0: #{channel_transformer.83}
  #allocation0 [shape = 'u32[]', space=smem, size = 0x4, offset = 0x4, fixed_abs, tag = 'smem constant byte address 0x4 - core index']
  #allocation1 [shape = 'u32[144,128]{1,0:T(1,128)}', space=vmem, size = 0x12000, scoped, tag = 'internal scratch']
  %s0 = inlined_call_operand.vmem [shape: f32[32,32], index: 0, kind: input, shape index: {}]
  %s1 = inlined_call_operand.vmem [shape: f32[32,32], index: 1, kind: input, shape index: {}]
  %s2 = inlined_call_operand.vmem [shape: f32[32,32], index: 2, kind: input, shape index: {}]
  %s3 = inlined_call_operand.vmem [shape: f32[1,32], index: 3, kind: input, shape index: {}]
  %s4 = inlined_call_operand.vmem [shape: f32[1,32], index: 4, kind: input, shape index: {}]
  %s5 = inlined_call_operand.vmem [shape: f32[32,128], index: 5, kind: input, shape index: {}]
  %s6 = inlined_call_operand.vmem [shape: f32[1,128], index: 6, kind: input, shape index: {}]
  %s7 = inlined_call_operand.vmem [shape: f32[128,32], index: 7, kind: input, shape index: {}]
  %s8 = inlined_call_operand.vmem [shape: f32[1,32], index: 8, kind: input, shape index: {}]
  %s9 = inlined_call_operand.vmem [shape: f32[32,32], index: 9, kind: output, shape index: {}]
  %s10 = sld [smem:[#allocation0]]
  $region46: #{channel_transformer.83} parent=0
    _
  %s12 = ssub.s32 1, %s10
  %s13 = scalar_select 0, %s12, %s10
  // Predicated region
  $region2: #{channel_transformer.83} parent=0 // pred_check
    _
  $region3: #{channel_transformer.83} parent=0 // pred_check_branch
    %15 = sbr.rel (0) target = $region5
  $region4: #{channel_transformer.83} parent=0 // pred_region
    _
  $region5: #{channel_transformer.83} parent=0 // pred_fallthru
    _
  // Predicated region
  $region6: #{channel_transformer.83} parent=0 // pred_check
    _
  $region7: #{channel_transformer.83} parent=0 // pred_check_branch
    %17 = sbr.rel (0) target = $region9
  $region8: #{channel_transformer.83} parent=0 // pred_region
    _
  $region9: #{channel_transformer.83} parent=0 // pred_fallthru
    _
  // Predicated region
  $region10: #{channel_transformer.83} parent=0 // pred_check
    _
  $region11: #{channel_transformer.83} parent=0 // pred_check_branch
    %19 = sbr.rel (0) target = $region13
  $region12: #{channel_transformer.83} parent=0 // pred_region
    _
  $region13: #{channel_transformer.83} parent=0 // pred_fallthru
    _
  // Predicated region
  $region14: #{channel_transformer.83} parent=0 // pred_check
    _
  $region15: #{channel_transformer.83} parent=0 // pred_check_branch
    %21 = sbr.rel (0) target = $region17
  $region16: #{channel_transformer.83} parent=0 // pred_region
    _
  $region17: #{channel_transformer.83} parent=0 // pred_fallthru
    _
  // Predicated region
  $region18: #{channel_transformer.83} parent=0 // pred_check
    _
  $region19: #{channel_transformer.83} parent=0 // pred_check_branch
    %23 = sbr.rel (0) target = $region21
  $region20: #{channel_transformer.83} parent=0 // pred_region
    _
  $region21: #{channel_transformer.83} parent=0 // pred_fallthru
    _
  // Predicated region
  $region22: #{channel_transformer.83} parent=0 // pred_check
    _
  $region23: #{channel_transformer.83} parent=0 // pred_check_branch
    %25 = sbr.rel (0) target = $region25
  $region24: #{channel_transformer.83} parent=0 // pred_region
    _
  $region25: #{channel_transformer.83} parent=0 // pred_fallthru
    _
  // Predicated region
  $region26: #{channel_transformer.83} parent=0 // pred_check
    _
  $region27: #{channel_transformer.83} parent=0 // pred_check_branch
    %27 = sbr.rel (0) target = $region29
  $region28: #{channel_transformer.83} parent=0 // pred_region
    _
  $region29: #{channel_transformer.83} parent=0 // pred_fallthru
    _
  // Predicated region
  $region30: #{channel_transformer.83} parent=0 // pred_check
    _
  $region31: #{channel_transformer.83} parent=0 // pred_check_branch
    %29 = sbr.rel (0) target = $region33
  $region32: #{channel_transformer.83} parent=0 // pred_region
    _
  $region33: #{channel_transformer.83} parent=0 // pred_fallthru
    _
  // Predicated region
  $region34: #{channel_transformer.83} parent=0 // pred_check
    _
  $region35: #{channel_transformer.83} parent=0 // pred_check_branch
    %31 = sbr.rel (0) target = $region37
  $region36: #{channel_transformer.83} parent=0 // pred_region
    _
  $region37: #{channel_transformer.83} parent=0 // pred_fallthru
    _
  %v32 = vld [vmem:[%s0] sm:$0xff]
  %v33 = vld [vmem:[%s0 + $0x8] sm:$0xff]
  %v34 = vld [vmem:[%s0 + $0x10] sm:$0xff]
  %v35 = vld [vmem:[%s0 + $0x18] sm:$0xff]
  %v36 = vld [vmem:[%s2] sm:$0xff]
  %v37 = vld [vmem:[%s2 + $0x8] sm:$0xff]
  %v38 = vld [vmem:[%s2 + $0x10] sm:$0xff]
  %v39 = vld [vmem:[%s2 + $0x18] sm:$0xff]
  %vm40 = vcmask 261120
  %v42 = vsel %vm40, %v32, 0
  %v45 = vsel %vm40, %v33, 0
  %v48 = vsel %vm40, %v34, 0
  %v51 = vsel %vm40, %v35, 0
  %53 = vmatprep.subr.mxu0 0.0
  %54 = vmatpush1.msra.mxu0 %v36
  %55 = vmatprep.subr.mxu0 0.0
  %56 = vmatpush1.msra.mxu0 %v37
  %57 = vmatprep.subr.mxu0 0.0
  %58 = vmatpush1.msra.mxu0 %v38
  %59 = vmatprep.subr.mxu0 0.0
  %60 = vmatpush1.msra.mxu0 %v39
  %61 = vmatprep.subr.mxu0 0.0
  %62 = vmatpush1.msra.mxu0 0.0
  %63 = vmatprep.subr.mxu0 0.0
  %64 = vmatpush1.msra.mxu0 0.0
  %65 = vmatprep.subr.mxu0 0.0
  %66 = vmatpush1.msra.mxu0 0.0
  %67 = vmatprep.subr.mxu0 0.0
  %68 = vmatpush1.msra.mxu0 0.0
  %69 = vmatprep.subr.mxu0 0.0
  %70 = vmatpush1.msra.mxu0 0.0
  %71 = vmatprep.subr.mxu0 0.0
  %72 = vmatpush1.msra.mxu0 0.0
  %73 = vmatprep.subr.mxu0 0.0
  %74 = vmatpush1.msra.mxu0 0.0
  %75 = vmatprep.subr.mxu0 0.0
  %76 = vmatpush1.msra.mxu0 0.0
  %77 = vmatprep.subr.mxu0 0.0
  %78 = vmatpush1.msra.mxu0 0.0
  %79 = vmatprep.subr.mxu0 0.0
  %80 = vmatpush1.msra.mxu0 0.0
  %81 = vmatprep.subr.mxu0 0.0
  %82 = vmatpush1.msra.mxu0 0.0
  %83 = vmatprep.subr.mxu0 0.0
  %84 = vmatpush1.msra.mxu0 0.0
  %85 = vmatprep.subr.mxu0 0.0
  %86 = vmatpush1.msra.mxu0 0.0
  %87 = vmatprep.subr.mxu0 0.0
  %88 = vmatpush1.msra.mxu0 0.0
  %89 = vmatprep.subr.mxu0 0.0
  %90 = vmatpush1.msra.mxu0 0.0
  %91 = vmatprep.subr.mxu0 0.0
  %92 = vmatpush1.msra.mxu0 0.0
  %93 = vmatprep.subr.mxu0 0.0
  %94 = vmatpush1.msra.mxu0 0.0
  %95 = vmatprep.subr.mxu0 0.0
  %96 = vmatpush1.msra.mxu0 0.0
  %97 = vmatprep.subr.mxu0 0.0
  %98 = vmatpush1.msra.mxu0 0.0
  %99 = vmatprep.subr.mxu0 0.0
  %100 = vmatpush1.msra.mxu0 0.0
  %101 = vmatprep.subr.mxu0 0.0
  %102 = vmatpush1.msra.mxu0 0.0
  %103 = vmatprep.subr.mxu0 0.0
  %104 = vmatpush1.msra.mxu0 0.0
  %105 = vmatprep.subr.mxu0 0.0
  %106 = vmatpush1.msra.mxu0 0.0
  %107 = vmatprep.subr.mxu0 0.0
  %108 = vmatpush1.msra.mxu0 0.0
  %109 = vmatprep.subr.mxu0 0.0
  %110 = vmatpush1.msra.mxu0 0.0
  %111 = vmatprep.subr.mxu0 0.0
  %112 = vmatpush1.msra.mxu0 0.0
  %113 = vmatprep.subr.mxu0 0.0
  %114 = vmatpush1.msra.mxu0 0.0
  %115 = vmatprep.subr.mxu0 0.0
  %116 = vmatpush1.msra.mxu0 0.0
  %117 = vmatprep.mubr.f32.mxu0 0.0
  %118 = vmatmul.mubr.f32.gmra.mrb[0].mxu0 %v42
  %v119 = vpop.f32.mrb[0].mxu0
  %v120 = vadd.f32 0.0, %v119
  %v121 = vpop.f32.mrb[0].mxu0
  %122 = vmatprep.mubr.f32.mxu0 0.0
  %123 = vmatmul.mubr.f32.gmra.mrb[0].mxu0 %v45
  %v124 = vpop.f32.mrb[0].mxu0
  %v125 = vadd.f32 0.0, %v124
  %v126 = vpop.f32.mrb[0].mxu0
  %127 = vmatprep.mubr.f32.mxu0 0.0
  %128 = vmatmul.mubr.f32.gmra.mrb[0].mxu0 %v48
  %v129 = vpop.f32.mrb[0].mxu0
  %v130 = vadd.f32 0.0, %v129
  %v131 = vpop.f32.mrb[0].mxu0
  %132 = vmatprep.mubr.f32.mxu0 0.0
  %133 = vmatmul.mubr.f32.gmra.mrb[0].mxu0 %v51
  %v134 = vpop.f32.mrb[0].mxu0
  %v135 = vadd.f32 0.0, %v134
  %v136 = vpop.f32.mrb[0].mxu0
  %137 = vdwg.mxu0
  %v138 = vld [vmem:[%s1] sm:$0xff]
  %v139 = vld [vmem:[%s1 + $0x8] sm:$0xff]
  %v140 = vld [vmem:[%s1 + $0x10] sm:$0xff]
  %v141 = vld [vmem:[%s1 + $0x18] sm:$0xff]
  %v142 = vadd.f32 %v138, %v120
  %v143 = vadd.f32 %v139, %v125
  %v144 = vadd.f32 %v140, %v130
  %v145 = vadd.f32 %v141, %v135
  %v146 = vsel %vm40, %v142, 0.0
  %147 = vadd.xlane.f32.xlu0 %v146
  %v148 = vpop.xlane.xlu0 %147
  %v149 = vsel %vm40, %v143, 0.0
  %150 = vadd.xlane.f32.xlu0 %v149
  %v151 = vpop.xlane.xlu0 %150
  %v152 = vsel %vm40, %v144, 0.0
  %153 = vadd.xlane.f32.xlu0 %v152
  %v154 = vpop.xlane.xlu0 %153
  %v155 = vsel %vm40, %v145, 0.0
  %156 = vadd.xlane.f32.xlu0 %v155
  %v157 = vpop.xlane.xlu0 %156
  %v158 = vrcp.pop 32.0
  %v159 = vmul.f32 %v148, %v158
  %v160 = vmul.f32 %v151, %v158
  %v161 = vmul.f32 %v154, %v158
  %v162 = vmul.f32 %v157, %v158
  %v163 = vsub.f32 %v142, %v159
  %v164 = vsub.f32 %v143, %v160
  %v165 = vsub.f32 %v144, %v161
  %v166 = vsub.f32 %v145, %v162
  %v167 = vmul.f32 %v163, %v163
  %v168 = vmul.f32 %v164, %v164
  %v169 = vmul.f32 %v165, %v165
  %v170 = vmul.f32 %v166, %v166
  %v171 = vsel %vm40, %v167, 0.0
  %172 = vadd.xlane.f32.xlu0 %v171
  %v173 = vpop.xlane.xlu0 %172
  %v174 = vsel %vm40, %v168, 0.0
  %175 = vadd.xlane.f32.xlu0 %v174
  %v176 = vpop.xlane.xlu0 %175
  %v177 = vsel %vm40, %v169, 0.0
  %178 = vadd.xlane.f32.xlu0 %v177
  %v179 = vpop.xlane.xlu0 %178
  %v180 = vsel %vm40, %v170, 0.0
  %181 = vadd.xlane.f32.xlu0 %v180
  %v182 = vpop.xlane.xlu0 %181
  %v183 = vmul.f32 %v173, %v158
  %v184 = vmul.f32 %v176, %v158
  %v185 = vmul.f32 %v179, %v158
  %v186 = vmul.f32 %v182, %v158
  %v187 = vadd.f32 %v183, 1e-06
  %v188 = vadd.f32 %v184, 1e-06
  %v189 = vadd.f32 %v185, 1e-06
  %v190 = vadd.f32 %v186, 1e-06
  %v191 = vrsqrt.pop %v187
  %v192 = vrsqrt.pop %v188
  %v193 = vrsqrt.pop %v189
  %v194 = vrsqrt.pop %v190
  %v195 = vmul.f32 %v163, %v191
  %v196 = vmul.f32 %v164, %v192
  %v197 = vmul.f32 %v165, %v193
  %v198 = vmul.f32 %v166, %v194
  %v199 = vld [vmem:[%s3] sm:$0x1]
  %v201 = vlaneseq
  %v202 = vshrl.u32 %v201, 7
  %v203 = vsub.s32 0, %v202
  %v204 = vrot.slane %v199, %v203
  %v206 = vmul.f32 %v195, %v204
  %v207 = vmul.f32 %v196, %v204
  %v208 = vmul.f32 %v197, %v204
  %v209 = vmul.f32 %v198, %v204
  %v210 = vld [vmem:[%s4] sm:$0x1]
  %v212 = vlaneseq
  %v213 = vshrl.u32 %v212, 7
  %v214 = vsub.s32 0, %v213
  %v215 = vrot.slane %v210, %v214
  %v217 = vadd.f32 %v206, %v215
  %v218 = vadd.f32 %v207, %v215
  %v219 = vadd.f32 %v208, %v215
  %v220 = vadd.f32 %v209, %v215
  %v221 = vld [vmem:[%s5] sm:$0xff]
  %v222 = vld [vmem:[%s5 + $0x8] sm:$0xff]
  %v223 = vld [vmem:[%s5 + $0x10] sm:$0xff]
  %v224 = vld [vmem:[%s5 + $0x18] sm:$0xff]
  %v225 = vld [vmem:[%s6] sm:$0x1]
  %v227 = vlaneseq
  %v228 = vshrl.u32 %v227, 7
  %v229 = vsub.s32 0, %v228
  %v230 = vrot.slane %v225, %v229
  %v233 = vsel %vm40, %v217, 0
  %v236 = vsel %vm40, %v218, 0
  %v239 = vsel %vm40, %v219, 0
  %v242 = vsel %vm40, %v220, 0
  %244 = vmatprep.subr.mxu0 0.0
  %245 = vmatpush1.msra.mxu0 %v221
  %246 = vmatprep.subr.mxu0 0.0
  %247 = vmatpush1.msra.mxu0 %v222
  %248 = vmatprep.subr.mxu0 0.0
  %249 = vmatpush1.msra.mxu0 %v223
  %250 = vmatprep.subr.mxu0 0.0
  %251 = vmatpush1.msra.mxu0 %v224
  %252 = vmatprep.subr.mxu0 0.0
  %253 = vmatpush1.msra.mxu0 0.0
  %254 = vmatprep.subr.mxu0 0.0
  %255 = vmatpush1.msra.mxu0 0.0
  %256 = vmatprep.subr.mxu0 0.0
  %257 = vmatpush1.msra.mxu0 0.0
  %258 = vmatprep.subr.mxu0 0.0
  %259 = vmatpush1.msra.mxu0 0.0
  %260 = vmatprep.subr.mxu0 0.0
  %261 = vmatpush1.msra.mxu0 0.0
  %262 = vmatprep.subr.mxu0 0.0
  %263 = vmatpush1.msra.mxu0 0.0
  %264 = vmatprep.subr.mxu0 0.0
  %265 = vmatpush1.msra.mxu0 0.0
  %266 = vmatprep.subr.mxu0 0.0
  %267 = vmatpush1.msra.mxu0 0.0
  %268 = vmatprep.subr.mxu0 0.0
  %269 = vmatpush1.msra.mxu0 0.0
  %270 = vmatprep.subr.mxu0 0.0
  %271 = vmatpush1.msra.mxu0 0.0
  %272 = vmatprep.subr.mxu0 0.0
  %273 = vmatpush1.msra.mxu0 0.0
  %274 = vmatprep.subr.mxu0 0.0
  %275 = vmatpush1.msra.mxu0 0.0
  %276 = vmatprep.subr.mxu0 0.0
  %277 = vmatpush1.msra.mxu0 0.0
  %278 = vmatprep.subr.mxu0 0.0
  %279 = vmatpush1.msra.mxu0 0.0
  %280 = vmatprep.subr.mxu0 0.0
  %281 = vmatpush1.msra.mxu0 0.0
  %282 = vmatprep.subr.mxu0 0.0
  %283 = vmatpush1.msra.mxu0 0.0
  %284 = vmatprep.subr.mxu0 0.0
  %285 = vmatpush1.msra.mxu0 0.0
  %286 = vmatprep.subr.mxu0 0.0
  %287 = vmatpush1.msra.mxu0 0.0
  %288 = vmatprep.subr.mxu0 0.0
  %289 = vmatpush1.msra.mxu0 0.0
  %290 = vmatprep.subr.mxu0 0.0
  %291 = vmatpush1.msra.mxu0 0.0
  %292 = vmatprep.subr.mxu0 0.0
  %293 = vmatpush1.msra.mxu0 0.0
  %294 = vmatprep.subr.mxu0 0.0
  %295 = vmatpush1.msra.mxu0 0.0
  %296 = vmatprep.subr.mxu0 0.0
  %297 = vmatpush1.msra.mxu0 0.0
  %298 = vmatprep.subr.mxu0 0.0
  %299 = vmatpush1.msra.mxu0 0.0
  %300 = vmatprep.subr.mxu0 0.0
  %301 = vmatpush1.msra.mxu0 0.0
  %302 = vmatprep.subr.mxu0 0.0
  %303 = vmatpush1.msra.mxu0 0.0
  %304 = vmatprep.subr.mxu0 0.0
  %305 = vmatpush1.msra.mxu0 0.0
  %306 = vmatprep.subr.mxu0 0.0
  %307 = vmatpush1.msra.mxu0 0.0
  %308 = vmatprep.mubr.f32.mxu0 0.0
  %309 = vmatmul.mubr.f32.gmra.mrb[0].mxu0 %v233
  %v310 = vpop.f32.mrb[0].mxu0
  %v311 = vadd.f32 %v230, %v310
  %v312 = vpop.f32.mrb[0].mxu0
  %313 = vmatprep.mubr.f32.mxu0 0.0
  %314 = vmatmul.mubr.f32.gmra.mrb[0].mxu0 %v236
  %v315 = vpop.f32.mrb[0].mxu0
  %v316 = vadd.f32 %v230, %v315
  %v317 = vpop.f32.mrb[0].mxu0
  %318 = vmatprep.mubr.f32.mxu0 0.0
  %319 = vmatmul.mubr.f32.gmra.mrb[0].mxu0 %v239
  %v320 = vpop.f32.mrb[0].mxu0
  %v321 = vadd.f32 %v230, %v320
  %v322 = vpop.f32.mrb[0].mxu0
  %323 = vmatprep.mubr.f32.mxu0 0.0
  %324 = vmatmul.mubr.f32.gmra.mrb[0].mxu0 %v242
  %v325 = vpop.f32.mrb[0].mxu0
  %v326 = vadd.f32 %v230, %v325
  %v327 = vpop.f32.mrb[0].mxu0
  %328 = vdwg.mxu0
  %v329 = vmul.f32 %v311, 0.5
  %v330 = vmul.f32 %v316, 0.5
  %v331 = vmul.f32 %v321, 0.5
  %v332 = vmul.f32 %v326, 0.5
  %v333 = vmul.f32 %v311, 0.70710677
  %v334 = vmul.f32 %v316, 0.70710677
  %v335 = vmul.f32 %v321, 0.70710677
  %v336 = vmul.f32 %v326, 0.70710677
  %v337 = vand.u32 2147483647, %v333
  %v338 = vand.u32 2147483647, %v334
  %v339 = vand.u32 2147483647, %v335
  %v340 = vand.u32 2147483647, %v336
  %v341 = vmul.f32 %v337, 0.3275911
  %v342 = vmul.f32 %v338, 0.3275911
  %v343 = vmul.f32 %v339, 0.3275911
  %v344 = vmul.f32 %v340, 0.3275911
  %v345 = vadd.f32 %v341, 1.0
  %v346 = vadd.f32 %v342, 1.0
  %v347 = vadd.f32 %v343, 1.0
  %v348 = vadd.f32 %v344, 1.0
  %v349 = vrcp.pop %v345
  %v350 = vmul.f32 1.0, %v349
  %v351 = vrcp.pop %v346
  %v352 = vmul.f32 1.0, %v351
  %v353 = vrcp.pop %v347
  %v354 = vmul.f32 1.0, %v353
  %v355 = vrcp.pop %v348
  %v356 = vmul.f32 1.0, %v355
  %v357 = vmul.f32 %v350, 1.0614054
  %v358 = vmul.f32 %v352, 1.0614054
  %v359 = vmul.f32 %v354, 1.0614054
  %v360 = vmul.f32 %v356, 1.0614054
  %v361 = vadd.f32 %v357, -1.4531521
  %v362 = vadd.f32 %v358, -1.4531521
  %v363 = vadd.f32 %v359, -1.4531521
  %v364 = vadd.f32 %v360, -1.4531521
  %v365 = vmul.f32 %v361, %v350
  %v366 = vmul.f32 %v362, %v352
  %v367 = vmul.f32 %v363, %v354
  %v368 = vmul.f32 %v364, %v356
  %v369 = vadd.f32 %v365, 1.4214138
  %v370 = vadd.f32 %v366, 1.4214138
  %v371 = vadd.f32 %v367, 1.4214138
  %v372 = vadd.f32 %v368, 1.4214138
  %v373 = vmul.f32 %v369, %v350
  %v374 = vmul.f32 %v370, %v352
  %v375 = vmul.f32 %v371, %v354
  %v376 = vmul.f32 %v372, %v356
  %v377 = vadd.f32 %v373, -0.28449672
  %v378 = vadd.f32 %v374, -0.28449672
  %v379 = vadd.f32 %v375, -0.28449672
  %v380 = vadd.f32 %v376, -0.28449672
  %v381 = vmul.f32 %v377, %v350
  %v382 = vmul.f32 %v378, %v352
  %v383 = vmul.f32 %v379, %v354
  %v384 = vmul.f32 %v380, %v356
  %v385 = vadd.f32 %v381, 0.2548296
  %v386 = vadd.f32 %v382, 0.2548296
  %v387 = vadd.f32 %v383, 0.2548296
  %v388 = vadd.f32 %v384, 0.2548296
  %v389 = vmul.f32 %v385, %v350
  %v390 = vmul.f32 %v386, %v352
  %v391 = vmul.f32 %v387, %v354
  %v392 = vmul.f32 %v388, %v356
  %v393 = vsub.f32 0.0, %v337
  %v394 = vsub.f32 0.0, %v338
  %v395 = vsub.f32 0.0, %v339
  %v396 = vsub.f32 0.0, %v340
  %v397 = vmul.f32 %v393, %v337
  %v398 = vmul.f32 %v394, %v338
  %v399 = vmul.f32 %v395, %v339
  %v400 = vmul.f32 %v396, %v340
  %v401 = vmul.f32 %v397, 1.442695
  %v402 = vpow.pop %v401
  %v403 = vmul.f32 %v398, 1.442695
  %v404 = vpow.pop %v403
  %v405 = vmul.f32 %v399, 1.442695
  %v406 = vpow.pop %v405
  %v407 = vmul.f32 %v400, 1.442695
  %v408 = vpow.pop %v407
  %v409 = vmul.f32 %v389, %v402
  %v410 = vmul.f32 %v390, %v404
  %v411 = vmul.f32 %v391, %v406
  %v412 = vmul.f32 %v392, %v408
  %v413 = vsub.f32 1.0, %v409
  %v414 = vsub.f32 1.0, %v410
  %v415 = vsub.f32 1.0, %v411
  %v416 = vsub.f32 1.0, %v412
  %vm417 = vcmp.ge.f32.partialorder %v333, 0.0
  %vm418 = vcmp.ge.f32.partialorder %v334, 0.0
  %vm419 = vcmp.ge.f32.partialorder %v335, 0.0
  %vm420 = vcmp.ge.f32.partialorder %v336, 0.0
  %v421 = vsub.f32 0.0, %v413
  %v422 = vsub.f32 0.0, %v414
  %v423 = vsub.f32 0.0, %v415
  %v424 = vsub.f32 0.0, %v416
  %v425 = vsel %vm417, %v413, %v421
  %v426 = vsel %vm418, %v414, %v422
  %v427 = vsel %vm419, %v415, %v423
  %v428 = vsel %vm420, %v416, %v424
  %v429 = vadd.f32 %v425, 1.0
  %v430 = vadd.f32 %v426, 1.0
  %v431 = vadd.f32 %v427, 1.0
  %v432 = vadd.f32 %v428, 1.0
  %v433 = vmul.f32 %v329, %v429
  %v434 = vmul.f32 %v330, %v430
  %v435 = vmul.f32 %v331, %v431
  %v436 = vmul.f32 %v332, %v432
  %v437 = vld [vmem:[%s7] sm:$0xff]
  %v438 = vld [vmem:[%s7 + $0x8] sm:$0xff]
  %v439 = vld [vmem:[%s7 + $0x10] sm:$0xff]
  %v440 = vld [vmem:[%s7 + $0x18] sm:$0xff]
  %v441 = vld [vmem:[%s7 + $0x20] sm:$0xff]
  %v442 = vld [vmem:[%s7 + $0x28] sm:$0xff]
  %v443 = vld [vmem:[%s7 + $0x30] sm:$0xff]
  %v444 = vld [vmem:[%s7 + $0x38] sm:$0xff]
  %v445 = vld [vmem:[%s7 + $0x40] sm:$0xff]
  %v446 = vld [vmem:[%s7 + $0x48] sm:$0xff]
  %v447 = vld [vmem:[%s7 + $0x50] sm:$0xff]
  %v448 = vld [vmem:[%s7 + $0x58] sm:$0xff]
  %v449 = vld [vmem:[%s7 + $0x60] sm:$0xff]
  %v450 = vld [vmem:[%s7 + $0x68] sm:$0xff]
  %v451 = vld [vmem:[%s7 + $0x70] sm:$0xff]
  %v452 = vld [vmem:[%s7 + $0x78] sm:$0xff]
  %v453 = vld [vmem:[%s8] sm:$0x1]
  %v455 = vlaneseq
  %v456 = vshrl.u32 %v455, 7
  %v457 = vsub.s32 0, %v456
  %v458 = vrot.slane %v453, %v457
  %460 = vmatprep.subr.mxu0 0.0
  %461 = vmatpush1.msra.mxu0 %v437
  %462 = vmatprep.subr.mxu0 0.0
  %463 = vmatpush1.msra.mxu0 %v438
  %464 = vmatprep.subr.mxu0 0.0
  %465 = vmatpush1.msra.mxu0 %v439
  %466 = vmatprep.subr.mxu0 0.0
  %467 = vmatpush1.msra.mxu0 %v440
  %468 = vmatprep.subr.mxu0 0.0
  %469 = vmatpush1.msra.mxu0 %v441
  %470 = vmatprep.subr.mxu0 0.0
  %471 = vmatpush1.msra.mxu0 %v442
  %472 = vmatprep.subr.mxu0 0.0
  %473 = vmatpush1.msra.mxu0 %v443
  %474 = vmatprep.subr.mxu0 0.0
  %475 = vmatpush1.msra.mxu0 %v444
  %476 = vmatprep.subr.mxu0 0.0
  %477 = vmatpush1.msra.mxu0 %v445
  %478 = vmatprep.subr.mxu0 0.0
  %479 = vmatpush1.msra.mxu0 %v446
  %480 = vmatprep.subr.mxu0 0.0
  %481 = vmatpush1.msra.mxu0 %v447
  %482 = vmatprep.subr.mxu0 0.0
  %483 = vmatpush1.msra.mxu0 %v448
  %484 = vmatprep.subr.mxu0 0.0
  %485 = vmatpush1.msra.mxu0 %v449
  %486 = vmatprep.subr.mxu0 0.0
  %487 = vmatpush1.msra.mxu0 %v450
  %488 = vmatprep.subr.mxu0 0.0
  %489 = vmatpush1.msra.mxu0 %v451
  %490 = vmatprep.subr.mxu0 0.0
  %491 = vmatpush1.msra.mxu0 %v452
  %492 = vmatprep.subr.mxu0 0.0
  %493 = vmatpush1.msra.mxu0 0.0
  %494 = vmatprep.subr.mxu0 0.0
  %495 = vmatpush1.msra.mxu0 0.0
  %496 = vmatprep.subr.mxu0 0.0
  %497 = vmatpush1.msra.mxu0 0.0
  %498 = vmatprep.subr.mxu0 0.0
  %499 = vmatpush1.msra.mxu0 0.0
  %500 = vmatprep.subr.mxu0 0.0
  %501 = vmatpush1.msra.mxu0 0.0
  %502 = vmatprep.subr.mxu0 0.0
  %503 = vmatpush1.msra.mxu0 0.0
  %504 = vmatprep.subr.mxu0 0.0
  %505 = vmatpush1.msra.mxu0 0.0
  %506 = vmatprep.subr.mxu0 0.0
  %507 = vmatpush1.msra.mxu0 0.0
  %508 = vmatprep.subr.mxu0 0.0
  %509 = vmatpush1.msra.mxu0 0.0
  %510 = vmatprep.subr.mxu0 0.0
  %511 = vmatpush1.msra.mxu0 0.0
  %512 = vmatprep.subr.mxu0 0.0
  %513 = vmatpush1.msra.mxu0 0.0
  %514 = vmatprep.subr.mxu0 0.0
  %515 = vmatpush1.msra.mxu0 0.0
  %516 = vmatprep.subr.mxu0 0.0
  %517 = vmatpush1.msra.mxu0 0.0
  %518 = vmatprep.subr.mxu0 0.0
  %519 = vmatpush1.msra.mxu0 0.0
  %520 = vmatprep.subr.mxu0 0.0
  %521 = vmatpush1.msra.mxu0 0.0
  %522 = vmatprep.subr.mxu0 0.0
  %523 = vmatpush1.msra.mxu0 0.0
  %524 = vmatprep.mubr.f32.mxu0 0.0
  %525 = vmatmul.mubr.f32.gmra.mrb[0].mxu0 %v433
  %v526 = vpop.f32.mrb[0].mxu0
  %v527 = vadd.f32 %v458, %v526
  %v528 = vpop.f32.mrb[0].mxu0
  %529 = vmatprep.mubr.f32.mxu0 0.0
  %530 = vmatmul.mubr.f32.gmra.mrb[0].mxu0 %v434
  %v531 = vpop.f32.mrb[0].mxu0
  %v532 = vadd.f32 %v458, %v531
  %v533 = vpop.f32.mrb[0].mxu0
  %534 = vmatprep.mubr.f32.mxu0 0.0
  %535 = vmatmul.mubr.f32.gmra.mrb[0].mxu0 %v435
  %v536 = vpop.f32.mrb[0].mxu0
  %v537 = vadd.f32 %v458, %v536
  %v538 = vpop.f32.mrb[0].mxu0
  %539 = vmatprep.mubr.f32.mxu0 0.0
  %540 = vmatmul.mubr.f32.gmra.mrb[0].mxu0 %v436
  %v541 = vpop.f32.mrb[0].mxu0
  %v542 = vadd.f32 %v458, %v541
  %v543 = vpop.f32.mrb[0].mxu0
  %544 = vdwg.mxu0
  %v545 = vadd.f32 %v527, %v142
  %v546 = vadd.f32 %v532, %v143
  %v547 = vadd.f32 %v537, %v144
  %v548 = vadd.f32 %v542, %v145
  %549 = vst.msk [vmem:[%s9] sm:$0xff] %vm40, %v545
  %550 = vst.msk [vmem:[%s9 + $0x8] sm:$0xff] %vm40, %v546
  %551 = vst.msk [vmem:[%s9 + $0x10] sm:$0xff] %vm40, %v547
  %552 = vst.msk [vmem:[%s9 + $0x18] sm:$0xff] %vm40, %v548
  // Predicated region
  $region38: #{channel_transformer.83} parent=0 // pred_check
    _
  $region39: #{channel_transformer.83} parent=0 // pred_check_branch
    %554 = sbr.rel (0) target = $region41
  $region40: #{channel_transformer.83} parent=0 // pred_region
    _
  $region41: #{channel_transformer.83} parent=0 // pred_fallthru
    _
  // Predicated region
  $region42: #{channel_transformer.83} parent=0 // pred_check
    _
  $region43: #{channel_transformer.83} parent=0 // pred_check_branch
    %556 = sbr.rel (0) target = $region45
  $region44: #{channel_transformer.83} parent=0 // pred_region
    _
  $region45: #{channel_transformer.83} parent=0 // pred_fallthru
    _

// kernel: channel_transformer.110
$region0: #{channel_transformer.110}
  #allocation0 [shape = 'u32[]', space=smem, size = 0x4, offset = 0x4, fixed_abs, tag = 'smem constant byte address 0x4 - core index']
  #allocation1 [shape = 'u32[144,128]{1,0:T(1,128)}', space=vmem, size = 0x12000, scoped, tag = 'internal scratch']
  %s0 = inlined_call_operand.vmem [shape: f32[32,32], index: 0, kind: input, shape index: {}]
  %s1 = inlined_call_operand.vmem [shape: f32[1,32], index: 1, kind: input, shape index: {}]
  %s2 = inlined_call_operand.vmem [shape: f32[1,32], index: 2, kind: input, shape index: {}]
  %s3 = inlined_call_operand.vmem [shape: f32[32,32], index: 3, kind: output, shape index: {}]
  %s4 = sld [smem:[#allocation0]]
  $region22: #{channel_transformer.110} parent=0
    _
  %s6 = ssub.s32 1, %s4
  %s7 = scalar_select 0, %s6, %s4
  // Predicated region
  $region2: #{channel_transformer.110} parent=0 // pred_check
    _
  $region3: #{channel_transformer.110} parent=0 // pred_check_branch
    %9 = sbr.rel (0) target = $region5
  $region4: #{channel_transformer.110} parent=0 // pred_region
    _
  $region5: #{channel_transformer.110} parent=0 // pred_fallthru
    _
  // Predicated region
  $region6: #{channel_transformer.110} parent=0 // pred_check
    _
  $region7: #{channel_transformer.110} parent=0 // pred_check_branch
    %11 = sbr.rel (0) target = $region9
  $region8: #{channel_transformer.110} parent=0 // pred_region
    _
  $region9: #{channel_transformer.110} parent=0 // pred_fallthru
    _
  // Predicated region
  $region10: #{channel_transformer.110} parent=0 // pred_check
    _
  $region11: #{channel_transformer.110} parent=0 // pred_check_branch
    %13 = sbr.rel (0) target = $region13
  $region12: #{channel_transformer.110} parent=0 // pred_region
    _
  $region13: #{channel_transformer.110} parent=0 // pred_fallthru
    _
  %v14 = vld [vmem:[%s0] sm:$0xff]
  %v15 = vld [vmem:[%s0 + $0x8] sm:$0xff]
  %v16 = vld [vmem:[%s0 + $0x10] sm:$0xff]
  %v17 = vld [vmem:[%s0 + $0x18] sm:$0xff]
  %vm18 = vcmask 261120
  %v19 = vsel %vm18, %v14, 0.0
  %20 = vadd.xlane.f32.xlu0 %v19
  %v21 = vpop.xlane.xlu0 %20
  %v22 = vsel %vm18, %v15, 0.0
  %23 = vadd.xlane.f32.xlu0 %v22
  %v24 = vpop.xlane.xlu0 %23
  %v25 = vsel %vm18, %v16, 0.0
  %26 = vadd.xlane.f32.xlu0 %v25
  %v27 = vpop.xlane.xlu0 %26
  %v28 = vsel %vm18, %v17, 0.0
  %29 = vadd.xlane.f32.xlu0 %v28
  %v30 = vpop.xlane.xlu0 %29
  %v31 = vrcp.pop 32.0
  %v32 = vmul.f32 %v21, %v31
  %v33 = vmul.f32 %v24, %v31
  %v34 = vmul.f32 %v27, %v31
  %v35 = vmul.f32 %v30, %v31
  %v36 = vsub.f32 %v14, %v32
  %v37 = vsub.f32 %v15, %v33
  %v38 = vsub.f32 %v16, %v34
  %v39 = vsub.f32 %v17, %v35
  %v40 = vmul.f32 %v36, %v36
  %v41 = vmul.f32 %v37, %v37
  %v42 = vmul.f32 %v38, %v38
  %v43 = vmul.f32 %v39, %v39
  %v44 = vsel %vm18, %v40, 0.0
  %45 = vadd.xlane.f32.xlu0 %v44
  %v46 = vpop.xlane.xlu0 %45
  %v47 = vsel %vm18, %v41, 0.0
  %48 = vadd.xlane.f32.xlu0 %v47
  %v49 = vpop.xlane.xlu0 %48
  %v50 = vsel %vm18, %v42, 0.0
  %51 = vadd.xlane.f32.xlu0 %v50
  %v52 = vpop.xlane.xlu0 %51
  %v53 = vsel %vm18, %v43, 0.0
  %54 = vadd.xlane.f32.xlu0 %v53
  %v55 = vpop.xlane.xlu0 %54
  %v56 = vmul.f32 %v46, %v31
  %v57 = vmul.f32 %v49, %v31
  %v58 = vmul.f32 %v52, %v31
  %v59 = vmul.f32 %v55, %v31
  %v60 = vadd.f32 %v56, 1e-06
  %v61 = vadd.f32 %v57, 1e-06
  %v62 = vadd.f32 %v58, 1e-06
  %v63 = vadd.f32 %v59, 1e-06
  %v64 = vrsqrt.pop %v60
  %v65 = vrsqrt.pop %v61
  %v66 = vrsqrt.pop %v62
  %v67 = vrsqrt.pop %v63
  %v68 = vmul.f32 %v36, %v64
  %v69 = vmul.f32 %v37, %v65
  %v70 = vmul.f32 %v38, %v66
  %v71 = vmul.f32 %v39, %v67
  %v72 = vld [vmem:[%s1] sm:$0x1]
  %v74 = vlaneseq
  %v75 = vshrl.u32 %v74, 7
  %v76 = vsub.s32 0, %v75
  %v77 = vrot.slane %v72, %v76
  %v79 = vmul.f32 %v68, %v77
  %v80 = vmul.f32 %v69, %v77
  %v81 = vmul.f32 %v70, %v77
  %v82 = vmul.f32 %v71, %v77
  %v83 = vld [vmem:[%s2] sm:$0x1]
  %v85 = vlaneseq
  %v86 = vshrl.u32 %v85, 7
  %v87 = vsub.s32 0, %v86
  %v88 = vrot.slane %v83, %v87
  %v90 = vadd.f32 %v79, %v88
  %v91 = vadd.f32 %v80, %v88
  %v92 = vadd.f32 %v81, %v88
  %v93 = vadd.f32 %v82, %v88
  %94 = vst.msk [vmem:[%s3] sm:$0xff] %vm18, %v90
  %95 = vst.msk [vmem:[%s3 + $0x8] sm:$0xff] %vm18, %v91
  %96 = vst.msk [vmem:[%s3 + $0x10] sm:$0xff] %vm18, %v92
  %97 = vst.msk [vmem:[%s3 + $0x18] sm:$0xff] %vm18, %v93
  // Predicated region
  $region14: #{channel_transformer.110} parent=0 // pred_check
    _
  $region15: #{channel_transformer.110} parent=0 // pred_check_branch
    %99 = sbr.rel (0) target = $region17
  $region16: #{channel_transformer.110} parent=0 // pred_region
    _
  $region17: #{channel_transformer.110} parent=0 // pred_fallthru
    _
  // Predicated region
  $region18: #{channel_transformer.110} parent=0 // pred_check
    _
  $region19: #{channel_transformer.110} parent=0 // pred_check_branch
    %101 = sbr.rel (0) target = $region21
  $region20: #{channel_transformer.110} parent=0 // pred_region
    _
  $region21: #{channel_transformer.110} parent=0 // pred_fallthru
    _

// kernel: channel_transformer.105
$region0: #{channel_transformer.105}
  #allocation0 [shape = 'u32[]', space=smem, size = 0x4, offset = 0x4, fixed_abs, tag = 'smem constant byte address 0x4 - core index']
  #allocation1 [shape = 'u32[144,128]{1,0:T(1,128)}', space=vmem, size = 0x12000, scoped, tag = 'internal scratch']
  %s0 = inlined_call_operand.vmem [shape: f32[32,32], index: 0, kind: input, shape index: {}]
  %s1 = inlined_call_operand.vmem [shape: f32[32,32], index: 1, kind: input, shape index: {}]
  %s2 = inlined_call_operand.vmem [shape: f32[32,32], index: 2, kind: input, shape index: {}]
  %s3 = inlined_call_operand.hbm [shape: f32[1,32], index: 3, kind: input, shape index: {}]
  %s4 = inlined_call_operand.hbm [shape: f32[1,32], index: 4, kind: input, shape index: {}]
  %s5 = inlined_call_operand.vmem [shape: f32[32,128], index: 5, kind: input, shape index: {}]
  %s6 = inlined_call_operand.hbm [shape: f32[1,128], index: 6, kind: input, shape index: {}]
  %s7 = inlined_call_operand.vmem [shape: f32[128,32], index: 7, kind: input, shape index: {}]
  %s8 = inlined_call_operand.hbm [shape: f32[1,32], index: 8, kind: input, shape index: {}]
  %s9 = inlined_call_operand.vmem [shape: f32[32,32], index: 9, kind: output, shape index: {}]
  %s10 = sld [smem:[#allocation0]]
  $region62: #{channel_transformer.105} parent=0
    _
  %s12 = ssub.s32 1, %s10
  %s13 = scalar_select 0, %s12, %s10
  $region1: #{channel_transformer.105} parent=0
    #allocation2 [shape = 'u8[512]{0}', space=vmem, size = 0x400, scoped, tag = 'input window, operand 3, single buffered']
    #allocation3 [shape = 's32[1]{0}', space=sflag, size = 0x4, scoped, tag = 'scoped memory for channel_transformer.105']
    #allocation4 [shape = 'u8[512]{0}', space=vmem, size = 0x400, scoped, tag = 'input window, operand 4, single buffered']
    #allocation5 [shape = 's32[1]{0}', space=sflag, size = 0x4, scoped, tag = 'scoped memory for channel_transformer.105']
    #allocation6 [shape = 'u8[512]{0}', space=vmem, size = 0x400, scoped, tag = 'input window, operand 6, single buffered']
    #allocation7 [shape = 'u8[512]{0}', space=vmem, size = 0x400, scoped, tag = 'input window, operand 8, single buffered']
    #allocation8 [shape = 's32[1]{0}', space=sflag, size = 0x4, scoped, tag = 'scoped memory for channel_transformer.105']
    %14 = vsyncpa [#allocation3], 0
    %15 = vsyncpa [#allocation5], 0
    %16 = vsyncpa [#allocation8], 0
    // Predicated region
    $region2: #{channel_transformer.105} parent=1 // pred_check
      _
    $region3: #{channel_transformer.105} parent=1 // pred_check_branch
      %18 = sbr.rel (0) target = $region5
    $region4: #{channel_transformer.105} parent=1 // pred_region
      _
    $region5: #{channel_transformer.105} parent=1 // pred_fallthru
      _
    // Predicated region
    $region6: #{channel_transformer.105} parent=1 // pred_check
      _
    $region7: #{channel_transformer.105} parent=1 // pred_check_branch
      %20 = sbr.rel (0) target = $region9
    $region8: #{channel_transformer.105} parent=1 // pred_region
      _
    $region9: #{channel_transformer.105} parent=1 // pred_fallthru
      _
    // Predicated region
    $region10: #{channel_transformer.105} parent=1 // pred_check
      _
    $region11: #{channel_transformer.105} parent=1 // pred_check_branch
      %22 = sbr.rel (0) target = $region13
    $region12: #{channel_transformer.105} parent=1 // pred_region
      _
    $region13: #{channel_transformer.105} parent=1 // pred_fallthru
      _
    // Predicated region
    $region14: #{channel_transformer.105} parent=1 // pred_check
      _
    $region15: #{channel_transformer.105} parent=1 // pred_check_branch
      %24 = sbr.rel (0) target = $region17
    $region16: #{channel_transformer.105} parent=1 // pred_region
      %s26 = ssub.s32 16, 16
      %27 = vsyncadd [#allocation3], %s26
      %s29 = sshll.u32 [#allocation2], 4
      %s30 = int_to_ptr.vmem [resolvable:$true] %s29
      %32 = dma.hbm_to_vmem [thread:$0]  %s3, 16, %s30, [#allocation3]
    $region17: #{channel_transformer.105} parent=1 // pred_fallthru
      _
    // Predicated region
    $region18: #{channel_transformer.105} parent=1 // pred_check
      _
    $region19: #{channel_transformer.105} parent=1 // pred_check_branch
      %34 = sbr.rel (0) target = $region21
    $region20: #{channel_transformer.105} parent=1 // pred_region
      %s36 = ssub.s32 16, 16
      %37 = vsyncadd [#allocation5], %s36
      %s39 = sshll.u32 [#allocation4], 4
      %s40 = int_to_ptr.vmem [resolvable:$true] %s39
      %42 = dma.hbm_to_vmem [thread:$0]  %s4, 16, %s40, [#allocation5]
    $region21: #{channel_transformer.105} parent=1 // pred_fallthru
      _
    // Predicated region
    $region22: #{channel_transformer.105} parent=1 // pred_check
      _
    $region23: #{channel_transformer.105} parent=1 // pred_check_branch
      %44 = sbr.rel (0) target = $region25
    $region24: #{channel_transformer.105} parent=1 // pred_region
      _
    $region25: #{channel_transformer.105} parent=1 // pred_fallthru
      _
    // Predicated region
    $region26: #{channel_transformer.105} parent=1 // pred_check
      _
    $region27: #{channel_transformer.105} parent=1 // pred_check_branch
      %46 = sbr.rel (0) target = $region29
    $region28: #{channel_transformer.105} parent=1 // pred_region
      %s48 = ssub.s32 16, 16
      %49 = vsyncadd [#allocation5], %s48
      %s51 = sshll.u32 [#allocation6], 4
      %s52 = int_to_ptr.vmem [resolvable:$true] %s51
      %54 = dma.hbm_to_vmem [thread:$0]  %s6, 16, %s52, [#allocation5]
    $region29: #{channel_transformer.105} parent=1 // pred_fallthru
      _
    // Predicated region
    $region30: #{channel_transformer.105} parent=1 // pred_check
      _
    $region31: #{channel_transformer.105} parent=1 // pred_check_branch
      %56 = sbr.rel (0) target = $region33
    $region32: #{channel_transformer.105} parent=1 // pred_region
      _
    $region33: #{channel_transformer.105} parent=1 // pred_fallthru
      _
    // Predicated region
    $region34: #{channel_transformer.105} parent=1 // pred_check
      _
    $region35: #{channel_transformer.105} parent=1 // pred_check_branch
      %58 = sbr.rel (0) target = $region37
    $region36: #{channel_transformer.105} parent=1 // pred_region
      %s60 = ssub.s32 16, 16
      %61 = vsyncadd [#allocation8], %s60
      %s63 = sshll.u32 [#allocation7], 4
      %s64 = int_to_ptr.vmem [resolvable:$true] %s63
      %66 = dma.hbm_to_vmem [thread:$0]  %s8, 16, %s64, [#allocation8]
    $region37: #{channel_transformer.105} parent=1 // pred_fallthru
      _
    // Predicated region
    $region38: #{channel_transformer.105} parent=1 // pred_check
      _
    $region39: #{channel_transformer.105} parent=1 // pred_check_branch
      %68 = sbr.rel (0) target = $region41
    $region40: #{channel_transformer.105} parent=1 // pred_region
      %69 = dma.done [#allocation3], 16
    $region41: #{channel_transformer.105} parent=1 // pred_fallthru
      _
    // Predicated region
    $region42: #{channel_transformer.105} parent=1 // pred_check
      _
    $region43: #{channel_transformer.105} parent=1 // pred_check_branch
      %71 = sbr.rel (0) target = $region45
    $region44: #{channel_transformer.105} parent=1 // pred_region
      %72 = dma.done [#allocation5], 16
    $region45: #{channel_transformer.105} parent=1 // pred_fallthru
      _
    // Predicated region
    $region46: #{channel_transformer.105} parent=1 // pred_check
      _
    $region47: #{channel_transformer.105} parent=1 // pred_check_branch
      %74 = sbr.rel (0) target = $region49
    $region48: #{channel_transformer.105} parent=1 // pred_region
      %75 = dma.done [#allocation5], 16
    $region49: #{channel_transformer.105} parent=1 // pred_fallthru
      _
    // Predicated region
    $region50: #{channel_transformer.105} parent=1 // pred_check
      _
    $region51: #{channel_transformer.105} parent=1 // pred_check_branch
      %77 = sbr.rel (0) target = $region53
    $region52: #{channel_transformer.105} parent=1 // pred_region
      %78 = dma.done [#allocation8], 16
    $region53: #{channel_transformer.105} parent=1 // pred_fallthru
      _
    %v79 = vld [vmem:[%s0] sm:$0xff]
    %v80 = vld [vmem:[%s0 + $0x8] sm:$0xff]
    %v81 = vld [vmem:[%s0 + $0x10] sm:$0xff]
    %v82 = vld [vmem:[%s0 + $0x18] sm:$0xff]
    %v83 = vld [vmem:[%s2] sm:$0xff]
    %v84 = vld [vmem:[%s2 + $0x8] sm:$0xff]
    %v85 = vld [vmem:[%s2 + $0x10] sm:$0xff]
    %v86 = vld [vmem:[%s2 + $0x18] sm:$0xff]
    %vm87 = vcmask 261120
    %v89 = vsel %vm87, %v79, 0
    %v92 = vsel %vm87, %v80, 0
    %v95 = vsel %vm87, %v81, 0
    %v98 = vsel %vm87, %v82, 0
    %100 = vmatprep.subr.mxu0 0.0
    %101 = vmatpush1.msra.mxu0 %v83
    %102 = vmatprep.subr.mxu0 0.0
    %103 = vmatpush1.msra.mxu0 %v84
    %104 = vmatprep.subr.mxu0 0.0
    %105 = vmatpush1.msra.mxu0 %v85
    %106 = vmatprep.subr.mxu0 0.0
    %107 = vmatpush1.msra.mxu0 %v86
    %108 = vmatprep.subr.mxu0 0.0
    %109 = vmatpush1.msra.mxu0 0.0
    %110 = vmatprep.subr.mxu0 0.0
    %111 = vmatpush1.msra.mxu0 0.0
    %112 = vmatprep.subr.mxu0 0.0
    %113 = vmatpush1.msra.mxu0 0.0
    %114 = vmatprep.subr.mxu0 0.0
    %115 = vmatpush1.msra.mxu0 0.0
    %116 = vmatprep.subr.mxu0 0.0
    %117 = vmatpush1.msra.mxu0 0.0
    %118 = vmatprep.subr.mxu0 0.0
    %119 = vmatpush1.msra.mxu0 0.0
    %120 = vmatprep.subr.mxu0 0.0
    %121 = vmatpush1.msra.mxu0 0.0
    %122 = vmatprep.subr.mxu0 0.0
    %123 = vmatpush1.msra.mxu0 0.0
    %124 = vmatprep.subr.mxu0 0.0
    %125 = vmatpush1.msra.mxu0 0.0
    %126 = vmatprep.subr.mxu0 0.0
    %127 = vmatpush1.msra.mxu0 0.0
    %128 = vmatprep.subr.mxu0 0.0
    %129 = vmatpush1.msra.mxu0 0.0
    %130 = vmatprep.subr.mxu0 0.0
    %131 = vmatpush1.msra.mxu0 0.0
    %132 = vmatprep.subr.mxu0 0.0
    %133 = vmatpush1.msra.mxu0 0.0
    %134 = vmatprep.subr.mxu0 0.0
    %135 = vmatpush1.msra.mxu0 0.0
    %136 = vmatprep.subr.mxu0 0.0
    %137 = vmatpush1.msra.mxu0 0.0
    %138 = vmatprep.subr.mxu0 0.0
    %139 = vmatpush1.msra.mxu0 0.0
    %140 = vmatprep.subr.mxu0 0.0
    %141 = vmatpush1.msra.mxu0 0.0
    %142 = vmatprep.subr.mxu0 0.0
    %143 = vmatpush1.msra.mxu0 0.0
    %144 = vmatprep.subr.mxu0 0.0
    %145 = vmatpush1.msra.mxu0 0.0
    %146 = vmatprep.subr.mxu0 0.0
    %147 = vmatpush1.msra.mxu0 0.0
    %148 = vmatprep.subr.mxu0 0.0
    %149 = vmatpush1.msra.mxu0 0.0
    %150 = vmatprep.subr.mxu0 0.0
    %151 = vmatpush1.msra.mxu0 0.0
    %152 = vmatprep.subr.mxu0 0.0
    %153 = vmatpush1.msra.mxu0 0.0
    %154 = vmatprep.subr.mxu0 0.0
    %155 = vmatpush1.msra.mxu0 0.0
    %156 = vmatprep.subr.mxu0 0.0
    %157 = vmatpush1.msra.mxu0 0.0
    %158 = vmatprep.subr.mxu0 0.0
    %159 = vmatpush1.msra.mxu0 0.0
    %160 = vmatprep.subr.mxu0 0.0
    %161 = vmatpush1.msra.mxu0 0.0
    %162 = vmatprep.subr.mxu0 0.0
    %163 = vmatpush1.msra.mxu0 0.0
    %164 = vmatprep.mubr.f32.mxu0 0.0
    %165 = vmatmul.mubr.f32.gmra.mrb[0].mxu0 %v89
    %v166 = vpop.f32.mrb[0].mxu0
    %v167 = vadd.f32 0.0, %v166
    %v168 = vpop.f32.mrb[0].mxu0
    %169 = vmatprep.mubr.f32.mxu0 0.0
    %170 = vmatmul.mubr.f32.gmra.mrb[0].mxu0 %v92
    %v171 = vpop.f32.mrb[0].mxu0
    %v172 = vadd.f32 0.0, %v171
    %v173 = vpop.f32.mrb[0].mxu0
    %174 = vmatprep.mubr.f32.mxu0 0.0
    %175 = vmatmul.mubr.f32.gmra.mrb[0].mxu0 %v95
    %v176 = vpop.f32.mrb[0].mxu0
    %v177 = vadd.f32 0.0, %v176
    %v178 = vpop.f32.mrb[0].mxu0
    %179 = vmatprep.mubr.f32.mxu0 0.0
    %180 = vmatmul.mubr.f32.gmra.mrb[0].mxu0 %v98
    %v181 = vpop.f32.mrb[0].mxu0
    %v182 = vadd.f32 0.0, %v181
    %v183 = vpop.f32.mrb[0].mxu0
    %184 = vdwg.mxu0
    %v185 = vld [vmem:[%s1] sm:$0xff]
    %v186 = vld [vmem:[%s1 + $0x8] sm:$0xff]
    %v187 = vld [vmem:[%s1 + $0x10] sm:$0xff]
    %v188 = vld [vmem:[%s1 + $0x18] sm:$0xff]
    %v189 = vadd.f32 %v185, %v167
    %v190 = vadd.f32 %v186, %v172
    %v191 = vadd.f32 %v187, %v177
    %v192 = vadd.f32 %v188, %v182
    %v193 = vsel %vm87, %v189, 0.0
    %194 = vadd.xlane.f32.xlu0 %v193
    %v195 = vpop.xlane.xlu0 %194
    %v196 = vsel %vm87, %v190, 0.0
    %197 = vadd.xlane.f32.xlu0 %v196
    %v198 = vpop.xlane.xlu0 %197
    %v199 = vsel %vm87, %v191, 0.0
    %200 = vadd.xlane.f32.xlu0 %v199
    %v201 = vpop.xlane.xlu0 %200
    %v202 = vsel %vm87, %v192, 0.0
    %203 = vadd.xlane.f32.xlu0 %v202
    %v204 = vpop.xlane.xlu0 %203
    %v205 = vrcp.pop 32.0
    %v206 = vmul.f32 %v195, %v205
    %v207 = vmul.f32 %v198, %v205
    %v208 = vmul.f32 %v201, %v205
    %v209 = vmul.f32 %v204, %v205
    %v210 = vsub.f32 %v189, %v206
    %v211 = vsub.f32 %v190, %v207
    %v212 = vsub.f32 %v191, %v208
    %v213 = vsub.f32 %v192, %v209
    %v214 = vmul.f32 %v210, %v210
    %v215 = vmul.f32 %v211, %v211
    %v216 = vmul.f32 %v212, %v212
    %v217 = vmul.f32 %v213, %v213
    %v218 = vsel %vm87, %v214, 0.0
    %219 = vadd.xlane.f32.xlu0 %v218
    %v220 = vpop.xlane.xlu0 %219
    %v221 = vsel %vm87, %v215, 0.0
    %222 = vadd.xlane.f32.xlu0 %v221
    %v223 = vpop.xlane.xlu0 %222
    %v224 = vsel %vm87, %v216, 0.0
    %225 = vadd.xlane.f32.xlu0 %v224
    %v226 = vpop.xlane.xlu0 %225
    %v227 = vsel %vm87, %v217, 0.0
    %228 = vadd.xlane.f32.xlu0 %v227
    %v229 = vpop.xlane.xlu0 %228
    %v230 = vmul.f32 %v220, %v205
    %v231 = vmul.f32 %v223, %v205
    %v232 = vmul.f32 %v226, %v205
    %v233 = vmul.f32 %v229, %v205
    %v234 = vadd.f32 %v230, 1e-06
    %v235 = vadd.f32 %v231, 1e-06
    %v236 = vadd.f32 %v232, 1e-06
    %v237 = vadd.f32 %v233, 1e-06
    %v238 = vrsqrt.pop %v234
    %v239 = vrsqrt.pop %v235
    %v240 = vrsqrt.pop %v236
    %v241 = vrsqrt.pop %v237
    %v242 = vmul.f32 %v210, %v238
    %v243 = vmul.f32 %v211, %v239
    %v244 = vmul.f32 %v212, %v240
    %v245 = vmul.f32 %v213, %v241
    %v246 = vld [vmem:[#allocation2] sm:$0x1]
    %v248 = vlaneseq
    %v249 = vshrl.u32 %v248, 7
    %v250 = vsub.s32 0, %v249
    %v251 = vrot.slane %v246, %v250
    %v253 = vmul.f32 %v242, %v251
    %v254 = vmul.f32 %v243, %v251
    %v255 = vmul.f32 %v244, %v251
    %v256 = vmul.f32 %v245, %v251
    %v257 = vld [vmem:[#allocation4] sm:$0x1]
    %v259 = vlaneseq
    %v260 = vshrl.u32 %v259, 7
    %v261 = vsub.s32 0, %v260
    %v262 = vrot.slane %v257, %v261
    %v264 = vadd.f32 %v253, %v262
    %v265 = vadd.f32 %v254, %v262
    %v266 = vadd.f32 %v255, %v262
    %v267 = vadd.f32 %v256, %v262
    %v268 = vld [vmem:[%s5] sm:$0xff]
    %v269 = vld [vmem:[%s5 + $0x8] sm:$0xff]
    %v270 = vld [vmem:[%s5 + $0x10] sm:$0xff]
    %v271 = vld [vmem:[%s5 + $0x18] sm:$0xff]
    %v272 = vld [vmem:[#allocation6] sm:$0x1]
    %v274 = vlaneseq
    %v275 = vshrl.u32 %v274, 7
    %v276 = vsub.s32 0, %v275
    %v277 = vrot.slane %v272, %v276
    %v280 = vsel %vm87, %v264, 0
    %v283 = vsel %vm87, %v265, 0
    %v286 = vsel %vm87, %v266, 0
    %v289 = vsel %vm87, %v267, 0
    %291 = vmatprep.subr.mxu0 0.0
    %292 = vmatpush1.msra.mxu0 %v268
    %293 = vmatprep.subr.mxu0 0.0
    %294 = vmatpush1.msra.mxu0 %v269
    %295 = vmatprep.subr.mxu0 0.0
    %296 = vmatpush1.msra.mxu0 %v270
    %297 = vmatprep.subr.mxu0 0.0
    %298 = vmatpush1.msra.mxu0 %v271
    %299 = vmatprep.subr.mxu0 0.0
    %300 = vmatpush1.msra.mxu0 0.0
    %301 = vmatprep.subr.mxu0 0.0
    %302 = vmatpush1.msra.mxu0 0.0
    %303 = vmatprep.subr.mxu0 0.0
    %304 = vmatpush1.msra.mxu0 0.0
    %305 = vmatprep.subr.mxu0 0.0
    %306 = vmatpush1.msra.mxu0 0.0
    %307 = vmatprep.subr.mxu0 0.0
    %308 = vmatpush1.msra.mxu0 0.0
    %309 = vmatprep.subr.mxu0 0.0
    %310 = vmatpush1.msra.mxu0 0.0
    %311 = vmatprep.subr.mxu0 0.0
    %312 = vmatpush1.msra.mxu0 0.0
    %313 = vmatprep.subr.mxu0 0.0
    %314 = vmatpush1.msra.mxu0 0.0
    %315 = vmatprep.subr.mxu0 0.0
    %316 = vmatpush1.msra.mxu0 0.0
    %317 = vmatprep.subr.mxu0 0.0
    %318 = vmatpush1.msra.mxu0 0.0
    %319 = vmatprep.subr.mxu0 0.0
    %320 = vmatpush1.msra.mxu0 0.0
    %321 = vmatprep.subr.mxu0 0.0
    %322 = vmatpush1.msra.mxu0 0.0
    %323 = vmatprep.subr.mxu0 0.0
    %324 = vmatpush1.msra.mxu0 0.0
    %325 = vmatprep.subr.mxu0 0.0
    %326 = vmatpush1.msra.mxu0 0.0
    %327 = vmatprep.subr.mxu0 0.0
    %328 = vmatpush1.msra.mxu0 0.0
    %329 = vmatprep.subr.mxu0 0.0
    %330 = vmatpush1.msra.mxu0 0.0
    %331 = vmatprep.subr.mxu0 0.0
    %332 = vmatpush1.msra.mxu0 0.0
    %333 = vmatprep.subr.mxu0 0.0
    %334 = vmatpush1.msra.mxu0 0.0
    %335 = vmatprep.subr.mxu0 0.0
    %336 = vmatpush1.msra.mxu0 0.0
    %337 = vmatprep.subr.mxu0 0.0
    %338 = vmatpush1.msra.mxu0 0.0
    %339 = vmatprep.subr.mxu0 0.0
    %340 = vmatpush1.msra.mxu0 0.0
    %341 = vmatprep.subr.mxu0 0.0
    %342 = vmatpush1.msra.mxu0 0.0
    %343 = vmatprep.subr.mxu0 0.0
    %344 = vmatpush1.msra.mxu0 0.0
    %345 = vmatprep.subr.mxu0 0.0
    %346 = vmatpush1.msra.mxu0 0.0
    %347 = vmatprep.subr.mxu0 0.0
    %348 = vmatpush1.msra.mxu0 0.0
    %349 = vmatprep.subr.mxu0 0.0
    %350 = vmatpush1.msra.mxu0 0.0
    %351 = vmatprep.subr.mxu0 0.0
    %352 = vmatpush1.msra.mxu0 0.0
    %353 = vmatprep.subr.mxu0 0.0
    %354 = vmatpush1.msra.mxu0 0.0
    %355 = vmatprep.mubr.f32.mxu0 0.0
    %356 = vmatmul.mubr.f32.gmra.mrb[0].mxu0 %v280
    %v357 = vpop.f32.mrb[0].mxu0
    %v358 = vadd.f32 %v277, %v357
    %v359 = vpop.f32.mrb[0].mxu0
    %360 = vmatprep.mubr.f32.mxu0 0.0
    %361 = vmatmul.mubr.f32.gmra.mrb[0].mxu0 %v283
    %v362 = vpop.f32.mrb[0].mxu0
    %v363 = vadd.f32 %v277, %v362
    %v364 = vpop.f32.mrb[0].mxu0
    %365 = vmatprep.mubr.f32.mxu0 0.0
    %366 = vmatmul.mubr.f32.gmra.mrb[0].mxu0 %v286
    %v367 = vpop.f32.mrb[0].mxu0
    %v368 = vadd.f32 %v277, %v367
    %v369 = vpop.f32.mrb[0].mxu0
    %370 = vmatprep.mubr.f32.mxu0 0.0
    %371 = vmatmul.mubr.f32.gmra.mrb[0].mxu0 %v289
    %v372 = vpop.f32.mrb[0].mxu0
    %v373 = vadd.f32 %v277, %v372
    %v374 = vpop.f32.mrb[0].mxu0
    %375 = vdwg.mxu0
    %v376 = vmul.f32 %v358, 0.5
    %v377 = vmul.f32 %v363, 0.5
    %v378 = vmul.f32 %v368, 0.5
    %v379 = vmul.f32 %v373, 0.5
    %v380 = vmul.f32 %v358, 0.70710677
    %v381 = vmul.f32 %v363, 0.70710677
    %v382 = vmul.f32 %v368, 0.70710677
    %v383 = vmul.f32 %v373, 0.70710677
    %v384 = vand.u32 2147483647, %v380
    %v385 = vand.u32 2147483647, %v381
    %v386 = vand.u32 2147483647, %v382
    %v387 = vand.u32 2147483647, %v383
    %v388 = vmul.f32 %v384, 0.3275911
    %v389 = vmul.f32 %v385, 0.3275911
    %v390 = vmul.f32 %v386, 0.3275911
    %v391 = vmul.f32 %v387, 0.3275911
    %v392 = vadd.f32 %v388, 1.0
    %v393 = vadd.f32 %v389, 1.0
    %v394 = vadd.f32 %v390, 1.0
    %v395 = vadd.f32 %v391, 1.0
    %v396 = vrcp.pop %v392
    %v397 = vmul.f32 1.0, %v396
    %v398 = vrcp.pop %v393
    %v399 = vmul.f32 1.0, %v398
    %v400 = vrcp.pop %v394
    %v401 = vmul.f32 1.0, %v400
    %v402 = vrcp.pop %v395
    %v403 = vmul.f32 1.0, %v402
    %v404 = vmul.f32 %v397, 1.0614054
    %v405 = vmul.f32 %v399, 1.0614054
    %v406 = vmul.f32 %v401, 1.0614054
    %v407 = vmul.f32 %v403, 1.0614054
    %v408 = vadd.f32 %v404, -1.4531521
    %v409 = vadd.f32 %v405, -1.4531521
    %v410 = vadd.f32 %v406, -1.4531521
    %v411 = vadd.f32 %v407, -1.4531521
    %v412 = vmul.f32 %v408, %v397
    %v413 = vmul.f32 %v409, %v399
    %v414 = vmul.f32 %v410, %v401
    %v415 = vmul.f32 %v411, %v403
    %v416 = vadd.f32 %v412, 1.4214138
    %v417 = vadd.f32 %v413, 1.4214138
    %v418 = vadd.f32 %v414, 1.4214138
    %v419 = vadd.f32 %v415, 1.4214138
    %v420 = vmul.f32 %v416, %v397
    %v421 = vmul.f32 %v417, %v399
    %v422 = vmul.f32 %v418, %v401
    %v423 = vmul.f32 %v419, %v403
    %v424 = vadd.f32 %v420, -0.28449672
    %v425 = vadd.f32 %v421, -0.28449672
    %v426 = vadd.f32 %v422, -0.28449672
    %v427 = vadd.f32 %v423, -0.28449672
    %v428 = vmul.f32 %v424, %v397
    %v429 = vmul.f32 %v425, %v399
    %v430 = vmul.f32 %v426, %v401
    %v431 = vmul.f32 %v427, %v403
    %v432 = vadd.f32 %v428, 0.2548296
    %v433 = vadd.f32 %v429, 0.2548296
    %v434 = vadd.f32 %v430, 0.2548296
    %v435 = vadd.f32 %v431, 0.2548296
    %v436 = vmul.f32 %v432, %v397
    %v437 = vmul.f32 %v433, %v399
    %v438 = vmul.f32 %v434, %v401
    %v439 = vmul.f32 %v435, %v403
    %v440 = vsub.f32 0.0, %v384
    %v441 = vsub.f32 0.0, %v385
    %v442 = vsub.f32 0.0, %v386
    %v443 = vsub.f32 0.0, %v387
    %v444 = vmul.f32 %v440, %v384
    %v445 = vmul.f32 %v441, %v385
    %v446 = vmul.f32 %v442, %v386
    %v447 = vmul.f32 %v443, %v387
    %v448 = vmul.f32 %v444, 1.442695
    %v449 = vpow.pop %v448
    %v450 = vmul.f32 %v445, 1.442695
    %v451 = vpow.pop %v450
    %v452 = vmul.f32 %v446, 1.442695
    %v453 = vpow.pop %v452
    %v454 = vmul.f32 %v447, 1.442695
    %v455 = vpow.pop %v454
    %v456 = vmul.f32 %v436, %v449
    %v457 = vmul.f32 %v437, %v451
    %v458 = vmul.f32 %v438, %v453
    %v459 = vmul.f32 %v439, %v455
    %v460 = vsub.f32 1.0, %v456
    %v461 = vsub.f32 1.0, %v457
    %v462 = vsub.f32 1.0, %v458
    %v463 = vsub.f32 1.0, %v459
    %vm464 = vcmp.ge.f32.partialorder %v380, 0.0
    %vm465 = vcmp.ge.f32.partialorder %v381, 0.0
    %vm466 = vcmp.ge.f32.partialorder %v382, 0.0
    %vm467 = vcmp.ge.f32.partialorder %v383, 0.0
    %v468 = vsub.f32 0.0, %v460
    %v469 = vsub.f32 0.0, %v461
    %v470 = vsub.f32 0.0, %v462
    %v471 = vsub.f32 0.0, %v463
    %v472 = vsel %vm464, %v460, %v468
    %v473 = vsel %vm465, %v461, %v469
    %v474 = vsel %vm466, %v462, %v470
    %v475 = vsel %vm467, %v463, %v471
    %v476 = vadd.f32 %v472, 1.0
    %v477 = vadd.f32 %v473, 1.0
    %v478 = vadd.f32 %v474, 1.0
    %v479 = vadd.f32 %v475, 1.0
    %v480 = vmul.f32 %v376, %v476
    %v481 = vmul.f32 %v377, %v477
    %v482 = vmul.f32 %v378, %v478
    %v483 = vmul.f32 %v379, %v479
    %v484 = vld [vmem:[%s7] sm:$0xff]
    %v485 = vld [vmem:[%s7 + $0x8] sm:$0xff]
    %v486 = vld [vmem:[%s7 + $0x10] sm:$0xff]
    %v487 = vld [vmem:[%s7 + $0x18] sm:$0xff]
    %v488 = vld [vmem:[%s7 + $0x20] sm:$0xff]
    %v489 = vld [vmem:[%s7 + $0x28] sm:$0xff]
    %v490 = vld [vmem:[%s7 + $0x30] sm:$0xff]
    %v491 = vld [vmem:[%s7 + $0x38] sm:$0xff]
    %v492 = vld [vmem:[%s7 + $0x40] sm:$0xff]
    %v493 = vld [vmem:[%s7 + $0x48] sm:$0xff]
    %v494 = vld [vmem:[%s7 + $0x50] sm:$0xff]
    %v495 = vld [vmem:[%s7 + $0x58] sm:$0xff]
    %v496 = vld [vmem:[%s7 + $0x60] sm:$0xff]
    %v497 = vld [vmem:[%s7 + $0x68] sm:$0xff]
    %v498 = vld [vmem:[%s7 + $0x70] sm:$0xff]
    %v499 = vld [vmem:[%s7 + $0x78] sm:$0xff]
    %v500 = vld [vmem:[#allocation7] sm:$0x1]
    %v502 = vlaneseq
    %v503 = vshrl.u32 %v502, 7
    %v504 = vsub.s32 0, %v503
    %v505 = vrot.slane %v500, %v504
    %507 = vmatprep.subr.mxu0 0.0
    %508 = vmatpush1.msra.mxu0 %v484
    %509 = vmatprep.subr.mxu0 0.0
    %510 = vmatpush1.msra.mxu0 %v485
    %511 = vmatprep.subr.mxu0 0.0
    %512 = vmatpush1.msra.mxu0 %v486
    %513 = vmatprep.subr.mxu0 0.0
    %514 = vmatpush1.msra.mxu0 %v487
    %515 = vmatprep.subr.mxu0 0.0
    %516 = vmatpush1.msra.mxu0 %v488
    %517 = vmatprep.subr.mxu0 0.0
    %518 = vmatpush1.msra.mxu0 %v489
    %519 = vmatprep.subr.mxu0 0.0
    %520 = vmatpush1.msra.mxu0 %v490
    %521 = vmatprep.subr.mxu0 0.0
    %522 = vmatpush1.msra.mxu0 %v491
    %523 = vmatprep.subr.mxu0 0.0
    %524 = vmatpush1.msra.mxu0 %v492
    %525 = vmatprep.subr.mxu0 0.0
    %526 = vmatpush1.msra.mxu0 %v493
    %527 = vmatprep.subr.mxu0 0.0
    %528 = vmatpush1.msra.mxu0 %v494
    %529 = vmatprep.subr.mxu0 0.0
    %530 = vmatpush1.msra.mxu0 %v495
    %531 = vmatprep.subr.mxu0 0.0
    %532 = vmatpush1.msra.mxu0 %v496
    %533 = vmatprep.subr.mxu0 0.0
    %534 = vmatpush1.msra.mxu0 %v497
    %535 = vmatprep.subr.mxu0 0.0
    %536 = vmatpush1.msra.mxu0 %v498
    %537 = vmatprep.subr.mxu0 0.0
    %538 = vmatpush1.msra.mxu0 %v499
    %539 = vmatprep.subr.mxu0 0.0
    %540 = vmatpush1.msra.mxu0 0.0
    %541 = vmatprep.subr.mxu0 0.0
    %542 = vmatpush1.msra.mxu0 0.0
    %543 = vmatprep.subr.mxu0 0.0
    %544 = vmatpush1.msra.mxu0 0.0
    %545 = vmatprep.subr.mxu0 0.0
    %546 = vmatpush1.msra.mxu0 0.0
    %547 = vmatprep.subr.mxu0 0.0
    %548 = vmatpush1.msra.mxu0 0.0
    %549 = vmatprep.subr.mxu0 0.0
    %550 = vmatpush1.msra.mxu0 0.0
    %551 = vmatprep.subr.mxu0 0.0
    %552 = vmatpush1.msra.mxu0 0.0
    %553 = vmatprep.subr.mxu0 0.0
    %554 = vmatpush1.msra.mxu0 0.0
    %555 = vmatprep.subr.mxu0 0.0
    %556 = vmatpush1.msra.mxu0 0.0
    %557 = vmatprep.subr.mxu0 0.0
    %558 = vmatpush1.msra.mxu0 0.0
    %559 = vmatprep.subr.mxu0 0.0
    %560 = vmatpush1.msra.mxu0 0.0
    %561 = vmatprep.subr.mxu0 0.0
    %562 = vmatpush1.msra.mxu0 0.0
    %563 = vmatprep.subr.mxu0 0.0
    %564 = vmatpush1.msra.mxu0 0.0
    %565 = vmatprep.subr.mxu0 0.0
    %566 = vmatpush1.msra.mxu0 0.0
    %567 = vmatprep.subr.mxu0 0.0
    %568 = vmatpush1.msra.mxu0 0.0
    %569 = vmatprep.subr.mxu0 0.0
    %570 = vmatpush1.msra.mxu0 0.0
    %571 = vmatprep.mubr.f32.mxu0 0.0
    %572 = vmatmul.mubr.f32.gmra.mrb[0].mxu0 %v480
    %v573 = vpop.f32.mrb[0].mxu0
    %v574 = vadd.f32 %v505, %v573
    %v575 = vpop.f32.mrb[0].mxu0
    %576 = vmatprep.mubr.f32.mxu0 0.0
    %577 = vmatmul.mubr.f32.gmra.mrb[0].mxu0 %v481
    %v578 = vpop.f32.mrb[0].mxu0
    %v579 = vadd.f32 %v505, %v578
    %v580 = vpop.f32.mrb[0].mxu0
    %581 = vmatprep.mubr.f32.mxu0 0.0
    %582 = vmatmul.mubr.f32.gmra.mrb[0].mxu0 %v482
    %v583 = vpop.f32.mrb[0].mxu0
    %v584 = vadd.f32 %v505, %v583
    %v585 = vpop.f32.mrb[0].mxu0
    %586 = vmatprep.mubr.f32.mxu0 0.0
    %587 = vmatmul.mubr.f32.gmra.mrb[0].mxu0 %v483
    %v588 = vpop.f32.mrb[0].mxu0
    %v589 = vadd.f32 %v505, %v588
    %v590 = vpop.f32.mrb[0].mxu0
    %591 = vdwg.mxu0
    %v592 = vadd.f32 %v574, %v189
    %v593 = vadd.f32 %v579, %v190
    %v594 = vadd.f32 %v584, %v191
    %v595 = vadd.f32 %v589, %v192
    %596 = vst.msk [vmem:[%s9] sm:$0xff] %vm87, %v592
    %597 = vst.msk [vmem:[%s9 + $0x8] sm:$0xff] %vm87, %v593
    %598 = vst.msk [vmem:[%s9 + $0x10] sm:$0xff] %vm87, %v594
    %599 = vst.msk [vmem:[%s9 + $0x18] sm:$0xff] %vm87, %v595
    // Predicated region
    $region54: #{channel_transformer.105} parent=1 // pred_check
      _
    $region55: #{channel_transformer.105} parent=1 // pred_check_branch
      %601 = sbr.rel (0) target = $region57
    $region56: #{channel_transformer.105} parent=1 // pred_region
      _
    $region57: #{channel_transformer.105} parent=1 // pred_fallthru
      _
    // Predicated region
    $region58: #{channel_transformer.105} parent=1 // pred_check
      _
    $region59: #{channel_transformer.105} parent=1 // pred_check_branch
      %603 = sbr.rel (0) target = $region61
    $region60: #{channel_transformer.105} parent=1 // pred_region
      _
    $region61: #{channel_transformer.105} parent=1 // pred_fallthru
      _
    %604 = vsyncpa [#allocation3], 1
    %605 = vsyncpa [#allocation5], 1
    %606 = vsyncpa [#allocation8], 1

// kernel: channel_transformer.143
$region0: #{channel_transformer.143}
  #allocation0 [shape = 'u32[]', space=smem, size = 0x4, offset = 0x4, fixed_abs, tag = 'smem constant byte address 0x4 - core index']
  #allocation1 [shape = 'u32[144,128]{1,0:T(1,128)}', space=vmem, size = 0x12000, scoped, tag = 'internal scratch']
  %s0 = inlined_call_operand.vmem [shape: f32[32,32], index: 0, kind: input, shape index: {}]
  %s1 = inlined_call_operand.vmem [shape: f32[1,32], index: 1, kind: input, shape index: {}]
  %s2 = inlined_call_operand.vmem [shape: f32[1,32], index: 2, kind: input, shape index: {}]
  %s3 = inlined_call_operand.hbm [shape: f32[32,32], index: 3, kind: output, shape index: {}]
  %s4 = sld [smem:[#allocation0]]
  $region22: #{channel_transformer.143} parent=0
    _
  %s6 = ssub.s32 1, %s4
  %s7 = scalar_select 0, %s6, %s4
  $region1: #{channel_transformer.143} parent=0
    #allocation2 [shape = 'u8[16384]{0}', space=vmem, size = 0x4000, scoped, tag = 'output window, operand 0, single buffered']
    #allocation3 [shape = 's32[1]{0}', space=sflag, size = 0x4, scoped, tag = 'scoped memory for channel_transformer.143']
    %8 = vsyncpa [#allocation3], 0
    // Predicated region
    $region2: #{channel_transformer.143} parent=1 // pred_check
      _
    $region3: #{channel_transformer.143} parent=1 // pred_check_branch
      %10 = sbr.rel (0) target = $region5
    $region4: #{channel_transformer.143} parent=1 // pred_region
      _
    $region5: #{channel_transformer.143} parent=1 // pred_fallthru
      _
    // Predicated region
    $region6: #{channel_transformer.143} parent=1 // pred_check
      _
    $region7: #{channel_transformer.143} parent=1 // pred_check_branch
      %12 = sbr.rel (0) target = $region9
    $region8: #{channel_transformer.143} parent=1 // pred_region
      _
    $region9: #{channel_transformer.143} parent=1 // pred_fallthru
      _
    // Predicated region
    $region10: #{channel_transformer.143} parent=1 // pred_check
      _
    $region11: #{channel_transformer.143} parent=1 // pred_check_branch
      %14 = sbr.rel (0) target = $region13
    $region12: #{channel_transformer.143} parent=1 // pred_region
      _
    $region13: #{channel_transformer.143} parent=1 // pred_fallthru
      _
    %v15 = vld [vmem:[%s0] sm:$0xff]
    %v16 = vld [vmem:[%s0 + $0x8] sm:$0xff]
    %v17 = vld [vmem:[%s0 + $0x10] sm:$0xff]
    %v18 = vld [vmem:[%s0 + $0x18] sm:$0xff]
    %vm19 = vcmask 261120
    %v20 = vsel %vm19, %v15, 0.0
    %21 = vadd.xlane.f32.xlu0 %v20
    %v22 = vpop.xlane.xlu0 %21
    %v23 = vsel %vm19, %v16, 0.0
    %24 = vadd.xlane.f32.xlu0 %v23
    %v25 = vpop.xlane.xlu0 %24
    %v26 = vsel %vm19, %v17, 0.0
    %27 = vadd.xlane.f32.xlu0 %v26
    %v28 = vpop.xlane.xlu0 %27
    %v29 = vsel %vm19, %v18, 0.0
    %30 = vadd.xlane.f32.xlu0 %v29
    %v31 = vpop.xlane.xlu0 %30
    %v32 = vrcp.pop 32.0
    %v33 = vmul.f32 %v22, %v32
    %v34 = vmul.f32 %v25, %v32
    %v35 = vmul.f32 %v28, %v32
    %v36 = vmul.f32 %v31, %v32
    %v37 = vsub.f32 %v15, %v33
    %v38 = vsub.f32 %v16, %v34
    %v39 = vsub.f32 %v17, %v35
    %v40 = vsub.f32 %v18, %v36
    %v41 = vmul.f32 %v37, %v37
    %v42 = vmul.f32 %v38, %v38
    %v43 = vmul.f32 %v39, %v39
    %v44 = vmul.f32 %v40, %v40
    %v45 = vsel %vm19, %v41, 0.0
    %46 = vadd.xlane.f32.xlu0 %v45
    %v47 = vpop.xlane.xlu0 %46
    %v48 = vsel %vm19, %v42, 0.0
    %49 = vadd.xlane.f32.xlu0 %v48
    %v50 = vpop.xlane.xlu0 %49
    %v51 = vsel %vm19, %v43, 0.0
    %52 = vadd.xlane.f32.xlu0 %v51
    %v53 = vpop.xlane.xlu0 %52
    %v54 = vsel %vm19, %v44, 0.0
    %55 = vadd.xlane.f32.xlu0 %v54
    %v56 = vpop.xlane.xlu0 %55
    %v57 = vmul.f32 %v47, %v32
    %v58 = vmul.f32 %v50, %v32
    %v59 = vmul.f32 %v53, %v32
    %v60 = vmul.f32 %v56, %v32
    %v61 = vadd.f32 %v57, 1e-06
    %v62 = vadd.f32 %v58, 1e-06
    %v63 = vadd.f32 %v59, 1e-06
    %v64 = vadd.f32 %v60, 1e-06
    %v65 = vrsqrt.pop %v61
    %v66 = vrsqrt.pop %v62
    %v67 = vrsqrt.pop %v63
    %v68 = vrsqrt.pop %v64
    %v69 = vmul.f32 %v37, %v65
    %v70 = vmul.f32 %v38, %v66
    %v71 = vmul.f32 %v39, %v67
    %v72 = vmul.f32 %v40, %v68
    %v73 = vld [vmem:[%s1] sm:$0x1]
    %v75 = vlaneseq
    %v76 = vshrl.u32 %v75, 7
    %v77 = vsub.s32 0, %v76
    %v78 = vrot.slane %v73, %v77
    %v80 = vmul.f32 %v69, %v78
    %v81 = vmul.f32 %v70, %v78
    %v82 = vmul.f32 %v71, %v78
    %v83 = vmul.f32 %v72, %v78
    %v84 = vld [vmem:[%s2] sm:$0x1]
    %v86 = vlaneseq
    %v87 = vshrl.u32 %v86, 7
    %v88 = vsub.s32 0, %v87
    %v89 = vrot.slane %v84, %v88
    %v91 = vadd.f32 %v80, %v89
    %v92 = vadd.f32 %v81, %v89
    %v93 = vadd.f32 %v82, %v89
    %v94 = vadd.f32 %v83, %v89
    %95 = vst.msk [vmem:[#allocation2] sm:$0xff] %vm19, %v91
    %96 = vst.msk [vmem:[#allocation2 + $0x8] sm:$0xff] %vm19, %v92
    %97 = vst.msk [vmem:[#allocation2 + $0x10] sm:$0xff] %vm19, %v93
    %98 = vst.msk [vmem:[#allocation2 + $0x18] sm:$0xff] %vm19, %v94
    // Predicated region
    $region14: #{channel_transformer.143} parent=1 // pred_check
      _
    $region15: #{channel_transformer.143} parent=1 // pred_check_branch
      %100 = sbr.rel (0) target = $region17
    $region16: #{channel_transformer.143} parent=1 // pred_region
      %s102 = ssub.s32 512, 512
      %103 = vsyncadd [#allocation3], %s102
      %s104 = sshll.u32 [#allocation2], 4
      %s105 = int_to_ptr.vmem [resolvable:$true] %s104
      %110 = dma.vmem_to_hbm [thread:$0]  %s105, 512, %s3, [#allocation3], 128, 128, 8
    $region17: #{channel_transformer.143} parent=1 // pred_fallthru
      _
    // Predicated region
    $region18: #{channel_transformer.143} parent=1 // pred_check
      _
    $region19: #{channel_transformer.143} parent=1 // pred_check_branch
      %112 = sbr.rel (0) target = $region21
    $region20: #{channel_transformer.143} parent=1 // pred_region
      %113 = dma.done [#allocation3], 512
    $region21: #{channel_transformer.143} parent=1 // pred_fallthru
      _
    %114 = vsyncpa [#allocation3], 1

// kernel: channel_transformer.111
$region0: #{channel_transformer.111}
  #allocation0 [shape = 'u32[]', space=smem, size = 0x4, offset = 0x4, fixed_abs, tag = 'smem constant byte address 0x4 - core index']
  #allocation1 [shape = 'u32[144,128]{1,0:T(1,128)}', space=vmem, size = 0x12000, scoped, tag = 'internal scratch']
  %s0 = inlined_call_operand.vmem [shape: f32[32,96], index: 0, kind: input, shape index: {}]
  %s1 = inlined_call_operand.hbm [shape: f32[1,96], index: 1, kind: input, shape index: {}]
  %s2 = inlined_call_operand.hbm [shape: f32[1,96], index: 2, kind: input, shape index: {}]
  %s3 = inlined_call_operand.vmem [shape: f32[96,768], index: 3, kind: input, shape index: {}]
  %s4 = inlined_call_operand.vmem [shape: f32[32,768], index: 4, kind: output, shape index: {}]
  %s5 = sld [smem:[#allocation0]]
  $region34: #{channel_transformer.111} parent=0
    _
  %s7 = ssub.s32 1, %s5
  %s8 = scalar_select 0, %s7, %s5
  $region1: #{channel_transformer.111} parent=0
    #allocation2 [shape = 'u8[512]{0}', space=vmem, size = 0x400, scoped, tag = 'input window, operand 1, single buffered']
    #allocation3 [shape = 's32[1]{0}', space=sflag, size = 0x4, scoped, tag = 'scoped memory for channel_transformer.111']
    #allocation4 [shape = 'u8[512]{0}', space=vmem, size = 0x400, scoped, tag = 'input window, operand 2, single buffered']
    #allocation5 [shape = 's32[1]{0}', space=sflag, size = 0x4, scoped, tag = 'scoped memory for channel_transformer.111']
    %9 = vsyncpa [#allocation3], 0
    %10 = vsyncpa [#allocation5], 0
    // Predicated region
    $region2: #{channel_transformer.111} parent=1 // pred_check
      _
    $region3: #{channel_transformer.111} parent=1 // pred_check_branch
      %12 = sbr.rel (0) target = $region5
    $region4: #{channel_transformer.111} parent=1 // pred_region
      _
    $region5: #{channel_transformer.111} parent=1 // pred_fallthru
      _
    // Predicated region
    $region6: #{channel_transformer.111} parent=1 // pred_check
      _
    $region7: #{channel_transformer.111} parent=1 // pred_check_branch
      %14 = sbr.rel (0) target = $region9
    $region8: #{channel_transformer.111} parent=1 // pred_region
      %s16 = ssub.s32 16, 16
      %17 = vsyncadd [#allocation3], %s16
      %s19 = sshll.u32 [#allocation2], 4
      %s20 = int_to_ptr.vmem [resolvable:$true] %s19
      %22 = dma.hbm_to_vmem [thread:$0]  %s1, 16, %s20, [#allocation3]
    $region9: #{channel_transformer.111} parent=1 // pred_fallthru
      _
    // Predicated region
    $region10: #{channel_transformer.111} parent=1 // pred_check
      _
    $region11: #{channel_transformer.111} parent=1 // pred_check_branch
      %24 = sbr.rel (0) target = $region13
    $region12: #{channel_transformer.111} parent=1 // pred_region
      %s26 = ssub.s32 16, 16
      %27 = vsyncadd [#allocation5], %s26
      %s29 = sshll.u32 [#allocation4], 4
      %s30 = int_to_ptr.vmem [resolvable:$true] %s29
      %32 = dma.hbm_to_vmem [thread:$0]  %s2, 16, %s30, [#allocation5]
    $region13: #{channel_transformer.111} parent=1 // pred_fallthru
      _
    // Predicated region
    $region14: #{channel_transformer.111} parent=1 // pred_check
      _
    $region15: #{channel_transformer.111} parent=1 // pred_check_branch
      %34 = sbr.rel (0) target = $region17
    $region16: #{channel_transformer.111} parent=1 // pred_region
      _
    $region17: #{channel_transformer.111} parent=1 // pred_fallthru
      _
    // Predicated region
    $region18: #{channel_transformer.111} parent=1 // pred_check
      _
    $region19: #{channel_transformer.111} parent=1 // pred_check_branch
      %36 = sbr.rel (0) target = $region21
    $region20: #{channel_transformer.111} parent=1 // pred_region
      %37 = dma.done [#allocation3], 16
    $region21: #{channel_transformer.111} parent=1 // pred_fallthru
      _
    // Predicated region
    $region22: #{channel_transformer.111} parent=1 // pred_check
      _
    $region23: #{channel_transformer.111} parent=1 // pred_check_branch
      %39 = sbr.rel (0) target = $region25
    $region24: #{channel_transformer.111} parent=1 // pred_region
      %40 = dma.done [#allocation5], 16
    $region25: #{channel_transformer.111} parent=1 // pred_fallthru
      _
    %v41 = vld [vmem:[%s0] sm:$0xff]
    %v42 = vld [vmem:[%s0 + $0x8] sm:$0xff]
    %v43 = vld [vmem:[%s0 + $0x10] sm:$0xff]
    %v44 = vld [vmem:[%s0 + $0x18] sm:$0xff]
    %vm45 = vcmask 785408
    %v46 = vsel %vm45, %v41, 0.0
    %47 = vadd.xlane.f32.xlu0 %v46
    %v48 = vpop.xlane.xlu0 %47
    %v49 = vsel %vm45, %v42, 0.0
    %50 = vadd.xlane.f32.xlu0 %v49
    %v51 = vpop.xlane.xlu0 %50
    %v52 = vsel %vm45, %v43, 0.0
    %53 = vadd.xlane.f32.xlu0 %v52
    %v54 = vpop.xlane.xlu0 %53
    %v55 = vsel %vm45, %v44, 0.0
    %56 = vadd.xlane.f32.xlu0 %v55
    %v57 = vpop.xlane.xlu0 %56
    %v58 = vrcp.pop 96.0
    %v59 = vmul.f32 %v48, %v58
    %v60 = vmul.f32 %v51, %v58
    %v61 = vmul.f32 %v54, %v58
    %v62 = vmul.f32 %v57, %v58
    %v63 = vsub.f32 %v41, %v59
    %v64 = vsub.f32 %v42, %v60
    %v65 = vsub.f32 %v43, %v61
    %v66 = vsub.f32 %v44, %v62
    %v67 = vmul.f32 %v63, %v63
    %v68 = vmul.f32 %v64, %v64
    %v69 = vmul.f32 %v65, %v65
    %v70 = vmul.f32 %v66, %v66
    %v71 = vsel %vm45, %v67, 0.0
    %72 = vadd.xlane.f32.xlu0 %v71
    %v73 = vpop.xlane.xlu0 %72
    %v74 = vsel %vm45, %v68, 0.0
    %75 = vadd.xlane.f32.xlu0 %v74
    %v76 = vpop.xlane.xlu0 %75
    %v77 = vsel %vm45, %v69, 0.0
    %78 = vadd.xlane.f32.xlu0 %v77
    %v79 = vpop.xlane.xlu0 %78
    %v80 = vsel %vm45, %v70, 0.0
    %81 = vadd.xlane.f32.xlu0 %v80
    %v82 = vpop.xlane.xlu0 %81
    %v83 = vmul.f32 %v73, %v58
    %v84 = vmul.f32 %v76, %v58
    %v85 = vmul.f32 %v79, %v58
    %v86 = vmul.f32 %v82, %v58
    %v87 = vadd.f32 %v83, 1e-06
    %v88 = vadd.f32 %v84, 1e-06
    %v89 = vadd.f32 %v85, 1e-06
    %v90 = vadd.f32 %v86, 1e-06
    %v91 = vrsqrt.pop %v87
    %v92 = vrsqrt.pop %v88
    %v93 = vrsqrt.pop %v89
    %v94 = vrsqrt.pop %v90
    %v95 = vmul.f32 %v63, %v91
    %v96 = vmul.f32 %v64, %v92
    %v97 = vmul.f32 %v65, %v93
    %v98 = vmul.f32 %v66, %v94
    %v99 = vld [vmem:[#allocation2] sm:$0x1]
    %v101 = vlaneseq
    %v102 = vshrl.u32 %v101, 7
    %v103 = vsub.s32 0, %v102
    %v104 = vrot.slane %v99, %v103
    %v106 = vmul.f32 %v95, %v104
    %v107 = vmul.f32 %v96, %v104
    %v108 = vmul.f32 %v97, %v104
    %v109 = vmul.f32 %v98, %v104
    %v110 = vld [vmem:[#allocation4] sm:$0x1]
    %v112 = vlaneseq
    %v113 = vshrl.u32 %v112, 7
    %v114 = vsub.s32 0, %v113
    %v115 = vrot.slane %v110, %v114
    %v117 = vadd.f32 %v106, %v115
    %v118 = vadd.f32 %v107, %v115
    %v119 = vadd.f32 %v108, %v115
    %v120 = vadd.f32 %v109, %v115
    %v121 = vld [vmem:[%s3] sm:$0xff]
    %v122 = vld [vmem:[%s3 + $0x8] sm:$0xff]
    %v123 = vld [vmem:[%s3 + $0x10] sm:$0xff]
    %v124 = vld [vmem:[%s3 + $0x18] sm:$0xff]
    %v125 = vld [vmem:[%s3 + $0x20] sm:$0xff]
    %v126 = vld [vmem:[%s3 + $0x28] sm:$0xff]
    %v127 = vld [vmem:[%s3 + $0x30] sm:$0xff]
    %v128 = vld [vmem:[%s3 + $0x38] sm:$0xff]
    %v129 = vld [vmem:[%s3 + $0x40] sm:$0xff]
    %v130 = vld [vmem:[%s3 + $0x48] sm:$0xff]
    %v131 = vld [vmem:[%s3 + $0x50] sm:$0xff]
    %v132 = vld [vmem:[%s3 + $0x58] sm:$0xff]
    %v133 = vld [vmem:[%s3 + $0x60] sm:$0xff]
    %v134 = vld [vmem:[%s3 + $0x68] sm:$0xff]
    %v135 = vld [vmem:[%s3 + $0x70] sm:$0xff]
    %v136 = vld [vmem:[%s3 + $0x78] sm:$0xff]
    %v137 = vld [vmem:[%s3 + $0x80] sm:$0xff]
    %v138 = vld [vmem:[%s3 + $0x88] sm:$0xff]
    %v139 = vld [vmem:[%s3 + $0x90] sm:$0xff]
    %v140 = vld [vmem:[%s3 + $0x98] sm:$0xff]
    %v141 = vld [vmem:[%s3 + $0xa0] sm:$0xff]
    %v142 = vld [vmem:[%s3 + $0xa8] sm:$0xff]
    %v143 = vld [vmem:[%s3 + $0xb0] sm:$0xff]
    %v144 = vld [vmem:[%s3 + $0xb8] sm:$0xff]
    %v145 = vld [vmem:[%s3 + $0xc0] sm:$0xff]
    %v146 = vld [vmem:[%s3 + $0xc8] sm:$0xff]
    %v147 = vld [vmem:[%s3 + $0xd0] sm:$0xff]
    %v148 = vld [vmem:[%s3 + $0xd8] sm:$0xff]
    %v149 = vld [vmem:[%s3 + $0xe0] sm:$0xff]
    %v150 = vld [vmem:[%s3 + $0xe8] sm:$0xff]
    %v151 = vld [vmem:[%s3 + $0xf0] sm:$0xff]
    %v152 = vld [vmem:[%s3 + $0xf8] sm:$0xff]
    %v153 = vld [vmem:[%s3 + $0x100] sm:$0xff]
    %v154 = vld [vmem:[%s3 + $0x108] sm:$0xff]
    %v155 = vld [vmem:[%s3 + $0x110] sm:$0xff]
    %v156 = vld [vmem:[%s3 + $0x118] sm:$0xff]
    %v157 = vld [vmem:[%s3 + $0x120] sm:$0xff]
    %v158 = vld [vmem:[%s3 + $0x128] sm:$0xff]
    %v159 = vld [vmem:[%s3 + $0x130] sm:$0xff]
    %v160 = vld [vmem:[%s3 + $0x138] sm:$0xff]
    %v161 = vld [vmem:[%s3 + $0x140] sm:$0xff]
    %v162 = vld [vmem:[%s3 + $0x148] sm:$0xff]
    %v163 = vld [vmem:[%s3 + $0x150] sm:$0xff]
    %v164 = vld [vmem:[%s3 + $0x158] sm:$0xff]
    %v165 = vld [vmem:[%s3 + $0x160] sm:$0xff]
    %v166 = vld [vmem:[%s3 + $0x168] sm:$0xff]
    %v167 = vld [vmem:[%s3 + $0x170] sm:$0xff]
    %v168 = vld [vmem:[%s3 + $0x178] sm:$0xff]
    %v169 = vld [vmem:[%s3 + $0x180] sm:$0xff]
    %v170 = vld [vmem:[%s3 + $0x188] sm:$0xff]
    %v171 = vld [vmem:[%s3 + $0x190] sm:$0xff]
    %v172 = vld [vmem:[%s3 + $0x198] sm:$0xff]
    %v173 = vld [vmem:[%s3 + $0x1a0] sm:$0xff]
    %v174 = vld [vmem:[%s3 + $0x1a8] sm:$0xff]
    %v175 = vld [vmem:[%s3 + $0x1b0] sm:$0xff]
    %v176 = vld [vmem:[%s3 + $0x1b8] sm:$0xff]
    %v177 = vld [vmem:[%s3 + $0x1c0] sm:$0xff]
    %v178 = vld [vmem:[%s3 + $0x1c8] sm:$0xff]
    %v179 = vld [vmem:[%s3 + $0x1d0] sm:$0xff]
    %v180 = vld [vmem:[%s3 + $0x1d8] sm:$0xff]
    %v181 = vld [vmem:[%s3 + $0x1e0] sm:$0xff]
    %v182 = vld [vmem:[%s3 + $0x1e8] sm:$0xff]
    %v183 = vld [vmem:[%s3 + $0x1f0] sm:$0xff]
    %v184 = vld [vmem:[%s3 + $0x1f8] sm:$0xff]
    %v185 = vld [vmem:[%s3 + $0x200] sm:$0xff]
    %v186 = vld [vmem:[%s3 + $0x208] sm:$0xff]
    %v187 = vld [vmem:[%s3 + $0x210] sm:$0xff]
    %v188 = vld [vmem:[%s3 + $0x218] sm:$0xff]
    %v189 = vld [vmem:[%s3 + $0x220] sm:$0xff]
    %v190 = vld [vmem:[%s3 + $0x228] sm:$0xff]
    %v191 = vld [vmem:[%s3 + $0x230] sm:$0xff]
    %v192 = vld [vmem:[%s3 + $0x238] sm:$0xff]
    %v194 = vsel %vm45, %v117, 0
    %v197 = vsel %vm45, %v118, 0
    %v200 = vsel %vm45, %v119, 0
    %v203 = vsel %vm45, %v120, 0
    %205 = vmatprep.subr.mxu0 %v122
    %206 = vmatpush1.msra.mxu0 %v121
    %207 = vmatprep.subr.mxu0 %v128
    %208 = vmatpush1.msra.mxu0 %v127
    %209 = vmatprep.subr.mxu0 %v134
    %210 = vmatpush1.msra.mxu0 %v133
    %211 = vmatprep.subr.mxu0 %v140
    %212 = vmatpush1.msra.mxu0 %v139
    %213 = vmatprep.subr.mxu0 %v146
    %214 = vmatpush1.msra.mxu0 %v145
    %215 = vmatprep.subr.mxu0 %v152
    %216 = vmatpush1.msra.mxu0 %v151
    %217 = vmatprep.subr.mxu0 %v158
    %218 = vmatpush1.msra.mxu0 %v157
    %219 = vmatprep.subr.mxu0 %v164
    %220 = vmatpush1.msra.mxu0 %v163
    %221 = vmatprep.subr.mxu0 %v170
    %222 = vmatpush1.msra.mxu0 %v169
    %223 = vmatprep.subr.mxu0 %v176
    %224 = vmatpush1.msra.mxu0 %v175
    %225 = vmatprep.subr.mxu0 %v182
    %226 = vmatpush1.msra.mxu0 %v181
    %227 = vmatprep.subr.mxu0 %v188
    %228 = vmatpush1.msra.mxu0 %v187
    %229 = vmatprep.subr.mxu0 0.0
    %230 = vmatpush1.msra.mxu0 0.0
    %231 = vmatprep.subr.mxu0 0.0
    %232 = vmatpush1.msra.mxu0 0.0
    %233 = vmatprep.subr.mxu0 0.0
    %234 = vmatpush1.msra.mxu0 0.0
    %235 = vmatprep.subr.mxu0 0.0
    %236 = vmatpush1.msra.mxu0 0.0
    %237 = vmatprep.subr.mxu0 0.0
    %238 = vmatpush1.msra.mxu0 0.0
    %239 = vmatprep.subr.mxu0 0.0
    %240 = vmatpush1.msra.mxu0 0.0
    %241 = vmatprep.subr.mxu0 0.0
    %242 = vmatpush1.msra.mxu0 0.0
    %243 = vmatprep.subr.mxu0 0.0
    %244 = vmatpush1.msra.mxu0 0.0
    %245 = vmatprep.subr.mxu0 0.0
    %246 = vmatpush1.msra.mxu0 0.0
    %247 = vmatprep.subr.mxu0 0.0
    %248 = vmatpush1.msra.mxu0 0.0
    %249 = vmatprep.subr.mxu0 0.0
    %250 = vmatpush1.msra.mxu0 0.0
    %251 = vmatprep.subr.mxu0 0.0
    %252 = vmatpush1.msra.mxu0 0.0
    %253 = vmatprep.subr.mxu0 0.0
    %254 = vmatpush1.msra.mxu0 0.0
    %255 = vmatprep.subr.mxu0 0.0
    %256 = vmatpush1.msra.mxu0 0.0
    %257 = vmatprep.subr.mxu0 0.0
    %258 = vmatpush1.msra.mxu0 0.0
    %259 = vmatprep.subr.mxu0 0.0
    %260 = vmatpush1.msra.mxu0 0.0
    %261 = vmatprep.subr.mxu0 0.0
    %262 = vmatpush1.msra.mxu0 0.0
    %263 = vmatprep.subr.mxu0 0.0
    %264 = vmatpush1.msra.mxu0 0.0
    %265 = vmatprep.subr.mxu0 0.0
    %266 = vmatpush1.msra.mxu0 0.0
    %267 = vmatprep.subr.mxu0 0.0
    %268 = vmatpush1.msra.mxu0 0.0
    %269 = vmatprep.mubr.f32.mxu0 0.0
    %270 = vmatmul.mubr.f32.gmra.mrb[0].mxu0 %v194
    %v271 = vpop.f32.mrb[0].mxu0
    %v272 = vadd.f32 0.0, %v271
    %v273 = vpop.f32.mrb[0].mxu0
    %v274 = vadd.f32 0.0, %v273
    %275 = vmatprep.mubr.f32.mxu0 0.0
    %276 = vmatmul.mubr.f32.gmra.mrb[0].mxu0 %v197
    %v277 = vpop.f32.mrb[0].mxu0
    %v278 = vadd.f32 0.0, %v277
    %v279 = vpop.f32.mrb[0].mxu0
    %v280 = vadd.f32 0.0, %v279
    %281 = vmatprep.mubr.f32.mxu0 0.0
    %282 = vmatmul.mubr.f32.gmra.mrb[0].mxu0 %v200
    %v283 = vpop.f32.mrb[0].mxu0
    %v284 = vadd.f32 0.0, %v283
    %v285 = vpop.f32.mrb[0].mxu0
    %v286 = vadd.f32 0.0, %v285
    %287 = vmatprep.mubr.f32.mxu0 0.0
    %288 = vmatmul.mubr.f32.gmra.mrb[0].mxu0 %v203
    %v289 = vpop.f32.mrb[0].mxu0
    %v290 = vadd.f32 0.0, %v289
    %v291 = vpop.f32.mrb[0].mxu0
    %v292 = vadd.f32 0.0, %v291
    %293 = vdwg.mxu0
    %294 = vmatprep.subr.mxu0 %v124
    %295 = vmatpush1.msra.mxu0 %v123
    %296 = vmatprep.subr.mxu0 %v130
    %297 = vmatpush1.msra.mxu0 %v129
    %298 = vmatprep.subr.mxu0 %v136
    %299 = vmatpush1.msra.mxu0 %v135
    %300 = vmatprep.subr.mxu0 %v142
    %301 = vmatpush1.msra.mxu0 %v141
    %302 = vmatprep.subr.mxu0 %v148
    %303 = vmatpush1.msra.mxu0 %v147
    %304 = vmatprep.subr.mxu0 %v154
    %305 = vmatpush1.msra.mxu0 %v153
    %306 = vmatprep.subr.mxu0 %v160
    %307 = vmatpush1.msra.mxu0 %v159
    %308 = vmatprep.subr.mxu0 %v166
    %309 = vmatpush1.msra.mxu0 %v165
    %310 = vmatprep.subr.mxu0 %v172
    %311 = vmatpush1.msra.mxu0 %v171
    %312 = vmatprep.subr.mxu0 %v178
    %313 = vmatpush1.msra.mxu0 %v177
    %314 = vmatprep.subr.mxu0 %v184
    %315 = vmatpush1.msra.mxu0 %v183
    %316 = vmatprep.subr.mxu0 %v190
    %317 = vmatpush1.msra.mxu0 %v189
    %318 = vmatprep.subr.mxu0 0.0
    %319 = vmatpush1.msra.mxu0 0.0
    %320 = vmatprep.subr.mxu0 0.0
    %321 = vmatpush1.msra.mxu0 0.0
    %322 = vmatprep.subr.mxu0 0.0
    %323 = vmatpush1.msra.mxu0 0.0
    %324 = vmatprep.subr.mxu0 0.0
    %325 = vmatpush1.msra.mxu0 0.0
    %326 = vmatprep.subr.mxu0 0.0
    %327 = vmatpush1.msra.mxu0 0.0
    %328 = vmatprep.subr.mxu0 0.0
    %329 = vmatpush1.msra.mxu0 0.0
    %330 = vmatprep.subr.mxu0 0.0
    %331 = vmatpush1.msra.mxu0 0.0
    %332 = vmatprep.subr.mxu0 0.0
    %333 = vmatpush1.msra.mxu0 0.0
    %334 = vmatprep.subr.mxu0 0.0
    %335 = vmatpush1.msra.mxu0 0.0
    %336 = vmatprep.subr.mxu0 0.0
    %337 = vmatpush1.msra.mxu0 0.0
    %338 = vmatprep.subr.mxu0 0.0
    %339 = vmatpush1.msra.mxu0 0.0
    %340 = vmatprep.subr.mxu0 0.0
    %341 = vmatpush1.msra.mxu0 0.0
    %342 = vmatprep.subr.mxu0 0.0
    %343 = vmatpush1.msra.mxu0 0.0
    %344 = vmatprep.subr.mxu0 0.0
    %345 = vmatpush1.msra.mxu0 0.0
    %346 = vmatprep.subr.mxu0 0.0
    %347 = vmatpush1.msra.mxu0 0.0
    %348 = vmatprep.subr.mxu0 0.0
    %349 = vmatpush1.msra.mxu0 0.0
    %350 = vmatprep.subr.mxu0 0.0
    %351 = vmatpush1.msra.mxu0 0.0
    %352 = vmatprep.subr.mxu0 0.0
    %353 = vmatpush1.msra.mxu0 0.0
    %354 = vmatprep.subr.mxu0 0.0
    %355 = vmatpush1.msra.mxu0 0.0
    %356 = vmatprep.subr.mxu0 0.0
    %357 = vmatpush1.msra.mxu0 0.0
    %358 = vmatprep.mubr.f32.mxu0 0.0
    %359 = vmatmul.mubr.f32.gmra.mrb[0].mxu0 %v194
    %v360 = vpop.f32.mrb[0].mxu0
    %v361 = vadd.f32 0.0, %v360
    %v362 = vpop.f32.mrb[0].mxu0
    %v363 = vadd.f32 0.0, %v362
    %364 = vmatprep.mubr.f32.mxu0 0.0
    %365 = vmatmul.mubr.f32.gmra.mrb[0].mxu0 %v197
    %v366 = vpop.f32.mrb[0].mxu0
    %v367 = vadd.f32 0.0, %v366
    %v368 = vpop.f32.mrb[0].mxu0
    %v369 = vadd.f32 0.0, %v368
    %370 = vmatprep.mubr.f32.mxu0 0.0
    %371 = vmatmul.mubr.f32.gmra.mrb[0].mxu0 %v200
    %v372 = vpop.f32.mrb[0].mxu0
    %v373 = vadd.f32 0.0, %v372
    %v374 = vpop.f32.mrb[0].mxu0
    %v375 = vadd.f32 0.0, %v374
    %376 = vmatprep.mubr.f32.mxu0 0.0
    %377 = vmatmul.mubr.f32.gmra.mrb[0].mxu0 %v203
    %v378 = vpop.f32.mrb[0].mxu0
    %v379 = vadd.f32 0.0, %v378
    %v380 = vpop.f32.mrb[0].mxu0
    %v381 = vadd.f32 0.0, %v380
    %382 = vdwg.mxu0
    %383 = vmatprep.subr.mxu0 %v126
    %384 = vmatpush1.msra.mxu0 %v125
    %385 = vmatprep.subr.mxu0 %v132
    %386 = vmatpush1.msra.mxu0 %v131
    %387 = vmatprep.subr.mxu0 %v138
    %388 = vmatpush1.msra.mxu0 %v137
    %389 = vmatprep.subr.mxu0 %v144
    %390 = vmatpush1.msra.mxu0 %v143
    %391 = vmatprep.subr.mxu0 %v150
    %392 = vmatpush1.msra.mxu0 %v149
    %393 = vmatprep.subr.mxu0 %v156
    %394 = vmatpush1.msra.mxu0 %v155
    %395 = vmatprep.subr.mxu0 %v162
    %396 = vmatpush1.msra.mxu0 %v161
    %397 = vmatprep.subr.mxu0 %v168
    %398 = vmatpush1.msra.mxu0 %v167
    %399 = vmatprep.subr.mxu0 %v174
    %400 = vmatpush1.msra.mxu0 %v173
    %401 = vmatprep.subr.mxu0 %v180
    %402 = vmatpush1.msra.mxu0 %v179
    %403 = vmatprep.subr.mxu0 %v186
    %404 = vmatpush1.msra.mxu0 %v185
    %405 = vmatprep.subr.mxu0 %v192
    %406 = vmatpush1.msra.mxu0 %v191
    %407 = vmatprep.subr.mxu0 0.0
    %408 = vmatpush1.msra.mxu0 0.0
    %409 = vmatprep.subr.mxu0 0.0
    %410 = vmatpush1.msra.mxu0 0.0
    %411 = vmatprep.subr.mxu0 0.0
    %412 = vmatpush1.msra.mxu0 0.0
    %413 = vmatprep.subr.mxu0 0.0
    %414 = vmatpush1.msra.mxu0 0.0
    %415 = vmatprep.subr.mxu0 0.0
    %416 = vmatpush1.msra.mxu0 0.0
    %417 = vmatprep.subr.mxu0 0.0
    %418 = vmatpush1.msra.mxu0 0.0
    %419 = vmatprep.subr.mxu0 0.0
    %420 = vmatpush1.msra.mxu0 0.0
    %421 = vmatprep.subr.mxu0 0.0
    %422 = vmatpush1.msra.mxu0 0.0
    %423 = vmatprep.subr.mxu0 0.0
    %424 = vmatpush1.msra.mxu0 0.0
    %425 = vmatprep.subr.mxu0 0.0
    %426 = vmatpush1.msra.mxu0 0.0
    %427 = vmatprep.subr.mxu0 0.0
    %428 = vmatpush1.msra.mxu0 0.0
    %429 = vmatprep.subr.mxu0 0.0
    %430 = vmatpush1.msra.mxu0 0.0
    %431 = vmatprep.subr.mxu0 0.0
    %432 = vmatpush1.msra.mxu0 0.0
    %433 = vmatprep.subr.mxu0 0.0
    %434 = vmatpush1.msra.mxu0 0.0
    %435 = vmatprep.subr.mxu0 0.0
    %436 = vmatpush1.msra.mxu0 0.0
    %437 = vmatprep.subr.mxu0 0.0
    %438 = vmatpush1.msra.mxu0 0.0
    %439 = vmatprep.subr.mxu0 0.0
    %440 = vmatpush1.msra.mxu0 0.0
    %441 = vmatprep.subr.mxu0 0.0
    %442 = vmatpush1.msra.mxu0 0.0
    %443 = vmatprep.subr.mxu0 0.0
    %444 = vmatpush1.msra.mxu0 0.0
    %445 = vmatprep.subr.mxu0 0.0
    %446 = vmatpush1.msra.mxu0 0.0
    %447 = vmatprep.mubr.f32.mxu0 0.0
    %448 = vmatmul.mubr.f32.gmra.mrb[0].mxu0 %v194
    %v449 = vpop.f32.mrb[0].mxu0
    %v450 = vadd.f32 0.0, %v449
    %v451 = vpop.f32.mrb[0].mxu0
    %v452 = vadd.f32 0.0, %v451
    %453 = vmatprep.mubr.f32.mxu0 0.0
    %454 = vmatmul.mubr.f32.gmra.mrb[0].mxu0 %v197
    %v455 = vpop.f32.mrb[0].mxu0
    %v456 = vadd.f32 0.0, %v455
    %v457 = vpop.f32.mrb[0].mxu0
    %v458 = vadd.f32 0.0, %v457
    %459 = vmatprep.mubr.f32.mxu0 0.0
    %460 = vmatmul.mubr.f32.gmra.mrb[0].mxu0 %v200
    %v461 = vpop.f32.mrb[0].mxu0
    %v462 = vadd.f32 0.0, %v461
    %v463 = vpop.f32.mrb[0].mxu0
    %v464 = vadd.f32 0.0, %v463
    %465 = vmatprep.mubr.f32.mxu0 0.0
    %466 = vmatmul.mubr.f32.gmra.mrb[0].mxu0 %v203
    %v467 = vpop.f32.mrb[0].mxu0
    %v468 = vadd.f32 0.0, %v467
    %v469 = vpop.f32.mrb[0].mxu0
    %v470 = vadd.f32 0.0, %v469
    %471 = vdwg.mxu0
    %472 = vst [vmem:[%s4] sm:$0xff] %v272
    %473 = vst [vmem:[%s4 + $0x8] sm:$0xff] %v274
    %474 = vst [vmem:[%s4 + $0x10] sm:$0xff] %v361
    %475 = vst [vmem:[%s4 + $0x18] sm:$0xff] %v363
    %476 = vst [vmem:[%s4 + $0x20] sm:$0xff] %v450
    %477 = vst [vmem:[%s4 + $0x28] sm:$0xff] %v452
    %478 = vst [vmem:[%s4 + $0x30] sm:$0xff] %v278
    %479 = vst [vmem:[%s4 + $0x38] sm:$0xff] %v280
    %480 = vst [vmem:[%s4 + $0x40] sm:$0xff] %v367
    %481 = vst [vmem:[%s4 + $0x48] sm:$0xff] %v369
    %482 = vst [vmem:[%s4 + $0x50] sm:$0xff] %v456
    %483 = vst [vmem:[%s4 + $0x58] sm:$0xff] %v458
    %484 = vst [vmem:[%s4 + $0x60] sm:$0xff] %v284
    %485 = vst [vmem:[%s4 + $0x68] sm:$0xff] %v286
    %486 = vst [vmem:[%s4 + $0x70] sm:$0xff] %v373
    %487 = vst [vmem:[%s4 + $0x78] sm:$0xff] %v375
    %488 = vst [vmem:[%s4 + $0x80] sm:$0xff] %v462
    %489 = vst [vmem:[%s4 + $0x88] sm:$0xff] %v464
    %490 = vst [vmem:[%s4 + $0x90] sm:$0xff] %v290
    %491 = vst [vmem:[%s4 + $0x98] sm:$0xff] %v292
    %492 = vst [vmem:[%s4 + $0xa0] sm:$0xff] %v379
    %493 = vst [vmem:[%s4 + $0xa8] sm:$0xff] %v381
    %494 = vst [vmem:[%s4 + $0xb0] sm:$0xff] %v468
    %495 = vst [vmem:[%s4 + $0xb8] sm:$0xff] %v470
    // Predicated region
    $region26: #{channel_transformer.111} parent=1 // pred_check
      _
    $region27: #{channel_transformer.111} parent=1 // pred_check_branch
      %497 = sbr.rel (0) target = $region29
    $region28: #{channel_transformer.111} parent=1 // pred_region
      _
    $region29: #{channel_transformer.111} parent=1 // pred_fallthru
      _
    // Predicated region
    $region30: #{channel_transformer.111} parent=1 // pred_check
      _
    $region31: #{channel_transformer.111} parent=1 // pred_check_branch
      %499 = sbr.rel (0) target = $region33
    $region32: #{channel_transformer.111} parent=1 // pred_region
      _
    $region33: #{channel_transformer.111} parent=1 // pred_fallthru
      _
    %500 = vsyncpa [#allocation3], 1
    %501 = vsyncpa [#allocation5], 1

</llo_original>
